<compile_context>
chip_gen: v7x
topology: tpu7x:2x2x1
jax: 0.10.0
libtpu: 0.0.40
codegen_flags: <defaults>
</compile_context>

<pallas_src>
import functools

import jax
import jax.numpy as jnp
from jax import lax
from jax.experimental import pallas as pl
from jax.experimental.pallas import tpu as pltpu

POOL_KS = (5, 9, 13)   # SPP pool sizes (stride 1, "same" padding)
LANE = 128             # TPU lane width


def _round_up(x, m):
    return (x + m - 1) // m * m


def _vmem_limit(working_set_bytes):
    # Generous but bounded scoped-VMEM budget (v7x physical VMEM is 64 MiB).
    return int(min(64 * 2**20, max(32 * 2**20, 2 * working_set_bytes)))


# ---------------------------------------------------------------------------
# Kernel 1: fused 1x1-conv (matmul over channels) + folded BN + SiLU  (cv1)
# ---------------------------------------------------------------------------
def _pw_conv_silu_kernel(x_ref, w_ref, b_ref, o_ref):
    z = jnp.dot(x_ref[...], w_ref[...], preferred_element_type=jnp.float32)
    z = z + b_ref[...]
    o_ref[...] = (z * jax.nn.sigmoid(z)).astype(o_ref.dtype)


def pw_conv_silu(x2d, w, b, tm=512):
    rows, cin = x2d.shape
    cout = w.shape[1]
    tm = min(tm, _round_up(rows, 8))
    rows_p = _round_up(rows, tm)
    if rows_p != rows:
        x2d = jnp.pad(x2d, ((0, rows_p - rows), (0, 0)))
    ws = 2 * (tm * cin * 2 + cin * cout * 2 + cout * 4 + tm * cout * 2)
    out = pl.pallas_call(
        _pw_conv_silu_kernel,
        out_shape=jax.ShapeDtypeStruct((rows_p, cout), jnp.bfloat16),
        grid_spec=pltpu.PrefetchScalarGridSpec(
            num_scalar_prefetch=0,
            grid=(rows_p // tm,),
            in_specs=[
                pl.BlockSpec((tm, cin), lambda i: (i, 0)),
                pl.BlockSpec((cin, cout), lambda i: (0, 0)),
                pl.BlockSpec((1, cout), lambda i: (0, 0)),
            ],
            out_specs=pl.BlockSpec((tm, cout), lambda i: (i, 0)),
        ),
        compiler_params=pltpu.CompilerParams(
            dimension_semantics=("parallel",),
            vmem_limit_bytes=_vmem_limit(ws)),
    )(x2d, w, b)
    return out if rows_p == rows else out[:rows]


# ---------------------------------------------------------------------------
# Kernel 2: fused maxpool(5,9,13) + channel concat + cv2 (1x1 conv + BN + SiLU)
# ---------------------------------------------------------------------------
def _spp_pool_cv2_kernel(y_ref, w2_ref, b2_ref, wbias_ref, o_ref,
                         pad_ref, acc_ref, *, H, W):
    # y_ref    : (H*W, C)   bf16  cv1 output of one image, flat row = h*W + w
    # w2_ref   : (4*C, C2)  bf16  cv2 weight (BN folded), branches stacked on rows
    # b2_ref   : (1, C2)    f32   cv2 bias
    # wbias_ref: (H*W, 4)   f32   0 / -inf additive masks for shifts (-2,-1,1,2)
    # o_ref    : (H*W, C2)  f32   SPP output of one image
    # pad_ref  : (H*W+4W, C) f32  scratch with a 2-image-row -inf halo each side
    # acc_ref  : (H*W, C2)  f32   cv2 accumulator
    HW = H * W
    C = y_ref.shape[-1]
    OFF = 2 * W
    NEG = jnp.float32(-jnp.inf)

    y_bf = y_ref[...]

    # cv2 contribution of the identity branch (branch 0).
    acc_ref[...] = jnp.dot(y_bf, w2_ref[0:C, :],
                           preferred_element_type=jnp.float32)

    # -inf halo (2 image rows above/below in the flat layout) + interior.
    pad_ref[...] = jnp.full(pad_ref.shape, NEG, jnp.float32)
    pad_ref[OFF:OFF + HW, :] = y_bf.astype(jnp.float32)

    # Cascade of stride-1 5x5 max pools: 5, then 5.5 = 9, then 5.9 = 13.
    for stage in range(3):
        # vertical (H) axis: shifts by whole image rows; halo handles borders.
        m = pad_ref[OFF:OFF + HW, :]
        for dy in (-2, -1, 1, 2):
            m = jnp.maximum(m, pad_ref[OFF + dy * W:OFF + dy * W + HW, :])
        # horizontal (W) axis: shifts by +-1/+-2 columns; the additive -inf
        # masks kill values that would wrap across an image-row boundary.
        pad_ref[OFF:OFF + HW, :] = m
        r = m
        for j, dx in enumerate((-2, -1, 1, 2)):
            shifted = pad_ref[OFF + dx:OFF + dx + HW, :]
            r = jnp.maximum(r, shifted + wbias_ref[:, j:j + 1])
        # feed the next cascade stage and accumulate this branch into cv2
        # (the 4C concat is never materialized in HBM).
        pad_ref[OFF:OFF + HW, :] = r
        acc_ref[...] += jnp.dot(r.astype(jnp.bfloat16),
                                w2_ref[(stage + 1) * C:(stage + 2) * C, :],
                                preferred_element_type=jnp.float32)

    z = acc_ref[...] + b2_ref[...]
    o_ref[...] = (z * jax.nn.sigmoid(z)).astype(o_ref.dtype)


def spp_pool_cv2(y3d, w2, b2, wbias, H, W):
    # TODO(synk): for very large images (and v7x's 2 TensorCores) tile the
    # spatial axis into H-bands with a 6-row halo instead of one image per step.
    N, HW, C = y3d.shape
    c2 = w2.shape[1]
    ws = (2 * (HW * C * 2 + 4 * C * c2 * 2 + c2 * 4 + HW * 4 * 4 + HW * c2 * 4)
          + (HW + 4 * W) * C * 4 + HW * c2 * 4)
    return pl.pallas_call(
        functools.partial(_spp_pool_cv2_kernel, H=H, W=W),
        out_shape=jax.ShapeDtypeStruct((N, HW, c2), jnp.float32),
        grid_spec=pltpu.PrefetchScalarGridSpec(
            num_scalar_prefetch=0,
            grid=(N,),
            in_specs=[
                pl.BlockSpec((None, HW, C), lambda n: (n, 0, 0)),
                pl.BlockSpec((4 * C, c2), lambda n: (0, 0)),
                pl.BlockSpec((1, c2), lambda n: (0, 0)),
                pl.BlockSpec((HW, 4), lambda n: (0, 0)),
            ],
            out_specs=pl.BlockSpec((None, HW, c2), lambda n: (n, 0, 0)),
            scratch_shapes=[
                pltpu.VMEM((HW + 4 * W, C), jnp.float32),
                pltpu.VMEM((HW, c2), jnp.float32),
            ],
        ),
        compiler_params=pltpu.CompilerParams(
            dimension_semantics=("parallel",),
            vmem_limit_bytes=_vmem_limit(ws)),
    )(y3d, w2, b2, wbias)


# ---------------------------------------------------------------------------
# Parameter setup (deterministic) + BN folding (glue, plain JAX)
# ---------------------------------------------------------------------------
def fold_bn(w, gamma, beta, mean, var, eps=1e-5):
    # w: (cin, cout) matmul form of a 1x1 conv (PyTorch weight is (cout,cin,1,1))
    scale = gamma / jnp.sqrt(var + eps)
    w_eff = (w * scale[None, :]).astype(jnp.float32)
    b_eff = (beta - mean * scale).astype(jnp.float32)
    return w_eff, b_eff


def init_params(key, c1, c2):
    c_ = c1 // 2
    ks = jax.random.split(key, 10)
    w1 = jax.random.normal(ks[0], (c1, c_), jnp.float32) * 0.2
    g1 = jax.random.uniform(ks[1], (c_,), jnp.float32, 0.5, 1.5)
    be1 = jax.random.normal(ks[2], (c_,), jnp.float32) * 0.1
    m1 = jax.random.normal(ks[3], (c_,), jnp.float32) * 0.1
    v1 = jax.random.uniform(ks[4], (c_,), jnp.float32, 0.5, 1.5)

    w2 = jax.random.normal(ks[5], (c_ * (len(POOL_KS) + 1), c2), jnp.float32) * 0.2
    g2 = jax.random.uniform(ks[6], (c2,), jnp.float32, 0.5, 1.5)
    be2 = jax.random.normal(ks[7], (c2,), jnp.float32) * 0.1
    m2 = jax.random.normal(ks[8], (c2,), jnp.float32) * 0.1
    v2 = jax.random.uniform(ks[9], (c2,), jnp.float32, 0.5, 1.5)

    w1f, b1f = fold_bn(w1, g1, be1, m1, v1)
    w2f, b2f = fold_bn(w2, g2, be2, m2, v2)
    return {"w1": w1f, "b1": b1f, "w2": w2f, "b2": b2f}


# ---------------------------------------------------------------------------
# SPP forward (wrapper)
# ---------------------------------------------------------------------------
def spp_forward(x_nchw, params, *, tm=512):
    N, c1, H, W = x_nchw.shape
    w1, b1 = params["w1"], params["b1"]
    w2, b2 = params["w2"], params["b2"]
    c_, c2 = w1.shape[1], w2.shape[1]
    n_parts = len(POOL_KS) + 1

    # Pad channel dims to lane multiples so every kernel store is lane-dense;
    # padded channels carry exact zeros and are sliced off at the end.
    c_p = _round_up(c_, LANE)
    c2p = _round_up(c2, LANE)
    w1p = jnp.pad(w1, ((0, 0), (0, c_p - c_))).astype(jnp.bfloat16)
    b1p = jnp.pad(b1, (0, c_p - c_)).reshape(1, c_p).astype(jnp.float32)
    w2p = jnp.pad(w2.reshape(n_parts, c_, c2),
                  ((0, 0), (0, c_p - c_), (0, c2p - c2)))
    w2p = w2p.reshape(n_parts * c_p, c2p).astype(jnp.bfloat16)
    b2p = jnp.pad(b2, (0, c2p - c2)).reshape(1, c2p).astype(jnp.float32)

    # 0 / -inf additive masks for the in-kernel horizontal (W-axis) shifts.
    col = jnp.arange(H * W, dtype=jnp.int32) % W
    wbias = jnp.stack(
        [jnp.where((col + s >= 0) & (col + s < W), 0.0, -jnp.inf)
         for s in (-2, -1, 1, 2)], axis=1).astype(jnp.float32)

    x = jnp.transpose(x_nchw, (0, 2, 3, 1)).astype(jnp.bfloat16)  # NHWC bf16
    # cv1: 1x1 conv + BN + SiLU
    y2d = pw_conv_silu(x.reshape(N * H * W, c1), w1p, b1p, tm=tm)
    y3d = y2d.reshape(N, H * W, c_p)
    # maxpool(5,9,13) + concat + cv2 (+ BN + SiLU), fused in one kernel
    out3d = spp_pool_cv2(y3d, w2p, b2p, wbias, H, W)      # (N, HW, c2p) f32
    out = out3d[:, :, :c2].reshape(N, H, W, c2)
    return jnp.transpose(out, (0, 3, 1, 2))                # -> NCHW


# ---------------------------------------------------------------------------
# Pure-JAX reference (same precision path: bf16 inputs, f32 accumulation)
# ---------------------------------------------------------------------------
def spp_reference(x_nchw, params):
    x = jnp.transpose(x_nchw, (0, 2, 3, 1)).astype(jnp.bfloat16)

    def pw(v, w, b):
        z = jnp.einsum("nhwc,cd->nhwd", v, w.astype(jnp.bfloat16),
                       preferred_element_type=jnp.float32)
        z = z + b.reshape(1, 1, 1, -1)
        return z * jax.nn.sigmoid(z)

    y = pw(x, params["w1"], params["b1"]).astype(jnp.bfloat16)
    y32 = y.astype(jnp.float32)
    pools = [y32]
    for k in POOL_KS:
        p = k // 2
        pools.append(lax.reduce_window(
            y32, -jnp.inf, lax.max,
            (1, k, k, 1), (1, 1, 1, 1),
            [(0, 0), (p, p), (p, p), (0, 0)]))
    cat = jnp.concatenate(pools, axis=-1).astype(jnp.bfloat16)
    out = pw(cat, params["w2"], params["b2"])
    return jnp.transpose(out, (0, 3, 1, 2))


if __name__ == "__main__":
    N, c1, H, W = 2, 8, 16, 16
    c2 = 8

    key = jax.random.PRNGKey(0)
    kp, kx = jax.random.split(key)
    params = init_params(kp, c1, c2)
    x = jax.random.normal(kx, (N, c1, H, W), jnp.float32)

    out = jax.jit(spp_forward)(x, params)
    out = jax.block_until_ready(out)

    ref = spp_reference(x, params)
    assert out.shape == (N, c2, H, W), out.shape
    max_err = float(jnp.max(jnp.abs(out - ref)))
    assert jnp.allclose(out, ref, atol=3e-2, rtol=3e-2), max_err

    print("KERNEL_OK")
</pallas_src>

<mosaic_0001>
module attributes {stable_mosaic.version = 11 : i64} {
  func.func @_pw_conv_silu_kernel(%arg0: i32, %arg1: memref<512x8xbf16, #tpu.memory_space<vmem>>, %arg2: memref<8x128xbf16, #tpu.memory_space<vmem>>, %arg3: memref<1x128xf32, #tpu.memory_space<vmem>>, %arg4: memref<512x128xbf16, #tpu.memory_space<vmem>>) attributes {dimension_semantics = [#tpu.dimension_semantics<parallel>], iteration_bounds = array<i64: 1>, scalar_prefetch = 0 : i64, scratch_operands = 0 : i64, tpu.core_type = #tpu.core_type<tc>, window_params = [{transform_indices = @transform_0, window_bounds = array<i64: 512, 8>}, {pipeline_mode = #tpu.pipeline_mode<synchronous>, transform_indices = @transform_1, window_bounds = array<i64: 8, 128>}, {pipeline_mode = #tpu.pipeline_mode<synchronous>, transform_indices = @transform_2, window_bounds = array<i64: 1, 128>}, {transform_indices = @transform_3, window_bounds = array<i64: 512, 128>}]} {
    %c0 = arith.constant 0 : index
    %c0_0 = arith.constant 0 : index
    %0 = vector.load %arg1[%c0, %c0_0] : memref<512x8xbf16, #tpu.memory_space<vmem>>, vector<512x8xbf16>
    %c0_1 = arith.constant 0 : index
    %c0_2 = arith.constant 0 : index
    %1 = vector.load %arg2[%c0_1, %c0_2] : memref<8x128xbf16, #tpu.memory_space<vmem>>, vector<8x128xbf16>
    %cst = arith.constant dense<0.000000e+00> : vector<512x128xf32>
    %2 = tpu.matmul %0, %1, %cst {dimension_numbers = #tpu.dot_dimension_numbers<[1], [0], [0], [1], [0, 0, 1, 1], [], []>} : vector<512x8xbf16>, vector<8x128xbf16>, vector<512x128xf32> -> vector<512x128xf32>
    %c0_3 = arith.constant 0 : index
    %c0_4 = arith.constant 0 : index
    %3 = vector.load %arg3[%c0_3, %c0_4] : memref<1x128xf32, #tpu.memory_space<vmem>>, vector<1x128xf32>
    %4 = vector.broadcast %3 : vector<1x128xf32> to vector<512x128xf32>
    %5 = arith.addf %2, %4 : vector<512x128xf32>
    %6 = arith.negf %5 : vector<512x128xf32>
    %7 = math.exp %6 : vector<512x128xf32>
    %cst_5 = arith.constant 1.000000e+00 : f32
    %8 = vector.broadcast %cst_5 : f32 to vector<512x128xf32>
    %9 = arith.addf %8, %7 : vector<512x128xf32>
    %10 = arith.divf %8, %9 : vector<512x128xf32>
    %11 = arith.mulf %5, %10 : vector<512x128xf32>
    %12 = arith.truncf %11 : vector<512x128xf32> to vector<512x128xbf16>
    %c0_6 = arith.constant 0 : index
    %c0_7 = arith.constant 0 : index
    %13 = vector.load %arg4[%c0_6, %c0_7] : memref<512x128xbf16, #tpu.memory_space<vmem>>, vector<512x128xbf16>
    tpu.vector_store %arg4[%c0_6, %c0_7], %12 {strides = array<i32>} : memref<512x128xbf16, #tpu.memory_space<vmem>>, vector<512x128xbf16>,
    return
  }
  func.func @transform_0(%arg0: i32) -> (i32, i32) {
    %c0_i32 = arith.constant 0 : i32
    %c0_i32_0 = arith.constant 0 : i32
    return %arg0, %c0_i32 : i32, i32
  }
  func.func @transform_1(%arg0: i32) -> (i32, i32) {
    %c0_i32 = arith.constant 0 : i32
    %c0_i32_0 = arith.constant 0 : i32
    %c0_i32_1 = arith.constant 0 : i32
    return %c0_i32, %c0_i32_0 : i32, i32
  }
  func.func @transform_2(%arg0: i32) -> (i32, i32) {
    %c0_i32 = arith.constant 0 : i32
    %c0_i32_0 = arith.constant 0 : i32
    %c0_i32_1 = arith.constant 0 : i32
    return %c0_i32, %c0_i32_0 : i32, i32
  }
  func.func @transform_3(%arg0: i32) -> (i32, i32) {
    %c0_i32 = arith.constant 0 : i32
    %c0_i32_0 = arith.constant 0 : i32
    return %arg0, %c0_i32 : i32, i32
  }
}

module attributes {stable_mosaic.version = 11 : i64} {
  func.func @_spp_pool_cv2_kernel(%arg0: i32, %arg1: memref<1x256x128xbf16, #tpu.memory_space<vmem>>, %arg2: memref<512x128xbf16, #tpu.memory_space<vmem>>, %arg3: memref<1x128xf32, #tpu.memory_space<vmem>>, %arg4: memref<256x4xf32, #tpu.memory_space<vmem>>, %arg5: memref<1x256x128xf32, #tpu.memory_space<vmem>>, %arg6: memref<320x128xf32, #tpu.memory_space<vmem>>, %arg7: memref<256x128xf32, #tpu.memory_space<vmem>>) attributes {dimension_semantics = [#tpu.dimension_semantics<parallel>], iteration_bounds = array<i64: 2>, scalar_prefetch = 0 : i64, scratch_operands = 2 : i64, tpu.core_type = #tpu.core_type<tc>, window_params = [{transform_indices = @transform_0, window_bounds = array<i64: 1, 256, 128>}, {pipeline_mode = #tpu.pipeline_mode<synchronous>, transform_indices = @transform_1, window_bounds = array<i64: 512, 128>}, {pipeline_mode = #tpu.pipeline_mode<synchronous>, transform_indices = @transform_2, window_bounds = array<i64: 1, 128>}, {pipeline_mode = #tpu.pipeline_mode<synchronous>, transform_indices = @transform_3, window_bounds = array<i64: 256, 4>}, {transform_indices = @transform_4, window_bounds = array<i64: 1, 256, 128>}]} {
    %c0 = arith.constant 0 : index
    %c0_0 = arith.constant 0 : index
    %c0_1 = arith.constant 0 : index
    %0 = vector.load %arg1[%c0, %c0_0, %c0_1] : memref<1x256x128xbf16, #tpu.memory_space<vmem>>, vector<1x256x128xbf16>
    %1 = vector.shape_cast %0 : vector<1x256x128xbf16> to vector<256x128xbf16>
    %c0_2 = arith.constant 0 : index
    %c0_3 = arith.constant 0 : index
    %2 = vector.load %arg2[%c0_2, %c0_3] : memref<512x128xbf16, #tpu.memory_space<vmem>>, vector<128x128xbf16>
    %cst = arith.constant dense<0.000000e+00> : vector<256x128xf32>
    %3 = tpu.matmul %1, %2, %cst {dimension_numbers = #tpu.dot_dimension_numbers<[1], [0], [0], [1], [0, 0, 1, 1], [], []>} : vector<256x128xbf16>, vector<128x128xbf16>, vector<256x128xf32> -> vector<256x128xf32>
    %c0_4 = arith.constant 0 : index
    %c0_5 = arith.constant 0 : index
    %4 = vector.load %arg7[%c0_4, %c0_5] : memref<256x128xf32, #tpu.memory_space<vmem>>, vector<256x128xf32>
    tpu.vector_store %arg7[%c0_4, %c0_5], %3 {strides = array<i32>} : memref<256x128xf32, #tpu.memory_space<vmem>>, vector<256x128xf32>,
    %cst_6 = arith.constant 0xFF800000 : f32
    %5 = vector.broadcast %cst_6 : f32 to vector<320x128xf32>
    %c0_7 = arith.constant 0 : index
    %c0_8 = arith.constant 0 : index
    %6 = vector.load %arg6[%c0_7, %c0_8] : memref<320x128xf32, #tpu.memory_space<vmem>>, vector<320x128xf32>
    tpu.vector_store %arg6[%c0_7, %c0_8], %5 {strides = array<i32>} : memref<320x128xf32, #tpu.memory_space<vmem>>, vector<320x128xf32>,
    %7 = arith.extf %1 : vector<256x128xbf16> to vector<256x128xf32>
    %c32 = arith.constant 32 : index
    %c0_9 = arith.constant 0 : index
    %8 = vector.load %arg6[%c32, %c0_9] : memref<320x128xf32, #tpu.memory_space<vmem>>, vector<256x128xf32>
    tpu.vector_store %arg6[%c32, %c0_9], %7 {strides = array<i32>} : memref<320x128xf32, #tpu.memory_space<vmem>>, vector<256x128xf32>,
    %c32_10 = arith.constant 32 : index
    %c0_11 = arith.constant 0 : index
    %9 = vector.load %arg6[%c32_10, %c0_11] : memref<320x128xf32, #tpu.memory_space<vmem>>, vector<256x128xf32>
    %c0_12 = arith.constant 0 : index
    %c0_13 = arith.constant 0 : index
    %10 = vector.load %arg6[%c0_12, %c0_13] : memref<320x128xf32, #tpu.memory_space<vmem>>, vector<256x128xf32>
    %11 = arith.maximumf %9, %10 : vector<256x128xf32>
    %c16 = arith.constant 16 : index
    %c0_14 = arith.constant 0 : index
    %12 = vector.load %arg6[%c16, %c0_14] : memref<320x128xf32, #tpu.memory_space<vmem>>, vector<256x128xf32>
    %13 = arith.maximumf %11, %12 : vector<256x128xf32>
    %c48 = arith.constant 48 : index
    %c0_15 = arith.constant 0 : index
    %14 = vector.load %arg6[%c48, %c0_15] : memref<320x128xf32, #tpu.memory_space<vmem>>, vector<256x128xf32>
    %15 = arith.maximumf %13, %14 : vector<256x128xf32>
    %c64 = arith.constant 64 : index
    %c0_16 = arith.constant 0 : index
    %16 = vector.load %arg6[%c64, %c0_16] : memref<320x128xf32, #tpu.memory_space<vmem>>, vector<256x128xf32>
    %17 = arith.maximumf %15, %16 : vector<256x128xf32>
    %c32_17 = arith.constant 32 : index
    %c0_18 = arith.constant 0 : index
    %18 = vector.load %arg6[%c32_17, %c0_18] : memref<320x128xf32, #tpu.memory_space<vmem>>, vector<256x128xf32>
    tpu.vector_store %arg6[%c32_17, %c0_18], %17 {strides = array<i32>} : memref<320x128xf32, #tpu.memory_space<vmem>>, vector<256x128xf32>,
    %c30 = arith.constant 30 : index
    %c0_19 = arith.constant 0 : index
    %19 = vector.load %arg6[%c30, %c0_19] : memref<320x128xf32, #tpu.memory_space<vmem>>, vector<256x128xf32>
    %c0_20 = arith.constant 0 : index
    %c0_21 = arith.constant 0 : index
    %20 = vector.load %arg4[%c0_20, %c0_21] : memref<256x4xf32, #tpu.memory_space<vmem>>, vector<256x1xf32>
    %21 = vector.broadcast %20 : vector<256x1xf32> to vector<256x128xf32>
    %22 = arith.addf %19, %21 : vector<256x128xf32>
    %23 = arith.maximumf %17, %22 : vector<256x128xf32>
    %c31 = arith.constant 31 : index
    %c0_22 = arith.constant 0 : index
    %24 = vector.load %arg6[%c31, %c0_22] : memref<320x128xf32, #tpu.memory_space<vmem>>, vector<256x128xf32>
    %c0_23 = arith.constant 0 : index
    %c1 = arith.constant 1 : index
    %25 = vector.load %arg4[%c0_23, %c1] : memref<256x4xf32, #tpu.memory_space<vmem>>, vector<256x1xf32>
    %26 = vector.broadcast %25 : vector<256x1xf32> to vector<256x128xf32>
    %27 = arith.addf %24, %26 : vector<256x128xf32>
    %28 = arith.maximumf %23, %27 : vector<256x128xf32>
    %c33 = arith.constant 33 : index
    %c0_24 = arith.constant 0 : index
    %29 = vector.load %arg6[%c33, %c0_24] : memref<320x128xf32, #tpu.memory_space<vmem>>, vector<256x128xf32>
    %c0_25 = arith.constant 0 : index
    %c2 = arith.constant 2 : index
    %30 = vector.load %arg4[%c0_25, %c2] : memref<256x4xf32, #tpu.memory_space<vmem>>, vector<256x1xf32>
    %31 = vector.broadcast %30 : vector<256x1xf32> to vector<256x128xf32>
    %32 = arith.addf %29, %31 : vector<256x128xf32>
    %33 = arith.maximumf %28, %32 : vector<256x128xf32>
    %c34 = arith.constant 34 : index
    %c0_26 = arith.constant 0 : index
    %34 = vector.load %arg6[%c34, %c0_26] : memref<320x128xf32, #tpu.memory_space<vmem>>, vector<256x128xf32>
    %c0_27 = arith.constant 0 : index
    %c3 = arith.constant 3 : index
    %35 = vector.load %arg4[%c0_27, %c3] : memref<256x4xf32, #tpu.memory_space<vmem>>, vector<256x1xf32>
    %36 = vector.broadcast %35 : vector<256x1xf32> to vector<256x128xf32>
    %37 = arith.addf %34, %36 : vector<256x128xf32>
    %38 = arith.maximumf %33, %37 : vector<256x128xf32>
    %c32_28 = arith.constant 32 : index
    %c0_29 = arith.constant 0 : index
    %39 = vector.load %arg6[%c32_28, %c0_29] : memref<320x128xf32, #tpu.memory_space<vmem>>, vector<256x128xf32>
    tpu.vector_store %arg6[%c32_28, %c0_29], %38 {strides = array<i32>} : memref<320x128xf32, #tpu.memory_space<vmem>>, vector<256x128xf32>,
    %c0_30 = arith.constant 0 : index
    %c0_31 = arith.constant 0 : index
    %40 = vector.load %arg7[%c0_30, %c0_31] : memref<256x128xf32, #tpu.memory_space<vmem>>, vector<256x128xf32>
    %41 = arith.truncf %38 : vector<256x128xf32> to vector<256x128xbf16>
    %c128 = arith.constant 128 : index
    %c0_32 = arith.constant 0 : index
    %42 = vector.load %arg2[%c128, %c0_32] : memref<512x128xbf16, #tpu.memory_space<vmem>>, vector<128x128xbf16>
    %cst_33 = arith.constant dense<0.000000e+00> : vector<256x128xf32>
    %43 = tpu.matmul %41, %42, %cst_33 {dimension_numbers = #tpu.dot_dimension_numbers<[1], [0], [0], [1], [0, 0, 1, 1], [], []>} : vector<256x128xbf16>, vector<128x128xbf16>, vector<256x128xf32> -> vector<256x128xf32>
    %44 = arith.addf %40, %43 : vector<256x128xf32>
    %c0_34 = arith.constant 0 : index
    %c0_35 = arith.constant 0 : index
    %45 = vector.load %arg7[%c0_34, %c0_35] : memref<256x128xf32, #tpu.memory_space<vmem>>, vector<256x128xf32>
    tpu.vector_store %arg7[%c0_34, %c0_35], %44 {strides = array<i32>} : memref<256x128xf32, #tpu.memory_space<vmem>>, vector<256x128xf32>,
    %c32_36 = arith.constant 32 : index
    %c0_37 = arith.constant 0 : index
    %46 = vector.load %arg6[%c32_36, %c0_37] : memref<320x128xf32, #tpu.memory_space<vmem>>, vector<256x128xf32>
    %c0_38 = arith.constant 0 : index
    %c0_39 = arith.constant 0 : index
    %47 = vector.load %arg6[%c0_38, %c0_39] : memref<320x128xf32, #tpu.memory_space<vmem>>, vector<256x128xf32>
    %48 = arith.maximumf %46, %47 : vector<256x128xf32>
    %c16_40 = arith.constant 16 : index
    %c0_41 = arith.constant 0 : index
    %49 = vector.load %arg6[%c16_40, %c0_41] : memref<320x128xf32, #tpu.memory_space<vmem>>, vector<256x128xf32>
    %50 = arith.maximumf %48, %49 : vector<256x128xf32>
    %c48_42 = arith.constant 48 : index
    %c0_43 = arith.constant 0 : index
    %51 = vector.load %arg6[%c48_42, %c0_43] : memref<320x128xf32, #tpu.memory_space<vmem>>, vector<256x128xf32>
    %52 = arith.maximumf %50, %51 : vector<256x128xf32>
    %c64_44 = arith.constant 64 : index
    %c0_45 = arith.constant 0 : index
    %53 = vector.load %arg6[%c64_44, %c0_45] : memref<320x128xf32, #tpu.memory_space<vmem>>, vector<256x128xf32>
    %54 = arith.maximumf %52, %53 : vector<256x128xf32>
    %c32_46 = arith.constant 32 : index
    %c0_47 = arith.constant 0 : index
    %55 = vector.load %arg6[%c32_46, %c0_47] : memref<320x128xf32, #tpu.memory_space<vmem>>, vector<256x128xf32>
    tpu.vector_store %arg6[%c32_46, %c0_47], %54 {strides = array<i32>} : memref<320x128xf32, #tpu.memory_space<vmem>>, vector<256x128xf32>,
    %c30_48 = arith.constant 30 : index
    %c0_49 = arith.constant 0 : index
    %56 = vector.load %arg6[%c30_48, %c0_49] : memref<320x128xf32, #tpu.memory_space<vmem>>, vector<256x128xf32>
    %c0_50 = arith.constant 0 : index
    %c0_51 = arith.constant 0 : index
    %57 = vector.load %arg4[%c0_50, %c0_51] : memref<256x4xf32, #tpu.memory_space<vmem>>, vector<256x1xf32>
    %58 = vector.broadcast %57 : vector<256x1xf32> to vector<256x128xf32>
    %59 = arith.addf %56, %58 : vector<256x128xf32>
    %60 = arith.maximumf %54, %59 : vector<256x128xf32>
    %c31_52 = arith.constant 31 : index
    %c0_53 = arith.constant 0 : index
    %61 = vector.load %arg6[%c31_52, %c0_53] : memref<320x128xf32, #tpu.memory_space<vmem>>, vector<256x128xf32>
    %c0_54 = arith.constant 0 : index
    %c1_55 = arith.constant 1 : index
    %62 = vector.load %arg4[%c0_54, %c1_55] : memref<256x4xf32, #tpu.memory_space<vmem>>, vector<256x1xf32>
    %63 = vector.broadcast %62 : vector<256x1xf32> to vector<256x128xf32>
    %64 = arith.addf %61, %63 : vector<256x128xf32>
    %65 = arith.maximumf %60, %64 : vector<256x128xf32>
    %c33_56 = arith.constant 33 : index
    %c0_57 = arith.constant 0 : index
    %66 = vector.load %arg6[%c33_56, %c0_57] : memref<320x128xf32, #tpu.memory_space<vmem>>, vector<256x128xf32>
    %c0_58 = arith.constant 0 : index
    %c2_59 = arith.constant 2 : index
    %67 = vector.load %arg4[%c0_58, %c2_59] : memref<256x4xf32, #tpu.memory_space<vmem>>, vector<256x1xf32>
    %68 = vector.broadcast %67 : vector<256x1xf32> to vector<256x128xf32>
    %69 = arith.addf %66, %68 : vector<256x128xf32>
    %70 = arith.maximumf %65, %69 : vector<256x128xf32>
    %c34_60 = arith.constant 34 : index
    %c0_61 = arith.constant 0 : index
    %71 = vector.load %arg6[%c34_60, %c0_61] : memref<320x128xf32, #tpu.memory_space<vmem>>, vector<256x128xf32>
    %c0_62 = arith.constant 0 : index
    %c3_63 = arith.constant 3 : index
    %72 = vector.load %arg4[%c0_62, %c3_63] : memref<256x4xf32, #tpu.memory_space<vmem>>, vector<256x1xf32>
    %73 = vector.broadcast %72 : vector<256x1xf32> to vector<256x128xf32>
    %74 = arith.addf %71, %73 : vector<256x128xf32>
    %75 = arith.maximumf %70, %74 : vector<256x128xf32>
    %c32_64 = arith.constant 32 : index
    %c0_65 = arith.constant 0 : index
    %76 = vector.load %arg6[%c32_64, %c0_65] : memref<320x128xf32, #tpu.memory_space<vmem>>, vector<256x128xf32>
    tpu.vector_store %arg6[%c32_64, %c0_65], %75 {strides = array<i32>} : memref<320x128xf32, #tpu.memory_space<vmem>>, vector<256x128xf32>,
    %c0_66 = arith.constant 0 : index
    %c0_67 = arith.constant 0 : index
    %77 = vector.load %arg7[%c0_66, %c0_67] : memref<256x128xf32, #tpu.memory_space<vmem>>, vector<256x128xf32>
    %78 = arith.truncf %75 : vector<256x128xf32> to vector<256x128xbf16>
    %c256 = arith.constant 256 : index
    %c0_68 = arith.constant 0 : index
    %79 = vector.load %arg2[%c256, %c0_68] : memref<512x128xbf16, #tpu.memory_space<vmem>>, vector<128x128xbf16>
    %cst_69 = arith.constant dense<0.000000e+00> : vector<256x128xf32>
    %80 = tpu.matmul %78, %79, %cst_69 {dimension_numbers = #tpu.dot_dimension_numbers<[1], [0], [0], [1], [0, 0, 1, 1], [], []>} : vector<256x128xbf16>, vector<128x128xbf16>, vector<256x128xf32> -> vector<256x128xf32>
    %81 = arith.addf %77, %80 : vector<256x128xf32>
    %c0_70 = arith.constant 0 : index
    %c0_71 = arith.constant 0 : index
    %82 = vector.load %arg7[%c0_70, %c0_71] : memref<256x128xf32, #tpu.memory_space<vmem>>, vector<256x128xf32>
    tpu.vector_store %arg7[%c0_70, %c0_71], %81 {strides = array<i32>} : memref<256x128xf32, #tpu.memory_space<vmem>>, vector<256x128xf32>,
    %c32_72 = arith.constant 32 : index
    %c0_73 = arith.constant 0 : index
    %83 = vector.load %arg6[%c32_72, %c0_73] : memref<320x128xf32, #tpu.memory_space<vmem>>, vector<256x128xf32>
    %c0_74 = arith.constant 0 : index
    %c0_75 = arith.constant 0 : index
    %84 = vector.load %arg6[%c0_74, %c0_75] : memref<320x128xf32, #tpu.memory_space<vmem>>, vector<256x128xf32>
    %85 = arith.maximumf %83, %84 : vector<256x128xf32>
    %c16_76 = arith.constant 16 : index
    %c0_77 = arith.constant 0 : index
    %86 = vector.load %arg6[%c16_76, %c0_77] : memref<320x128xf32, #tpu.memory_space<vmem>>, vector<256x128xf32>
    %87 = arith.maximumf %85, %86 : vector<256x128xf32>
    %c48_78 = arith.constant 48 : index
    %c0_79 = arith.constant 0 : index
    %88 = vector.load %arg6[%c48_78, %c0_79] : memref<320x128xf32, #tpu.memory_space<vmem>>, vector<256x128xf32>
    %89 = arith.maximumf %87, %88 : vector<256x128xf32>
    %c64_80 = arith.constant 64 : index
    %c0_81 = arith.constant 0 : index
    %90 = vector.load %arg6[%c64_80, %c0_81] : memref<320x128xf32, #tpu.memory_space<vmem>>, vector<256x128xf32>
    %91 = arith.maximumf %89, %90 : vector<256x128xf32>
    %c32_82 = arith.constant 32 : index
    %c0_83 = arith.constant 0 : index
    %92 = vector.load %arg6[%c32_82, %c0_83] : memref<320x128xf32, #tpu.memory_space<vmem>>, vector<256x128xf32>
    tpu.vector_store %arg6[%c32_82, %c0_83], %91 {strides = array<i32>} : memref<320x128xf32, #tpu.memory_space<vmem>>, vector<256x128xf32>,
    %c30_84 = arith.constant 30 : index
    %c0_85 = arith.constant 0 : index
    %93 = vector.load %arg6[%c30_84, %c0_85] : memref<320x128xf32, #tpu.memory_space<vmem>>, vector<256x128xf32>
    %c0_86 = arith.constant 0 : index
    %c0_87 = arith.constant 0 : index
    %94 = vector.load %arg4[%c0_86, %c0_87] : memref<256x4xf32, #tpu.memory_space<vmem>>, vector<256x1xf32>
    %95 = vector.broadcast %94 : vector<256x1xf32> to vector<256x128xf32>
    %96 = arith.addf %93, %95 : vector<256x128xf32>
    %97 = arith.maximumf %91, %96 : vector<256x128xf32>
    %c31_88 = arith.constant 31 : index
    %c0_89 = arith.constant 0 : index
    %98 = vector.load %arg6[%c31_88, %c0_89] : memref<320x128xf32, #tpu.memory_space<vmem>>, vector<256x128xf32>
    %c0_90 = arith.constant 0 : index
    %c1_91 = arith.constant 1 : index
    %99 = vector.load %arg4[%c0_90, %c1_91] : memref<256x4xf32, #tpu.memory_space<vmem>>, vector<256x1xf32>
    %100 = vector.broadcast %99 : vector<256x1xf32> to vector<256x128xf32>
    %101 = arith.addf %98, %100 : vector<256x128xf32>
    %102 = arith.maximumf %97, %101 : vector<256x128xf32>
    %c33_92 = arith.constant 33 : index
    %c0_93 = arith.constant 0 : index
    %103 = vector.load %arg6[%c33_92, %c0_93] : memref<320x128xf32, #tpu.memory_space<vmem>>, vector<256x128xf32>
    %c0_94 = arith.constant 0 : index
    %c2_95 = arith.constant 2 : index
    %104 = vector.load %arg4[%c0_94, %c2_95] : memref<256x4xf32, #tpu.memory_space<vmem>>, vector<256x1xf32>
    %105 = vector.broadcast %104 : vector<256x1xf32> to vector<256x128xf32>
    %106 = arith.addf %103, %105 : vector<256x128xf32>
    %107 = arith.maximumf %102, %106 : vector<256x128xf32>
    %c34_96 = arith.constant 34 : index
    %c0_97 = arith.constant 0 : index
    %108 = vector.load %arg6[%c34_96, %c0_97] : memref<320x128xf32, #tpu.memory_space<vmem>>, vector<256x128xf32>
    %c0_98 = arith.constant 0 : index
    %c3_99 = arith.constant 3 : index
    %109 = vector.load %arg4[%c0_98, %c3_99] : memref<256x4xf32, #tpu.memory_space<vmem>>, vector<256x1xf32>
    %110 = vector.broadcast %109 : vector<256x1xf32> to vector<256x128xf32>
    %111 = arith.addf %108, %110 : vector<256x128xf32>
    %112 = arith.maximumf %107, %111 : vector<256x128xf32>
    %c32_100 = arith.constant 32 : index
    %c0_101 = arith.constant 0 : index
    %113 = vector.load %arg6[%c32_100, %c0_101] : memref<320x128xf32, #tpu.memory_space<vmem>>, vector<256x128xf32>
    tpu.vector_store %arg6[%c32_100, %c0_101], %112 {strides = array<i32>} : memref<320x128xf32, #tpu.memory_space<vmem>>, vector<256x128xf32>,
    %c0_102 = arith.constant 0 : index
    %c0_103 = arith.constant 0 : index
    %114 = vector.load %arg7[%c0_102, %c0_103] : memref<256x128xf32, #tpu.memory_space<vmem>>, vector<256x128xf32>
    %115 = arith.truncf %112 : vector<256x128xf32> to vector<256x128xbf16>
    %c384 = arith.constant 384 : index
    %c0_104 = arith.constant 0 : index
    %116 = vector.load %arg2[%c384, %c0_104] : memref<512x128xbf16, #tpu.memory_space<vmem>>, vector<128x128xbf16>
    %cst_105 = arith.constant dense<0.000000e+00> : vector<256x128xf32>
    %117 = tpu.matmul %115, %116, %cst_105 {dimension_numbers = #tpu.dot_dimension_numbers<[1], [0], [0], [1], [0, 0, 1, 1], [], []>} : vector<256x128xbf16>, vector<128x128xbf16>, vector<256x128xf32> -> vector<256x128xf32>
    %118 = arith.addf %114, %117 : vector<256x128xf32>
    %c0_106 = arith.constant 0 : index
    %c0_107 = arith.constant 0 : index
    %119 = vector.load %arg7[%c0_106, %c0_107] : memref<256x128xf32, #tpu.memory_space<vmem>>, vector<256x128xf32>
    tpu.vector_store %arg7[%c0_106, %c0_107], %118 {strides = array<i32>} : memref<256x128xf32, #tpu.memory_space<vmem>>, vector<256x128xf32>,
    %c0_108 = arith.constant 0 : index
    %c0_109 = arith.constant 0 : index
    %120 = vector.load %arg7[%c0_108, %c0_109] : memref<256x128xf32, #tpu.memory_space<vmem>>, vector<256x128xf32>
    %c0_110 = arith.constant 0 : index
    %c0_111 = arith.constant 0 : index
    %121 = vector.load %arg3[%c0_110, %c0_111] : memref<1x128xf32, #tpu.memory_space<vmem>>, vector<1x128xf32>
    %122 = vector.broadcast %121 : vector<1x128xf32> to vector<256x128xf32>
    %123 = arith.addf %120, %122 : vector<256x128xf32>
    %124 = arith.negf %123 : vector<256x128xf32>
    %125 = math.exp %124 : vector<256x128xf32>
    %cst_112 = arith.constant 1.000000e+00 : f32
    %126 = vector.broadcast %cst_112 : f32 to vector<256x128xf32>
    %127 = arith.addf %126, %125 : vector<256x128xf32>
    %128 = arith.divf %126, %127 : vector<256x128xf32>
    %129 = arith.mulf %123, %128 : vector<256x128xf32>
    %c0_113 = arith.constant 0 : index
    %c0_114 = arith.constant 0 : index
    %c0_115 = arith.constant 0 : index
    %130 = vector.load %arg5[%c0_113, %c0_114, %c0_115] : memref<1x256x128xf32, #tpu.memory_space<vmem>>, vector<1x256x128xf32>
    %131 = vector.shape_cast %130 : vector<1x256x128xf32> to vector<256x128xf32>
    %132 = vector.shape_cast %129 : vector<256x128xf32> to vector<1x256x128xf32>
    tpu.vector_store %arg5[%c0_113, %c0_114, %c0_115], %132 {strides = array<i32>} : memref<1x256x128xf32, #tpu.memory_space<vmem>>, vector<1x256x128xf32>,
    return
  }
  func.func @transform_0(%arg0: i32) -> (i32, i32, i32) {
    %c0_i32 = arith.constant 0 : i32
    %c0_i32_0 = arith.constant 0 : i32
    %c0_i32_1 = arith.constant 0 : i32
    return %arg0, %c0_i32, %c0_i32_0 : i32, i32, i32
  }
  func.func @transform_1(%arg0: i32) -> (i32, i32) {
    %c0_i32 = arith.constant 0 : i32
    %c0_i32_0 = arith.constant 0 : i32
    %c0_i32_1 = arith.constant 0 : i32
    return %c0_i32, %c0_i32_0 : i32, i32
  }
  func.func @transform_2(%arg0: i32) -> (i32, i32) {
    %c0_i32 = arith.constant 0 : i32
    %c0_i32_0 = arith.constant 0 : i32
    %c0_i32_1 = arith.constant 0 : i32
    return %c0_i32, %c0_i32_0 : i32, i32
  }
  func.func @transform_3(%arg0: i32) -> (i32, i32) {
    %c0_i32 = arith.constant 0 : i32
    %c0_i32_0 = arith.constant 0 : i32
    %c0_i32_1 = arith.constant 0 : i32
    return %c0_i32, %c0_i32_0 : i32, i32
  }
  func.func @transform_4(%arg0: i32) -> (i32, i32, i32) {
    %c0_i32 = arith.constant 0 : i32
    %c0_i32_0 = arith.constant 0 : i32
    %c0_i32_1 = arith.constant 0 : i32
    return %arg0, %c0_i32, %c0_i32_0 : i32, i32, i32
  }
}

</mosaic_0001>

<llo_original>
// kernel: spp_forward.2
$region0: #{spp_forward.2}
  #allocation0 [shape = 'u32[]', space=smem, size = 0x4, offset = 0x4, fixed_abs, tag = 'smem constant byte address 0x4 - core index']
  #allocation1 [shape = 'u32[144,128]{1,0:T(1,128)}', space=vmem, size = 0x12000, scoped, tag = 'internal scratch']
  %s0 = inlined_call_operand.vmem [shape: bf16[512,8], index: 0, kind: input, shape index: {}]
  %s1 = inlined_call_operand.vmem [shape: bf16[8,128], index: 1, kind: input, shape index: {}]
  %s2 = inlined_call_operand.vmem [shape: f32[1,128], index: 2, kind: input, shape index: {}]
  %s3 = inlined_call_operand.vmem [shape: bf16[512,128], index: 3, kind: output, shape index: {}]
  %s4 = sld [smem:[#allocation0]]
  $region22: #{spp_forward.2} parent=0
    _
  %s6 = ssub.s32 1, %s4
  %s7 = scalar_select 0, %s6, %s4
  // Predicated region
  $region2: #{spp_forward.2} parent=0 // pred_check
    _
  $region3: #{spp_forward.2} parent=0 // pred_check_branch
    %9 = sbr.rel (0) target = $region5
  $region4: #{spp_forward.2} parent=0 // pred_region
    _
  $region5: #{spp_forward.2} parent=0 // pred_fallthru
    _
  // Predicated region
  $region6: #{spp_forward.2} parent=0 // pred_check
    _
  $region7: #{spp_forward.2} parent=0 // pred_check_branch
    %11 = sbr.rel (0) target = $region9
  $region8: #{spp_forward.2} parent=0 // pred_region
    _
  $region9: #{spp_forward.2} parent=0 // pred_fallthru
    _
  // Predicated region
  $region10: #{spp_forward.2} parent=0 // pred_check
    _
  $region11: #{spp_forward.2} parent=0 // pred_check_branch
    %13 = sbr.rel (0) target = $region13
  $region12: #{spp_forward.2} parent=0 // pred_region
    _
  $region13: #{spp_forward.2} parent=0 // pred_fallthru
    _
  %v15 = vld [vmem:[%s0] sm:$0xf]
  %v16 = vld [vmem:[%s0 + $0x4] sm:$0xf]
  %v17 = vld [vmem:[%s0 + $0x8] sm:$0xf]
  %v18 = vld [vmem:[%s0 + $0xc] sm:$0xf]
  %v19 = vld [vmem:[%s0 + $0x10] sm:$0xf]
  %v20 = vld [vmem:[%s0 + $0x14] sm:$0xf]
  %v21 = vld [vmem:[%s0 + $0x18] sm:$0xf]
  %v22 = vld [vmem:[%s0 + $0x1c] sm:$0xf]
  %v23 = vld [vmem:[%s0 + $0x20] sm:$0xf]
  %v24 = vld [vmem:[%s0 + $0x24] sm:$0xf]
  %v25 = vld [vmem:[%s0 + $0x28] sm:$0xf]
  %v26 = vld [vmem:[%s0 + $0x2c] sm:$0xf]
  %v27 = vld [vmem:[%s0 + $0x30] sm:$0xf]
  %v28 = vld [vmem:[%s0 + $0x34] sm:$0xf]
  %v29 = vld [vmem:[%s0 + $0x38] sm:$0xf]
  %v30 = vld [vmem:[%s0 + $0x3c] sm:$0xf]
  %v31 = vld [vmem:[%s0 + $0x40] sm:$0xf]
  %v32 = vld [vmem:[%s0 + $0x44] sm:$0xf]
  %v33 = vld [vmem:[%s0 + $0x48] sm:$0xf]
  %v34 = vld [vmem:[%s0 + $0x4c] sm:$0xf]
  %v35 = vld [vmem:[%s0 + $0x50] sm:$0xf]
  %v36 = vld [vmem:[%s0 + $0x54] sm:$0xf]
  %v37 = vld [vmem:[%s0 + $0x58] sm:$0xf]
  %v38 = vld [vmem:[%s0 + $0x5c] sm:$0xf]
  %v39 = vld [vmem:[%s0 + $0x60] sm:$0xf]
  %v40 = vld [vmem:[%s0 + $0x64] sm:$0xf]
  %v41 = vld [vmem:[%s0 + $0x68] sm:$0xf]
  %v42 = vld [vmem:[%s0 + $0x6c] sm:$0xf]
  %v43 = vld [vmem:[%s0 + $0x70] sm:$0xf]
  %v44 = vld [vmem:[%s0 + $0x74] sm:$0xf]
  %v45 = vld [vmem:[%s0 + $0x78] sm:$0xf]
  %v46 = vld [vmem:[%s0 + $0x7c] sm:$0xf]
  %v47 = vld [vmem:[%s0 + $0x80] sm:$0xf]
  %v48 = vld [vmem:[%s0 + $0x84] sm:$0xf]
  %v49 = vld [vmem:[%s0 + $0x88] sm:$0xf]
  %v50 = vld [vmem:[%s0 + $0x8c] sm:$0xf]
  %v51 = vld [vmem:[%s0 + $0x90] sm:$0xf]
  %v52 = vld [vmem:[%s0 + $0x94] sm:$0xf]
  %v53 = vld [vmem:[%s0 + $0x98] sm:$0xf]
  %v54 = vld [vmem:[%s0 + $0x9c] sm:$0xf]
  %v55 = vld [vmem:[%s0 + $0xa0] sm:$0xf]
  %v56 = vld [vmem:[%s0 + $0xa4] sm:$0xf]
  %v57 = vld [vmem:[%s0 + $0xa8] sm:$0xf]
  %v58 = vld [vmem:[%s0 + $0xac] sm:$0xf]
  %v59 = vld [vmem:[%s0 + $0xb0] sm:$0xf]
  %v60 = vld [vmem:[%s0 + $0xb4] sm:$0xf]
  %v61 = vld [vmem:[%s0 + $0xb8] sm:$0xf]
  %v62 = vld [vmem:[%s0 + $0xbc] sm:$0xf]
  %v63 = vld [vmem:[%s0 + $0xc0] sm:$0xf]
  %v64 = vld [vmem:[%s0 + $0xc4] sm:$0xf]
  %v65 = vld [vmem:[%s0 + $0xc8] sm:$0xf]
  %v66 = vld [vmem:[%s0 + $0xcc] sm:$0xf]
  %v67 = vld [vmem:[%s0 + $0xd0] sm:$0xf]
  %v68 = vld [vmem:[%s0 + $0xd4] sm:$0xf]
  %v69 = vld [vmem:[%s0 + $0xd8] sm:$0xf]
  %v70 = vld [vmem:[%s0 + $0xdc] sm:$0xf]
  %v71 = vld [vmem:[%s0 + $0xe0] sm:$0xf]
  %v72 = vld [vmem:[%s0 + $0xe4] sm:$0xf]
  %v73 = vld [vmem:[%s0 + $0xe8] sm:$0xf]
  %v74 = vld [vmem:[%s0 + $0xec] sm:$0xf]
  %v75 = vld [vmem:[%s0 + $0xf0] sm:$0xf]
  %v76 = vld [vmem:[%s0 + $0xf4] sm:$0xf]
  %v77 = vld [vmem:[%s0 + $0xf8] sm:$0xf]
  %v78 = vld [vmem:[%s0 + $0xfc] sm:$0xf]
  %v79 = vld [vmem:[%s1] sm:$0xf]
  %v80 = vld [vmem:[%s2] sm:$0x1]
  %v82 = vlaneseq
  %v83 = vshrl.u32 %v82, 7
  %v84 = vsub.s32 0, %v83
  %v85 = vrot.slane %v80, %v84
  %v151 = vunpack.c.l.b16 %v15
  %v152 = vunpack.c.l.b16 %v16
  %v153 = vunpack.c.l.b16 %v17
  %v154 = vunpack.c.l.b16 %v18
  %v155 = vunpack.c.l.b16 %v19
  %v156 = vunpack.c.l.b16 %v20
  %v157 = vunpack.c.l.b16 %v21
  %v158 = vunpack.c.l.b16 %v22
  %v159 = vunpack.c.l.b16 %v23
  %v160 = vunpack.c.l.b16 %v24
  %v161 = vunpack.c.l.b16 %v25
  %v162 = vunpack.c.l.b16 %v26
  %v163 = vunpack.c.l.b16 %v27
  %v164 = vunpack.c.l.b16 %v28
  %v165 = vunpack.c.l.b16 %v29
  %v166 = vunpack.c.l.b16 %v30
  %v167 = vunpack.c.l.b16 %v31
  %v168 = vunpack.c.l.b16 %v32
  %v169 = vunpack.c.l.b16 %v33
  %v170 = vunpack.c.l.b16 %v34
  %v171 = vunpack.c.l.b16 %v35
  %v172 = vunpack.c.l.b16 %v36
  %v173 = vunpack.c.l.b16 %v37
  %v174 = vunpack.c.l.b16 %v38
  %v175 = vunpack.c.l.b16 %v39
  %v176 = vunpack.c.l.b16 %v40
  %v177 = vunpack.c.l.b16 %v41
  %v178 = vunpack.c.l.b16 %v42
  %v179 = vunpack.c.l.b16 %v43
  %v180 = vunpack.c.l.b16 %v44
  %v181 = vunpack.c.l.b16 %v45
  %v182 = vunpack.c.l.b16 %v46
  %v183 = vunpack.c.l.b16 %v47
  %v184 = vunpack.c.l.b16 %v48
  %v185 = vunpack.c.l.b16 %v49
  %v186 = vunpack.c.l.b16 %v50
  %v187 = vunpack.c.l.b16 %v51
  %v188 = vunpack.c.l.b16 %v52
  %v189 = vunpack.c.l.b16 %v53
  %v190 = vunpack.c.l.b16 %v54
  %v191 = vunpack.c.l.b16 %v55
  %v192 = vunpack.c.l.b16 %v56
  %v193 = vunpack.c.l.b16 %v57
  %v194 = vunpack.c.l.b16 %v58
  %v195 = vunpack.c.l.b16 %v59
  %v196 = vunpack.c.l.b16 %v60
  %v197 = vunpack.c.l.b16 %v61
  %v198 = vunpack.c.l.b16 %v62
  %v199 = vunpack.c.l.b16 %v63
  %v200 = vunpack.c.l.b16 %v64
  %v201 = vunpack.c.l.b16 %v65
  %v202 = vunpack.c.l.b16 %v66
  %v203 = vunpack.c.l.b16 %v67
  %v204 = vunpack.c.l.b16 %v68
  %v205 = vunpack.c.l.b16 %v69
  %v206 = vunpack.c.l.b16 %v70
  %v207 = vunpack.c.l.b16 %v71
  %v208 = vunpack.c.l.b16 %v72
  %v209 = vunpack.c.l.b16 %v73
  %v210 = vunpack.c.l.b16 %v74
  %v211 = vunpack.c.l.b16 %v75
  %v212 = vunpack.c.l.b16 %v76
  %v213 = vunpack.c.l.b16 %v77
  %v214 = vunpack.c.l.b16 %v78
  %v215 = vpack.c.b16 %v152, %v151
  %v216 = vpack.c.b16 %v154, %v153
  %v217 = vpack.c.b16 %v156, %v155
  %v218 = vpack.c.b16 %v158, %v157
  %v219 = vpack.c.b16 %v160, %v159
  %v220 = vpack.c.b16 %v162, %v161
  %v221 = vpack.c.b16 %v164, %v163
  %v222 = vpack.c.b16 %v166, %v165
  %v223 = vpack.c.b16 %v168, %v167
  %v224 = vpack.c.b16 %v170, %v169
  %v225 = vpack.c.b16 %v172, %v171
  %v226 = vpack.c.b16 %v174, %v173
  %v227 = vpack.c.b16 %v176, %v175
  %v228 = vpack.c.b16 %v178, %v177
  %v229 = vpack.c.b16 %v180, %v179
  %v230 = vpack.c.b16 %v182, %v181
  %v231 = vpack.c.b16 %v184, %v183
  %v232 = vpack.c.b16 %v186, %v185
  %v233 = vpack.c.b16 %v188, %v187
  %v234 = vpack.c.b16 %v190, %v189
  %v235 = vpack.c.b16 %v192, %v191
  %v236 = vpack.c.b16 %v194, %v193
  %v237 = vpack.c.b16 %v196, %v195
  %v238 = vpack.c.b16 %v198, %v197
  %v239 = vpack.c.b16 %v200, %v199
  %v240 = vpack.c.b16 %v202, %v201
  %v241 = vpack.c.b16 %v204, %v203
  %v242 = vpack.c.b16 %v206, %v205
  %v243 = vpack.c.b16 %v208, %v207
  %v244 = vpack.c.b16 %v210, %v209
  %v245 = vpack.c.b16 %v212, %v211
  %v246 = vpack.c.b16 %v214, %v213
  %vm247 = vcmask 64512
  %v249 = vsel %vm247, %v215, 0
  %v252 = vsel %vm247, %v216, 0
  %v255 = vsel %vm247, %v217, 0
  %v258 = vsel %vm247, %v218, 0
  %v261 = vsel %vm247, %v219, 0
  %v264 = vsel %vm247, %v220, 0
  %v267 = vsel %vm247, %v221, 0
  %v270 = vsel %vm247, %v222, 0
  %v273 = vsel %vm247, %v223, 0
  %v276 = vsel %vm247, %v224, 0
  %v279 = vsel %vm247, %v225, 0
  %v282 = vsel %vm247, %v226, 0
  %v285 = vsel %vm247, %v227, 0
  %v288 = vsel %vm247, %v228, 0
  %v291 = vsel %vm247, %v229, 0
  %v294 = vsel %vm247, %v230, 0
  %v297 = vsel %vm247, %v231, 0
  %v300 = vsel %vm247, %v232, 0
  %v303 = vsel %vm247, %v233, 0
  %v306 = vsel %vm247, %v234, 0
  %v309 = vsel %vm247, %v235, 0
  %v312 = vsel %vm247, %v236, 0
  %v315 = vsel %vm247, %v237, 0
  %v318 = vsel %vm247, %v238, 0
  %v321 = vsel %vm247, %v239, 0
  %v324 = vsel %vm247, %v240, 0
  %v327 = vsel %vm247, %v241, 0
  %v330 = vsel %vm247, %v242, 0
  %v333 = vsel %vm247, %v243, 0
  %v336 = vsel %vm247, %v244, 0
  %v339 = vsel %vm247, %v245, 0
  %v342 = vsel %vm247, %v246, 0
  %vm344 = vcmask 1043456
  %v346 = vsel %vm344, %v79, 0
  %348 = vmatprep.subr.bf16.mxu0 0
  %349 = vmatpush1.bf16.msra.mxu0 %v346
  %350 = vmatprep.subr.bf16.mxu0 0
  %351 = vmatpush1.bf16.msra.mxu0 0
  %352 = vmatprep.subr.bf16.mxu0 0
  %353 = vmatpush1.bf16.msra.mxu0 0
  %354 = vmatprep.subr.bf16.mxu0 0
  %355 = vmatpush1.bf16.msra.mxu0 0
  %356 = vmatprep.subr.bf16.mxu0 0
  %357 = vmatpush1.bf16.msra.mxu0 0
  %358 = vmatprep.subr.bf16.mxu0 0
  %359 = vmatpush1.bf16.msra.mxu0 0
  %360 = vmatprep.subr.bf16.mxu0 0
  %361 = vmatpush1.bf16.msra.mxu0 0
  %362 = vmatprep.subr.bf16.mxu0 0
  %363 = vmatpush1.bf16.msra.mxu0 0
  %364 = vmatprep.subr.bf16.mxu0 0
  %365 = vmatpush1.bf16.msra.mxu0 0
  %366 = vmatprep.subr.bf16.mxu0 0
  %367 = vmatpush1.bf16.msra.mxu0 0
  %368 = vmatprep.subr.bf16.mxu0 0
  %369 = vmatpush1.bf16.msra.mxu0 0
  %370 = vmatprep.subr.bf16.mxu0 0
  %371 = vmatpush1.bf16.msra.mxu0 0
  %372 = vmatprep.subr.bf16.mxu0 0
  %373 = vmatpush1.bf16.msra.mxu0 0
  %374 = vmatprep.subr.bf16.mxu0 0
  %375 = vmatpush1.bf16.msra.mxu0 0
  %376 = vmatprep.subr.bf16.mxu0 0
  %377 = vmatpush1.bf16.msra.mxu0 0
  %378 = vmatprep.subr.bf16.mxu0 0
  %379 = vmatpush1.bf16.msra.mxu0 0
  %380 = vmatprep.mubr.bf16.mxu0 0
  %381 = vmatmul.mubr.bf16.gmra.mrb[0].mxu0 %v249
  %v382 = vpop.f32.mrb[0].mxu0
  %v383 = vadd.f32 %v85, %v382
  %v384 = vpop.f32.mrb[0].mxu0
  %v385 = vpop.f32.mrb[0].mxu0
  %v386 = vadd.f32 %v85, %v385
  %v387 = vpop.f32.mrb[0].mxu0
  %388 = vmatprep.mubr.bf16.mxu0 0
  %389 = vmatmul.mubr.bf16.gmra.mrb[0].mxu0 %v252
  %v390 = vpop.f32.mrb[0].mxu0
  %v391 = vadd.f32 %v85, %v390
  %v392 = vpop.f32.mrb[0].mxu0
  %v393 = vpop.f32.mrb[0].mxu0
  %v394 = vadd.f32 %v85, %v393
  %v395 = vpop.f32.mrb[0].mxu0
  %396 = vmatprep.mubr.bf16.mxu0 0
  %397 = vmatmul.mubr.bf16.gmra.mrb[0].mxu0 %v255
  %v398 = vpop.f32.mrb[0].mxu0
  %v399 = vadd.f32 %v85, %v398
  %v400 = vpop.f32.mrb[0].mxu0
  %v401 = vpop.f32.mrb[0].mxu0
  %v402 = vadd.f32 %v85, %v401
  %v403 = vpop.f32.mrb[0].mxu0
  %404 = vmatprep.mubr.bf16.mxu0 0
  %405 = vmatmul.mubr.bf16.gmra.mrb[0].mxu0 %v258
  %v406 = vpop.f32.mrb[0].mxu0
  %v407 = vadd.f32 %v85, %v406
  %v408 = vpop.f32.mrb[0].mxu0
  %v409 = vpop.f32.mrb[0].mxu0
  %v410 = vadd.f32 %v85, %v409
  %v411 = vpop.f32.mrb[0].mxu0
  %412 = vmatprep.mubr.bf16.mxu0 0
  %413 = vmatmul.mubr.bf16.gmra.mrb[0].mxu0 %v261
  %v414 = vpop.f32.mrb[0].mxu0
  %v415 = vadd.f32 %v85, %v414
  %v416 = vpop.f32.mrb[0].mxu0
  %v417 = vpop.f32.mrb[0].mxu0
  %v418 = vadd.f32 %v85, %v417
  %v419 = vpop.f32.mrb[0].mxu0
  %420 = vmatprep.mubr.bf16.mxu0 0
  %421 = vmatmul.mubr.bf16.gmra.mrb[0].mxu0 %v264
  %v422 = vpop.f32.mrb[0].mxu0
  %v423 = vadd.f32 %v85, %v422
  %v424 = vpop.f32.mrb[0].mxu0
  %v425 = vpop.f32.mrb[0].mxu0
  %v426 = vadd.f32 %v85, %v425
  %v427 = vpop.f32.mrb[0].mxu0
  %428 = vmatprep.mubr.bf16.mxu0 0
  %429 = vmatmul.mubr.bf16.gmra.mrb[0].mxu0 %v267
  %v430 = vpop.f32.mrb[0].mxu0
  %v431 = vadd.f32 %v85, %v430
  %v432 = vpop.f32.mrb[0].mxu0
  %v433 = vpop.f32.mrb[0].mxu0
  %v434 = vadd.f32 %v85, %v433
  %v435 = vpop.f32.mrb[0].mxu0
  %436 = vmatprep.mubr.bf16.mxu0 0
  %437 = vmatmul.mubr.bf16.gmra.mrb[0].mxu0 %v270
  %v438 = vpop.f32.mrb[0].mxu0
  %v439 = vadd.f32 %v85, %v438
  %v440 = vpop.f32.mrb[0].mxu0
  %v441 = vpop.f32.mrb[0].mxu0
  %v442 = vadd.f32 %v85, %v441
  %v443 = vpop.f32.mrb[0].mxu0
  %444 = vmatprep.mubr.bf16.mxu0 0
  %445 = vmatmul.mubr.bf16.gmra.mrb[0].mxu0 %v273
  %v446 = vpop.f32.mrb[0].mxu0
  %v447 = vadd.f32 %v85, %v446
  %v448 = vpop.f32.mrb[0].mxu0
  %v449 = vpop.f32.mrb[0].mxu0
  %v450 = vadd.f32 %v85, %v449
  %v451 = vpop.f32.mrb[0].mxu0
  %452 = vmatprep.mubr.bf16.mxu0 0
  %453 = vmatmul.mubr.bf16.gmra.mrb[0].mxu0 %v276
  %v454 = vpop.f32.mrb[0].mxu0
  %v455 = vadd.f32 %v85, %v454
  %v456 = vpop.f32.mrb[0].mxu0
  %v457 = vpop.f32.mrb[0].mxu0
  %v458 = vadd.f32 %v85, %v457
  %v459 = vpop.f32.mrb[0].mxu0
  %460 = vmatprep.mubr.bf16.mxu0 0
  %461 = vmatmul.mubr.bf16.gmra.mrb[0].mxu0 %v279
  %v462 = vpop.f32.mrb[0].mxu0
  %v463 = vadd.f32 %v85, %v462
  %v464 = vpop.f32.mrb[0].mxu0
  %v465 = vpop.f32.mrb[0].mxu0
  %v466 = vadd.f32 %v85, %v465
  %v467 = vpop.f32.mrb[0].mxu0
  %468 = vmatprep.mubr.bf16.mxu0 0
  %469 = vmatmul.mubr.bf16.gmra.mrb[0].mxu0 %v282
  %v470 = vpop.f32.mrb[0].mxu0
  %v471 = vadd.f32 %v85, %v470
  %v472 = vpop.f32.mrb[0].mxu0
  %v473 = vpop.f32.mrb[0].mxu0
  %v474 = vadd.f32 %v85, %v473
  %v475 = vpop.f32.mrb[0].mxu0
  %476 = vmatprep.mubr.bf16.mxu0 0
  %477 = vmatmul.mubr.bf16.gmra.mrb[0].mxu0 %v285
  %v478 = vpop.f32.mrb[0].mxu0
  %v479 = vadd.f32 %v85, %v478
  %v480 = vpop.f32.mrb[0].mxu0
  %v481 = vpop.f32.mrb[0].mxu0
  %v482 = vadd.f32 %v85, %v481
  %v483 = vpop.f32.mrb[0].mxu0
  %484 = vmatprep.mubr.bf16.mxu0 0
  %485 = vmatmul.mubr.bf16.gmra.mrb[0].mxu0 %v288
  %v486 = vpop.f32.mrb[0].mxu0
  %v487 = vadd.f32 %v85, %v486
  %v488 = vpop.f32.mrb[0].mxu0
  %v489 = vpop.f32.mrb[0].mxu0
  %v490 = vadd.f32 %v85, %v489
  %v491 = vpop.f32.mrb[0].mxu0
  %492 = vmatprep.mubr.bf16.mxu0 0
  %493 = vmatmul.mubr.bf16.gmra.mrb[0].mxu0 %v291
  %v494 = vpop.f32.mrb[0].mxu0
  %v495 = vadd.f32 %v85, %v494
  %v496 = vpop.f32.mrb[0].mxu0
  %v497 = vpop.f32.mrb[0].mxu0
  %v498 = vadd.f32 %v85, %v497
  %v499 = vpop.f32.mrb[0].mxu0
  %500 = vmatprep.mubr.bf16.mxu0 0
  %501 = vmatmul.mubr.bf16.gmra.mrb[0].mxu0 %v294
  %v502 = vpop.f32.mrb[0].mxu0
  %v503 = vadd.f32 %v85, %v502
  %v504 = vpop.f32.mrb[0].mxu0
  %v505 = vpop.f32.mrb[0].mxu0
  %v506 = vadd.f32 %v85, %v505
  %v507 = vpop.f32.mrb[0].mxu0
  %508 = vmatprep.mubr.bf16.mxu0 0
  %509 = vmatmul.mubr.bf16.gmra.mrb[0].mxu0 %v297
  %v510 = vpop.f32.mrb[0].mxu0
  %v511 = vadd.f32 %v85, %v510
  %v512 = vpop.f32.mrb[0].mxu0
  %v513 = vpop.f32.mrb[0].mxu0
  %v514 = vadd.f32 %v85, %v513
  %v515 = vpop.f32.mrb[0].mxu0
  %516 = vmatprep.mubr.bf16.mxu0 0
  %517 = vmatmul.mubr.bf16.gmra.mrb[0].mxu0 %v300
  %v518 = vpop.f32.mrb[0].mxu0
  %v519 = vadd.f32 %v85, %v518
  %v520 = vpop.f32.mrb[0].mxu0
  %v521 = vpop.f32.mrb[0].mxu0
  %v522 = vadd.f32 %v85, %v521
  %v523 = vpop.f32.mrb[0].mxu0
  %524 = vmatprep.mubr.bf16.mxu0 0
  %525 = vmatmul.mubr.bf16.gmra.mrb[0].mxu0 %v303
  %v526 = vpop.f32.mrb[0].mxu0
  %v527 = vadd.f32 %v85, %v526
  %v528 = vpop.f32.mrb[0].mxu0
  %v529 = vpop.f32.mrb[0].mxu0
  %v530 = vadd.f32 %v85, %v529
  %v531 = vpop.f32.mrb[0].mxu0
  %532 = vmatprep.mubr.bf16.mxu0 0
  %533 = vmatmul.mubr.bf16.gmra.mrb[0].mxu0 %v306
  %v534 = vpop.f32.mrb[0].mxu0
  %v535 = vadd.f32 %v85, %v534
  %v536 = vpop.f32.mrb[0].mxu0
  %v537 = vpop.f32.mrb[0].mxu0
  %v538 = vadd.f32 %v85, %v537
  %v539 = vpop.f32.mrb[0].mxu0
  %540 = vmatprep.mubr.bf16.mxu0 0
  %541 = vmatmul.mubr.bf16.gmra.mrb[0].mxu0 %v309
  %v542 = vpop.f32.mrb[0].mxu0
  %v543 = vadd.f32 %v85, %v542
  %v544 = vpop.f32.mrb[0].mxu0
  %v545 = vpop.f32.mrb[0].mxu0
  %v546 = vadd.f32 %v85, %v545
  %v547 = vpop.f32.mrb[0].mxu0
  %548 = vmatprep.mubr.bf16.mxu0 0
  %549 = vmatmul.mubr.bf16.gmra.mrb[0].mxu0 %v312
  %v550 = vpop.f32.mrb[0].mxu0
  %v551 = vadd.f32 %v85, %v550
  %v552 = vpop.f32.mrb[0].mxu0
  %v553 = vpop.f32.mrb[0].mxu0
  %v554 = vadd.f32 %v85, %v553
  %v555 = vpop.f32.mrb[0].mxu0
  %556 = vmatprep.mubr.bf16.mxu0 0
  %557 = vmatmul.mubr.bf16.gmra.mrb[0].mxu0 %v315
  %v558 = vpop.f32.mrb[0].mxu0
  %v559 = vadd.f32 %v85, %v558
  %v560 = vpop.f32.mrb[0].mxu0
  %v561 = vpop.f32.mrb[0].mxu0
  %v562 = vadd.f32 %v85, %v561
  %v563 = vpop.f32.mrb[0].mxu0
  %564 = vmatprep.mubr.bf16.mxu0 0
  %565 = vmatmul.mubr.bf16.gmra.mrb[0].mxu0 %v318
  %v566 = vpop.f32.mrb[0].mxu0
  %v567 = vadd.f32 %v85, %v566
  %v568 = vpop.f32.mrb[0].mxu0
  %v569 = vpop.f32.mrb[0].mxu0
  %v570 = vadd.f32 %v85, %v569
  %v571 = vpop.f32.mrb[0].mxu0
  %572 = vmatprep.mubr.bf16.mxu0 0
  %573 = vmatmul.mubr.bf16.gmra.mrb[0].mxu0 %v321
  %v574 = vpop.f32.mrb[0].mxu0
  %v575 = vadd.f32 %v85, %v574
  %v576 = vpop.f32.mrb[0].mxu0
  %v577 = vpop.f32.mrb[0].mxu0
  %v578 = vadd.f32 %v85, %v577
  %v579 = vpop.f32.mrb[0].mxu0
  %580 = vmatprep.mubr.bf16.mxu0 0
  %581 = vmatmul.mubr.bf16.gmra.mrb[0].mxu0 %v324
  %v582 = vpop.f32.mrb[0].mxu0
  %v583 = vadd.f32 %v85, %v582
  %v584 = vpop.f32.mrb[0].mxu0
  %v585 = vpop.f32.mrb[0].mxu0
  %v586 = vadd.f32 %v85, %v585
  %v587 = vpop.f32.mrb[0].mxu0
  %588 = vmatprep.mubr.bf16.mxu0 0
  %589 = vmatmul.mubr.bf16.gmra.mrb[0].mxu0 %v327
  %v590 = vpop.f32.mrb[0].mxu0
  %v591 = vadd.f32 %v85, %v590
  %v592 = vpop.f32.mrb[0].mxu0
  %v593 = vpop.f32.mrb[0].mxu0
  %v594 = vadd.f32 %v85, %v593
  %v595 = vpop.f32.mrb[0].mxu0
  %596 = vmatprep.mubr.bf16.mxu0 0
  %597 = vmatmul.mubr.bf16.gmra.mrb[0].mxu0 %v330
  %v598 = vpop.f32.mrb[0].mxu0
  %v599 = vadd.f32 %v85, %v598
  %v600 = vpop.f32.mrb[0].mxu0
  %v601 = vpop.f32.mrb[0].mxu0
  %v602 = vadd.f32 %v85, %v601
  %v603 = vpop.f32.mrb[0].mxu0
  %604 = vmatprep.mubr.bf16.mxu0 0
  %605 = vmatmul.mubr.bf16.gmra.mrb[0].mxu0 %v333
  %v606 = vpop.f32.mrb[0].mxu0
  %v607 = vadd.f32 %v85, %v606
  %v608 = vpop.f32.mrb[0].mxu0
  %v609 = vpop.f32.mrb[0].mxu0
  %v610 = vadd.f32 %v85, %v609
  %v611 = vpop.f32.mrb[0].mxu0
  %612 = vmatprep.mubr.bf16.mxu0 0
  %613 = vmatmul.mubr.bf16.gmra.mrb[0].mxu0 %v336
  %v614 = vpop.f32.mrb[0].mxu0
  %v615 = vadd.f32 %v85, %v614
  %v616 = vpop.f32.mrb[0].mxu0
  %v617 = vpop.f32.mrb[0].mxu0
  %v618 = vadd.f32 %v85, %v617
  %v619 = vpop.f32.mrb[0].mxu0
  %620 = vmatprep.mubr.bf16.mxu0 0
  %621 = vmatmul.mubr.bf16.gmra.mrb[0].mxu0 %v339
  %v622 = vpop.f32.mrb[0].mxu0
  %v623 = vadd.f32 %v85, %v622
  %v624 = vpop.f32.mrb[0].mxu0
  %v625 = vpop.f32.mrb[0].mxu0
  %v626 = vadd.f32 %v85, %v625
  %v627 = vpop.f32.mrb[0].mxu0
  %628 = vmatprep.mubr.bf16.mxu0 0
  %629 = vmatmul.mubr.bf16.gmra.mrb[0].mxu0 %v342
  %v630 = vpop.f32.mrb[0].mxu0
  %v631 = vadd.f32 %v85, %v630
  %v632 = vpop.f32.mrb[0].mxu0
  %v633 = vpop.f32.mrb[0].mxu0
  %v634 = vadd.f32 %v85, %v633
  %v635 = vpop.f32.mrb[0].mxu0
  %636 = vdwg.mxu0
  %v637 = vxor.u32 %v383, 2147483648
  %v638 = vxor.u32 %v386, 2147483648
  %v639 = vxor.u32 %v391, 2147483648
  %v640 = vxor.u32 %v394, 2147483648
  %v641 = vxor.u32 %v399, 2147483648
  %v642 = vxor.u32 %v402, 2147483648
  %v643 = vxor.u32 %v407, 2147483648
  %v644 = vxor.u32 %v410, 2147483648
  %v645 = vxor.u32 %v415, 2147483648
  %v646 = vxor.u32 %v418, 2147483648
  %v647 = vxor.u32 %v423, 2147483648
  %v648 = vxor.u32 %v426, 2147483648
  %v649 = vxor.u32 %v431, 2147483648
  %v650 = vxor.u32 %v434, 2147483648
  %v651 = vxor.u32 %v439, 2147483648
  %v652 = vxor.u32 %v442, 2147483648
  %v653 = vxor.u32 %v447, 2147483648
  %v654 = vxor.u32 %v450, 2147483648
  %v655 = vxor.u32 %v455, 2147483648
  %v656 = vxor.u32 %v458, 2147483648
  %v657 = vxor.u32 %v463, 2147483648
  %v658 = vxor.u32 %v466, 2147483648
  %v659 = vxor.u32 %v471, 2147483648
  %v660 = vxor.u32 %v474, 2147483648
  %v661 = vxor.u32 %v479, 2147483648
  %v662 = vxor.u32 %v482, 2147483648
  %v663 = vxor.u32 %v487, 2147483648
  %v664 = vxor.u32 %v490, 2147483648
  %v665 = vxor.u32 %v495, 2147483648
  %v666 = vxor.u32 %v498, 2147483648
  %v667 = vxor.u32 %v503, 2147483648
  %v668 = vxor.u32 %v506, 2147483648
  %v669 = vxor.u32 %v511, 2147483648
  %v670 = vxor.u32 %v514, 2147483648
  %v671 = vxor.u32 %v519, 2147483648
  %v672 = vxor.u32 %v522, 2147483648
  %v673 = vxor.u32 %v527, 2147483648
  %v674 = vxor.u32 %v530, 2147483648
  %v675 = vxor.u32 %v535, 2147483648
  %v676 = vxor.u32 %v538, 2147483648
  %v677 = vxor.u32 %v543, 2147483648
  %v678 = vxor.u32 %v546, 2147483648
  %v679 = vxor.u32 %v551, 2147483648
  %v680 = vxor.u32 %v554, 2147483648
  %v681 = vxor.u32 %v559, 2147483648
  %v682 = vxor.u32 %v562, 2147483648
  %v683 = vxor.u32 %v567, 2147483648
  %v684 = vxor.u32 %v570, 2147483648
  %v685 = vxor.u32 %v575, 2147483648
  %v686 = vxor.u32 %v578, 2147483648
  %v687 = vxor.u32 %v583, 2147483648
  %v688 = vxor.u32 %v586, 2147483648
  %v689 = vxor.u32 %v591, 2147483648
  %v690 = vxor.u32 %v594, 2147483648
  %v691 = vxor.u32 %v599, 2147483648
  %v692 = vxor.u32 %v602, 2147483648
  %v693 = vxor.u32 %v607, 2147483648
  %v694 = vxor.u32 %v610, 2147483648
  %v695 = vxor.u32 %v615, 2147483648
  %v696 = vxor.u32 %v618, 2147483648
  %v697 = vxor.u32 %v623, 2147483648
  %v698 = vxor.u32 %v626, 2147483648
  %v699 = vxor.u32 %v631, 2147483648
  %v700 = vxor.u32 %v634, 2147483648
  %v701 = vmul.f32 %v637, 1.442695
  %v702 = vpow.pop %v701
  %v703 = vmul.f32 %v638, 1.442695
  %v704 = vpow.pop %v703
  %v705 = vmul.f32 %v639, 1.442695
  %v706 = vpow.pop %v705
  %v707 = vmul.f32 %v640, 1.442695
  %v708 = vpow.pop %v707
  %v709 = vmul.f32 %v641, 1.442695
  %v710 = vpow.pop %v709
  %v711 = vmul.f32 %v642, 1.442695
  %v712 = vpow.pop %v711
  %v713 = vmul.f32 %v643, 1.442695
  %v714 = vpow.pop %v713
  %v715 = vmul.f32 %v644, 1.442695
  %v716 = vpow.pop %v715
  %v717 = vmul.f32 %v645, 1.442695
  %v718 = vpow.pop %v717
  %v719 = vmul.f32 %v646, 1.442695
  %v720 = vpow.pop %v719
  %v721 = vmul.f32 %v647, 1.442695
  %v722 = vpow.pop %v721
  %v723 = vmul.f32 %v648, 1.442695
  %v724 = vpow.pop %v723
  %v725 = vmul.f32 %v649, 1.442695
  %v726 = vpow.pop %v725
  %v727 = vmul.f32 %v650, 1.442695
  %v728 = vpow.pop %v727
  %v729 = vmul.f32 %v651, 1.442695
  %v730 = vpow.pop %v729
  %v731 = vmul.f32 %v652, 1.442695
  %v732 = vpow.pop %v731
  %v733 = vmul.f32 %v653, 1.442695
  %v734 = vpow.pop %v733
  %v735 = vmul.f32 %v654, 1.442695
  %v736 = vpow.pop %v735
  %v737 = vmul.f32 %v655, 1.442695
  %v738 = vpow.pop %v737
  %v739 = vmul.f32 %v656, 1.442695
  %v740 = vpow.pop %v739
  %v741 = vmul.f32 %v657, 1.442695
  %v742 = vpow.pop %v741
  %v743 = vmul.f32 %v658, 1.442695
  %v744 = vpow.pop %v743
  %v745 = vmul.f32 %v659, 1.442695
  %v746 = vpow.pop %v745
  %v747 = vmul.f32 %v660, 1.442695
  %v748 = vpow.pop %v747
  %v749 = vmul.f32 %v661, 1.442695
  %v750 = vpow.pop %v749
  %v751 = vmul.f32 %v662, 1.442695
  %v752 = vpow.pop %v751
  %v753 = vmul.f32 %v663, 1.442695
  %v754 = vpow.pop %v753
  %v755 = vmul.f32 %v664, 1.442695
  %v756 = vpow.pop %v755
  %v757 = vmul.f32 %v665, 1.442695
  %v758 = vpow.pop %v757
  %v759 = vmul.f32 %v666, 1.442695
  %v760 = vpow.pop %v759
  %v761 = vmul.f32 %v667, 1.442695
  %v762 = vpow.pop %v761
  %v763 = vmul.f32 %v668, 1.442695
  %v764 = vpow.pop %v763
  %v765 = vmul.f32 %v669, 1.442695
  %v766 = vpow.pop %v765
  %v767 = vmul.f32 %v670, 1.442695
  %v768 = vpow.pop %v767
  %v769 = vmul.f32 %v671, 1.442695
  %v770 = vpow.pop %v769
  %v771 = vmul.f32 %v672, 1.442695
  %v772 = vpow.pop %v771
  %v773 = vmul.f32 %v673, 1.442695
  %v774 = vpow.pop %v773
  %v775 = vmul.f32 %v674, 1.442695
  %v776 = vpow.pop %v775
  %v777 = vmul.f32 %v675, 1.442695
  %v778 = vpow.pop %v777
  %v779 = vmul.f32 %v676, 1.442695
  %v780 = vpow.pop %v779
  %v781 = vmul.f32 %v677, 1.442695
  %v782 = vpow.pop %v781
  %v783 = vmul.f32 %v678, 1.442695
  %v784 = vpow.pop %v783
  %v785 = vmul.f32 %v679, 1.442695
  %v786 = vpow.pop %v785
  %v787 = vmul.f32 %v680, 1.442695
  %v788 = vpow.pop %v787
  %v789 = vmul.f32 %v681, 1.442695
  %v790 = vpow.pop %v789
  %v791 = vmul.f32 %v682, 1.442695
  %v792 = vpow.pop %v791
  %v793 = vmul.f32 %v683, 1.442695
  %v794 = vpow.pop %v793
  %v795 = vmul.f32 %v684, 1.442695
  %v796 = vpow.pop %v795
  %v797 = vmul.f32 %v685, 1.442695
  %v798 = vpow.pop %v797
  %v799 = vmul.f32 %v686, 1.442695
  %v800 = vpow.pop %v799
  %v801 = vmul.f32 %v687, 1.442695
  %v802 = vpow.pop %v801
  %v803 = vmul.f32 %v688, 1.442695
  %v804 = vpow.pop %v803
  %v805 = vmul.f32 %v689, 1.442695
  %v806 = vpow.pop %v805
  %v807 = vmul.f32 %v690, 1.442695
  %v808 = vpow.pop %v807
  %v809 = vmul.f32 %v691, 1.442695
  %v810 = vpow.pop %v809
  %v811 = vmul.f32 %v692, 1.442695
  %v812 = vpow.pop %v811
  %v813 = vmul.f32 %v693, 1.442695
  %v814 = vpow.pop %v813
  %v815 = vmul.f32 %v694, 1.442695
  %v816 = vpow.pop %v815
  %v817 = vmul.f32 %v695, 1.442695
  %v818 = vpow.pop %v817
  %v819 = vmul.f32 %v696, 1.442695
  %v820 = vpow.pop %v819
  %v821 = vmul.f32 %v697, 1.442695
  %v822 = vpow.pop %v821
  %v823 = vmul.f32 %v698, 1.442695
  %v824 = vpow.pop %v823
  %v825 = vmul.f32 %v699, 1.442695
  %v826 = vpow.pop %v825
  %v827 = vmul.f32 %v700, 1.442695
  %v828 = vpow.pop %v827
  %v829 = vadd.f32 %v702, 1.0
  %v830 = vadd.f32 %v704, 1.0
  %v831 = vadd.f32 %v706, 1.0
  %v832 = vadd.f32 %v708, 1.0
  %v833 = vadd.f32 %v710, 1.0
  %v834 = vadd.f32 %v712, 1.0
  %v835 = vadd.f32 %v714, 1.0
  %v836 = vadd.f32 %v716, 1.0
  %v837 = vadd.f32 %v718, 1.0
  %v838 = vadd.f32 %v720, 1.0
  %v839 = vadd.f32 %v722, 1.0
  %v840 = vadd.f32 %v724, 1.0
  %v841 = vadd.f32 %v726, 1.0
  %v842 = vadd.f32 %v728, 1.0
  %v843 = vadd.f32 %v730, 1.0
  %v844 = vadd.f32 %v732, 1.0
  %v845 = vadd.f32 %v734, 1.0
  %v846 = vadd.f32 %v736, 1.0
  %v847 = vadd.f32 %v738, 1.0
  %v848 = vadd.f32 %v740, 1.0
  %v849 = vadd.f32 %v742, 1.0
  %v850 = vadd.f32 %v744, 1.0
  %v851 = vadd.f32 %v746, 1.0
  %v852 = vadd.f32 %v748, 1.0
  %v853 = vadd.f32 %v750, 1.0
  %v854 = vadd.f32 %v752, 1.0
  %v855 = vadd.f32 %v754, 1.0
  %v856 = vadd.f32 %v756, 1.0
  %v857 = vadd.f32 %v758, 1.0
  %v858 = vadd.f32 %v760, 1.0
  %v859 = vadd.f32 %v762, 1.0
  %v860 = vadd.f32 %v764, 1.0
  %v861 = vadd.f32 %v766, 1.0
  %v862 = vadd.f32 %v768, 1.0
  %v863 = vadd.f32 %v770, 1.0
  %v864 = vadd.f32 %v772, 1.0
  %v865 = vadd.f32 %v774, 1.0
  %v866 = vadd.f32 %v776, 1.0
  %v867 = vadd.f32 %v778, 1.0
  %v868 = vadd.f32 %v780, 1.0
  %v869 = vadd.f32 %v782, 1.0
  %v870 = vadd.f32 %v784, 1.0
  %v871 = vadd.f32 %v786, 1.0
  %v872 = vadd.f32 %v788, 1.0
  %v873 = vadd.f32 %v790, 1.0
  %v874 = vadd.f32 %v792, 1.0
  %v875 = vadd.f32 %v794, 1.0
  %v876 = vadd.f32 %v796, 1.0
  %v877 = vadd.f32 %v798, 1.0
  %v878 = vadd.f32 %v800, 1.0
  %v879 = vadd.f32 %v802, 1.0
  %v880 = vadd.f32 %v804, 1.0
  %v881 = vadd.f32 %v806, 1.0
  %v882 = vadd.f32 %v808, 1.0
  %v883 = vadd.f32 %v810, 1.0
  %v884 = vadd.f32 %v812, 1.0
  %v885 = vadd.f32 %v814, 1.0
  %v886 = vadd.f32 %v816, 1.0
  %v887 = vadd.f32 %v818, 1.0
  %v888 = vadd.f32 %v820, 1.0
  %v889 = vadd.f32 %v822, 1.0
  %v890 = vadd.f32 %v824, 1.0
  %v891 = vadd.f32 %v826, 1.0
  %v892 = vadd.f32 %v828, 1.0
  %v893 = vrcp.pop %v829
  %v894 = vmul.f32 1.0, %v893
  %v895 = vrcp.pop %v830
  %v896 = vmul.f32 1.0, %v895
  %v897 = vrcp.pop %v831
  %v898 = vmul.f32 1.0, %v897
  %v899 = vrcp.pop %v832
  %v900 = vmul.f32 1.0, %v899
  %v901 = vrcp.pop %v833
  %v902 = vmul.f32 1.0, %v901
  %v903 = vrcp.pop %v834
  %v904 = vmul.f32 1.0, %v903
  %v905 = vrcp.pop %v835
  %v906 = vmul.f32 1.0, %v905
  %v907 = vrcp.pop %v836
  %v908 = vmul.f32 1.0, %v907
  %v909 = vrcp.pop %v837
  %v910 = vmul.f32 1.0, %v909
  %v911 = vrcp.pop %v838
  %v912 = vmul.f32 1.0, %v911
  %v913 = vrcp.pop %v839
  %v914 = vmul.f32 1.0, %v913
  %v915 = vrcp.pop %v840
  %v916 = vmul.f32 1.0, %v915
  %v917 = vrcp.pop %v841
  %v918 = vmul.f32 1.0, %v917
  %v919 = vrcp.pop %v842
  %v920 = vmul.f32 1.0, %v919
  %v921 = vrcp.pop %v843
  %v922 = vmul.f32 1.0, %v921
  %v923 = vrcp.pop %v844
  %v924 = vmul.f32 1.0, %v923
  %v925 = vrcp.pop %v845
  %v926 = vmul.f32 1.0, %v925
  %v927 = vrcp.pop %v846
  %v928 = vmul.f32 1.0, %v927
  %v929 = vrcp.pop %v847
  %v930 = vmul.f32 1.0, %v929
  %v931 = vrcp.pop %v848
  %v932 = vmul.f32 1.0, %v931
  %v933 = vrcp.pop %v849
  %v934 = vmul.f32 1.0, %v933
  %v935 = vrcp.pop %v850
  %v936 = vmul.f32 1.0, %v935
  %v937 = vrcp.pop %v851
  %v938 = vmul.f32 1.0, %v937
  %v939 = vrcp.pop %v852
  %v940 = vmul.f32 1.0, %v939
  %v941 = vrcp.pop %v853
  %v942 = vmul.f32 1.0, %v941
  %v943 = vrcp.pop %v854
  %v944 = vmul.f32 1.0, %v943
  %v945 = vrcp.pop %v855
  %v946 = vmul.f32 1.0, %v945
  %v947 = vrcp.pop %v856
  %v948 = vmul.f32 1.0, %v947
  %v949 = vrcp.pop %v857
  %v950 = vmul.f32 1.0, %v949
  %v951 = vrcp.pop %v858
  %v952 = vmul.f32 1.0, %v951
  %v953 = vrcp.pop %v859
  %v954 = vmul.f32 1.0, %v953
  %v955 = vrcp.pop %v860
  %v956 = vmul.f32 1.0, %v955
  %v957 = vrcp.pop %v861
  %v958 = vmul.f32 1.0, %v957
  %v959 = vrcp.pop %v862
  %v960 = vmul.f32 1.0, %v959
  %v961 = vrcp.pop %v863
  %v962 = vmul.f32 1.0, %v961
  %v963 = vrcp.pop %v864
  %v964 = vmul.f32 1.0, %v963
  %v965 = vrcp.pop %v865
  %v966 = vmul.f32 1.0, %v965
  %v967 = vrcp.pop %v866
  %v968 = vmul.f32 1.0, %v967
  %v969 = vrcp.pop %v867
  %v970 = vmul.f32 1.0, %v969
  %v971 = vrcp.pop %v868
  %v972 = vmul.f32 1.0, %v971
  %v973 = vrcp.pop %v869
  %v974 = vmul.f32 1.0, %v973
  %v975 = vrcp.pop %v870
  %v976 = vmul.f32 1.0, %v975
  %v977 = vrcp.pop %v871
  %v978 = vmul.f32 1.0, %v977
  %v979 = vrcp.pop %v872
  %v980 = vmul.f32 1.0, %v979
  %v981 = vrcp.pop %v873
  %v982 = vmul.f32 1.0, %v981
  %v983 = vrcp.pop %v874
  %v984 = vmul.f32 1.0, %v983
  %v985 = vrcp.pop %v875
  %v986 = vmul.f32 1.0, %v985
  %v987 = vrcp.pop %v876
  %v988 = vmul.f32 1.0, %v987
  %v989 = vrcp.pop %v877
  %v990 = vmul.f32 1.0, %v989
  %v991 = vrcp.pop %v878
  %v992 = vmul.f32 1.0, %v991
  %v993 = vrcp.pop %v879
  %v994 = vmul.f32 1.0, %v993
  %v995 = vrcp.pop %v880
  %v996 = vmul.f32 1.0, %v995
  %v997 = vrcp.pop %v881
  %v998 = vmul.f32 1.0, %v997
  %v999 = vrcp.pop %v882
  %v1000 = vmul.f32 1.0, %v999
  %v1001 = vrcp.pop %v883
  %v1002 = vmul.f32 1.0, %v1001
  %v1003 = vrcp.pop %v884
  %v1004 = vmul.f32 1.0, %v1003
  %v1005 = vrcp.pop %v885
  %v1006 = vmul.f32 1.0, %v1005
  %v1007 = vrcp.pop %v886
  %v1008 = vmul.f32 1.0, %v1007
  %v1009 = vrcp.pop %v887
  %v1010 = vmul.f32 1.0, %v1009
  %v1011 = vrcp.pop %v888
  %v1012 = vmul.f32 1.0, %v1011
  %v1013 = vrcp.pop %v889
  %v1014 = vmul.f32 1.0, %v1013
  %v1015 = vrcp.pop %v890
  %v1016 = vmul.f32 1.0, %v1015
  %v1017 = vrcp.pop %v891
  %v1018 = vmul.f32 1.0, %v1017
  %v1019 = vrcp.pop %v892
  %v1020 = vmul.f32 1.0, %v1019
  %v1021 = vmul.f32 %v383, %v894
  %v1022 = vmul.f32 %v386, %v896
  %v1023 = vmul.f32 %v391, %v898
  %v1024 = vmul.f32 %v394, %v900
  %v1025 = vmul.f32 %v399, %v902
  %v1026 = vmul.f32 %v402, %v904
  %v1027 = vmul.f32 %v407, %v906
  %v1028 = vmul.f32 %v410, %v908
  %v1029 = vmul.f32 %v415, %v910
  %v1030 = vmul.f32 %v418, %v912
  %v1031 = vmul.f32 %v423, %v914
  %v1032 = vmul.f32 %v426, %v916
  %v1033 = vmul.f32 %v431, %v918
  %v1034 = vmul.f32 %v434, %v920
  %v1035 = vmul.f32 %v439, %v922
  %v1036 = vmul.f32 %v442, %v924
  %v1037 = vmul.f32 %v447, %v926
  %v1038 = vmul.f32 %v450, %v928
  %v1039 = vmul.f32 %v455, %v930
  %v1040 = vmul.f32 %v458, %v932
  %v1041 = vmul.f32 %v463, %v934
  %v1042 = vmul.f32 %v466, %v936
  %v1043 = vmul.f32 %v471, %v938
  %v1044 = vmul.f32 %v474, %v940
  %v1045 = vmul.f32 %v479, %v942
  %v1046 = vmul.f32 %v482, %v944
  %v1047 = vmul.f32 %v487, %v946
  %v1048 = vmul.f32 %v490, %v948
  %v1049 = vmul.f32 %v495, %v950
  %v1050 = vmul.f32 %v498, %v952
  %v1051 = vmul.f32 %v503, %v954
  %v1052 = vmul.f32 %v506, %v956
  %v1053 = vmul.f32 %v511, %v958
  %v1054 = vmul.f32 %v514, %v960
  %v1055 = vmul.f32 %v519, %v962
  %v1056 = vmul.f32 %v522, %v964
  %v1057 = vmul.f32 %v527, %v966
  %v1058 = vmul.f32 %v530, %v968
  %v1059 = vmul.f32 %v535, %v970
  %v1060 = vmul.f32 %v538, %v972
  %v1061 = vmul.f32 %v543, %v974
  %v1062 = vmul.f32 %v546, %v976
  %v1063 = vmul.f32 %v551, %v978
  %v1064 = vmul.f32 %v554, %v980
  %v1065 = vmul.f32 %v559, %v982
  %v1066 = vmul.f32 %v562, %v984
  %v1067 = vmul.f32 %v567, %v986
  %v1068 = vmul.f32 %v570, %v988
  %v1069 = vmul.f32 %v575, %v990
  %v1070 = vmul.f32 %v578, %v992
  %v1071 = vmul.f32 %v583, %v994
  %v1072 = vmul.f32 %v586, %v996
  %v1073 = vmul.f32 %v591, %v998
  %v1074 = vmul.f32 %v594, %v1000
  %v1075 = vmul.f32 %v599, %v1002
  %v1076 = vmul.f32 %v602, %v1004
  %v1077 = vmul.f32 %v607, %v1006
  %v1078 = vmul.f32 %v610, %v1008
  %v1079 = vmul.f32 %v615, %v1010
  %v1080 = vmul.f32 %v618, %v1012
  %v1081 = vmul.f32 %v623, %v1014
  %v1082 = vmul.f32 %v626, %v1016
  %v1083 = vmul.f32 %v631, %v1018
  %v1084 = vmul.f32 %v634, %v1020
  %v1085 = vpack.c.bf16 %v1022, %v1021
  %v1086 = vpack.c.bf16 %v1024, %v1023
  %v1087 = vpack.c.bf16 %v1026, %v1025
  %v1088 = vpack.c.bf16 %v1028, %v1027
  %v1089 = vpack.c.bf16 %v1030, %v1029
  %v1090 = vpack.c.bf16 %v1032, %v1031
  %v1091 = vpack.c.bf16 %v1034, %v1033
  %v1092 = vpack.c.bf16 %v1036, %v1035
  %v1093 = vpack.c.bf16 %v1038, %v1037
  %v1094 = vpack.c.bf16 %v1040, %v1039
  %v1095 = vpack.c.bf16 %v1042, %v1041
  %v1096 = vpack.c.bf16 %v1044, %v1043
  %v1097 = vpack.c.bf16 %v1046, %v1045
  %v1098 = vpack.c.bf16 %v1048, %v1047
  %v1099 = vpack.c.bf16 %v1050, %v1049
  %v1100 = vpack.c.bf16 %v1052, %v1051
  %v1101 = vpack.c.bf16 %v1054, %v1053
  %v1102 = vpack.c.bf16 %v1056, %v1055
  %v1103 = vpack.c.bf16 %v1058, %v1057
  %v1104 = vpack.c.bf16 %v1060, %v1059
  %v1105 = vpack.c.bf16 %v1062, %v1061
  %v1106 = vpack.c.bf16 %v1064, %v1063
  %v1107 = vpack.c.bf16 %v1066, %v1065
  %v1108 = vpack.c.bf16 %v1068, %v1067
  %v1109 = vpack.c.bf16 %v1070, %v1069
  %v1110 = vpack.c.bf16 %v1072, %v1071
  %v1111 = vpack.c.bf16 %v1074, %v1073
  %v1112 = vpack.c.bf16 %v1076, %v1075
  %v1113 = vpack.c.bf16 %v1078, %v1077
  %v1114 = vpack.c.bf16 %v1080, %v1079
  %v1115 = vpack.c.bf16 %v1082, %v1081
  %v1116 = vpack.c.bf16 %v1084, %v1083
  %v1149 = vunpack.c.l.b16 %v1085
  %v1150 = vunpack.c.h.b16 %v1085
  %v1151 = vunpack.c.l.b16 %v1086
  %v1152 = vunpack.c.h.b16 %v1086
  %v1153 = vunpack.c.l.b16 %v1087
  %v1154 = vunpack.c.h.b16 %v1087
  %v1155 = vunpack.c.l.b16 %v1088
  %v1156 = vunpack.c.h.b16 %v1088
  %v1157 = vunpack.c.l.b16 %v1089
  %v1158 = vunpack.c.h.b16 %v1089
  %v1159 = vunpack.c.l.b16 %v1090
  %v1160 = vunpack.c.h.b16 %v1090
  %v1161 = vunpack.c.l.b16 %v1091
  %v1162 = vunpack.c.h.b16 %v1091
  %v1163 = vunpack.c.l.b16 %v1092
  %v1164 = vunpack.c.h.b16 %v1092
  %v1165 = vunpack.c.l.b16 %v1093
  %v1166 = vunpack.c.h.b16 %v1093
  %v1167 = vunpack.c.l.b16 %v1094
  %v1168 = vunpack.c.h.b16 %v1094
  %v1169 = vunpack.c.l.b16 %v1095
  %v1170 = vunpack.c.h.b16 %v1095
  %v1171 = vunpack.c.l.b16 %v1096
  %v1172 = vunpack.c.h.b16 %v1096
  %v1173 = vunpack.c.l.b16 %v1097
  %v1174 = vunpack.c.h.b16 %v1097
  %v1175 = vunpack.c.l.b16 %v1098
  %v1176 = vunpack.c.h.b16 %v1098
  %v1177 = vunpack.c.l.b16 %v1099
  %v1178 = vunpack.c.h.b16 %v1099
  %v1179 = vunpack.c.l.b16 %v1100
  %v1180 = vunpack.c.h.b16 %v1100
  %v1181 = vunpack.c.l.b16 %v1101
  %v1182 = vunpack.c.h.b16 %v1101
  %v1183 = vunpack.c.l.b16 %v1102
  %v1184 = vunpack.c.h.b16 %v1102
  %v1185 = vunpack.c.l.b16 %v1103
  %v1186 = vunpack.c.h.b16 %v1103
  %v1187 = vunpack.c.l.b16 %v1104
  %v1188 = vunpack.c.h.b16 %v1104
  %v1189 = vunpack.c.l.b16 %v1105
  %v1190 = vunpack.c.h.b16 %v1105
  %v1191 = vunpack.c.l.b16 %v1106
  %v1192 = vunpack.c.h.b16 %v1106
  %v1193 = vunpack.c.l.b16 %v1107
  %v1194 = vunpack.c.h.b16 %v1107
  %v1195 = vunpack.c.l.b16 %v1108
  %v1196 = vunpack.c.h.b16 %v1108
  %v1197 = vunpack.c.l.b16 %v1109
  %v1198 = vunpack.c.h.b16 %v1109
  %v1199 = vunpack.c.l.b16 %v1110
  %v1200 = vunpack.c.h.b16 %v1110
  %v1201 = vunpack.c.l.b16 %v1111
  %v1202 = vunpack.c.h.b16 %v1111
  %v1203 = vunpack.c.l.b16 %v1112
  %v1204 = vunpack.c.h.b16 %v1112
  %v1205 = vunpack.c.l.b16 %v1113
  %v1206 = vunpack.c.h.b16 %v1113
  %v1207 = vunpack.c.l.b16 %v1114
  %v1208 = vunpack.c.h.b16 %v1114
  %v1209 = vunpack.c.l.b16 %v1115
  %v1210 = vunpack.c.h.b16 %v1115
  %v1211 = vunpack.c.l.b16 %v1116
  %v1212 = vunpack.c.h.b16 %v1116
  %v1213 = vpack.c.b16 %v1149, %v1149
  %v1214 = vpack.c.b16 %v1150, %v1150
  %v1215 = vpack.c.b16 %v1151, %v1151
  %v1216 = vpack.c.b16 %v1152, %v1152
  %v1217 = vpack.c.b16 %v1153, %v1153
  %v1218 = vpack.c.b16 %v1154, %v1154
  %v1219 = vpack.c.b16 %v1155, %v1155
  %v1220 = vpack.c.b16 %v1156, %v1156
  %v1221 = vpack.c.b16 %v1157, %v1157
  %v1222 = vpack.c.b16 %v1158, %v1158
  %v1223 = vpack.c.b16 %v1159, %v1159
  %v1224 = vpack.c.b16 %v1160, %v1160
  %v1225 = vpack.c.b16 %v1161, %v1161
  %v1226 = vpack.c.b16 %v1162, %v1162
  %v1227 = vpack.c.b16 %v1163, %v1163
  %v1228 = vpack.c.b16 %v1164, %v1164
  %v1229 = vpack.c.b16 %v1165, %v1165
  %v1230 = vpack.c.b16 %v1166, %v1166
  %v1231 = vpack.c.b16 %v1167, %v1167
  %v1232 = vpack.c.b16 %v1168, %v1168
  %v1233 = vpack.c.b16 %v1169, %v1169
  %v1234 = vpack.c.b16 %v1170, %v1170
  %v1235 = vpack.c.b16 %v1171, %v1171
  %v1236 = vpack.c.b16 %v1172, %v1172
  %v1237 = vpack.c.b16 %v1173, %v1173
  %v1238 = vpack.c.b16 %v1174, %v1174
  %v1239 = vpack.c.b16 %v1175, %v1175
  %v1240 = vpack.c.b16 %v1176, %v1176
  %v1241 = vpack.c.b16 %v1177, %v1177
  %v1242 = vpack.c.b16 %v1178, %v1178
  %v1243 = vpack.c.b16 %v1179, %v1179
  %v1244 = vpack.c.b16 %v1180, %v1180
  %v1245 = vpack.c.b16 %v1181, %v1181
  %v1246 = vpack.c.b16 %v1182, %v1182
  %v1247 = vpack.c.b16 %v1183, %v1183
  %v1248 = vpack.c.b16 %v1184, %v1184
  %v1249 = vpack.c.b16 %v1185, %v1185
  %v1250 = vpack.c.b16 %v1186, %v1186
  %v1251 = vpack.c.b16 %v1187, %v1187
  %v1252 = vpack.c.b16 %v1188, %v1188
  %v1253 = vpack.c.b16 %v1189, %v1189
  %v1254 = vpack.c.b16 %v1190, %v1190
  %v1255 = vpack.c.b16 %v1191, %v1191
  %v1256 = vpack.c.b16 %v1192, %v1192
  %v1257 = vpack.c.b16 %v1193, %v1193
  %v1258 = vpack.c.b16 %v1194, %v1194
  %v1259 = vpack.c.b16 %v1195, %v1195
  %v1260 = vpack.c.b16 %v1196, %v1196
  %v1261 = vpack.c.b16 %v1197, %v1197
  %v1262 = vpack.c.b16 %v1198, %v1198
  %v1263 = vpack.c.b16 %v1199, %v1199
  %v1264 = vpack.c.b16 %v1200, %v1200
  %v1265 = vpack.c.b16 %v1201, %v1201
  %v1266 = vpack.c.b16 %v1202, %v1202
  %v1267 = vpack.c.b16 %v1203, %v1203
  %v1268 = vpack.c.b16 %v1204, %v1204
  %v1269 = vpack.c.b16 %v1205, %v1205
  %v1270 = vpack.c.b16 %v1206, %v1206
  %v1271 = vpack.c.b16 %v1207, %v1207
  %v1272 = vpack.c.b16 %v1208, %v1208
  %v1273 = vpack.c.b16 %v1209, %v1209
  %v1274 = vpack.c.b16 %v1210, %v1210
  %v1275 = vpack.c.b16 %v1211, %v1211
  %v1276 = vpack.c.b16 %v1212, %v1212
  %1341 = vst [vmem:[%s3] sm:$0xf] %v1213
  %1342 = vst [vmem:[%s3 + $0x4] sm:$0xf] %v1214
  %1343 = vst [vmem:[%s3 + $0x8] sm:$0xf] %v1215
  %1344 = vst [vmem:[%s3 + $0xc] sm:$0xf] %v1216
  %1345 = vst [vmem:[%s3 + $0x10] sm:$0xf] %v1217
  %1346 = vst [vmem:[%s3 + $0x14] sm:$0xf] %v1218
  %1347 = vst [vmem:[%s3 + $0x18] sm:$0xf] %v1219
  %1348 = vst [vmem:[%s3 + $0x1c] sm:$0xf] %v1220
  %1349 = vst [vmem:[%s3 + $0x20] sm:$0xf] %v1221
  %1350 = vst [vmem:[%s3 + $0x24] sm:$0xf] %v1222
  %1351 = vst [vmem:[%s3 + $0x28] sm:$0xf] %v1223
  %1352 = vst [vmem:[%s3 + $0x2c] sm:$0xf] %v1224
  %1353 = vst [vmem:[%s3 + $0x30] sm:$0xf] %v1225
  %1354 = vst [vmem:[%s3 + $0x34] sm:$0xf] %v1226
  %1355 = vst [vmem:[%s3 + $0x38] sm:$0xf] %v1227
  %1356 = vst [vmem:[%s3 + $0x3c] sm:$0xf] %v1228
  %1357 = vst [vmem:[%s3 + $0x40] sm:$0xf] %v1229
  %1358 = vst [vmem:[%s3 + $0x44] sm:$0xf] %v1230
  %1359 = vst [vmem:[%s3 + $0x48] sm:$0xf] %v1231
  %1360 = vst [vmem:[%s3 + $0x4c] sm:$0xf] %v1232
  %1361 = vst [vmem:[%s3 + $0x50] sm:$0xf] %v1233
  %1362 = vst [vmem:[%s3 + $0x54] sm:$0xf] %v1234
  %1363 = vst [vmem:[%s3 + $0x58] sm:$0xf] %v1235
  %1364 = vst [vmem:[%s3 + $0x5c] sm:$0xf] %v1236
  %1365 = vst [vmem:[%s3 + $0x60] sm:$0xf] %v1237
  %1366 = vst [vmem:[%s3 + $0x64] sm:$0xf] %v1238
  %1367 = vst [vmem:[%s3 + $0x68] sm:$0xf] %v1239
  %1368 = vst [vmem:[%s3 + $0x6c] sm:$0xf] %v1240
  %1369 = vst [vmem:[%s3 + $0x70] sm:$0xf] %v1241
  %1370 = vst [vmem:[%s3 + $0x74] sm:$0xf] %v1242
  %1371 = vst [vmem:[%s3 + $0x78] sm:$0xf] %v1243
  %1372 = vst [vmem:[%s3 + $0x7c] sm:$0xf] %v1244
  %1373 = vst [vmem:[%s3 + $0x80] sm:$0xf] %v1245
  %1374 = vst [vmem:[%s3 + $0x84] sm:$0xf] %v1246
  %1375 = vst [vmem:[%s3 + $0x88] sm:$0xf] %v1247
  %1376 = vst [vmem:[%s3 + $0x8c] sm:$0xf] %v1248
  %1377 = vst [vmem:[%s3 + $0x90] sm:$0xf] %v1249
  %1378 = vst [vmem:[%s3 + $0x94] sm:$0xf] %v1250
  %1379 = vst [vmem:[%s3 + $0x98] sm:$0xf] %v1251
  %1380 = vst [vmem:[%s3 + $0x9c] sm:$0xf] %v1252
  %1381 = vst [vmem:[%s3 + $0xa0] sm:$0xf] %v1253
  %1382 = vst [vmem:[%s3 + $0xa4] sm:$0xf] %v1254
  %1383 = vst [vmem:[%s3 + $0xa8] sm:$0xf] %v1255
  %1384 = vst [vmem:[%s3 + $0xac] sm:$0xf] %v1256
  %1385 = vst [vmem:[%s3 + $0xb0] sm:$0xf] %v1257
  %1386 = vst [vmem:[%s3 + $0xb4] sm:$0xf] %v1258
  %1387 = vst [vmem:[%s3 + $0xb8] sm:$0xf] %v1259
  %1388 = vst [vmem:[%s3 + $0xbc] sm:$0xf] %v1260
  %1389 = vst [vmem:[%s3 + $0xc0] sm:$0xf] %v1261
  %1390 = vst [vmem:[%s3 + $0xc4] sm:$0xf] %v1262
  %1391 = vst [vmem:[%s3 + $0xc8] sm:$0xf] %v1263
  %1392 = vst [vmem:[%s3 + $0xcc] sm:$0xf] %v1264
  %1393 = vst [vmem:[%s3 + $0xd0] sm:$0xf] %v1265
  %1394 = vst [vmem:[%s3 + $0xd4] sm:$0xf] %v1266
  %1395 = vst [vmem:[%s3 + $0xd8] sm:$0xf] %v1267
  %1396 = vst [vmem:[%s3 + $0xdc] sm:$0xf] %v1268
  %1397 = vst [vmem:[%s3 + $0xe0] sm:$0xf] %v1269
  %1398 = vst [vmem:[%s3 + $0xe4] sm:$0xf] %v1270
  %1399 = vst [vmem:[%s3 + $0xe8] sm:$0xf] %v1271
  %1400 = vst [vmem:[%s3 + $0xec] sm:$0xf] %v1272
  %1401 = vst [vmem:[%s3 + $0xf0] sm:$0xf] %v1273
  %1402 = vst [vmem:[%s3 + $0xf4] sm:$0xf] %v1274
  %1403 = vst [vmem:[%s3 + $0xf8] sm:$0xf] %v1275
  %1404 = vst [vmem:[%s3 + $0xfc] sm:$0xf] %v1276
  // Predicated region
  $region14: #{spp_forward.2} parent=0 // pred_check
    _
  $region15: #{spp_forward.2} parent=0 // pred_check_branch
    %1406 = sbr.rel (0) target = $region17
  $region16: #{spp_forward.2} parent=0 // pred_region
    _
  $region17: #{spp_forward.2} parent=0 // pred_fallthru
    _
  // Predicated region
  $region18: #{spp_forward.2} parent=0 // pred_check
    _
  $region19: #{spp_forward.2} parent=0 // pred_check_branch
    %1408 = sbr.rel (0) target = $region21
  $region20: #{spp_forward.2} parent=0 // pred_region
    _
  $region21: #{spp_forward.2} parent=0 // pred_fallthru
    _

// kernel: spp_forward.3
$region0: #{spp_forward.3}
  #allocation0 [shape = 'u32[]', space=smem, size = 0x4, offset = 0x4, fixed_abs, tag = 'smem constant byte address 0x4 - core index']
  #allocation1 [shape = 'u32[144,128]{1,0:T(1,128)}', space=vmem, size = 0x12000, scoped, tag = 'internal scratch']
  #allocation2 [shape = 'f32[320,128]{1,0:T(8,128)}', space=vmem, size = 0x28000, scoped, tag = 'scratch operand']
  #allocation3 [shape = 'f32[256,128]{1,0:T(8,128)}', space=vmem, size = 0x20000, scoped, tag = 'scratch operand']
  %s0 = inlined_call_operand.vmem [shape: bf16[2,256,128], index: 0, kind: input, shape index: {}]
  %s1 = inlined_call_operand.vmem [shape: bf16[512,128], index: 1, kind: input, shape index: {}]
  %s2 = inlined_call_operand.vmem [shape: f32[1,128], index: 2, kind: input, shape index: {}]
  %s3 = inlined_call_operand.vmem [shape: f32[256,4], index: 3, kind: input, shape index: {}]
  %s4 = inlined_call_operand.vmem [shape: f32[2,256,128], index: 4, kind: output, shape index: {}]
  %s5 = sld [smem:[#allocation0]]
  $region49: #{spp_forward.3} parent=0
    _
  %s7 = ssub.s32 1, %s5
  %s8 = scalar_select 0, %s7, %s5
  loop: start=0, step=1, limit=4
  $region2: #{spp_forward.3} parent=0 // loop_pre_header
    _
  $region3: #{spp_forward.3} parent=0 // loop_header
    %s10 = sphi 0, %s14
    %p11 = scmp.ge.s32.totalorder %s10, 4
    %s20 = sphi 0, %s22
    %s23 = sphi 0, %s20
    %s24 = sphi 0, %s23
    %s40 = sphi 0, %s24
    %s44 = sphi 0, %s44
    %s46 = sphi 0, %s44
    %s47 = sphi 0, %s46
    %s61 = sphi 0, %s47
    %s65 = sphi 0, %s65
    %s67 = sphi 0, %s65
    %s68 = sphi 0, %s67
    %s82 = sphi 0, %s68
    %s86 = sphi 0, %s86
    %s88 = sphi 0, %s86
    %s89 = sphi 0, %s88
    %s103 = sphi 0, %s89
    %s109 = sphi 0, %s111
    %s112 = sphi 0, %s109
    %s113 = sphi 0, %s112
    %s129 = sphi 0, %s113
  $region4: #{spp_forward.3} parent=0 // loop_header_branch
    %13 = sbr.rel (%p11) target = $region8
  $region5: #{spp_forward.3} parent=0 // loop_body
    %s15 = ssub.s32 %s10, 1
    %s16 = ssub.s32 %s10, 2
    %s17 = sadd.s32 %s10, 1
    %s18 = ssub.s32 %s10, %s17
    %p19 = scmp.eq.s32.totalorder %s18, 0
    %s21 = sadd.s32 %s20, 1
    %s22 = scalar_select %p19, %s20, %s21
    %p25 = pneg %p19
    %p26 = scmp.eq.s32.totalorder %s10, 1
    %p27 = por %p25, %p26
    %p28 = scmp.ne.s32.totalorder %s20, %s23
    %p29 = scmp.eq.s32.totalorder %s10, 0
    %p30 = por %p28, %p29
    %p31 = scmp.ne.s32.totalorder %s20, %s23
    %p32 = scmp.eq.s32.totalorder %s15, 1
    %p33 = por %p31, %p32
    %p34 = scmp.ne.s32.totalorder %s23, %s24
    %p35 = scmp.eq.s32.totalorder %s15, 0
    %p36 = por %p34, %p35
    %p37 = scmp.ne.s32.totalorder %s23, %s24
    %p38 = scmp.eq.s32.totalorder %s16, 1
    %p39 = por %p37, %p38
    %p41 = scmp.ne.s32.totalorder %s24, %s40
    %p42 = scmp.eq.s32.totalorder %s16, 0
    %p43 = por %p41, %p42
    %s45 = sadd.s32 %s44, 1
    %p48 = scmp.eq.s32.totalorder %s10, 1
    %p49 = scmp.ne.s32.totalorder %s44, %s46
    %p50 = scmp.eq.s32.totalorder %s10, 0
    %p51 = por %p49, %p50
    %p52 = scmp.ne.s32.totalorder %s44, %s46
    %p53 = scmp.eq.s32.totalorder %s15, 1
    %p54 = por %p52, %p53
    %p55 = scmp.ne.s32.totalorder %s46, %s47
    %p56 = scmp.eq.s32.totalorder %s15, 0
    %p57 = por %p55, %p56
    %p58 = scmp.ne.s32.totalorder %s46, %s47
    %p59 = scmp.eq.s32.totalorder %s16, 1
    %p60 = por %p58, %p59
    %p62 = scmp.ne.s32.totalorder %s47, %s61
    %p63 = scmp.eq.s32.totalorder %s16, 0
    %p64 = por %p62, %p63
    %s66 = sadd.s32 %s65, 1
    %p69 = scmp.eq.s32.totalorder %s10, 1
    %p70 = scmp.ne.s32.totalorder %s65, %s67
    %p71 = scmp.eq.s32.totalorder %s10, 0
    %p72 = por %p70, %p71
    %p73 = scmp.ne.s32.totalorder %s65, %s67
    %p74 = scmp.eq.s32.totalorder %s15, 1
    %p75 = por %p73, %p74
    %p76 = scmp.ne.s32.totalorder %s67, %s68
    %p77 = scmp.eq.s32.totalorder %s15, 0
    %p78 = por %p76, %p77
    %p79 = scmp.ne.s32.totalorder %s67, %s68
    %p80 = scmp.eq.s32.totalorder %s16, 1
    %p81 = por %p79, %p80
    %p83 = scmp.ne.s32.totalorder %s68, %s82
    %p84 = scmp.eq.s32.totalorder %s16, 0
    %p85 = por %p83, %p84
    %s87 = sadd.s32 %s86, 1
    %p90 = scmp.eq.s32.totalorder %s10, 1
    %p91 = scmp.ne.s32.totalorder %s86, %s88
    %p92 = scmp.eq.s32.totalorder %s10, 0
    %p93 = por %p91, %p92
    %p94 = scmp.ne.s32.totalorder %s86, %s88
    %p95 = scmp.eq.s32.totalorder %s15, 1
    %p96 = por %p94, %p95
    %p97 = scmp.ne.s32.totalorder %s88, %s89
    %p98 = scmp.eq.s32.totalorder %s15, 0
    %p99 = por %p97, %p98
    %p100 = scmp.ne.s32.totalorder %s88, %s89
    %p101 = scmp.eq.s32.totalorder %s16, 1
    %p102 = por %p100, %p101
    %p104 = scmp.ne.s32.totalorder %s89, %s103
    %p105 = scmp.eq.s32.totalorder %s16, 0
    %p106 = por %p104, %p105
    %s107 = ssub.s32 %s10, %s17
    %p108 = scmp.eq.s32.totalorder %s107, 0
    %s110 = sadd.s32 %s109, 1
    %s111 = scalar_select %p108, %s109, %s110
    %p114 = pneg %p108
    %p115 = scmp.eq.s32.totalorder %s10, 1
    %p116 = por %p114, %p115
    %p117 = scmp.ne.s32.totalorder %s109, %s112
    %p118 = scmp.eq.s32.totalorder %s10, 0
    %p119 = por %p117, %p118
    %p120 = scmp.ne.s32.totalorder %s109, %s112
    %p121 = scmp.eq.s32.totalorder %s15, 1
    %p122 = por %p120, %p121
    %p123 = scmp.ne.s32.totalorder %s112, %s113
    %p124 = scmp.eq.s32.totalorder %s15, 0
    %p125 = por %p123, %p124
    %p126 = scmp.ne.s32.totalorder %s112, %s113
    %p127 = scmp.eq.s32.totalorder %s16, 1
    %p128 = por %p126, %p127
    %p130 = scmp.ne.s32.totalorder %s113, %s129
    %p131 = scmp.eq.s32.totalorder %s16, 0
    %p132 = por %p130, %p131
    %p133 = scmp.le.s32.totalorder 1, %s10
    %p134 = scmp.lt.s32.totalorder %s10, 3
    %p135 = pnand %p133, %p134
    %p136 = pneg %p135
    // Predicated region
    $region9: #{spp_forward.3} parent=5 // pred_check
      _
    $region10: #{spp_forward.3} parent=5 // pred_check_branch
      %138 = sbr.rel (%p135) target = $region12
    $region11: #{spp_forward.3} parent=5 // pred_region
      %s139 = ssub.s32 %s10, 1
      // Predicated region
      $region13: #{spp_forward.3} parent=11 // pred_check
        %p140 = pneg %p57
      $region14: #{spp_forward.3} parent=11 // pred_check_branch
        %142 = sbr.rel (%p140) target = $region16
      $region15: #{spp_forward.3} parent=11 // pred_region
        _
      $region16: #{spp_forward.3} parent=11 // pred_fallthru
        _
      // Predicated region
      $region17: #{spp_forward.3} parent=11 // pred_check
        %p143 = pneg %p78
      $region18: #{spp_forward.3} parent=11 // pred_check_branch
        %145 = sbr.rel (%p143) target = $region20
      $region19: #{spp_forward.3} parent=11 // pred_region
        _
      $region20: #{spp_forward.3} parent=11 // pred_fallthru
        _
      // Predicated region
      $region21: #{spp_forward.3} parent=11 // pred_check
        %p146 = pneg %p99
      $region22: #{spp_forward.3} parent=11 // pred_check_branch
        %148 = sbr.rel (%p146) target = $region24
      $region23: #{spp_forward.3} parent=11 // pred_region
        _
      $region24: #{spp_forward.3} parent=11 // pred_fallthru
        _
    $region12: #{spp_forward.3} parent=5 // pred_fallthru
      _
    %p149 = scmp.lt.s32.totalorder %s10, 2
    // Predicated region
    $region25: #{spp_forward.3} parent=5 // pred_check
      %p150 = pneg %p149
    $region26: #{spp_forward.3} parent=5 // pred_check_branch
      %152 = sbr.rel (%p150) target = $region28
    $region27: #{spp_forward.3} parent=5 // pred_region
      // Predicated region
      $region29: #{spp_forward.3} parent=27 // pred_check
        %p153 = pneg %p30
      $region30: #{spp_forward.3} parent=27 // pred_check_branch
        %155 = sbr.rel (%p153) target = $region32
      $region31: #{spp_forward.3} parent=27 // pred_region
        %p156 = scmp.lt.s32.totalorder %s10, 1
        %s157 = scalar_select %p156, %s10, 1
        %s158 = smul.addr %s157, 32
        %s159 = smul.addr %s158, 4
        %s160 = scalar_lea.vmem %s0, %s159
      $region32: #{spp_forward.3} parent=27 // pred_fallthru
        _
    $region28: #{spp_forward.3} parent=5 // pred_fallthru
      _
    %p161 = scmp.le.s32.totalorder 1, %s10
    %p162 = scmp.lt.s32.totalorder %s10, 3
    %p163 = pnand %p161, %p162
    %p164 = pneg %p163
    // Predicated region
    $region33: #{spp_forward.3} parent=5 // pred_check
      _
    $region34: #{spp_forward.3} parent=5 // pred_check_branch
      %166 = sbr.rel (%p163) target = $region36
    $region35: #{spp_forward.3} parent=5 // pred_region
      %s167 = ssub.s32 %s10, 1
      %p168 = scmp.lt.s32.totalorder %s15, 1
      %s169 = scalar_select %p168, %s15, 1
      %s170 = smul.addr %s169, 32
      %s171 = smul.addr %s170, 4
      %s172 = scalar_lea.vmem %s0, %s171
      %p173 = pneg %p36
      %p174 = pneg %p33
      %p175 = pneg %p57
      %p176 = pneg %p54
      %p177 = pneg %p78
      %p178 = pneg %p75
      %p179 = pneg %p99
      %p180 = pneg %p96
      %p181 = pneg %p125
      %p182 = pneg %p122
      %p183 = scmp.lt.s32.totalorder %s15, 1
      %s184 = scalar_select %p183, %s15, 1
      %s185 = smul.addr %s184, 32
      %s186 = smul.addr %s185, 8
      %s187 = scalar_lea.vmem %s4, %s186
      %p188 = scmp.lt.s32.totalorder %s15, 1
      %s189 = scalar_select %p188, %s15, 1
      %s190 = smul.addr %s189, 32
      %s191 = smul.addr %s190, 4
      %s192 = scalar_lea.vmem %s0, %s191
      %p193 = scmp.lt.s32.totalorder %s15, 1
      %s194 = scalar_select %p193, %s15, 1
      %s195 = smul.addr %s194, 32
      %s196 = smul.addr %s195, 8
      %s197 = scalar_lea.vmem %s4, %s196
      %v199 = vld [vmem:[%s192] sm:$0xf]
      %v200 = vld [vmem:[%s192 + $0x4] sm:$0xf]
      %v201 = vld [vmem:[%s192 + $0x8] sm:$0xf]
      %v202 = vld [vmem:[%s192 + $0xc] sm:$0xf]
      %v203 = vld [vmem:[%s192 + $0x10] sm:$0xf]
      %v204 = vld [vmem:[%s192 + $0x14] sm:$0xf]
      %v205 = vld [vmem:[%s192 + $0x18] sm:$0xf]
      %v206 = vld [vmem:[%s192 + $0x1c] sm:$0xf]
      %v207 = vld [vmem:[%s192 + $0x20] sm:$0xf]
      %v208 = vld [vmem:[%s192 + $0x24] sm:$0xf]
      %v209 = vld [vmem:[%s192 + $0x28] sm:$0xf]
      %v210 = vld [vmem:[%s192 + $0x2c] sm:$0xf]
      %v211 = vld [vmem:[%s192 + $0x30] sm:$0xf]
      %v212 = vld [vmem:[%s192 + $0x34] sm:$0xf]
      %v213 = vld [vmem:[%s192 + $0x38] sm:$0xf]
      %v214 = vld [vmem:[%s192 + $0x3c] sm:$0xf]
      %v215 = vld [vmem:[%s192 + $0x40] sm:$0xf]
      %v216 = vld [vmem:[%s192 + $0x44] sm:$0xf]
      %v217 = vld [vmem:[%s192 + $0x48] sm:$0xf]
      %v218 = vld [vmem:[%s192 + $0x4c] sm:$0xf]
      %v219 = vld [vmem:[%s192 + $0x50] sm:$0xf]
      %v220 = vld [vmem:[%s192 + $0x54] sm:$0xf]
      %v221 = vld [vmem:[%s192 + $0x58] sm:$0xf]
      %v222 = vld [vmem:[%s192 + $0x5c] sm:$0xf]
      %v223 = vld [vmem:[%s192 + $0x60] sm:$0xf]
      %v224 = vld [vmem:[%s192 + $0x64] sm:$0xf]
      %v225 = vld [vmem:[%s192 + $0x68] sm:$0xf]
      %v226 = vld [vmem:[%s192 + $0x6c] sm:$0xf]
      %v227 = vld [vmem:[%s192 + $0x70] sm:$0xf]
      %v228 = vld [vmem:[%s192 + $0x74] sm:$0xf]
      %v229 = vld [vmem:[%s192 + $0x78] sm:$0xf]
      %v230 = vld [vmem:[%s192 + $0x7c] sm:$0xf]
      %v231 = vld [vmem:[%s1] sm:$0xf]
      %v232 = vld [vmem:[%s1 + $0x4] sm:$0xf]
      %v233 = vld [vmem:[%s1 + $0x8] sm:$0xf]
      %v234 = vld [vmem:[%s1 + $0xc] sm:$0xf]
      %v235 = vld [vmem:[%s1 + $0x10] sm:$0xf]
      %v236 = vld [vmem:[%s1 + $0x14] sm:$0xf]
      %v237 = vld [vmem:[%s1 + $0x18] sm:$0xf]
      %v238 = vld [vmem:[%s1 + $0x1c] sm:$0xf]
      %v239 = vld [vmem:[%s1 + $0x20] sm:$0xf]
      %v240 = vld [vmem:[%s1 + $0x24] sm:$0xf]
      %v241 = vld [vmem:[%s1 + $0x28] sm:$0xf]
      %v242 = vld [vmem:[%s1 + $0x2c] sm:$0xf]
      %v243 = vld [vmem:[%s1 + $0x30] sm:$0xf]
      %v244 = vld [vmem:[%s1 + $0x34] sm:$0xf]
      %v245 = vld [vmem:[%s1 + $0x38] sm:$0xf]
      %v246 = vld [vmem:[%s1 + $0x3c] sm:$0xf]
      %v279 = vunpack.c.l.b16 %v199
      %v280 = vunpack.c.l.b16 %v200
      %v281 = vunpack.c.l.b16 %v201
      %v282 = vunpack.c.l.b16 %v202
      %v283 = vunpack.c.l.b16 %v203
      %v284 = vunpack.c.l.b16 %v204
      %v285 = vunpack.c.l.b16 %v205
      %v286 = vunpack.c.l.b16 %v206
      %v287 = vunpack.c.l.b16 %v207
      %v288 = vunpack.c.l.b16 %v208
      %v289 = vunpack.c.l.b16 %v209
      %v290 = vunpack.c.l.b16 %v210
      %v291 = vunpack.c.l.b16 %v211
      %v292 = vunpack.c.l.b16 %v212
      %v293 = vunpack.c.l.b16 %v213
      %v294 = vunpack.c.l.b16 %v214
      %v295 = vunpack.c.l.b16 %v215
      %v296 = vunpack.c.l.b16 %v216
      %v297 = vunpack.c.l.b16 %v217
      %v298 = vunpack.c.l.b16 %v218
      %v299 = vunpack.c.l.b16 %v219
      %v300 = vunpack.c.l.b16 %v220
      %v301 = vunpack.c.l.b16 %v221
      %v302 = vunpack.c.l.b16 %v222
      %v303 = vunpack.c.l.b16 %v223
      %v304 = vunpack.c.l.b16 %v224
      %v305 = vunpack.c.l.b16 %v225
      %v306 = vunpack.c.l.b16 %v226
      %v307 = vunpack.c.l.b16 %v227
      %v308 = vunpack.c.l.b16 %v228
      %v309 = vunpack.c.l.b16 %v229
      %v310 = vunpack.c.l.b16 %v230
      %v311 = vpack.c.b16 %v280, %v279
      %v312 = vpack.c.b16 %v282, %v281
      %v313 = vpack.c.b16 %v284, %v283
      %v314 = vpack.c.b16 %v286, %v285
      %v315 = vpack.c.b16 %v288, %v287
      %v316 = vpack.c.b16 %v290, %v289
      %v317 = vpack.c.b16 %v292, %v291
      %v318 = vpack.c.b16 %v294, %v293
      %v319 = vpack.c.b16 %v296, %v295
      %v320 = vpack.c.b16 %v298, %v297
      %v321 = vpack.c.b16 %v300, %v299
      %v322 = vpack.c.b16 %v302, %v301
      %v323 = vpack.c.b16 %v304, %v303
      %v324 = vpack.c.b16 %v306, %v305
      %v325 = vpack.c.b16 %v308, %v307
      %v326 = vpack.c.b16 %v310, %v309
      %v359 = vunpack.c.l.b16 %v231
      %v360 = vunpack.c.l.b16 %v232
      %v361 = vunpack.c.l.b16 %v233
      %v362 = vunpack.c.l.b16 %v234
      %v363 = vunpack.c.l.b16 %v235
      %v364 = vunpack.c.l.b16 %v236
      %v365 = vunpack.c.l.b16 %v237
      %v366 = vunpack.c.l.b16 %v238
      %v367 = vunpack.c.l.b16 %v239
      %v368 = vunpack.c.l.b16 %v240
      %v369 = vunpack.c.l.b16 %v241
      %v370 = vunpack.c.l.b16 %v242
      %v371 = vunpack.c.l.b16 %v243
      %v372 = vunpack.c.l.b16 %v244
      %v373 = vunpack.c.l.b16 %v245
      %v374 = vunpack.c.l.b16 %v246
      %v375 = vpack.c.b16 %v360, %v359
      %v376 = vpack.c.b16 %v362, %v361
      %v377 = vpack.c.b16 %v364, %v363
      %v378 = vpack.c.b16 %v366, %v365
      %v379 = vpack.c.b16 %v368, %v367
      %v380 = vpack.c.b16 %v370, %v369
      %v381 = vpack.c.b16 %v372, %v371
      %v382 = vpack.c.b16 %v374, %v373
      %391 = vmatprep.subr.bf16.mxu0 0
      %392 = vmatpush1.bf16.msra.mxu0 %v375
      %393 = vmatprep.subr.bf16.mxu0 0
      %394 = vmatpush1.bf16.msra.mxu0 %v376
      %395 = vmatprep.subr.bf16.mxu0 0
      %396 = vmatpush1.bf16.msra.mxu0 %v377
      %397 = vmatprep.subr.bf16.mxu0 0
      %398 = vmatpush1.bf16.msra.mxu0 %v378
      %399 = vmatprep.subr.bf16.mxu0 0
      %400 = vmatpush1.bf16.msra.mxu0 %v379
      %401 = vmatprep.subr.bf16.mxu0 0
      %402 = vmatpush1.bf16.msra.mxu0 %v380
      %403 = vmatprep.subr.bf16.mxu0 0
      %404 = vmatpush1.bf16.msra.mxu0 %v381
      %405 = vmatprep.subr.bf16.mxu0 0
      %406 = vmatpush1.bf16.msra.mxu0 %v382
      %407 = vmatprep.subr.bf16.mxu0 0
      %408 = vmatpush1.bf16.msra.mxu0 0
      %409 = vmatprep.subr.bf16.mxu0 0
      %410 = vmatpush1.bf16.msra.mxu0 0
      %411 = vmatprep.subr.bf16.mxu0 0
      %412 = vmatpush1.bf16.msra.mxu0 0
      %413 = vmatprep.subr.bf16.mxu0 0
      %414 = vmatpush1.bf16.msra.mxu0 0
      %415 = vmatprep.subr.bf16.mxu0 0
      %416 = vmatpush1.bf16.msra.mxu0 0
      %417 = vmatprep.subr.bf16.mxu0 0
      %418 = vmatpush1.bf16.msra.mxu0 0
      %419 = vmatprep.subr.bf16.mxu0 0
      %420 = vmatpush1.bf16.msra.mxu0 0
      %421 = vmatprep.subr.bf16.mxu0 0
      %422 = vmatpush1.bf16.msra.mxu0 0
      %423 = vmatprep.mubr.bf16.mxu0 0
      %424 = vmatmul.mubr.bf16.gmra.mrb[0].mxu0 %v311
      %v425 = vpop.f32.mrb[0].mxu0
      %v426 = vadd.f32 0.0, %v425
      %v427 = vpop.f32.mrb[0].mxu0
      %v428 = vpop.f32.mrb[0].mxu0
      %v429 = vadd.f32 0.0, %v428
      %v430 = vpop.f32.mrb[0].mxu0
      %431 = vmatprep.mubr.bf16.mxu0 0
      %432 = vmatmul.mubr.bf16.gmra.mrb[0].mxu0 %v312
      %v433 = vpop.f32.mrb[0].mxu0
      %v434 = vadd.f32 0.0, %v433
      %v435 = vpop.f32.mrb[0].mxu0
      %v436 = vpop.f32.mrb[0].mxu0
      %v437 = vadd.f32 0.0, %v436
      %v438 = vpop.f32.mrb[0].mxu0
      %439 = vmatprep.mubr.bf16.mxu0 0
      %440 = vmatmul.mubr.bf16.gmra.mrb[0].mxu0 %v313
      %v441 = vpop.f32.mrb[0].mxu0
      %v442 = vadd.f32 0.0, %v441
      %v443 = vpop.f32.mrb[0].mxu0
      %v444 = vpop.f32.mrb[0].mxu0
      %v445 = vadd.f32 0.0, %v444
      %v446 = vpop.f32.mrb[0].mxu0
      %447 = vmatprep.mubr.bf16.mxu0 0
      %448 = vmatmul.mubr.bf16.gmra.mrb[0].mxu0 %v314
      %v449 = vpop.f32.mrb[0].mxu0
      %v450 = vadd.f32 0.0, %v449
      %v451 = vpop.f32.mrb[0].mxu0
      %v452 = vpop.f32.mrb[0].mxu0
      %v453 = vadd.f32 0.0, %v452
      %v454 = vpop.f32.mrb[0].mxu0
      %455 = vmatprep.mubr.bf16.mxu0 0
      %456 = vmatmul.mubr.bf16.gmra.mrb[0].mxu0 %v315
      %v457 = vpop.f32.mrb[0].mxu0
      %v458 = vadd.f32 0.0, %v457
      %v459 = vpop.f32.mrb[0].mxu0
      %v460 = vpop.f32.mrb[0].mxu0
      %v461 = vadd.f32 0.0, %v460
      %v462 = vpop.f32.mrb[0].mxu0
      %463 = vmatprep.mubr.bf16.mxu0 0
      %464 = vmatmul.mubr.bf16.gmra.mrb[0].mxu0 %v316
      %v465 = vpop.f32.mrb[0].mxu0
      %v466 = vadd.f32 0.0, %v465
      %v467 = vpop.f32.mrb[0].mxu0
      %v468 = vpop.f32.mrb[0].mxu0
      %v469 = vadd.f32 0.0, %v468
      %v470 = vpop.f32.mrb[0].mxu0
      %471 = vmatprep.mubr.bf16.mxu0 0
      %472 = vmatmul.mubr.bf16.gmra.mrb[0].mxu0 %v317
      %v473 = vpop.f32.mrb[0].mxu0
      %v474 = vadd.f32 0.0, %v473
      %v475 = vpop.f32.mrb[0].mxu0
      %v476 = vpop.f32.mrb[0].mxu0
      %v477 = vadd.f32 0.0, %v476
      %v478 = vpop.f32.mrb[0].mxu0
      %479 = vmatprep.mubr.bf16.mxu0 0
      %480 = vmatmul.mubr.bf16.gmra.mrb[0].mxu0 %v318
      %v481 = vpop.f32.mrb[0].mxu0
      %v482 = vadd.f32 0.0, %v481
      %v483 = vpop.f32.mrb[0].mxu0
      %v484 = vpop.f32.mrb[0].mxu0
      %v485 = vadd.f32 0.0, %v484
      %v486 = vpop.f32.mrb[0].mxu0
      %487 = vmatprep.mubr.bf16.mxu0 0
      %488 = vmatmul.mubr.bf16.gmra.mrb[0].mxu0 %v319
      %v489 = vpop.f32.mrb[0].mxu0
      %v490 = vadd.f32 0.0, %v489
      %v491 = vpop.f32.mrb[0].mxu0
      %v492 = vpop.f32.mrb[0].mxu0
      %v493 = vadd.f32 0.0, %v492
      %v494 = vpop.f32.mrb[0].mxu0
      %495 = vmatprep.mubr.bf16.mxu0 0
      %496 = vmatmul.mubr.bf16.gmra.mrb[0].mxu0 %v320
      %v497 = vpop.f32.mrb[0].mxu0
      %v498 = vadd.f32 0.0, %v497
      %v499 = vpop.f32.mrb[0].mxu0
      %v500 = vpop.f32.mrb[0].mxu0
      %v501 = vadd.f32 0.0, %v500
      %v502 = vpop.f32.mrb[0].mxu0
      %503 = vmatprep.mubr.bf16.mxu0 0
      %504 = vmatmul.mubr.bf16.gmra.mrb[0].mxu0 %v321
      %v505 = vpop.f32.mrb[0].mxu0
      %v506 = vadd.f32 0.0, %v505
      %v507 = vpop.f32.mrb[0].mxu0
      %v508 = vpop.f32.mrb[0].mxu0
      %v509 = vadd.f32 0.0, %v508
      %v510 = vpop.f32.mrb[0].mxu0
      %511 = vmatprep.mubr.bf16.mxu0 0
      %512 = vmatmul.mubr.bf16.gmra.mrb[0].mxu0 %v322
      %v513 = vpop.f32.mrb[0].mxu0
      %v514 = vadd.f32 0.0, %v513
      %v515 = vpop.f32.mrb[0].mxu0
      %v516 = vpop.f32.mrb[0].mxu0
      %v517 = vadd.f32 0.0, %v516
      %v518 = vpop.f32.mrb[0].mxu0
      %519 = vmatprep.mubr.bf16.mxu0 0
      %520 = vmatmul.mubr.bf16.gmra.mrb[0].mxu0 %v323
      %v521 = vpop.f32.mrb[0].mxu0
      %v522 = vadd.f32 0.0, %v521
      %v523 = vpop.f32.mrb[0].mxu0
      %v524 = vpop.f32.mrb[0].mxu0
      %v525 = vadd.f32 0.0, %v524
      %v526 = vpop.f32.mrb[0].mxu0
      %527 = vmatprep.mubr.bf16.mxu0 0
      %528 = vmatmul.mubr.bf16.gmra.mrb[0].mxu0 %v324
      %v529 = vpop.f32.mrb[0].mxu0
      %v530 = vadd.f32 0.0, %v529
      %v531 = vpop.f32.mrb[0].mxu0
      %v532 = vpop.f32.mrb[0].mxu0
      %v533 = vadd.f32 0.0, %v532
      %v534 = vpop.f32.mrb[0].mxu0
      %535 = vmatprep.mubr.bf16.mxu0 0
      %536 = vmatmul.mubr.bf16.gmra.mrb[0].mxu0 %v325
      %v537 = vpop.f32.mrb[0].mxu0
      %v538 = vadd.f32 0.0, %v537
      %v539 = vpop.f32.mrb[0].mxu0
      %v540 = vpop.f32.mrb[0].mxu0
      %v541 = vadd.f32 0.0, %v540
      %v542 = vpop.f32.mrb[0].mxu0
      %543 = vmatprep.mubr.bf16.mxu0 0
      %544 = vmatmul.mubr.bf16.gmra.mrb[0].mxu0 %v326
      %v545 = vpop.f32.mrb[0].mxu0
      %v546 = vadd.f32 0.0, %v545
      %v547 = vpop.f32.mrb[0].mxu0
      %v548 = vpop.f32.mrb[0].mxu0
      %v549 = vadd.f32 0.0, %v548
      %v550 = vpop.f32.mrb[0].mxu0
      %551 = vdwg.mxu0
      %552 = vst [vmem:[#allocation3] sm:$0xff] %v426
      %553 = vst [vmem:[#allocation3 + $0x8] sm:$0xff] %v429
      %554 = vst [vmem:[#allocation3 + $0x10] sm:$0xff] %v434
      %555 = vst [vmem:[#allocation3 + $0x18] sm:$0xff] %v437
      %556 = vst [vmem:[#allocation3 + $0x20] sm:$0xff] %v442
      %557 = vst [vmem:[#allocation3 + $0x28] sm:$0xff] %v445
      %558 = vst [vmem:[#allocation3 + $0x30] sm:$0xff] %v450
      %559 = vst [vmem:[#allocation3 + $0x38] sm:$0xff] %v453
      %560 = vst [vmem:[#allocation3 + $0x40] sm:$0xff] %v458
      %561 = vst [vmem:[#allocation3 + $0x48] sm:$0xff] %v461
      %562 = vst [vmem:[#allocation3 + $0x50] sm:$0xff] %v466
      %563 = vst [vmem:[#allocation3 + $0x58] sm:$0xff] %v469
      %564 = vst [vmem:[#allocation3 + $0x60] sm:$0xff] %v474
      %565 = vst [vmem:[#allocation3 + $0x68] sm:$0xff] %v477
      %566 = vst [vmem:[#allocation3 + $0x70] sm:$0xff] %v482
      %567 = vst [vmem:[#allocation3 + $0x78] sm:$0xff] %v485
      %568 = vst [vmem:[#allocation3 + $0x80] sm:$0xff] %v490
      %569 = vst [vmem:[#allocation3 + $0x88] sm:$0xff] %v493
      %570 = vst [vmem:[#allocation3 + $0x90] sm:$0xff] %v498
      %571 = vst [vmem:[#allocation3 + $0x98] sm:$0xff] %v501
      %572 = vst [vmem:[#allocation3 + $0xa0] sm:$0xff] %v506
      %573 = vst [vmem:[#allocation3 + $0xa8] sm:$0xff] %v509
      %574 = vst [vmem:[#allocation3 + $0xb0] sm:$0xff] %v514
      %575 = vst [vmem:[#allocation3 + $0xb8] sm:$0xff] %v517
      %576 = vst [vmem:[#allocation3 + $0xc0] sm:$0xff] %v522
      %577 = vst [vmem:[#allocation3 + $0xc8] sm:$0xff] %v525
      %578 = vst [vmem:[#allocation3 + $0xd0] sm:$0xff] %v530
      %579 = vst [vmem:[#allocation3 + $0xd8] sm:$0xff] %v533
      %580 = vst [vmem:[#allocation3 + $0xe0] sm:$0xff] %v538
      %581 = vst [vmem:[#allocation3 + $0xe8] sm:$0xff] %v541
      %582 = vst [vmem:[#allocation3 + $0xf0] sm:$0xff] %v546
      %583 = vst [vmem:[#allocation3 + $0xf8] sm:$0xff] %v549
      %584 = vst [vmem:[#allocation2] sm:$0xff] -inf
      %585 = vst [vmem:[#allocation2 + $0x8] sm:$0xff] -inf
      %586 = vst [vmem:[#allocation2 + $0x10] sm:$0xff] -inf
      %587 = vst [vmem:[#allocation2 + $0x18] sm:$0xff] -inf
      %588 = vst [vmem:[#allocation2 + $0x20] sm:$0xff] -inf
      %589 = vst [vmem:[#allocation2 + $0x28] sm:$0xff] -inf
      %590 = vst [vmem:[#allocation2 + $0x30] sm:$0xff] -inf
      %591 = vst [vmem:[#allocation2 + $0x38] sm:$0xff] -inf
      %592 = vst [vmem:[#allocation2 + $0x40] sm:$0xff] -inf
      %593 = vst [vmem:[#allocation2 + $0x48] sm:$0xff] -inf
      %594 = vst [vmem:[#allocation2 + $0x50] sm:$0xff] -inf
      %595 = vst [vmem:[#allocation2 + $0x58] sm:$0xff] -inf
      %596 = vst [vmem:[#allocation2 + $0x60] sm:$0xff] -inf
      %597 = vst [vmem:[#allocation2 + $0x68] sm:$0xff] -inf
      %598 = vst [vmem:[#allocation2 + $0x70] sm:$0xff] -inf
      %599 = vst [vmem:[#allocation2 + $0x78] sm:$0xff] -inf
      %600 = vst [vmem:[#allocation2 + $0x80] sm:$0xff] -inf
      %601 = vst [vmem:[#allocation2 + $0x88] sm:$0xff] -inf
      %602 = vst [vmem:[#allocation2 + $0x90] sm:$0xff] -inf
      %603 = vst [vmem:[#allocation2 + $0x98] sm:$0xff] -inf
      %604 = vst [vmem:[#allocation2 + $0xa0] sm:$0xff] -inf
      %605 = vst [vmem:[#allocation2 + $0xa8] sm:$0xff] -inf
      %606 = vst [vmem:[#allocation2 + $0xb0] sm:$0xff] -inf
      %607 = vst [vmem:[#allocation2 + $0xb8] sm:$0xff] -inf
      %608 = vst [vmem:[#allocation2 + $0xc0] sm:$0xff] -inf
      %609 = vst [vmem:[#allocation2 + $0xc8] sm:$0xff] -inf
      %610 = vst [vmem:[#allocation2 + $0xd0] sm:$0xff] -inf
      %611 = vst [vmem:[#allocation2 + $0xd8] sm:$0xff] -inf
      %612 = vst [vmem:[#allocation2 + $0xe0] sm:$0xff] -inf
      %613 = vst [vmem:[#allocation2 + $0xe8] sm:$0xff] -inf
      %614 = vst [vmem:[#allocation2 + $0xf0] sm:$0xff] -inf
      %615 = vst [vmem:[#allocation2 + $0xf8] sm:$0xff] -inf
      %616 = vst [vmem:[#allocation2 + $0x100] sm:$0xff] -inf
      %617 = vst [vmem:[#allocation2 + $0x108] sm:$0xff] -inf
      %618 = vst [vmem:[#allocation2 + $0x110] sm:$0xff] -inf
      %619 = vst [vmem:[#allocation2 + $0x118] sm:$0xff] -inf
      %620 = vst [vmem:[#allocation2 + $0x120] sm:$0xff] -inf
      %621 = vst [vmem:[#allocation2 + $0x128] sm:$0xff] -inf
      %622 = vst [vmem:[#allocation2 + $0x130] sm:$0xff] -inf
      %623 = vst [vmem:[#allocation2 + $0x138] sm:$0xff] -inf
      %v624 = vunpack.c.l.bf16 %v199
      %v625 = vunpack.c.l.bf16 %v200
      %v626 = vunpack.c.l.bf16 %v201
      %v627 = vunpack.c.l.bf16 %v202
      %v628 = vunpack.c.l.bf16 %v203
      %v629 = vunpack.c.l.bf16 %v204
      %v630 = vunpack.c.l.bf16 %v205
      %v631 = vunpack.c.l.bf16 %v206
      %v632 = vunpack.c.l.bf16 %v207
      %v633 = vunpack.c.l.bf16 %v208
      %v634 = vunpack.c.l.bf16 %v209
      %v635 = vunpack.c.l.bf16 %v210
      %v636 = vunpack.c.l.bf16 %v211
      %v637 = vunpack.c.l.bf16 %v212
      %v638 = vunpack.c.l.bf16 %v213
      %v639 = vunpack.c.l.bf16 %v214
      %v640 = vunpack.c.l.bf16 %v215
      %v641 = vunpack.c.l.bf16 %v216
      %v642 = vunpack.c.l.bf16 %v217
      %v643 = vunpack.c.l.bf16 %v218
      %v644 = vunpack.c.l.bf16 %v219
      %v645 = vunpack.c.l.bf16 %v220
      %v646 = vunpack.c.l.bf16 %v221
      %v647 = vunpack.c.l.bf16 %v222
      %v648 = vunpack.c.l.bf16 %v223
      %v649 = vunpack.c.l.bf16 %v224
      %v650 = vunpack.c.l.bf16 %v225
      %v651 = vunpack.c.l.bf16 %v226
      %v652 = vunpack.c.l.bf16 %v227
      %v653 = vunpack.c.l.bf16 %v228
      %v654 = vunpack.c.l.bf16 %v229
      %v655 = vunpack.c.l.bf16 %v230
      %656 = vst [vmem:[#allocation2 + $0x20] sm:$0xff] %v624
      %657 = vst [vmem:[#allocation2 + $0x28] sm:$0xff] %v625
      %658 = vst [vmem:[#allocation2 + $0x30] sm:$0xff] %v626
      %659 = vst [vmem:[#allocation2 + $0x38] sm:$0xff] %v627
      %660 = vst [vmem:[#allocation2 + $0x40] sm:$0xff] %v628
      %661 = vst [vmem:[#allocation2 + $0x48] sm:$0xff] %v629
      %662 = vst [vmem:[#allocation2 + $0x50] sm:$0xff] %v630
      %663 = vst [vmem:[#allocation2 + $0x58] sm:$0xff] %v631
      %664 = vst [vmem:[#allocation2 + $0x60] sm:$0xff] %v632
      %665 = vst [vmem:[#allocation2 + $0x68] sm:$0xff] %v633
      %666 = vst [vmem:[#allocation2 + $0x70] sm:$0xff] %v634
      %667 = vst [vmem:[#allocation2 + $0x78] sm:$0xff] %v635
      %668 = vst [vmem:[#allocation2 + $0x80] sm:$0xff] %v636
      %669 = vst [vmem:[#allocation2 + $0x88] sm:$0xff] %v637
      %670 = vst [vmem:[#allocation2 + $0x90] sm:$0xff] %v638
      %671 = vst [vmem:[#allocation2 + $0x98] sm:$0xff] %v639
      %672 = vst [vmem:[#allocation2 + $0xa0] sm:$0xff] %v640
      %673 = vst [vmem:[#allocation2 + $0xa8] sm:$0xff] %v641
      %674 = vst [vmem:[#allocation2 + $0xb0] sm:$0xff] %v642
      %675 = vst [vmem:[#allocation2 + $0xb8] sm:$0xff] %v643
      %676 = vst [vmem:[#allocation2 + $0xc0] sm:$0xff] %v644
      %677 = vst [vmem:[#allocation2 + $0xc8] sm:$0xff] %v645
      %678 = vst [vmem:[#allocation2 + $0xd0] sm:$0xff] %v646
      %679 = vst [vmem:[#allocation2 + $0xd8] sm:$0xff] %v647
      %680 = vst [vmem:[#allocation2 + $0xe0] sm:$0xff] %v648
      %681 = vst [vmem:[#allocation2 + $0xe8] sm:$0xff] %v649
      %682 = vst [vmem:[#allocation2 + $0xf0] sm:$0xff] %v650
      %683 = vst [vmem:[#allocation2 + $0xf8] sm:$0xff] %v651
      %684 = vst [vmem:[#allocation2 + $0x100] sm:$0xff] %v652
      %685 = vst [vmem:[#allocation2 + $0x108] sm:$0xff] %v653
      %686 = vst [vmem:[#allocation2 + $0x110] sm:$0xff] %v654
      %687 = vst [vmem:[#allocation2 + $0x118] sm:$0xff] %v655
      %v688 = vld [vmem:[#allocation2 + $0x20] sm:$0xff]
      %v689 = vld [vmem:[#allocation2 + $0x28] sm:$0xff]
      %v690 = vld [vmem:[#allocation2 + $0x30] sm:$0xff]
      %v691 = vld [vmem:[#allocation2 + $0x38] sm:$0xff]
      %v692 = vld [vmem:[#allocation2 + $0x40] sm:$0xff]
      %v693 = vld [vmem:[#allocation2 + $0x48] sm:$0xff]
      %v694 = vld [vmem:[#allocation2 + $0x50] sm:$0xff]
      %v695 = vld [vmem:[#allocation2 + $0x58] sm:$0xff]
      %v696 = vld [vmem:[#allocation2 + $0x60] sm:$0xff]
      %v697 = vld [vmem:[#allocation2 + $0x68] sm:$0xff]
      %v698 = vld [vmem:[#allocation2 + $0x70] sm:$0xff]
      %v699 = vld [vmem:[#allocation2 + $0x78] sm:$0xff]
      %v700 = vld [vmem:[#allocation2 + $0x80] sm:$0xff]
      %v701 = vld [vmem:[#allocation2 + $0x88] sm:$0xff]
      %v702 = vld [vmem:[#allocation2 + $0x90] sm:$0xff]
      %v703 = vld [vmem:[#allocation2 + $0x98] sm:$0xff]
      %v704 = vld [vmem:[#allocation2 + $0xa0] sm:$0xff]
      %v705 = vld [vmem:[#allocation2 + $0xa8] sm:$0xff]
      %v706 = vld [vmem:[#allocation2 + $0xb0] sm:$0xff]
      %v707 = vld [vmem:[#allocation2 + $0xb8] sm:$0xff]
      %v708 = vld [vmem:[#allocation2 + $0xc0] sm:$0xff]
      %v709 = vld [vmem:[#allocation2 + $0xc8] sm:$0xff]
      %v710 = vld [vmem:[#allocation2 + $0xd0] sm:$0xff]
      %v711 = vld [vmem:[#allocation2 + $0xd8] sm:$0xff]
      %v712 = vld [vmem:[#allocation2 + $0xe0] sm:$0xff]
      %v713 = vld [vmem:[#allocation2 + $0xe8] sm:$0xff]
      %v714 = vld [vmem:[#allocation2 + $0xf0] sm:$0xff]
      %v715 = vld [vmem:[#allocation2 + $0xf8] sm:$0xff]
      %v716 = vld [vmem:[#allocation2 + $0x100] sm:$0xff]
      %v717 = vld [vmem:[#allocation2 + $0x108] sm:$0xff]
      %v718 = vld [vmem:[#allocation2 + $0x110] sm:$0xff]
      %v719 = vld [vmem:[#allocation2 + $0x118] sm:$0xff]
      %v720 = vld [vmem:[#allocation2] sm:$0xff]
      %v721 = vld [vmem:[#allocation2 + $0x8] sm:$0xff]
      %v722 = vld [vmem:[#allocation2 + $0x10] sm:$0xff]
      %v723 = vld [vmem:[#allocation2 + $0x18] sm:$0xff]
      %v724 = vmax.f32 %v688, %v720
      %v725 = vmax.f32 %v689, %v721
      %v726 = vmax.f32 %v690, %v722
      %v727 = vmax.f32 %v691, %v723
      %v728 = vmax.f32 %v692, %v688
      %v729 = vmax.f32 %v693, %v689
      %v730 = vmax.f32 %v694, %v690
      %v731 = vmax.f32 %v695, %v691
      %v732 = vmax.f32 %v696, %v692
      %v733 = vmax.f32 %v697, %v693
      %v734 = vmax.f32 %v698, %v694
      %v735 = vmax.f32 %v699, %v695
      %v736 = vmax.f32 %v700, %v696
      %v737 = vmax.f32 %v701, %v697
      %v738 = vmax.f32 %v702, %v698
      %v739 = vmax.f32 %v703, %v699
      %v740 = vmax.f32 %v704, %v700
      %v741 = vmax.f32 %v705, %v701
      %v742 = vmax.f32 %v706, %v702
      %v743 = vmax.f32 %v707, %v703
      %v744 = vmax.f32 %v708, %v704
      %v745 = vmax.f32 %v709, %v705
      %v746 = vmax.f32 %v710, %v706
      %v747 = vmax.f32 %v711, %v707
      %v748 = vmax.f32 %v712, %v708
      %v749 = vmax.f32 %v713, %v709
      %v750 = vmax.f32 %v714, %v710
      %v751 = vmax.f32 %v715, %v711
      %v752 = vmax.f32 %v716, %v712
      %v753 = vmax.f32 %v717, %v713
      %v754 = vmax.f32 %v718, %v714
      %v755 = vmax.f32 %v719, %v715
      %v756 = vmax.f32 %v724, %v722
      %v757 = vmax.f32 %v725, %v723
      %v758 = vmax.f32 %v726, %v688
      %v759 = vmax.f32 %v727, %v689
      %v760 = vmax.f32 %v728, %v690
      %v761 = vmax.f32 %v729, %v691
      %v762 = vmax.f32 %v730, %v692
      %v763 = vmax.f32 %v731, %v693
      %v764 = vmax.f32 %v732, %v694
      %v765 = vmax.f32 %v733, %v695
      %v766 = vmax.f32 %v734, %v696
      %v767 = vmax.f32 %v735, %v697
      %v768 = vmax.f32 %v736, %v698
      %v769 = vmax.f32 %v737, %v699
      %v770 = vmax.f32 %v738, %v700
      %v771 = vmax.f32 %v739, %v701
      %v772 = vmax.f32 %v740, %v702
      %v773 = vmax.f32 %v741, %v703
      %v774 = vmax.f32 %v742, %v704
      %v775 = vmax.f32 %v743, %v705
      %v776 = vmax.f32 %v744, %v706
      %v777 = vmax.f32 %v745, %v707
      %v778 = vmax.f32 %v746, %v708
      %v779 = vmax.f32 %v747, %v709
      %v780 = vmax.f32 %v748, %v710
      %v781 = vmax.f32 %v749, %v711
      %v782 = vmax.f32 %v750, %v712
      %v783 = vmax.f32 %v751, %v713
      %v784 = vmax.f32 %v752, %v714
      %v785 = vmax.f32 %v753, %v715
      %v786 = vmax.f32 %v754, %v716
      %v787 = vmax.f32 %v755, %v717
      %v788 = vld [vmem:[#allocation2 + $0x120] sm:$0xff]
      %v789 = vld [vmem:[#allocation2 + $0x128] sm:$0xff]
      %v790 = vmax.f32 %v756, %v690
      %v791 = vmax.f32 %v757, %v691
      %v792 = vmax.f32 %v758, %v692
      %v793 = vmax.f32 %v759, %v693
      %v794 = vmax.f32 %v760, %v694
      %v795 = vmax.f32 %v761, %v695
      %v796 = vmax.f32 %v762, %v696
      %v797 = vmax.f32 %v763, %v697
      %v798 = vmax.f32 %v764, %v698
      %v799 = vmax.f32 %v765, %v699
      %v800 = vmax.f32 %v766, %v700
      %v801 = vmax.f32 %v767, %v701
      %v802 = vmax.f32 %v768, %v702
      %v803 = vmax.f32 %v769, %v703
      %v804 = vmax.f32 %v770, %v704
      %v805 = vmax.f32 %v771, %v705
      %v806 = vmax.f32 %v772, %v706
      %v807 = vmax.f32 %v773, %v707
      %v808 = vmax.f32 %v774, %v708
      %v809 = vmax.f32 %v775, %v709
      %v810 = vmax.f32 %v776, %v710
      %v811 = vmax.f32 %v777, %v711
      %v812 = vmax.f32 %v778, %v712
      %v813 = vmax.f32 %v779, %v713
      %v814 = vmax.f32 %v780, %v714
      %v815 = vmax.f32 %v781, %v715
      %v816 = vmax.f32 %v782, %v716
      %v817 = vmax.f32 %v783, %v717
      %v818 = vmax.f32 %v784, %v718
      %v819 = vmax.f32 %v785, %v719
      %v820 = vmax.f32 %v786, %v788
      %v821 = vmax.f32 %v787, %v789
      %v822 = vld [vmem:[#allocation2 + $0x40] sm:$0xff]
      %v823 = vld [vmem:[#allocation2 + $0x48] sm:$0xff]
      %v824 = vld [vmem:[#allocation2 + $0x50] sm:$0xff]
      %v825 = vld [vmem:[#allocation2 + $0x58] sm:$0xff]
      %v826 = vld [vmem:[#allocation2 + $0x60] sm:$0xff]
      %v827 = vld [vmem:[#allocation2 + $0x68] sm:$0xff]
      %v828 = vld [vmem:[#allocation2 + $0x70] sm:$0xff]
      %v829 = vld [vmem:[#allocation2 + $0x78] sm:$0xff]
      %v830 = vld [vmem:[#allocation2 + $0x80] sm:$0xff]
      %v831 = vld [vmem:[#allocation2 + $0x88] sm:$0xff]
      %v832 = vld [vmem:[#allocation2 + $0x90] sm:$0xff]
      %v833 = vld [vmem:[#allocation2 + $0x98] sm:$0xff]
      %v834 = vld [vmem:[#allocation2 + $0xa0] sm:$0xff]
      %v835 = vld [vmem:[#allocation2 + $0xa8] sm:$0xff]
      %v836 = vld [vmem:[#allocation2 + $0xb0] sm:$0xff]
      %v837 = vld [vmem:[#allocation2 + $0xb8] sm:$0xff]
      %v838 = vld [vmem:[#allocation2 + $0xc0] sm:$0xff]
      %v839 = vld [vmem:[#allocation2 + $0xc8] sm:$0xff]
      %v840 = vld [vmem:[#allocation2 + $0xd0] sm:$0xff]
      %v841 = vld [vmem:[#allocation2 + $0xd8] sm:$0xff]
      %v842 = vld [vmem:[#allocation2 + $0xe0] sm:$0xff]
      %v843 = vld [vmem:[#allocation2 + $0xe8] sm:$0xff]
      %v844 = vld [vmem:[#allocation2 + $0xf0] sm:$0xff]
      %v845 = vld [vmem:[#allocation2 + $0xf8] sm:$0xff]
      %v846 = vld [vmem:[#allocation2 + $0x100] sm:$0xff]
      %v847 = vld [vmem:[#allocation2 + $0x108] sm:$0xff]
      %v848 = vld [vmem:[#allocation2 + $0x110] sm:$0xff]
      %v849 = vld [vmem:[#allocation2 + $0x118] sm:$0xff]
      %v850 = vld [vmem:[#allocation2 + $0x120] sm:$0xff]
      %v851 = vld [vmem:[#allocation2 + $0x128] sm:$0xff]
      %v852 = vld [vmem:[#allocation2 + $0x130] sm:$0xff]
      %v853 = vld [vmem:[#allocation2 + $0x138] sm:$0xff]
      %v854 = vmax.f32 %v790, %v822
      %v855 = vmax.f32 %v791, %v823
      %v856 = vmax.f32 %v792, %v824
      %v857 = vmax.f32 %v793, %v825
      %v858 = vmax.f32 %v794, %v826
      %v859 = vmax.f32 %v795, %v827
      %v860 = vmax.f32 %v796, %v828
      %v861 = vmax.f32 %v797, %v829
      %v862 = vmax.f32 %v798, %v830
      %v863 = vmax.f32 %v799, %v831
      %v864 = vmax.f32 %v800, %v832
      %v865 = vmax.f32 %v801, %v833
      %v866 = vmax.f32 %v802, %v834
      %v867 = vmax.f32 %v803, %v835
      %v868 = vmax.f32 %v804, %v836
      %v869 = vmax.f32 %v805, %v837
      %v870 = vmax.f32 %v806, %v838
      %v871 = vmax.f32 %v807, %v839
      %v872 = vmax.f32 %v808, %v840
      %v873 = vmax.f32 %v809, %v841
      %v874 = vmax.f32 %v810, %v842
      %v875 = vmax.f32 %v811, %v843
      %v876 = vmax.f32 %v812, %v844
      %v877 = vmax.f32 %v813, %v845
      %v878 = vmax.f32 %v814, %v846
      %v879 = vmax.f32 %v815, %v847
      %v880 = vmax.f32 %v816, %v848
      %v881 = vmax.f32 %v817, %v849
      %v882 = vmax.f32 %v818, %v850
      %v883 = vmax.f32 %v819, %v851
      %v884 = vmax.f32 %v820, %v852
      %v885 = vmax.f32 %v821, %v853
      %886 = vst [vmem:[#allocation2 + $0x20] sm:$0xff] %v854
      %887 = vst [vmem:[#allocation2 + $0x28] sm:$0xff] %v855
      %888 = vst [vmem:[#allocation2 + $0x30] sm:$0xff] %v856
      %889 = vst [vmem:[#allocation2 + $0x38] sm:$0xff] %v857
      %890 = vst [vmem:[#allocation2 + $0x40] sm:$0xff] %v858
      %891 = vst [vmem:[#allocation2 + $0x48] sm:$0xff] %v859
      %892 = vst [vmem:[#allocation2 + $0x50] sm:$0xff] %v860
      %893 = vst [vmem:[#allocation2 + $0x58] sm:$0xff] %v861
      %894 = vst [vmem:[#allocation2 + $0x60] sm:$0xff] %v862
      %895 = vst [vmem:[#allocation2 + $0x68] sm:$0xff] %v863
      %896 = vst [vmem:[#allocation2 + $0x70] sm:$0xff] %v864
      %897 = vst [vmem:[#allocation2 + $0x78] sm:$0xff] %v865
      %898 = vst [vmem:[#allocation2 + $0x80] sm:$0xff] %v866
      %899 = vst [vmem:[#allocation2 + $0x88] sm:$0xff] %v867
      %900 = vst [vmem:[#allocation2 + $0x90] sm:$0xff] %v868
      %901 = vst [vmem:[#allocation2 + $0x98] sm:$0xff] %v869
      %902 = vst [vmem:[#allocation2 + $0xa0] sm:$0xff] %v870
      %903 = vst [vmem:[#allocation2 + $0xa8] sm:$0xff] %v871
      %904 = vst [vmem:[#allocation2 + $0xb0] sm:$0xff] %v872
      %905 = vst [vmem:[#allocation2 + $0xb8] sm:$0xff] %v873
      %906 = vst [vmem:[#allocation2 + $0xc0] sm:$0xff] %v874
      %907 = vst [vmem:[#allocation2 + $0xc8] sm:$0xff] %v875
      %908 = vst [vmem:[#allocation2 + $0xd0] sm:$0xff] %v876
      %909 = vst [vmem:[#allocation2 + $0xd8] sm:$0xff] %v877
      %910 = vst [vmem:[#allocation2 + $0xe0] sm:$0xff] %v878
      %911 = vst [vmem:[#allocation2 + $0xe8] sm:$0xff] %v879
      %912 = vst [vmem:[#allocation2 + $0xf0] sm:$0xff] %v880
      %913 = vst [vmem:[#allocation2 + $0xf8] sm:$0xff] %v881
      %914 = vst [vmem:[#allocation2 + $0x100] sm:$0xff] %v882
      %915 = vst [vmem:[#allocation2 + $0x108] sm:$0xff] %v883
      %916 = vst [vmem:[#allocation2 + $0x110] sm:$0xff] %v884
      %917 = vst [vmem:[#allocation2 + $0x118] sm:$0xff] %v885
      %v918 = vld [vmem:[#allocation2 + $0x1e] sm:$0xff]
      %v919 = vld [vmem:[#allocation2 + $0x26] sm:$0xff]
      %v920 = vld [vmem:[#allocation2 + $0x2e] sm:$0xff]
      %v921 = vld [vmem:[#allocation2 + $0x36] sm:$0xff]
      %v922 = vld [vmem:[#allocation2 + $0x3e] sm:$0xff]
      %v923 = vld [vmem:[#allocation2 + $0x46] sm:$0xff]
      %v924 = vld [vmem:[#allocation2 + $0x4e] sm:$0xff]
      %v925 = vld [vmem:[#allocation2 + $0x56] sm:$0xff]
      %v926 = vld [vmem:[#allocation2 + $0x5e] sm:$0xff]
      %v927 = vld [vmem:[#allocation2 + $0x66] sm:$0xff]
      %v928 = vld [vmem:[#allocation2 + $0x6e] sm:$0xff]
      %v929 = vld [vmem:[#allocation2 + $0x76] sm:$0xff]
      %v930 = vld [vmem:[#allocation2 + $0x7e] sm:$0xff]
      %v931 = vld [vmem:[#allocation2 + $0x86] sm:$0xff]
      %v932 = vld [vmem:[#allocation2 + $0x8e] sm:$0xff]
      %v933 = vld [vmem:[#allocation2 + $0x96] sm:$0xff]
      %v934 = vld [vmem:[#allocation2 + $0x9e] sm:$0xff]
      %v935 = vld [vmem:[#allocation2 + $0xa6] sm:$0xff]
      %v936 = vld [vmem:[#allocation2 + $0xae] sm:$0xff]
      %v937 = vld [vmem:[#allocation2 + $0xb6] sm:$0xff]
      %v938 = vld [vmem:[#allocation2 + $0xbe] sm:$0xff]
      %v939 = vld [vmem:[#allocation2 + $0xc6] sm:$0xff]
      %v940 = vld [vmem:[#allocation2 + $0xce] sm:$0xff]
      %v941 = vld [vmem:[#allocation2 + $0xd6] sm:$0xff]
      %v942 = vld [vmem:[#allocation2 + $0xde] sm:$0xff]
      %v943 = vld [vmem:[#allocation2 + $0xe6] sm:$0xff]
      %v944 = vld [vmem:[#allocation2 + $0xee] sm:$0xff]
      %v945 = vld [vmem:[#allocation2 + $0xf6] sm:$0xff]
      %v946 = vld [vmem:[#allocation2 + $0xfe] sm:$0xff]
      %v947 = vld [vmem:[#allocation2 + $0x106] sm:$0xff]
      %v948 = vld [vmem:[#allocation2 + $0x10e] sm:$0xff]
      %v949 = vld [vmem:[#allocation2 + $0x116] sm:$0xff]
      %v950 = vld [vmem:[%s3] sm:$0xff]
      %v951 = vld [vmem:[%s3 + $0x8] sm:$0xff]
      %v952 = vld [vmem:[%s3 + $0x10] sm:$0xff]
      %v953 = vld [vmem:[%s3 + $0x18] sm:$0xff]
      %v954 = vld [vmem:[%s3 + $0x20] sm:$0xff]
      %v955 = vld [vmem:[%s3 + $0x28] sm:$0xff]
      %v956 = vld [vmem:[%s3 + $0x30] sm:$0xff]
      %v957 = vld [vmem:[%s3 + $0x38] sm:$0xff]
      %v958 = vld [vmem:[%s3 + $0x40] sm:$0xff]
      %v959 = vld [vmem:[%s3 + $0x48] sm:$0xff]
      %v960 = vld [vmem:[%s3 + $0x50] sm:$0xff]
      %v961 = vld [vmem:[%s3 + $0x58] sm:$0xff]
      %v962 = vld [vmem:[%s3 + $0x60] sm:$0xff]
      %v963 = vld [vmem:[%s3 + $0x68] sm:$0xff]
      %v964 = vld [vmem:[%s3 + $0x70] sm:$0xff]
      %v965 = vld [vmem:[%s3 + $0x78] sm:$0xff]
      %v966 = vld [vmem:[%s3 + $0x80] sm:$0xff]
      %v967 = vld [vmem:[%s3 + $0x88] sm:$0xff]
      %v968 = vld [vmem:[%s3 + $0x90] sm:$0xff]
      %v969 = vld [vmem:[%s3 + $0x98] sm:$0xff]
      %v970 = vld [vmem:[%s3 + $0xa0] sm:$0xff]
      %v971 = vld [vmem:[%s3 + $0xa8] sm:$0xff]
      %v972 = vld [vmem:[%s3 + $0xb0] sm:$0xff]
      %v973 = vld [vmem:[%s3 + $0xb8] sm:$0xff]
      %v974 = vld [vmem:[%s3 + $0xc0] sm:$0xff]
      %v975 = vld [vmem:[%s3 + $0xc8] sm:$0xff]
      %v976 = vld [vmem:[%s3 + $0xd0] sm:$0xff]
      %v977 = vld [vmem:[%s3 + $0xd8] sm:$0xff]
      %v978 = vld [vmem:[%s3 + $0xe0] sm:$0xff]
      %v979 = vld [vmem:[%s3 + $0xe8] sm:$0xff]
      %v980 = vld [vmem:[%s3 + $0xf0] sm:$0xff]
      %v981 = vld [vmem:[%s3 + $0xf8] sm:$0xff]
      %983 = vset.pattern.permute.xlu0 0
      %984 = vperm.xlu0 %983, %v950
      %v985 = vpop.permute.xlu0 %984
      %988 = vset.pattern.permute.xlu0 0
      %989 = vperm.xlu0 %988, %v951
      %v990 = vpop.permute.xlu0 %989
      %993 = vset.pattern.permute.xlu0 0
      %994 = vperm.xlu0 %993, %v952
      %v995 = vpop.permute.xlu0 %994
      %998 = vset.pattern.permute.xlu0 0
      %999 = vperm.xlu0 %998, %v953
      %v1000 = vpop.permute.xlu0 %999
      %1003 = vset.pattern.permute.xlu0 0
      %1004 = vperm.xlu0 %1003, %v954
      %v1005 = vpop.permute.xlu0 %1004
      %1008 = vset.pattern.permute.xlu0 0
      %1009 = vperm.xlu0 %1008, %v955
      %v1010 = vpop.permute.xlu0 %1009
      %1013 = vset.pattern.permute.xlu0 0
      %1014 = vperm.xlu0 %1013, %v956
      %v1015 = vpop.permute.xlu0 %1014
      %1018 = vset.pattern.permute.xlu0 0
      %1019 = vperm.xlu0 %1018, %v957
      %v1020 = vpop.permute.xlu0 %1019
      %1023 = vset.pattern.permute.xlu0 0
      %1024 = vperm.xlu0 %1023, %v958
      %v1025 = vpop.permute.xlu0 %1024
      %1028 = vset.pattern.permute.xlu0 0
      %1029 = vperm.xlu0 %1028, %v959
      %v1030 = vpop.permute.xlu0 %1029
      %1033 = vset.pattern.permute.xlu0 0
      %1034 = vperm.xlu0 %1033, %v960
      %v1035 = vpop.permute.xlu0 %1034
      %1038 = vset.pattern.permute.xlu0 0
      %1039 = vperm.xlu0 %1038, %v961
      %v1040 = vpop.permute.xlu0 %1039
      %1043 = vset.pattern.permute.xlu0 0
      %1044 = vperm.xlu0 %1043, %v962
      %v1045 = vpop.permute.xlu0 %1044
      %1048 = vset.pattern.permute.xlu0 0
      %1049 = vperm.xlu0 %1048, %v963
      %v1050 = vpop.permute.xlu0 %1049
      %1053 = vset.pattern.permute.xlu0 0
      %1054 = vperm.xlu0 %1053, %v964
      %v1055 = vpop.permute.xlu0 %1054
      %1058 = vset.pattern.permute.xlu0 0
      %1059 = vperm.xlu0 %1058, %v965
      %v1060 = vpop.permute.xlu0 %1059
      %1063 = vset.pattern.permute.xlu0 0
      %1064 = vperm.xlu0 %1063, %v966
      %v1065 = vpop.permute.xlu0 %1064
      %1068 = vset.pattern.permute.xlu0 0
      %1069 = vperm.xlu0 %1068, %v967
      %v1070 = vpop.permute.xlu0 %1069
      %1073 = vset.pattern.permute.xlu0 0
      %1074 = vperm.xlu0 %1073, %v968
      %v1075 = vpop.permute.xlu0 %1074
      %1078 = vset.pattern.permute.xlu0 0
      %1079 = vperm.xlu0 %1078, %v969
      %v1080 = vpop.permute.xlu0 %1079
      %1083 = vset.pattern.permute.xlu0 0
      %1084 = vperm.xlu0 %1083, %v970
      %v1085 = vpop.permute.xlu0 %1084
      %1088 = vset.pattern.permute.xlu0 0
      %1089 = vperm.xlu0 %1088, %v971
      %v1090 = vpop.permute.xlu0 %1089
      %1093 = vset.pattern.permute.xlu0 0
      %1094 = vperm.xlu0 %1093, %v972
      %v1095 = vpop.permute.xlu0 %1094
      %1098 = vset.pattern.permute.xlu0 0
      %1099 = vperm.xlu0 %1098, %v973
      %v1100 = vpop.permute.xlu0 %1099
      %1103 = vset.pattern.permute.xlu0 0
      %1104 = vperm.xlu0 %1103, %v974
      %v1105 = vpop.permute.xlu0 %1104
      %1108 = vset.pattern.permute.xlu0 0
      %1109 = vperm.xlu0 %1108, %v975
      %v1110 = vpop.permute.xlu0 %1109
      %1113 = vset.pattern.permute.xlu0 0
      %1114 = vperm.xlu0 %1113, %v976
      %v1115 = vpop.permute.xlu0 %1114
      %1118 = vset.pattern.permute.xlu0 0
      %1119 = vperm.xlu0 %1118, %v977
      %v1120 = vpop.permute.xlu0 %1119
      %1123 = vset.pattern.permute.xlu0 0
      %1124 = vperm.xlu0 %1123, %v978
      %v1125 = vpop.permute.xlu0 %1124
      %1128 = vset.pattern.permute.xlu0 0
      %1129 = vperm.xlu0 %1128, %v979
      %v1130 = vpop.permute.xlu0 %1129
      %1133 = vset.pattern.permute.xlu0 0
      %1134 = vperm.xlu0 %1133, %v980
      %v1135 = vpop.permute.xlu0 %1134
      %1138 = vset.pattern.permute.xlu0 0
      %1139 = vperm.xlu0 %1138, %v981
      %v1140 = vpop.permute.xlu0 %1139
      %v1142 = vadd.f32 %v918, %v985
      %v1143 = vadd.f32 %v919, %v990
      %v1144 = vadd.f32 %v920, %v995
      %v1145 = vadd.f32 %v921, %v1000
      %v1146 = vadd.f32 %v922, %v1005
      %v1147 = vadd.f32 %v923, %v1010
      %v1148 = vadd.f32 %v924, %v1015
      %v1149 = vadd.f32 %v925, %v1020
      %v1150 = vadd.f32 %v926, %v1025
      %v1151 = vadd.f32 %v927, %v1030
      %v1152 = vadd.f32 %v928, %v1035
      %v1153 = vadd.f32 %v929, %v1040
      %v1154 = vadd.f32 %v930, %v1045
      %v1155 = vadd.f32 %v931, %v1050
      %v1156 = vadd.f32 %v932, %v1055
      %v1157 = vadd.f32 %v933, %v1060
      %v1158 = vadd.f32 %v934, %v1065
      %v1159 = vadd.f32 %v935, %v1070
      %v1160 = vadd.f32 %v936, %v1075
      %v1161 = vadd.f32 %v937, %v1080
      %v1162 = vadd.f32 %v938, %v1085
      %v1163 = vadd.f32 %v939, %v1090
      %v1164 = vadd.f32 %v940, %v1095
      %v1165 = vadd.f32 %v941, %v1100
      %v1166 = vadd.f32 %v942, %v1105
      %v1167 = vadd.f32 %v943, %v1110
      %v1168 = vadd.f32 %v944, %v1115
      %v1169 = vadd.f32 %v945, %v1120
      %v1170 = vadd.f32 %v946, %v1125
      %v1171 = vadd.f32 %v947, %v1130
      %v1172 = vadd.f32 %v948, %v1135
      %v1173 = vadd.f32 %v949, %v1140
      %v1174 = vmax.f32 %v854, %v1142
      %v1175 = vmax.f32 %v855, %v1143
      %v1176 = vmax.f32 %v856, %v1144
      %v1177 = vmax.f32 %v857, %v1145
      %v1178 = vmax.f32 %v858, %v1146
      %v1179 = vmax.f32 %v859, %v1147
      %v1180 = vmax.f32 %v860, %v1148
      %v1181 = vmax.f32 %v861, %v1149
      %v1182 = vmax.f32 %v862, %v1150
      %v1183 = vmax.f32 %v863, %v1151
      %v1184 = vmax.f32 %v864, %v1152
      %v1185 = vmax.f32 %v865, %v1153
      %v1186 = vmax.f32 %v866, %v1154
      %v1187 = vmax.f32 %v867, %v1155
      %v1188 = vmax.f32 %v868, %v1156
      %v1189 = vmax.f32 %v869, %v1157
      %v1190 = vmax.f32 %v870, %v1158
      %v1191 = vmax.f32 %v871, %v1159
      %v1192 = vmax.f32 %v872, %v1160
      %v1193 = vmax.f32 %v873, %v1161
      %v1194 = vmax.f32 %v874, %v1162
      %v1195 = vmax.f32 %v875, %v1163
      %v1196 = vmax.f32 %v876, %v1164
      %v1197 = vmax.f32 %v877, %v1165
      %v1198 = vmax.f32 %v878, %v1166
      %v1199 = vmax.f32 %v879, %v1167
      %v1200 = vmax.f32 %v880, %v1168
      %v1201 = vmax.f32 %v881, %v1169
      %v1202 = vmax.f32 %v882, %v1170
      %v1203 = vmax.f32 %v883, %v1171
      %v1204 = vmax.f32 %v884, %v1172
      %v1205 = vmax.f32 %v885, %v1173
      %v1206 = vld [vmem:[#allocation2 + $0x1f] sm:$0xff]
      %v1207 = vld [vmem:[#allocation2 + $0x27] sm:$0xff]
      %v1208 = vld [vmem:[#allocation2 + $0x2f] sm:$0xff]
      %v1209 = vld [vmem:[#allocation2 + $0x37] sm:$0xff]
      %v1210 = vld [vmem:[#allocation2 + $0x3f] sm:$0xff]
      %v1211 = vld [vmem:[#allocation2 + $0x47] sm:$0xff]
      %v1212 = vld [vmem:[#allocation2 + $0x4f] sm:$0xff]
      %v1213 = vld [vmem:[#allocation2 + $0x57] sm:$0xff]
      %v1214 = vld [vmem:[#allocation2 + $0x5f] sm:$0xff]
      %v1215 = vld [vmem:[#allocation2 + $0x67] sm:$0xff]
      %v1216 = vld [vmem:[#allocation2 + $0x6f] sm:$0xff]
      %v1217 = vld [vmem:[#allocation2 + $0x77] sm:$0xff]
      %v1218 = vld [vmem:[#allocation2 + $0x7f] sm:$0xff]
      %v1219 = vld [vmem:[#allocation2 + $0x87] sm:$0xff]
      %v1220 = vld [vmem:[#allocation2 + $0x8f] sm:$0xff]
      %v1221 = vld [vmem:[#allocation2 + $0x97] sm:$0xff]
      %v1222 = vld [vmem:[#allocation2 + $0x9f] sm:$0xff]
      %v1223 = vld [vmem:[#allocation2 + $0xa7] sm:$0xff]
      %v1224 = vld [vmem:[#allocation2 + $0xaf] sm:$0xff]
      %v1225 = vld [vmem:[#allocation2 + $0xb7] sm:$0xff]
      %v1226 = vld [vmem:[#allocation2 + $0xbf] sm:$0xff]
      %v1227 = vld [vmem:[#allocation2 + $0xc7] sm:$0xff]
      %v1228 = vld [vmem:[#allocation2 + $0xcf] sm:$0xff]
      %v1229 = vld [vmem:[#allocation2 + $0xd7] sm:$0xff]
      %v1230 = vld [vmem:[#allocation2 + $0xdf] sm:$0xff]
      %v1231 = vld [vmem:[#allocation2 + $0xe7] sm:$0xff]
      %v1232 = vld [vmem:[#allocation2 + $0xef] sm:$0xff]
      %v1233 = vld [vmem:[#allocation2 + $0xf7] sm:$0xff]
      %v1234 = vld [vmem:[#allocation2 + $0xff] sm:$0xff]
      %v1235 = vld [vmem:[#allocation2 + $0x107] sm:$0xff]
      %v1236 = vld [vmem:[#allocation2 + $0x10f] sm:$0xff]
      %v1237 = vld [vmem:[#allocation2 + $0x117] sm:$0xff]
      %1238 = vset.pattern.permute.xlu0 1
      %1239 = vperm.xlu0 %1238, %v950
      %v1240 = vpop.permute.xlu0 %1239
      %1242 = vset.pattern.permute.xlu0 1
      %1243 = vperm.xlu0 %1242, %v951
      %v1244 = vpop.permute.xlu0 %1243
      %1246 = vset.pattern.permute.xlu0 1
      %1247 = vperm.xlu0 %1246, %v952
      %v1248 = vpop.permute.xlu0 %1247
      %1250 = vset.pattern.permute.xlu0 1
      %1251 = vperm.xlu0 %1250, %v953
      %v1252 = vpop.permute.xlu0 %1251
      %1254 = vset.pattern.permute.xlu0 1
      %1255 = vperm.xlu0 %1254, %v954
      %v1256 = vpop.permute.xlu0 %1255
      %1258 = vset.pattern.permute.xlu0 1
      %1259 = vperm.xlu0 %1258, %v955
      %v1260 = vpop.permute.xlu0 %1259
      %1262 = vset.pattern.permute.xlu0 1
      %1263 = vperm.xlu0 %1262, %v956
      %v1264 = vpop.permute.xlu0 %1263
      %1266 = vset.pattern.permute.xlu0 1
      %1267 = vperm.xlu0 %1266, %v957
      %v1268 = vpop.permute.xlu0 %1267
      %1270 = vset.pattern.permute.xlu0 1
      %1271 = vperm.xlu0 %1270, %v958
      %v1272 = vpop.permute.xlu0 %1271
      %1274 = vset.pattern.permute.xlu0 1
      %1275 = vperm.xlu0 %1274, %v959
      %v1276 = vpop.permute.xlu0 %1275
      %1278 = vset.pattern.permute.xlu0 1
      %1279 = vperm.xlu0 %1278, %v960
      %v1280 = vpop.permute.xlu0 %1279
      %1282 = vset.pattern.permute.xlu0 1
      %1283 = vperm.xlu0 %1282, %v961
      %v1284 = vpop.permute.xlu0 %1283
      %1286 = vset.pattern.permute.xlu0 1
      %1287 = vperm.xlu0 %1286, %v962
      %v1288 = vpop.permute.xlu0 %1287
      %1290 = vset.pattern.permute.xlu0 1
      %1291 = vperm.xlu0 %1290, %v963
      %v1292 = vpop.permute.xlu0 %1291
      %1294 = vset.pattern.permute.xlu0 1
      %1295 = vperm.xlu0 %1294, %v964
      %v1296 = vpop.permute.xlu0 %1295
      %1298 = vset.pattern.permute.xlu0 1
      %1299 = vperm.xlu0 %1298, %v965
      %v1300 = vpop.permute.xlu0 %1299
      %1302 = vset.pattern.permute.xlu0 1
      %1303 = vperm.xlu0 %1302, %v966
      %v1304 = vpop.permute.xlu0 %1303
      %1306 = vset.pattern.permute.xlu0 1
      %1307 = vperm.xlu0 %1306, %v967
      %v1308 = vpop.permute.xlu0 %1307
      %1310 = vset.pattern.permute.xlu0 1
      %1311 = vperm.xlu0 %1310, %v968
      %v1312 = vpop.permute.xlu0 %1311
      %1314 = vset.pattern.permute.xlu0 1
      %1315 = vperm.xlu0 %1314, %v969
      %v1316 = vpop.permute.xlu0 %1315
      %1318 = vset.pattern.permute.xlu0 1
      %1319 = vperm.xlu0 %1318, %v970
      %v1320 = vpop.permute.xlu0 %1319
      %1322 = vset.pattern.permute.xlu0 1
      %1323 = vperm.xlu0 %1322, %v971
      %v1324 = vpop.permute.xlu0 %1323
      %1326 = vset.pattern.permute.xlu0 1
      %1327 = vperm.xlu0 %1326, %v972
      %v1328 = vpop.permute.xlu0 %1327
      %1330 = vset.pattern.permute.xlu0 1
      %1331 = vperm.xlu0 %1330, %v973
      %v1332 = vpop.permute.xlu0 %1331
      %1334 = vset.pattern.permute.xlu0 1
      %1335 = vperm.xlu0 %1334, %v974
      %v1336 = vpop.permute.xlu0 %1335
      %1338 = vset.pattern.permute.xlu0 1
      %1339 = vperm.xlu0 %1338, %v975
      %v1340 = vpop.permute.xlu0 %1339
      %1342 = vset.pattern.permute.xlu0 1
      %1343 = vperm.xlu0 %1342, %v976
      %v1344 = vpop.permute.xlu0 %1343
      %1346 = vset.pattern.permute.xlu0 1
      %1347 = vperm.xlu0 %1346, %v977
      %v1348 = vpop.permute.xlu0 %1347
      %1350 = vset.pattern.permute.xlu0 1
      %1351 = vperm.xlu0 %1350, %v978
      %v1352 = vpop.permute.xlu0 %1351
      %1354 = vset.pattern.permute.xlu0 1
      %1355 = vperm.xlu0 %1354, %v979
      %v1356 = vpop.permute.xlu0 %1355
      %1358 = vset.pattern.permute.xlu0 1
      %1359 = vperm.xlu0 %1358, %v980
      %v1360 = vpop.permute.xlu0 %1359
      %1362 = vset.pattern.permute.xlu0 1
      %1363 = vperm.xlu0 %1362, %v981
      %v1364 = vpop.permute.xlu0 %1363
      %v1366 = vadd.f32 %v1206, %v1240
      %v1367 = vadd.f32 %v1207, %v1244
      %v1368 = vadd.f32 %v1208, %v1248
      %v1369 = vadd.f32 %v1209, %v1252
      %v1370 = vadd.f32 %v1210, %v1256
      %v1371 = vadd.f32 %v1211, %v1260
      %v1372 = vadd.f32 %v1212, %v1264
      %v1373 = vadd.f32 %v1213, %v1268
      %v1374 = vadd.f32 %v1214, %v1272
      %v1375 = vadd.f32 %v1215, %v1276
      %v1376 = vadd.f32 %v1216, %v1280
      %v1377 = vadd.f32 %v1217, %v1284
      %v1378 = vadd.f32 %v1218, %v1288
      %v1379 = vadd.f32 %v1219, %v1292
      %v1380 = vadd.f32 %v1220, %v1296
      %v1381 = vadd.f32 %v1221, %v1300
      %v1382 = vadd.f32 %v1222, %v1304
      %v1383 = vadd.f32 %v1223, %v1308
      %v1384 = vadd.f32 %v1224, %v1312
      %v1385 = vadd.f32 %v1225, %v1316
      %v1386 = vadd.f32 %v1226, %v1320
      %v1387 = vadd.f32 %v1227, %v1324
      %v1388 = vadd.f32 %v1228, %v1328
      %v1389 = vadd.f32 %v1229, %v1332
      %v1390 = vadd.f32 %v1230, %v1336
      %v1391 = vadd.f32 %v1231, %v1340
      %v1392 = vadd.f32 %v1232, %v1344
      %v1393 = vadd.f32 %v1233, %v1348
      %v1394 = vadd.f32 %v1234, %v1352
      %v1395 = vadd.f32 %v1235, %v1356
      %v1396 = vadd.f32 %v1236, %v1360
      %v1397 = vadd.f32 %v1237, %v1364
      %v1398 = vmax.f32 %v1174, %v1366
      %v1399 = vmax.f32 %v1175, %v1367
      %v1400 = vmax.f32 %v1176, %v1368
      %v1401 = vmax.f32 %v1177, %v1369
      %v1402 = vmax.f32 %v1178, %v1370
      %v1403 = vmax.f32 %v1179, %v1371
      %v1404 = vmax.f32 %v1180, %v1372
      %v1405 = vmax.f32 %v1181, %v1373
      %v1406 = vmax.f32 %v1182, %v1374
      %v1407 = vmax.f32 %v1183, %v1375
      %v1408 = vmax.f32 %v1184, %v1376
      %v1409 = vmax.f32 %v1185, %v1377
      %v1410 = vmax.f32 %v1186, %v1378
      %v1411 = vmax.f32 %v1187, %v1379
      %v1412 = vmax.f32 %v1188, %v1380
      %v1413 = vmax.f32 %v1189, %v1381
      %v1414 = vmax.f32 %v1190, %v1382
      %v1415 = vmax.f32 %v1191, %v1383
      %v1416 = vmax.f32 %v1192, %v1384
      %v1417 = vmax.f32 %v1193, %v1385
      %v1418 = vmax.f32 %v1194, %v1386
      %v1419 = vmax.f32 %v1195, %v1387
      %v1420 = vmax.f32 %v1196, %v1388
      %v1421 = vmax.f32 %v1197, %v1389
      %v1422 = vmax.f32 %v1198, %v1390
      %v1423 = vmax.f32 %v1199, %v1391
      %v1424 = vmax.f32 %v1200, %v1392
      %v1425 = vmax.f32 %v1201, %v1393
      %v1426 = vmax.f32 %v1202, %v1394
      %v1427 = vmax.f32 %v1203, %v1395
      %v1428 = vmax.f32 %v1204, %v1396
      %v1429 = vmax.f32 %v1205, %v1397
      %v1430 = vld [vmem:[#allocation2 + $0x21] sm:$0xff]
      %v1431 = vld [vmem:[#allocation2 + $0x29] sm:$0xff]
      %v1432 = vld [vmem:[#allocation2 + $0x31] sm:$0xff]
      %v1433 = vld [vmem:[#allocation2 + $0x39] sm:$0xff]
      %v1434 = vld [vmem:[#allocation2 + $0x41] sm:$0xff]
      %v1435 = vld [vmem:[#allocation2 + $0x49] sm:$0xff]
      %v1436 = vld [vmem:[#allocation2 + $0x51] sm:$0xff]
      %v1437 = vld [vmem:[#allocation2 + $0x59] sm:$0xff]
      %v1438 = vld [vmem:[#allocation2 + $0x61] sm:$0xff]
      %v1439 = vld [vmem:[#allocation2 + $0x69] sm:$0xff]
      %v1440 = vld [vmem:[#allocation2 + $0x71] sm:$0xff]
      %v1441 = vld [vmem:[#allocation2 + $0x79] sm:$0xff]
      %v1442 = vld [vmem:[#allocation2 + $0x81] sm:$0xff]
      %v1443 = vld [vmem:[#allocation2 + $0x89] sm:$0xff]
      %v1444 = vld [vmem:[#allocation2 + $0x91] sm:$0xff]
      %v1445 = vld [vmem:[#allocation2 + $0x99] sm:$0xff]
      %v1446 = vld [vmem:[#allocation2 + $0xa1] sm:$0xff]
      %v1447 = vld [vmem:[#allocation2 + $0xa9] sm:$0xff]
      %v1448 = vld [vmem:[#allocation2 + $0xb1] sm:$0xff]
      %v1449 = vld [vmem:[#allocation2 + $0xb9] sm:$0xff]
      %v1450 = vld [vmem:[#allocation2 + $0xc1] sm:$0xff]
      %v1451 = vld [vmem:[#allocation2 + $0xc9] sm:$0xff]
      %v1452 = vld [vmem:[#allocation2 + $0xd1] sm:$0xff]
      %v1453 = vld [vmem:[#allocation2 + $0xd9] sm:$0xff]
      %v1454 = vld [vmem:[#allocation2 + $0xe1] sm:$0xff]
      %v1455 = vld [vmem:[#allocation2 + $0xe9] sm:$0xff]
      %v1456 = vld [vmem:[#allocation2 + $0xf1] sm:$0xff]
      %v1457 = vld [vmem:[#allocation2 + $0xf9] sm:$0xff]
      %v1458 = vld [vmem:[#allocation2 + $0x101] sm:$0xff]
      %v1459 = vld [vmem:[#allocation2 + $0x109] sm:$0xff]
      %v1460 = vld [vmem:[#allocation2 + $0x111] sm:$0xff]
      %v1461 = vld [vmem:[#allocation2 + $0x119] sm:$0xff]
      %1462 = vset.pattern.permute.xlu0 2
      %1463 = vperm.xlu0 %1462, %v950
      %v1464 = vpop.permute.xlu0 %1463
      %1466 = vset.pattern.permute.xlu0 2
      %1467 = vperm.xlu0 %1466, %v951
      %v1468 = vpop.permute.xlu0 %1467
      %1470 = vset.pattern.permute.xlu0 2
      %1471 = vperm.xlu0 %1470, %v952
      %v1472 = vpop.permute.xlu0 %1471
      %1474 = vset.pattern.permute.xlu0 2
      %1475 = vperm.xlu0 %1474, %v953
      %v1476 = vpop.permute.xlu0 %1475
      %1478 = vset.pattern.permute.xlu0 2
      %1479 = vperm.xlu0 %1478, %v954
      %v1480 = vpop.permute.xlu0 %1479
      %1482 = vset.pattern.permute.xlu0 2
      %1483 = vperm.xlu0 %1482, %v955
      %v1484 = vpop.permute.xlu0 %1483
      %1486 = vset.pattern.permute.xlu0 2
      %1487 = vperm.xlu0 %1486, %v956
      %v1488 = vpop.permute.xlu0 %1487
      %1490 = vset.pattern.permute.xlu0 2
      %1491 = vperm.xlu0 %1490, %v957
      %v1492 = vpop.permute.xlu0 %1491
      %1494 = vset.pattern.permute.xlu0 2
      %1495 = vperm.xlu0 %1494, %v958
      %v1496 = vpop.permute.xlu0 %1495
      %1498 = vset.pattern.permute.xlu0 2
      %1499 = vperm.xlu0 %1498, %v959
      %v1500 = vpop.permute.xlu0 %1499
      %1502 = vset.pattern.permute.xlu0 2
      %1503 = vperm.xlu0 %1502, %v960
      %v1504 = vpop.permute.xlu0 %1503
      %1506 = vset.pattern.permute.xlu0 2
      %1507 = vperm.xlu0 %1506, %v961
      %v1508 = vpop.permute.xlu0 %1507
      %1510 = vset.pattern.permute.xlu0 2
      %1511 = vperm.xlu0 %1510, %v962
      %v1512 = vpop.permute.xlu0 %1511
      %1514 = vset.pattern.permute.xlu0 2
      %1515 = vperm.xlu0 %1514, %v963
      %v1516 = vpop.permute.xlu0 %1515
      %1518 = vset.pattern.permute.xlu0 2
      %1519 = vperm.xlu0 %1518, %v964
      %v1520 = vpop.permute.xlu0 %1519
      %1522 = vset.pattern.permute.xlu0 2
      %1523 = vperm.xlu0 %1522, %v965
      %v1524 = vpop.permute.xlu0 %1523
      %1526 = vset.pattern.permute.xlu0 2
      %1527 = vperm.xlu0 %1526, %v966
      %v1528 = vpop.permute.xlu0 %1527
      %1530 = vset.pattern.permute.xlu0 2
      %1531 = vperm.xlu0 %1530, %v967
      %v1532 = vpop.permute.xlu0 %1531
      %1534 = vset.pattern.permute.xlu0 2
      %1535 = vperm.xlu0 %1534, %v968
      %v1536 = vpop.permute.xlu0 %1535
      %1538 = vset.pattern.permute.xlu0 2
      %1539 = vperm.xlu0 %1538, %v969
      %v1540 = vpop.permute.xlu0 %1539
      %1542 = vset.pattern.permute.xlu0 2
      %1543 = vperm.xlu0 %1542, %v970
      %v1544 = vpop.permute.xlu0 %1543
      %1546 = vset.pattern.permute.xlu0 2
      %1547 = vperm.xlu0 %1546, %v971
      %v1548 = vpop.permute.xlu0 %1547
      %1550 = vset.pattern.permute.xlu0 2
      %1551 = vperm.xlu0 %1550, %v972
      %v1552 = vpop.permute.xlu0 %1551
      %1554 = vset.pattern.permute.xlu0 2
      %1555 = vperm.xlu0 %1554, %v973
      %v1556 = vpop.permute.xlu0 %1555
      %1558 = vset.pattern.permute.xlu0 2
      %1559 = vperm.xlu0 %1558, %v974
      %v1560 = vpop.permute.xlu0 %1559
      %1562 = vset.pattern.permute.xlu0 2
      %1563 = vperm.xlu0 %1562, %v975
      %v1564 = vpop.permute.xlu0 %1563
      %1566 = vset.pattern.permute.xlu0 2
      %1567 = vperm.xlu0 %1566, %v976
      %v1568 = vpop.permute.xlu0 %1567
      %1570 = vset.pattern.permute.xlu0 2
      %1571 = vperm.xlu0 %1570, %v977
      %v1572 = vpop.permute.xlu0 %1571
      %1574 = vset.pattern.permute.xlu0 2
      %1575 = vperm.xlu0 %1574, %v978
      %v1576 = vpop.permute.xlu0 %1575
      %1578 = vset.pattern.permute.xlu0 2
      %1579 = vperm.xlu0 %1578, %v979
      %v1580 = vpop.permute.xlu0 %1579
      %1582 = vset.pattern.permute.xlu0 2
      %1583 = vperm.xlu0 %1582, %v980
      %v1584 = vpop.permute.xlu0 %1583
      %1586 = vset.pattern.permute.xlu0 2
      %1587 = vperm.xlu0 %1586, %v981
      %v1588 = vpop.permute.xlu0 %1587
      %v1590 = vadd.f32 %v1430, %v1464
      %v1591 = vadd.f32 %v1431, %v1468
      %v1592 = vadd.f32 %v1432, %v1472
      %v1593 = vadd.f32 %v1433, %v1476
      %v1594 = vadd.f32 %v1434, %v1480
      %v1595 = vadd.f32 %v1435, %v1484
      %v1596 = vadd.f32 %v1436, %v1488
      %v1597 = vadd.f32 %v1437, %v1492
      %v1598 = vadd.f32 %v1438, %v1496
      %v1599 = vadd.f32 %v1439, %v1500
      %v1600 = vadd.f32 %v1440, %v1504
      %v1601 = vadd.f32 %v1441, %v1508
      %v1602 = vadd.f32 %v1442, %v1512
      %v1603 = vadd.f32 %v1443, %v1516
      %v1604 = vadd.f32 %v1444, %v1520
      %v1605 = vadd.f32 %v1445, %v1524
      %v1606 = vadd.f32 %v1446, %v1528
      %v1607 = vadd.f32 %v1447, %v1532
      %v1608 = vadd.f32 %v1448, %v1536
      %v1609 = vadd.f32 %v1449, %v1540
      %v1610 = vadd.f32 %v1450, %v1544
      %v1611 = vadd.f32 %v1451, %v1548
      %v1612 = vadd.f32 %v1452, %v1552
      %v1613 = vadd.f32 %v1453, %v1556
      %v1614 = vadd.f32 %v1454, %v1560
      %v1615 = vadd.f32 %v1455, %v1564
      %v1616 = vadd.f32 %v1456, %v1568
      %v1617 = vadd.f32 %v1457, %v1572
      %v1618 = vadd.f32 %v1458, %v1576
      %v1619 = vadd.f32 %v1459, %v1580
      %v1620 = vadd.f32 %v1460, %v1584
      %v1621 = vadd.f32 %v1461, %v1588
      %v1622 = vmax.f32 %v1398, %v1590
      %v1623 = vmax.f32 %v1399, %v1591
      %v1624 = vmax.f32 %v1400, %v1592
      %v1625 = vmax.f32 %v1401, %v1593
      %v1626 = vmax.f32 %v1402, %v1594
      %v1627 = vmax.f32 %v1403, %v1595
      %v1628 = vmax.f32 %v1404, %v1596
      %v1629 = vmax.f32 %v1405, %v1597
      %v1630 = vmax.f32 %v1406, %v1598
      %v1631 = vmax.f32 %v1407, %v1599
      %v1632 = vmax.f32 %v1408, %v1600
      %v1633 = vmax.f32 %v1409, %v1601
      %v1634 = vmax.f32 %v1410, %v1602
      %v1635 = vmax.f32 %v1411, %v1603
      %v1636 = vmax.f32 %v1412, %v1604
      %v1637 = vmax.f32 %v1413, %v1605
      %v1638 = vmax.f32 %v1414, %v1606
      %v1639 = vmax.f32 %v1415, %v1607
      %v1640 = vmax.f32 %v1416, %v1608
      %v1641 = vmax.f32 %v1417, %v1609
      %v1642 = vmax.f32 %v1418, %v1610
      %v1643 = vmax.f32 %v1419, %v1611
      %v1644 = vmax.f32 %v1420, %v1612
      %v1645 = vmax.f32 %v1421, %v1613
      %v1646 = vmax.f32 %v1422, %v1614
      %v1647 = vmax.f32 %v1423, %v1615
      %v1648 = vmax.f32 %v1424, %v1616
      %v1649 = vmax.f32 %v1425, %v1617
      %v1650 = vmax.f32 %v1426, %v1618
      %v1651 = vmax.f32 %v1427, %v1619
      %v1652 = vmax.f32 %v1428, %v1620
      %v1653 = vmax.f32 %v1429, %v1621
      %v1654 = vld [vmem:[#allocation2 + $0x22] sm:$0xff]
      %v1655 = vld [vmem:[#allocation2 + $0x2a] sm:$0xff]
      %v1656 = vld [vmem:[#allocation2 + $0x32] sm:$0xff]
      %v1657 = vld [vmem:[#allocation2 + $0x3a] sm:$0xff]
      %v1658 = vld [vmem:[#allocation2 + $0x42] sm:$0xff]
      %v1659 = vld [vmem:[#allocation2 + $0x4a] sm:$0xff]
      %v1660 = vld [vmem:[#allocation2 + $0x52] sm:$0xff]
      %v1661 = vld [vmem:[#allocation2 + $0x5a] sm:$0xff]
      %v1662 = vld [vmem:[#allocation2 + $0x62] sm:$0xff]
      %v1663 = vld [vmem:[#allocation2 + $0x6a] sm:$0xff]
      %v1664 = vld [vmem:[#allocation2 + $0x72] sm:$0xff]
      %v1665 = vld [vmem:[#allocation2 + $0x7a] sm:$0xff]
      %v1666 = vld [vmem:[#allocation2 + $0x82] sm:$0xff]
      %v1667 = vld [vmem:[#allocation2 + $0x8a] sm:$0xff]
      %v1668 = vld [vmem:[#allocation2 + $0x92] sm:$0xff]
      %v1669 = vld [vmem:[#allocation2 + $0x9a] sm:$0xff]
      %v1670 = vld [vmem:[#allocation2 + $0xa2] sm:$0xff]
      %v1671 = vld [vmem:[#allocation2 + $0xaa] sm:$0xff]
      %v1672 = vld [vmem:[#allocation2 + $0xb2] sm:$0xff]
      %v1673 = vld [vmem:[#allocation2 + $0xba] sm:$0xff]
      %v1674 = vld [vmem:[#allocation2 + $0xc2] sm:$0xff]
      %v1675 = vld [vmem:[#allocation2 + $0xca] sm:$0xff]
      %v1676 = vld [vmem:[#allocation2 + $0xd2] sm:$0xff]
      %v1677 = vld [vmem:[#allocation2 + $0xda] sm:$0xff]
      %v1678 = vld [vmem:[#allocation2 + $0xe2] sm:$0xff]
      %v1679 = vld [vmem:[#allocation2 + $0xea] sm:$0xff]
      %v1680 = vld [vmem:[#allocation2 + $0xf2] sm:$0xff]
      %v1681 = vld [vmem:[#allocation2 + $0xfa] sm:$0xff]
      %v1682 = vld [vmem:[#allocation2 + $0x102] sm:$0xff]
      %v1683 = vld [vmem:[#allocation2 + $0x10a] sm:$0xff]
      %v1684 = vld [vmem:[#allocation2 + $0x112] sm:$0xff]
      %v1685 = vld [vmem:[#allocation2 + $0x11a] sm:$0xff]
      %1686 = vset.pattern.permute.xlu0 3
      %1687 = vperm.xlu0 %1686, %v950
      %v1688 = vpop.permute.xlu0 %1687
      %1690 = vset.pattern.permute.xlu0 3
      %1691 = vperm.xlu0 %1690, %v951
      %v1692 = vpop.permute.xlu0 %1691
      %1694 = vset.pattern.permute.xlu0 3
      %1695 = vperm.xlu0 %1694, %v952
      %v1696 = vpop.permute.xlu0 %1695
      %1698 = vset.pattern.permute.xlu0 3
      %1699 = vperm.xlu0 %1698, %v953
      %v1700 = vpop.permute.xlu0 %1699
      %1702 = vset.pattern.permute.xlu0 3
      %1703 = vperm.xlu0 %1702, %v954
      %v1704 = vpop.permute.xlu0 %1703
      %1706 = vset.pattern.permute.xlu0 3
      %1707 = vperm.xlu0 %1706, %v955
      %v1708 = vpop.permute.xlu0 %1707
      %1710 = vset.pattern.permute.xlu0 3
      %1711 = vperm.xlu0 %1710, %v956
      %v1712 = vpop.permute.xlu0 %1711
      %1714 = vset.pattern.permute.xlu0 3
      %1715 = vperm.xlu0 %1714, %v957
      %v1716 = vpop.permute.xlu0 %1715
      %1718 = vset.pattern.permute.xlu0 3
      %1719 = vperm.xlu0 %1718, %v958
      %v1720 = vpop.permute.xlu0 %1719
      %1722 = vset.pattern.permute.xlu0 3
      %1723 = vperm.xlu0 %1722, %v959
      %v1724 = vpop.permute.xlu0 %1723
      %1726 = vset.pattern.permute.xlu0 3
      %1727 = vperm.xlu0 %1726, %v960
      %v1728 = vpop.permute.xlu0 %1727
      %1730 = vset.pattern.permute.xlu0 3
      %1731 = vperm.xlu0 %1730, %v961
      %v1732 = vpop.permute.xlu0 %1731
      %1734 = vset.pattern.permute.xlu0 3
      %1735 = vperm.xlu0 %1734, %v962
      %v1736 = vpop.permute.xlu0 %1735
      %1738 = vset.pattern.permute.xlu0 3
      %1739 = vperm.xlu0 %1738, %v963
      %v1740 = vpop.permute.xlu0 %1739
      %1742 = vset.pattern.permute.xlu0 3
      %1743 = vperm.xlu0 %1742, %v964
      %v1744 = vpop.permute.xlu0 %1743
      %1746 = vset.pattern.permute.xlu0 3
      %1747 = vperm.xlu0 %1746, %v965
      %v1748 = vpop.permute.xlu0 %1747
      %1750 = vset.pattern.permute.xlu0 3
      %1751 = vperm.xlu0 %1750, %v966
      %v1752 = vpop.permute.xlu0 %1751
      %1754 = vset.pattern.permute.xlu0 3
      %1755 = vperm.xlu0 %1754, %v967
      %v1756 = vpop.permute.xlu0 %1755
      %1758 = vset.pattern.permute.xlu0 3
      %1759 = vperm.xlu0 %1758, %v968
      %v1760 = vpop.permute.xlu0 %1759
      %1762 = vset.pattern.permute.xlu0 3
      %1763 = vperm.xlu0 %1762, %v969
      %v1764 = vpop.permute.xlu0 %1763
      %1766 = vset.pattern.permute.xlu0 3
      %1767 = vperm.xlu0 %1766, %v970
      %v1768 = vpop.permute.xlu0 %1767
      %1770 = vset.pattern.permute.xlu0 3
      %1771 = vperm.xlu0 %1770, %v971
      %v1772 = vpop.permute.xlu0 %1771
      %1774 = vset.pattern.permute.xlu0 3
      %1775 = vperm.xlu0 %1774, %v972
      %v1776 = vpop.permute.xlu0 %1775
      %1778 = vset.pattern.permute.xlu0 3
      %1779 = vperm.xlu0 %1778, %v973
      %v1780 = vpop.permute.xlu0 %1779
      %1782 = vset.pattern.permute.xlu0 3
      %1783 = vperm.xlu0 %1782, %v974
      %v1784 = vpop.permute.xlu0 %1783
      %1786 = vset.pattern.permute.xlu0 3
      %1787 = vperm.xlu0 %1786, %v975
      %v1788 = vpop.permute.xlu0 %1787
      %1790 = vset.pattern.permute.xlu0 3
      %1791 = vperm.xlu0 %1790, %v976
      %v1792 = vpop.permute.xlu0 %1791
      %1794 = vset.pattern.permute.xlu0 3
      %1795 = vperm.xlu0 %1794, %v977
      %v1796 = vpop.permute.xlu0 %1795
      %1798 = vset.pattern.permute.xlu0 3
      %1799 = vperm.xlu0 %1798, %v978
      %v1800 = vpop.permute.xlu0 %1799
      %1802 = vset.pattern.permute.xlu0 3
      %1803 = vperm.xlu0 %1802, %v979
      %v1804 = vpop.permute.xlu0 %1803
      %1806 = vset.pattern.permute.xlu0 3
      %1807 = vperm.xlu0 %1806, %v980
      %v1808 = vpop.permute.xlu0 %1807
      %1810 = vset.pattern.permute.xlu0 3
      %1811 = vperm.xlu0 %1810, %v981
      %v1812 = vpop.permute.xlu0 %1811
      %v1814 = vadd.f32 %v1654, %v1688
      %v1815 = vadd.f32 %v1655, %v1692
      %v1816 = vadd.f32 %v1656, %v1696
      %v1817 = vadd.f32 %v1657, %v1700
      %v1818 = vadd.f32 %v1658, %v1704
      %v1819 = vadd.f32 %v1659, %v1708
      %v1820 = vadd.f32 %v1660, %v1712
      %v1821 = vadd.f32 %v1661, %v1716
      %v1822 = vadd.f32 %v1662, %v1720
      %v1823 = vadd.f32 %v1663, %v1724
      %v1824 = vadd.f32 %v1664, %v1728
      %v1825 = vadd.f32 %v1665, %v1732
      %v1826 = vadd.f32 %v1666, %v1736
      %v1827 = vadd.f32 %v1667, %v1740
      %v1828 = vadd.f32 %v1668, %v1744
      %v1829 = vadd.f32 %v1669, %v1748
      %v1830 = vadd.f32 %v1670, %v1752
      %v1831 = vadd.f32 %v1671, %v1756
      %v1832 = vadd.f32 %v1672, %v1760
      %v1833 = vadd.f32 %v1673, %v1764
      %v1834 = vadd.f32 %v1674, %v1768
      %v1835 = vadd.f32 %v1675, %v1772
      %v1836 = vadd.f32 %v1676, %v1776
      %v1837 = vadd.f32 %v1677, %v1780
      %v1838 = vadd.f32 %v1678, %v1784
      %v1839 = vadd.f32 %v1679, %v1788
      %v1840 = vadd.f32 %v1680, %v1792
      %v1841 = vadd.f32 %v1681, %v1796
      %v1842 = vadd.f32 %v1682, %v1800
      %v1843 = vadd.f32 %v1683, %v1804
      %v1844 = vadd.f32 %v1684, %v1808
      %v1845 = vadd.f32 %v1685, %v1812
      %v1846 = vmax.f32 %v1622, %v1814
      %v1847 = vmax.f32 %v1623, %v1815
      %v1848 = vmax.f32 %v1624, %v1816
      %v1849 = vmax.f32 %v1625, %v1817
      %v1850 = vmax.f32 %v1626, %v1818
      %v1851 = vmax.f32 %v1627, %v1819
      %v1852 = vmax.f32 %v1628, %v1820
      %v1853 = vmax.f32 %v1629, %v1821
      %v1854 = vmax.f32 %v1630, %v1822
      %v1855 = vmax.f32 %v1631, %v1823
      %v1856 = vmax.f32 %v1632, %v1824
      %v1857 = vmax.f32 %v1633, %v1825
      %v1858 = vmax.f32 %v1634, %v1826
      %v1859 = vmax.f32 %v1635, %v1827
      %v1860 = vmax.f32 %v1636, %v1828
      %v1861 = vmax.f32 %v1637, %v1829
      %v1862 = vmax.f32 %v1638, %v1830
      %v1863 = vmax.f32 %v1639, %v1831
      %v1864 = vmax.f32 %v1640, %v1832
      %v1865 = vmax.f32 %v1641, %v1833
      %v1866 = vmax.f32 %v1642, %v1834
      %v1867 = vmax.f32 %v1643, %v1835
      %v1868 = vmax.f32 %v1644, %v1836
      %v1869 = vmax.f32 %v1645, %v1837
      %v1870 = vmax.f32 %v1646, %v1838
      %v1871 = vmax.f32 %v1647, %v1839
      %v1872 = vmax.f32 %v1648, %v1840
      %v1873 = vmax.f32 %v1649, %v1841
      %v1874 = vmax.f32 %v1650, %v1842
      %v1875 = vmax.f32 %v1651, %v1843
      %v1876 = vmax.f32 %v1652, %v1844
      %v1877 = vmax.f32 %v1653, %v1845
      %1878 = vst [vmem:[#allocation2 + $0x20] sm:$0xff] %v1846
      %1879 = vst [vmem:[#allocation2 + $0x28] sm:$0xff] %v1847
      %1880 = vst [vmem:[#allocation2 + $0x30] sm:$0xff] %v1848
      %1881 = vst [vmem:[#allocation2 + $0x38] sm:$0xff] %v1849
      %1882 = vst [vmem:[#allocation2 + $0x40] sm:$0xff] %v1850
      %1883 = vst [vmem:[#allocation2 + $0x48] sm:$0xff] %v1851
      %1884 = vst [vmem:[#allocation2 + $0x50] sm:$0xff] %v1852
      %1885 = vst [vmem:[#allocation2 + $0x58] sm:$0xff] %v1853
      %1886 = vst [vmem:[#allocation2 + $0x60] sm:$0xff] %v1854
      %1887 = vst [vmem:[#allocation2 + $0x68] sm:$0xff] %v1855
      %1888 = vst [vmem:[#allocation2 + $0x70] sm:$0xff] %v1856
      %1889 = vst [vmem:[#allocation2 + $0x78] sm:$0xff] %v1857
      %1890 = vst [vmem:[#allocation2 + $0x80] sm:$0xff] %v1858
      %1891 = vst [vmem:[#allocation2 + $0x88] sm:$0xff] %v1859
      %1892 = vst [vmem:[#allocation2 + $0x90] sm:$0xff] %v1860
      %1893 = vst [vmem:[#allocation2 + $0x98] sm:$0xff] %v1861
      %1894 = vst [vmem:[#allocation2 + $0xa0] sm:$0xff] %v1862
      %1895 = vst [vmem:[#allocation2 + $0xa8] sm:$0xff] %v1863
      %1896 = vst [vmem:[#allocation2 + $0xb0] sm:$0xff] %v1864
      %1897 = vst [vmem:[#allocation2 + $0xb8] sm:$0xff] %v1865
      %1898 = vst [vmem:[#allocation2 + $0xc0] sm:$0xff] %v1866
      %1899 = vst [vmem:[#allocation2 + $0xc8] sm:$0xff] %v1867
      %1900 = vst [vmem:[#allocation2 + $0xd0] sm:$0xff] %v1868
      %1901 = vst [vmem:[#allocation2 + $0xd8] sm:$0xff] %v1869
      %1902 = vst [vmem:[#allocation2 + $0xe0] sm:$0xff] %v1870
      %1903 = vst [vmem:[#allocation2 + $0xe8] sm:$0xff] %v1871
      %1904 = vst [vmem:[#allocation2 + $0xf0] sm:$0xff] %v1872
      %1905 = vst [vmem:[#allocation2 + $0xf8] sm:$0xff] %v1873
      %1906 = vst [vmem:[#allocation2 + $0x100] sm:$0xff] %v1874
      %1907 = vst [vmem:[#allocation2 + $0x108] sm:$0xff] %v1875
      %1908 = vst [vmem:[#allocation2 + $0x110] sm:$0xff] %v1876
      %1909 = vst [vmem:[#allocation2 + $0x118] sm:$0xff] %v1877
      %v1910 = vld [vmem:[#allocation3] sm:$0xff]
      %v1911 = vld [vmem:[#allocation3 + $0x8] sm:$0xff]
      %v1912 = vld [vmem:[#allocation3 + $0x10] sm:$0xff]
      %v1913 = vld [vmem:[#allocation3 + $0x18] sm:$0xff]
      %v1914 = vld [vmem:[#allocation3 + $0x20] sm:$0xff]
      %v1915 = vld [vmem:[#allocation3 + $0x28] sm:$0xff]
      %v1916 = vld [vmem:[#allocation3 + $0x30] sm:$0xff]
      %v1917 = vld [vmem:[#allocation3 + $0x38] sm:$0xff]
      %v1918 = vld [vmem:[#allocation3 + $0x40] sm:$0xff]
      %v1919 = vld [vmem:[#allocation3 + $0x48] sm:$0xff]
      %v1920 = vld [vmem:[#allocation3 + $0x50] sm:$0xff]
      %v1921 = vld [vmem:[#allocation3 + $0x58] sm:$0xff]
      %v1922 = vld [vmem:[#allocation3 + $0x60] sm:$0xff]
      %v1923 = vld [vmem:[#allocation3 + $0x68] sm:$0xff]
      %v1924 = vld [vmem:[#allocation3 + $0x70] sm:$0xff]
      %v1925 = vld [vmem:[#allocation3 + $0x78] sm:$0xff]
      %v1926 = vld [vmem:[#allocation3 + $0x80] sm:$0xff]
      %v1927 = vld [vmem:[#allocation3 + $0x88] sm:$0xff]
      %v1928 = vld [vmem:[#allocation3 + $0x90] sm:$0xff]
      %v1929 = vld [vmem:[#allocation3 + $0x98] sm:$0xff]
      %v1930 = vld [vmem:[#allocation3 + $0xa0] sm:$0xff]
      %v1931 = vld [vmem:[#allocation3 + $0xa8] sm:$0xff]
      %v1932 = vld [vmem:[#allocation3 + $0xb0] sm:$0xff]
      %v1933 = vld [vmem:[#allocation3 + $0xb8] sm:$0xff]
      %v1934 = vld [vmem:[#allocation3 + $0xc0] sm:$0xff]
      %v1935 = vld [vmem:[#allocation3 + $0xc8] sm:$0xff]
      %v1936 = vld [vmem:[#allocation3 + $0xd0] sm:$0xff]
      %v1937 = vld [vmem:[#allocation3 + $0xd8] sm:$0xff]
      %v1938 = vld [vmem:[#allocation3 + $0xe0] sm:$0xff]
      %v1939 = vld [vmem:[#allocation3 + $0xe8] sm:$0xff]
      %v1940 = vld [vmem:[#allocation3 + $0xf0] sm:$0xff]
      %v1941 = vld [vmem:[#allocation3 + $0xf8] sm:$0xff]
      %v1942 = vpack.c.bf16 %v1847, %v1846
      %v1943 = vpack.c.bf16 %v1849, %v1848
      %v1944 = vpack.c.bf16 %v1851, %v1850
      %v1945 = vpack.c.bf16 %v1853, %v1852
      %v1946 = vpack.c.bf16 %v1855, %v1854
      %v1947 = vpack.c.bf16 %v1857, %v1856
      %v1948 = vpack.c.bf16 %v1859, %v1858
      %v1949 = vpack.c.bf16 %v1861, %v1860
      %v1950 = vpack.c.bf16 %v1863, %v1862
      %v1951 = vpack.c.bf16 %v1865, %v1864
      %v1952 = vpack.c.bf16 %v1867, %v1866
      %v1953 = vpack.c.bf16 %v1869, %v1868
      %v1954 = vpack.c.bf16 %v1871, %v1870
      %v1955 = vpack.c.bf16 %v1873, %v1872
      %v1956 = vpack.c.bf16 %v1875, %v1874
      %v1957 = vpack.c.bf16 %v1877, %v1876
      %v1958 = vld [vmem:[%s1 + $0x40] sm:$0xf]
      %v1959 = vld [vmem:[%s1 + $0x44] sm:$0xf]
      %v1960 = vld [vmem:[%s1 + $0x48] sm:$0xf]
      %v1961 = vld [vmem:[%s1 + $0x4c] sm:$0xf]
      %v1962 = vld [vmem:[%s1 + $0x50] sm:$0xf]
      %v1963 = vld [vmem:[%s1 + $0x54] sm:$0xf]
      %v1964 = vld [vmem:[%s1 + $0x58] sm:$0xf]
      %v1965 = vld [vmem:[%s1 + $0x5c] sm:$0xf]
      %v1966 = vld [vmem:[%s1 + $0x60] sm:$0xf]
      %v1967 = vld [vmem:[%s1 + $0x64] sm:$0xf]
      %v1968 = vld [vmem:[%s1 + $0x68] sm:$0xf]
      %v1969 = vld [vmem:[%s1 + $0x6c] sm:$0xf]
      %v1970 = vld [vmem:[%s1 + $0x70] sm:$0xf]
      %v1971 = vld [vmem:[%s1 + $0x74] sm:$0xf]
      %v1972 = vld [vmem:[%s1 + $0x78] sm:$0xf]
      %v1973 = vld [vmem:[%s1 + $0x7c] sm:$0xf]
      %v1990 = vunpack.c.l.b16 %v1958
      %v1991 = vunpack.c.l.b16 %v1959
      %v1992 = vunpack.c.l.b16 %v1960
      %v1993 = vunpack.c.l.b16 %v1961
      %v1994 = vunpack.c.l.b16 %v1962
      %v1995 = vunpack.c.l.b16 %v1963
      %v1996 = vunpack.c.l.b16 %v1964
      %v1997 = vunpack.c.l.b16 %v1965
      %v1998 = vunpack.c.l.b16 %v1966
      %v1999 = vunpack.c.l.b16 %v1967
      %v2000 = vunpack.c.l.b16 %v1968
      %v2001 = vunpack.c.l.b16 %v1969
      %v2002 = vunpack.c.l.b16 %v1970
      %v2003 = vunpack.c.l.b16 %v1971
      %v2004 = vunpack.c.l.b16 %v1972
      %v2005 = vunpack.c.l.b16 %v1973
      %v2006 = vpack.c.b16 %v1991, %v1990
      %v2007 = vpack.c.b16 %v1993, %v1992
      %v2008 = vpack.c.b16 %v1995, %v1994
      %v2009 = vpack.c.b16 %v1997, %v1996
      %v2010 = vpack.c.b16 %v1999, %v1998
      %v2011 = vpack.c.b16 %v2001, %v2000
      %v2012 = vpack.c.b16 %v2003, %v2002
      %v2013 = vpack.c.b16 %v2005, %v2004
      %2022 = vmatprep.subr.bf16.mxu0 0
      %2023 = vmatpush1.bf16.msra.mxu0 %v2006
      %2024 = vmatprep.subr.bf16.mxu0 0
      %2025 = vmatpush1.bf16.msra.mxu0 %v2007
      %2026 = vmatprep.subr.bf16.mxu0 0
      %2027 = vmatpush1.bf16.msra.mxu0 %v2008
      %2028 = vmatprep.subr.bf16.mxu0 0
      %2029 = vmatpush1.bf16.msra.mxu0 %v2009
      %2030 = vmatprep.subr.bf16.mxu0 0
      %2031 = vmatpush1.bf16.msra.mxu0 %v2010
      %2032 = vmatprep.subr.bf16.mxu0 0
      %2033 = vmatpush1.bf16.msra.mxu0 %v2011
      %2034 = vmatprep.subr.bf16.mxu0 0
      %2035 = vmatpush1.bf16.msra.mxu0 %v2012
      %2036 = vmatprep.subr.bf16.mxu0 0
      %2037 = vmatpush1.bf16.msra.mxu0 %v2013
      %2038 = vmatprep.subr.bf16.mxu0 0
      %2039 = vmatpush1.bf16.msra.mxu0 0
      %2040 = vmatprep.subr.bf16.mxu0 0
      %2041 = vmatpush1.bf16.msra.mxu0 0
      %2042 = vmatprep.subr.bf16.mxu0 0
      %2043 = vmatpush1.bf16.msra.mxu0 0
      %2044 = vmatprep.subr.bf16.mxu0 0
      %2045 = vmatpush1.bf16.msra.mxu0 0
      %2046 = vmatprep.subr.bf16.mxu0 0
      %2047 = vmatpush1.bf16.msra.mxu0 0
      %2048 = vmatprep.subr.bf16.mxu0 0
      %2049 = vmatpush1.bf16.msra.mxu0 0
      %2050 = vmatprep.subr.bf16.mxu0 0
      %2051 = vmatpush1.bf16.msra.mxu0 0
      %2052 = vmatprep.subr.bf16.mxu0 0
      %2053 = vmatpush1.bf16.msra.mxu0 0
      %2054 = vmatprep.mubr.bf16.mxu0 0
      %2055 = vmatmul.mubr.bf16.gmra.mrb[0].mxu0 %v1942
      %v2056 = vpop.f32.mrb[0].mxu0
      %v2057 = vadd.f32 0.0, %v2056
      %v2058 = vpop.f32.mrb[0].mxu0
      %v2059 = vpop.f32.mrb[0].mxu0
      %v2060 = vadd.f32 0.0, %v2059
      %v2061 = vpop.f32.mrb[0].mxu0
      %2062 = vmatprep.mubr.bf16.mxu0 0
      %2063 = vmatmul.mubr.bf16.gmra.mrb[0].mxu0 %v1943
      %v2064 = vpop.f32.mrb[0].mxu0
      %v2065 = vadd.f32 0.0, %v2064
      %v2066 = vpop.f32.mrb[0].mxu0
      %v2067 = vpop.f32.mrb[0].mxu0
      %v2068 = vadd.f32 0.0, %v2067
      %v2069 = vpop.f32.mrb[0].mxu0
      %2070 = vmatprep.mubr.bf16.mxu0 0
      %2071 = vmatmul.mubr.bf16.gmra.mrb[0].mxu0 %v1944
      %v2072 = vpop.f32.mrb[0].mxu0
      %v2073 = vadd.f32 0.0, %v2072
      %v2074 = vpop.f32.mrb[0].mxu0
      %v2075 = vpop.f32.mrb[0].mxu0
      %v2076 = vadd.f32 0.0, %v2075
      %v2077 = vpop.f32.mrb[0].mxu0
      %2078 = vmatprep.mubr.bf16.mxu0 0
      %2079 = vmatmul.mubr.bf16.gmra.mrb[0].mxu0 %v1945
      %v2080 = vpop.f32.mrb[0].mxu0
      %v2081 = vadd.f32 0.0, %v2080
      %v2082 = vpop.f32.mrb[0].mxu0
      %v2083 = vpop.f32.mrb[0].mxu0
      %v2084 = vadd.f32 0.0, %v2083
      %v2085 = vpop.f32.mrb[0].mxu0
      %2086 = vmatprep.mubr.bf16.mxu0 0
      %2087 = vmatmul.mubr.bf16.gmra.mrb[0].mxu0 %v1946
      %v2088 = vpop.f32.mrb[0].mxu0
      %v2089 = vadd.f32 0.0, %v2088
      %v2090 = vpop.f32.mrb[0].mxu0
      %v2091 = vpop.f32.mrb[0].mxu0
      %v2092 = vadd.f32 0.0, %v2091
      %v2093 = vpop.f32.mrb[0].mxu0
      %2094 = vmatprep.mubr.bf16.mxu0 0
      %2095 = vmatmul.mubr.bf16.gmra.mrb[0].mxu0 %v1947
      %v2096 = vpop.f32.mrb[0].mxu0
      %v2097 = vadd.f32 0.0, %v2096
      %v2098 = vpop.f32.mrb[0].mxu0
      %v2099 = vpop.f32.mrb[0].mxu0
      %v2100 = vadd.f32 0.0, %v2099
      %v2101 = vpop.f32.mrb[0].mxu0
      %2102 = vmatprep.mubr.bf16.mxu0 0
      %2103 = vmatmul.mubr.bf16.gmra.mrb[0].mxu0 %v1948
      %v2104 = vpop.f32.mrb[0].mxu0
      %v2105 = vadd.f32 0.0, %v2104
      %v2106 = vpop.f32.mrb[0].mxu0
      %v2107 = vpop.f32.mrb[0].mxu0
      %v2108 = vadd.f32 0.0, %v2107
      %v2109 = vpop.f32.mrb[0].mxu0
      %2110 = vmatprep.mubr.bf16.mxu0 0
      %2111 = vmatmul.mubr.bf16.gmra.mrb[0].mxu0 %v1949
      %v2112 = vpop.f32.mrb[0].mxu0
      %v2113 = vadd.f32 0.0, %v2112
      %v2114 = vpop.f32.mrb[0].mxu0
      %v2115 = vpop.f32.mrb[0].mxu0
      %v2116 = vadd.f32 0.0, %v2115
      %v2117 = vpop.f32.mrb[0].mxu0
      %2118 = vmatprep.mubr.bf16.mxu0 0
      %2119 = vmatmul.mubr.bf16.gmra.mrb[0].mxu0 %v1950
      %v2120 = vpop.f32.mrb[0].mxu0
      %v2121 = vadd.f32 0.0, %v2120
      %v2122 = vpop.f32.mrb[0].mxu0
      %v2123 = vpop.f32.mrb[0].mxu0
      %v2124 = vadd.f32 0.0, %v2123
      %v2125 = vpop.f32.mrb[0].mxu0
      %2126 = vmatprep.mubr.bf16.mxu0 0
      %2127 = vmatmul.mubr.bf16.gmra.mrb[0].mxu0 %v1951
      %v2128 = vpop.f32.mrb[0].mxu0
      %v2129 = vadd.f32 0.0, %v2128
      %v2130 = vpop.f32.mrb[0].mxu0
      %v2131 = vpop.f32.mrb[0].mxu0
      %v2132 = vadd.f32 0.0, %v2131
      %v2133 = vpop.f32.mrb[0].mxu0
      %2134 = vmatprep.mubr.bf16.mxu0 0
      %2135 = vmatmul.mubr.bf16.gmra.mrb[0].mxu0 %v1952
      %v2136 = vpop.f32.mrb[0].mxu0
      %v2137 = vadd.f32 0.0, %v2136
      %v2138 = vpop.f32.mrb[0].mxu0
      %v2139 = vpop.f32.mrb[0].mxu0
      %v2140 = vadd.f32 0.0, %v2139
      %v2141 = vpop.f32.mrb[0].mxu0
      %2142 = vmatprep.mubr.bf16.mxu0 0
      %2143 = vmatmul.mubr.bf16.gmra.mrb[0].mxu0 %v1953
      %v2144 = vpop.f32.mrb[0].mxu0
      %v2145 = vadd.f32 0.0, %v2144
      %v2146 = vpop.f32.mrb[0].mxu0
      %v2147 = vpop.f32.mrb[0].mxu0
      %v2148 = vadd.f32 0.0, %v2147
      %v2149 = vpop.f32.mrb[0].mxu0
      %2150 = vmatprep.mubr.bf16.mxu0 0
      %2151 = vmatmul.mubr.bf16.gmra.mrb[0].mxu0 %v1954
      %v2152 = vpop.f32.mrb[0].mxu0
      %v2153 = vadd.f32 0.0, %v2152
      %v2154 = vpop.f32.mrb[0].mxu0
      %v2155 = vpop.f32.mrb[0].mxu0
      %v2156 = vadd.f32 0.0, %v2155
      %v2157 = vpop.f32.mrb[0].mxu0
      %2158 = vmatprep.mubr.bf16.mxu0 0
      %2159 = vmatmul.mubr.bf16.gmra.mrb[0].mxu0 %v1955
      %v2160 = vpop.f32.mrb[0].mxu0
      %v2161 = vadd.f32 0.0, %v2160
      %v2162 = vpop.f32.mrb[0].mxu0
      %v2163 = vpop.f32.mrb[0].mxu0
      %v2164 = vadd.f32 0.0, %v2163
      %v2165 = vpop.f32.mrb[0].mxu0
      %2166 = vmatprep.mubr.bf16.mxu0 0
      %2167 = vmatmul.mubr.bf16.gmra.mrb[0].mxu0 %v1956
      %v2168 = vpop.f32.mrb[0].mxu0
      %v2169 = vadd.f32 0.0, %v2168
      %v2170 = vpop.f32.mrb[0].mxu0
      %v2171 = vpop.f32.mrb[0].mxu0
      %v2172 = vadd.f32 0.0, %v2171
      %v2173 = vpop.f32.mrb[0].mxu0
      %2174 = vmatprep.mubr.bf16.mxu0 0
      %2175 = vmatmul.mubr.bf16.gmra.mrb[0].mxu0 %v1957
      %v2176 = vpop.f32.mrb[0].mxu0
      %v2177 = vadd.f32 0.0, %v2176
      %v2178 = vpop.f32.mrb[0].mxu0
      %v2179 = vpop.f32.mrb[0].mxu0
      %v2180 = vadd.f32 0.0, %v2179
      %v2181 = vpop.f32.mrb[0].mxu0
      %2182 = vdwg.mxu0
      %v2183 = vadd.f32 %v1910, %v2057
      %v2184 = vadd.f32 %v1911, %v2060
      %v2185 = vadd.f32 %v1912, %v2065
      %v2186 = vadd.f32 %v1913, %v2068
      %v2187 = vadd.f32 %v1914, %v2073
      %v2188 = vadd.f32 %v1915, %v2076
      %v2189 = vadd.f32 %v1916, %v2081
      %v2190 = vadd.f32 %v1917, %v2084
      %v2191 = vadd.f32 %v1918, %v2089
      %v2192 = vadd.f32 %v1919, %v2092
      %v2193 = vadd.f32 %v1920, %v2097
      %v2194 = vadd.f32 %v1921, %v2100
      %v2195 = vadd.f32 %v1922, %v2105
      %v2196 = vadd.f32 %v1923, %v2108
      %v2197 = vadd.f32 %v1924, %v2113
      %v2198 = vadd.f32 %v1925, %v2116
      %v2199 = vadd.f32 %v1926, %v2121
      %v2200 = vadd.f32 %v1927, %v2124
      %v2201 = vadd.f32 %v1928, %v2129
      %v2202 = vadd.f32 %v1929, %v2132
      %v2203 = vadd.f32 %v1930, %v2137
      %v2204 = vadd.f32 %v1931, %v2140
      %v2205 = vadd.f32 %v1932, %v2145
      %v2206 = vadd.f32 %v1933, %v2148
      %v2207 = vadd.f32 %v1934, %v2153
      %v2208 = vadd.f32 %v1935, %v2156
      %v2209 = vadd.f32 %v1936, %v2161
      %v2210 = vadd.f32 %v1937, %v2164
      %v2211 = vadd.f32 %v1938, %v2169
      %v2212 = vadd.f32 %v1939, %v2172
      %v2213 = vadd.f32 %v1940, %v2177
      %v2214 = vadd.f32 %v1941, %v2180
      %2215 = vst [vmem:[#allocation3] sm:$0xff] %v2183
      %2216 = vst [vmem:[#allocation3 + $0x8] sm:$0xff] %v2184
      %2217 = vst [vmem:[#allocation3 + $0x10] sm:$0xff] %v2185
      %2218 = vst [vmem:[#allocation3 + $0x18] sm:$0xff] %v2186
      %2219 = vst [vmem:[#allocation3 + $0x20] sm:$0xff] %v2187
      %2220 = vst [vmem:[#allocation3 + $0x28] sm:$0xff] %v2188
      %2221 = vst [vmem:[#allocation3 + $0x30] sm:$0xff] %v2189
      %2222 = vst [vmem:[#allocation3 + $0x38] sm:$0xff] %v2190
      %2223 = vst [vmem:[#allocation3 + $0x40] sm:$0xff] %v2191
      %2224 = vst [vmem:[#allocation3 + $0x48] sm:$0xff] %v2192
      %2225 = vst [vmem:[#allocation3 + $0x50] sm:$0xff] %v2193
      %2226 = vst [vmem:[#allocation3 + $0x58] sm:$0xff] %v2194
      %2227 = vst [vmem:[#allocation3 + $0x60] sm:$0xff] %v2195
      %2228 = vst [vmem:[#allocation3 + $0x68] sm:$0xff] %v2196
      %2229 = vst [vmem:[#allocation3 + $0x70] sm:$0xff] %v2197
      %2230 = vst [vmem:[#allocation3 + $0x78] sm:$0xff] %v2198
      %2231 = vst [vmem:[#allocation3 + $0x80] sm:$0xff] %v2199
      %2232 = vst [vmem:[#allocation3 + $0x88] sm:$0xff] %v2200
      %2233 = vst [vmem:[#allocation3 + $0x90] sm:$0xff] %v2201
      %2234 = vst [vmem:[#allocation3 + $0x98] sm:$0xff] %v2202
      %2235 = vst [vmem:[#allocation3 + $0xa0] sm:$0xff] %v2203
      %2236 = vst [vmem:[#allocation3 + $0xa8] sm:$0xff] %v2204
      %2237 = vst [vmem:[#allocation3 + $0xb0] sm:$0xff] %v2205
      %2238 = vst [vmem:[#allocation3 + $0xb8] sm:$0xff] %v2206
      %2239 = vst [vmem:[#allocation3 + $0xc0] sm:$0xff] %v2207
      %2240 = vst [vmem:[#allocation3 + $0xc8] sm:$0xff] %v2208
      %2241 = vst [vmem:[#allocation3 + $0xd0] sm:$0xff] %v2209
      %2242 = vst [vmem:[#allocation3 + $0xd8] sm:$0xff] %v2210
      %2243 = vst [vmem:[#allocation3 + $0xe0] sm:$0xff] %v2211
      %2244 = vst [vmem:[#allocation3 + $0xe8] sm:$0xff] %v2212
      %2245 = vst [vmem:[#allocation3 + $0xf0] sm:$0xff] %v2213
      %2246 = vst [vmem:[#allocation3 + $0xf8] sm:$0xff] %v2214
      %v2247 = vld [vmem:[#allocation2 + $0x20] sm:$0xff]
      %v2248 = vld [vmem:[#allocation2 + $0x28] sm:$0xff]
      %v2249 = vld [vmem:[#allocation2 + $0x30] sm:$0xff]
      %v2250 = vld [vmem:[#allocation2 + $0x38] sm:$0xff]
      %v2251 = vld [vmem:[#allocation2 + $0x40] sm:$0xff]
      %v2252 = vld [vmem:[#allocation2 + $0x48] sm:$0xff]
      %v2253 = vld [vmem:[#allocation2 + $0x50] sm:$0xff]
      %v2254 = vld [vmem:[#allocation2 + $0x58] sm:$0xff]
      %v2255 = vld [vmem:[#allocation2 + $0x60] sm:$0xff]
      %v2256 = vld [vmem:[#allocation2 + $0x68] sm:$0xff]
      %v2257 = vld [vmem:[#allocation2 + $0x70] sm:$0xff]
      %v2258 = vld [vmem:[#allocation2 + $0x78] sm:$0xff]
      %v2259 = vld [vmem:[#allocation2 + $0x80] sm:$0xff]
      %v2260 = vld [vmem:[#allocation2 + $0x88] sm:$0xff]
      %v2261 = vld [vmem:[#allocation2 + $0x90] sm:$0xff]
      %v2262 = vld [vmem:[#allocation2 + $0x98] sm:$0xff]
      %v2263 = vld [vmem:[#allocation2 + $0xa0] sm:$0xff]
      %v2264 = vld [vmem:[#allocation2 + $0xa8] sm:$0xff]
      %v2265 = vld [vmem:[#allocation2 + $0xb0] sm:$0xff]
      %v2266 = vld [vmem:[#allocation2 + $0xb8] sm:$0xff]
      %v2267 = vld [vmem:[#allocation2 + $0xc0] sm:$0xff]
      %v2268 = vld [vmem:[#allocation2 + $0xc8] sm:$0xff]
      %v2269 = vld [vmem:[#allocation2 + $0xd0] sm:$0xff]
      %v2270 = vld [vmem:[#allocation2 + $0xd8] sm:$0xff]
      %v2271 = vld [vmem:[#allocation2 + $0xe0] sm:$0xff]
      %v2272 = vld [vmem:[#allocation2 + $0xe8] sm:$0xff]
      %v2273 = vld [vmem:[#allocation2 + $0xf0] sm:$0xff]
      %v2274 = vld [vmem:[#allocation2 + $0xf8] sm:$0xff]
      %v2275 = vld [vmem:[#allocation2 + $0x100] sm:$0xff]
      %v2276 = vld [vmem:[#allocation2 + $0x108] sm:$0xff]
      %v2277 = vld [vmem:[#allocation2 + $0x110] sm:$0xff]
      %v2278 = vld [vmem:[#allocation2 + $0x118] sm:$0xff]
      %v2279 = vld [vmem:[#allocation2] sm:$0xff]
      %v2280 = vld [vmem:[#allocation2 + $0x8] sm:$0xff]
      %v2281 = vld [vmem:[#allocation2 + $0x10] sm:$0xff]
      %v2282 = vld [vmem:[#allocation2 + $0x18] sm:$0xff]
      %v2283 = vmax.f32 %v2247, %v2279
      %v2284 = vmax.f32 %v2248, %v2280
      %v2285 = vmax.f32 %v2249, %v2281
      %v2286 = vmax.f32 %v2250, %v2282
      %v2287 = vmax.f32 %v2251, %v2247
      %v2288 = vmax.f32 %v2252, %v2248
      %v2289 = vmax.f32 %v2253, %v2249
      %v2290 = vmax.f32 %v2254, %v2250
      %v2291 = vmax.f32 %v2255, %v2251
      %v2292 = vmax.f32 %v2256, %v2252
      %v2293 = vmax.f32 %v2257, %v2253
      %v2294 = vmax.f32 %v2258, %v2254
      %v2295 = vmax.f32 %v2259, %v2255
      %v2296 = vmax.f32 %v2260, %v2256
      %v2297 = vmax.f32 %v2261, %v2257
      %v2298 = vmax.f32 %v2262, %v2258
      %v2299 = vmax.f32 %v2263, %v2259
      %v2300 = vmax.f32 %v2264, %v2260
      %v2301 = vmax.f32 %v2265, %v2261
      %v2302 = vmax.f32 %v2266, %v2262
      %v2303 = vmax.f32 %v2267, %v2263
      %v2304 = vmax.f32 %v2268, %v2264
      %v2305 = vmax.f32 %v2269, %v2265
      %v2306 = vmax.f32 %v2270, %v2266
      %v2307 = vmax.f32 %v2271, %v2267
      %v2308 = vmax.f32 %v2272, %v2268
      %v2309 = vmax.f32 %v2273, %v2269
      %v2310 = vmax.f32 %v2274, %v2270
      %v2311 = vmax.f32 %v2275, %v2271
      %v2312 = vmax.f32 %v2276, %v2272
      %v2313 = vmax.f32 %v2277, %v2273
      %v2314 = vmax.f32 %v2278, %v2274
      %v2315 = vmax.f32 %v2283, %v2281
      %v2316 = vmax.f32 %v2284, %v2282
      %v2317 = vmax.f32 %v2285, %v2247
      %v2318 = vmax.f32 %v2286, %v2248
      %v2319 = vmax.f32 %v2287, %v2249
      %v2320 = vmax.f32 %v2288, %v2250
      %v2321 = vmax.f32 %v2289, %v2251
      %v2322 = vmax.f32 %v2290, %v2252
      %v2323 = vmax.f32 %v2291, %v2253
      %v2324 = vmax.f32 %v2292, %v2254
      %v2325 = vmax.f32 %v2293, %v2255
      %v2326 = vmax.f32 %v2294, %v2256
      %v2327 = vmax.f32 %v2295, %v2257
      %v2328 = vmax.f32 %v2296, %v2258
      %v2329 = vmax.f32 %v2297, %v2259
      %v2330 = vmax.f32 %v2298, %v2260
      %v2331 = vmax.f32 %v2299, %v2261
      %v2332 = vmax.f32 %v2300, %v2262
      %v2333 = vmax.f32 %v2301, %v2263
      %v2334 = vmax.f32 %v2302, %v2264
      %v2335 = vmax.f32 %v2303, %v2265
      %v2336 = vmax.f32 %v2304, %v2266
      %v2337 = vmax.f32 %v2305, %v2267
      %v2338 = vmax.f32 %v2306, %v2268
      %v2339 = vmax.f32 %v2307, %v2269
      %v2340 = vmax.f32 %v2308, %v2270
      %v2341 = vmax.f32 %v2309, %v2271
      %v2342 = vmax.f32 %v2310, %v2272
      %v2343 = vmax.f32 %v2311, %v2273
      %v2344 = vmax.f32 %v2312, %v2274
      %v2345 = vmax.f32 %v2313, %v2275
      %v2346 = vmax.f32 %v2314, %v2276
      %v2347 = vld [vmem:[#allocation2 + $0x120] sm:$0xff]
      %v2348 = vld [vmem:[#allocation2 + $0x128] sm:$0xff]
      %v2349 = vmax.f32 %v2315, %v2249
      %v2350 = vmax.f32 %v2316, %v2250
      %v2351 = vmax.f32 %v2317, %v2251
      %v2352 = vmax.f32 %v2318, %v2252
      %v2353 = vmax.f32 %v2319, %v2253
      %v2354 = vmax.f32 %v2320, %v2254
      %v2355 = vmax.f32 %v2321, %v2255
      %v2356 = vmax.f32 %v2322, %v2256
      %v2357 = vmax.f32 %v2323, %v2257
      %v2358 = vmax.f32 %v2324, %v2258
      %v2359 = vmax.f32 %v2325, %v2259
      %v2360 = vmax.f32 %v2326, %v2260
      %v2361 = vmax.f32 %v2327, %v2261
      %v2362 = vmax.f32 %v2328, %v2262
      %v2363 = vmax.f32 %v2329, %v2263
      %v2364 = vmax.f32 %v2330, %v2264
      %v2365 = vmax.f32 %v2331, %v2265
      %v2366 = vmax.f32 %v2332, %v2266
      %v2367 = vmax.f32 %v2333, %v2267
      %v2368 = vmax.f32 %v2334, %v2268
      %v2369 = vmax.f32 %v2335, %v2269
      %v2370 = vmax.f32 %v2336, %v2270
      %v2371 = vmax.f32 %v2337, %v2271
      %v2372 = vmax.f32 %v2338, %v2272
      %v2373 = vmax.f32 %v2339, %v2273
      %v2374 = vmax.f32 %v2340, %v2274
      %v2375 = vmax.f32 %v2341, %v2275
      %v2376 = vmax.f32 %v2342, %v2276
      %v2377 = vmax.f32 %v2343, %v2277
      %v2378 = vmax.f32 %v2344, %v2278
      %v2379 = vmax.f32 %v2345, %v2347
      %v2380 = vmax.f32 %v2346, %v2348
      %v2381 = vld [vmem:[#allocation2 + $0x40] sm:$0xff]
      %v2382 = vld [vmem:[#allocation2 + $0x48] sm:$0xff]
      %v2383 = vld [vmem:[#allocation2 + $0x50] sm:$0xff]
      %v2384 = vld [vmem:[#allocation2 + $0x58] sm:$0xff]
      %v2385 = vld [vmem:[#allocation2 + $0x60] sm:$0xff]
      %v2386 = vld [vmem:[#allocation2 + $0x68] sm:$0xff]
      %v2387 = vld [vmem:[#allocation2 + $0x70] sm:$0xff]
      %v2388 = vld [vmem:[#allocation2 + $0x78] sm:$0xff]
      %v2389 = vld [vmem:[#allocation2 + $0x80] sm:$0xff]
      %v2390 = vld [vmem:[#allocation2 + $0x88] sm:$0xff]
      %v2391 = vld [vmem:[#allocation2 + $0x90] sm:$0xff]
      %v2392 = vld [vmem:[#allocation2 + $0x98] sm:$0xff]
      %v2393 = vld [vmem:[#allocation2 + $0xa0] sm:$0xff]
      %v2394 = vld [vmem:[#allocation2 + $0xa8] sm:$0xff]
      %v2395 = vld [vmem:[#allocation2 + $0xb0] sm:$0xff]
      %v2396 = vld [vmem:[#allocation2 + $0xb8] sm:$0xff]
      %v2397 = vld [vmem:[#allocation2 + $0xc0] sm:$0xff]
      %v2398 = vld [vmem:[#allocation2 + $0xc8] sm:$0xff]
      %v2399 = vld [vmem:[#allocation2 + $0xd0] sm:$0xff]
      %v2400 = vld [vmem:[#allocation2 + $0xd8] sm:$0xff]
      %v2401 = vld [vmem:[#allocation2 + $0xe0] sm:$0xff]
      %v2402 = vld [vmem:[#allocation2 + $0xe8] sm:$0xff]
      %v2403 = vld [vmem:[#allocation2 + $0xf0] sm:$0xff]
      %v2404 = vld [vmem:[#allocation2 + $0xf8] sm:$0xff]
      %v2405 = vld [vmem:[#allocation2 + $0x100] sm:$0xff]
      %v2406 = vld [vmem:[#allocation2 + $0x108] sm:$0xff]
      %v2407 = vld [vmem:[#allocation2 + $0x110] sm:$0xff]
      %v2408 = vld [vmem:[#allocation2 + $0x118] sm:$0xff]
      %v2409 = vld [vmem:[#allocation2 + $0x120] sm:$0xff]
      %v2410 = vld [vmem:[#allocation2 + $0x128] sm:$0xff]
      %v2411 = vld [vmem:[#allocation2 + $0x130] sm:$0xff]
      %v2412 = vld [vmem:[#allocation2 + $0x138] sm:$0xff]
      %v2413 = vmax.f32 %v2349, %v2381
      %v2414 = vmax.f32 %v2350, %v2382
      %v2415 = vmax.f32 %v2351, %v2383
      %v2416 = vmax.f32 %v2352, %v2384
      %v2417 = vmax.f32 %v2353, %v2385
      %v2418 = vmax.f32 %v2354, %v2386
      %v2419 = vmax.f32 %v2355, %v2387
      %v2420 = vmax.f32 %v2356, %v2388
      %v2421 = vmax.f32 %v2357, %v2389
      %v2422 = vmax.f32 %v2358, %v2390
      %v2423 = vmax.f32 %v2359, %v2391
      %v2424 = vmax.f32 %v2360, %v2392
      %v2425 = vmax.f32 %v2361, %v2393
      %v2426 = vmax.f32 %v2362, %v2394
      %v2427 = vmax.f32 %v2363, %v2395
      %v2428 = vmax.f32 %v2364, %v2396
      %v2429 = vmax.f32 %v2365, %v2397
      %v2430 = vmax.f32 %v2366, %v2398
      %v2431 = vmax.f32 %v2367, %v2399
      %v2432 = vmax.f32 %v2368, %v2400
      %v2433 = vmax.f32 %v2369, %v2401
      %v2434 = vmax.f32 %v2370, %v2402
      %v2435 = vmax.f32 %v2371, %v2403
      %v2436 = vmax.f32 %v2372, %v2404
      %v2437 = vmax.f32 %v2373, %v2405
      %v2438 = vmax.f32 %v2374, %v2406
      %v2439 = vmax.f32 %v2375, %v2407
      %v2440 = vmax.f32 %v2376, %v2408
      %v2441 = vmax.f32 %v2377, %v2409
      %v2442 = vmax.f32 %v2378, %v2410
      %v2443 = vmax.f32 %v2379, %v2411
      %v2444 = vmax.f32 %v2380, %v2412
      %2445 = vst [vmem:[#allocation2 + $0x20] sm:$0xff] %v2413
      %2446 = vst [vmem:[#allocation2 + $0x28] sm:$0xff] %v2414
      %2447 = vst [vmem:[#allocation2 + $0x30] sm:$0xff] %v2415
      %2448 = vst [vmem:[#allocation2 + $0x38] sm:$0xff] %v2416
      %2449 = vst [vmem:[#allocation2 + $0x40] sm:$0xff] %v2417
      %2450 = vst [vmem:[#allocation2 + $0x48] sm:$0xff] %v2418
      %2451 = vst [vmem:[#allocation2 + $0x50] sm:$0xff] %v2419
      %2452 = vst [vmem:[#allocation2 + $0x58] sm:$0xff] %v2420
      %2453 = vst [vmem:[#allocation2 + $0x60] sm:$0xff] %v2421
      %2454 = vst [vmem:[#allocation2 + $0x68] sm:$0xff] %v2422
      %2455 = vst [vmem:[#allocation2 + $0x70] sm:$0xff] %v2423
      %2456 = vst [vmem:[#allocation2 + $0x78] sm:$0xff] %v2424
      %2457 = vst [vmem:[#allocation2 + $0x80] sm:$0xff] %v2425
      %2458 = vst [vmem:[#allocation2 + $0x88] sm:$0xff] %v2426
      %2459 = vst [vmem:[#allocation2 + $0x90] sm:$0xff] %v2427
      %2460 = vst [vmem:[#allocation2 + $0x98] sm:$0xff] %v2428
      %2461 = vst [vmem:[#allocation2 + $0xa0] sm:$0xff] %v2429
      %2462 = vst [vmem:[#allocation2 + $0xa8] sm:$0xff] %v2430
      %2463 = vst [vmem:[#allocation2 + $0xb0] sm:$0xff] %v2431
      %2464 = vst [vmem:[#allocation2 + $0xb8] sm:$0xff] %v2432
      %2465 = vst [vmem:[#allocation2 + $0xc0] sm:$0xff] %v2433
      %2466 = vst [vmem:[#allocation2 + $0xc8] sm:$0xff] %v2434
      %2467 = vst [vmem:[#allocation2 + $0xd0] sm:$0xff] %v2435
      %2468 = vst [vmem:[#allocation2 + $0xd8] sm:$0xff] %v2436
      %2469 = vst [vmem:[#allocation2 + $0xe0] sm:$0xff] %v2437
      %2470 = vst [vmem:[#allocation2 + $0xe8] sm:$0xff] %v2438
      %2471 = vst [vmem:[#allocation2 + $0xf0] sm:$0xff] %v2439
      %2472 = vst [vmem:[#allocation2 + $0xf8] sm:$0xff] %v2440
      %2473 = vst [vmem:[#allocation2 + $0x100] sm:$0xff] %v2441
      %2474 = vst [vmem:[#allocation2 + $0x108] sm:$0xff] %v2442
      %2475 = vst [vmem:[#allocation2 + $0x110] sm:$0xff] %v2443
      %2476 = vst [vmem:[#allocation2 + $0x118] sm:$0xff] %v2444
      %v2477 = vld [vmem:[#allocation2 + $0x1e] sm:$0xff]
      %v2478 = vld [vmem:[#allocation2 + $0x26] sm:$0xff]
      %v2479 = vld [vmem:[#allocation2 + $0x2e] sm:$0xff]
      %v2480 = vld [vmem:[#allocation2 + $0x36] sm:$0xff]
      %v2481 = vld [vmem:[#allocation2 + $0x3e] sm:$0xff]
      %v2482 = vld [vmem:[#allocation2 + $0x46] sm:$0xff]
      %v2483 = vld [vmem:[#allocation2 + $0x4e] sm:$0xff]
      %v2484 = vld [vmem:[#allocation2 + $0x56] sm:$0xff]
      %v2485 = vld [vmem:[#allocation2 + $0x5e] sm:$0xff]
      %v2486 = vld [vmem:[#allocation2 + $0x66] sm:$0xff]
      %v2487 = vld [vmem:[#allocation2 + $0x6e] sm:$0xff]
      %v2488 = vld [vmem:[#allocation2 + $0x76] sm:$0xff]
      %v2489 = vld [vmem:[#allocation2 + $0x7e] sm:$0xff]
      %v2490 = vld [vmem:[#allocation2 + $0x86] sm:$0xff]
      %v2491 = vld [vmem:[#allocation2 + $0x8e] sm:$0xff]
      %v2492 = vld [vmem:[#allocation2 + $0x96] sm:$0xff]
      %v2493 = vld [vmem:[#allocation2 + $0x9e] sm:$0xff]
      %v2494 = vld [vmem:[#allocation2 + $0xa6] sm:$0xff]
      %v2495 = vld [vmem:[#allocation2 + $0xae] sm:$0xff]
      %v2496 = vld [vmem:[#allocation2 + $0xb6] sm:$0xff]
      %v2497 = vld [vmem:[#allocation2 + $0xbe] sm:$0xff]
      %v2498 = vld [vmem:[#allocation2 + $0xc6] sm:$0xff]
      %v2499 = vld [vmem:[#allocation2 + $0xce] sm:$0xff]
      %v2500 = vld [vmem:[#allocation2 + $0xd6] sm:$0xff]
      %v2501 = vld [vmem:[#allocation2 + $0xde] sm:$0xff]
      %v2502 = vld [vmem:[#allocation2 + $0xe6] sm:$0xff]
      %v2503 = vld [vmem:[#allocation2 + $0xee] sm:$0xff]
      %v2504 = vld [vmem:[#allocation2 + $0xf6] sm:$0xff]
      %v2505 = vld [vmem:[#allocation2 + $0xfe] sm:$0xff]
      %v2506 = vld [vmem:[#allocation2 + $0x106] sm:$0xff]
      %v2507 = vld [vmem:[#allocation2 + $0x10e] sm:$0xff]
      %v2508 = vld [vmem:[#allocation2 + $0x116] sm:$0xff]
      %v2509 = vld [vmem:[%s3] sm:$0xff]
      %v2510 = vld [vmem:[%s3 + $0x8] sm:$0xff]
      %v2511 = vld [vmem:[%s3 + $0x10] sm:$0xff]
      %v2512 = vld [vmem:[%s3 + $0x18] sm:$0xff]
      %v2513 = vld [vmem:[%s3 + $0x20] sm:$0xff]
      %v2514 = vld [vmem:[%s3 + $0x28] sm:$0xff]
      %v2515 = vld [vmem:[%s3 + $0x30] sm:$0xff]
      %v2516 = vld [vmem:[%s3 + $0x38] sm:$0xff]
      %v2517 = vld [vmem:[%s3 + $0x40] sm:$0xff]
      %v2518 = vld [vmem:[%s3 + $0x48] sm:$0xff]
      %v2519 = vld [vmem:[%s3 + $0x50] sm:$0xff]
      %v2520 = vld [vmem:[%s3 + $0x58] sm:$0xff]
      %v2521 = vld [vmem:[%s3 + $0x60] sm:$0xff]
      %v2522 = vld [vmem:[%s3 + $0x68] sm:$0xff]
      %v2523 = vld [vmem:[%s3 + $0x70] sm:$0xff]
      %v2524 = vld [vmem:[%s3 + $0x78] sm:$0xff]
      %v2525 = vld [vmem:[%s3 + $0x80] sm:$0xff]
      %v2526 = vld [vmem:[%s3 + $0x88] sm:$0xff]
      %v2527 = vld [vmem:[%s3 + $0x90] sm:$0xff]
      %v2528 = vld [vmem:[%s3 + $0x98] sm:$0xff]
      %v2529 = vld [vmem:[%s3 + $0xa0] sm:$0xff]
      %v2530 = vld [vmem:[%s3 + $0xa8] sm:$0xff]
      %v2531 = vld [vmem:[%s3 + $0xb0] sm:$0xff]
      %v2532 = vld [vmem:[%s3 + $0xb8] sm:$0xff]
      %v2533 = vld [vmem:[%s3 + $0xc0] sm:$0xff]
      %v2534 = vld [vmem:[%s3 + $0xc8] sm:$0xff]
      %v2535 = vld [vmem:[%s3 + $0xd0] sm:$0xff]
      %v2536 = vld [vmem:[%s3 + $0xd8] sm:$0xff]
      %v2537 = vld [vmem:[%s3 + $0xe0] sm:$0xff]
      %v2538 = vld [vmem:[%s3 + $0xe8] sm:$0xff]
      %v2539 = vld [vmem:[%s3 + $0xf0] sm:$0xff]
      %v2540 = vld [vmem:[%s3 + $0xf8] sm:$0xff]
      %2542 = vset.pattern.permute.xlu0 0
      %2543 = vperm.xlu0 %2542, %v2509
      %v2544 = vpop.permute.xlu0 %2543
      %2547 = vset.pattern.permute.xlu0 0
      %2548 = vperm.xlu0 %2547, %v2510
      %v2549 = vpop.permute.xlu0 %2548
      %2552 = vset.pattern.permute.xlu0 0
      %2553 = vperm.xlu0 %2552, %v2511
      %v2554 = vpop.permute.xlu0 %2553
      %2557 = vset.pattern.permute.xlu0 0
      %2558 = vperm.xlu0 %2557, %v2512
      %v2559 = vpop.permute.xlu0 %2558
      %2562 = vset.pattern.permute.xlu0 0
      %2563 = vperm.xlu0 %2562, %v2513
      %v2564 = vpop.permute.xlu0 %2563
      %2567 = vset.pattern.permute.xlu0 0
      %2568 = vperm.xlu0 %2567, %v2514
      %v2569 = vpop.permute.xlu0 %2568
      %2572 = vset.pattern.permute.xlu0 0
      %2573 = vperm.xlu0 %2572, %v2515
      %v2574 = vpop.permute.xlu0 %2573
      %2577 = vset.pattern.permute.xlu0 0
      %2578 = vperm.xlu0 %2577, %v2516
      %v2579 = vpop.permute.xlu0 %2578
      %2582 = vset.pattern.permute.xlu0 0
      %2583 = vperm.xlu0 %2582, %v2517
      %v2584 = vpop.permute.xlu0 %2583
      %2587 = vset.pattern.permute.xlu0 0
      %2588 = vperm.xlu0 %2587, %v2518
      %v2589 = vpop.permute.xlu0 %2588
      %2592 = vset.pattern.permute.xlu0 0
      %2593 = vperm.xlu0 %2592, %v2519
      %v2594 = vpop.permute.xlu0 %2593
      %2597 = vset.pattern.permute.xlu0 0
      %2598 = vperm.xlu0 %2597, %v2520
      %v2599 = vpop.permute.xlu0 %2598
      %2602 = vset.pattern.permute.xlu0 0
      %2603 = vperm.xlu0 %2602, %v2521
      %v2604 = vpop.permute.xlu0 %2603
      %2607 = vset.pattern.permute.xlu0 0
      %2608 = vperm.xlu0 %2607, %v2522
      %v2609 = vpop.permute.xlu0 %2608
      %2612 = vset.pattern.permute.xlu0 0
      %2613 = vperm.xlu0 %2612, %v2523
      %v2614 = vpop.permute.xlu0 %2613
      %2617 = vset.pattern.permute.xlu0 0
      %2618 = vperm.xlu0 %2617, %v2524
      %v2619 = vpop.permute.xlu0 %2618
      %2622 = vset.pattern.permute.xlu0 0
      %2623 = vperm.xlu0 %2622, %v2525
      %v2624 = vpop.permute.xlu0 %2623
      %2627 = vset.pattern.permute.xlu0 0
      %2628 = vperm.xlu0 %2627, %v2526
      %v2629 = vpop.permute.xlu0 %2628
      %2632 = vset.pattern.permute.xlu0 0
      %2633 = vperm.xlu0 %2632, %v2527
      %v2634 = vpop.permute.xlu0 %2633
      %2637 = vset.pattern.permute.xlu0 0
      %2638 = vperm.xlu0 %2637, %v2528
      %v2639 = vpop.permute.xlu0 %2638
      %2642 = vset.pattern.permute.xlu0 0
      %2643 = vperm.xlu0 %2642, %v2529
      %v2644 = vpop.permute.xlu0 %2643
      %2647 = vset.pattern.permute.xlu0 0
      %2648 = vperm.xlu0 %2647, %v2530
      %v2649 = vpop.permute.xlu0 %2648
      %2652 = vset.pattern.permute.xlu0 0
      %2653 = vperm.xlu0 %2652, %v2531
      %v2654 = vpop.permute.xlu0 %2653
      %2657 = vset.pattern.permute.xlu0 0
      %2658 = vperm.xlu0 %2657, %v2532
      %v2659 = vpop.permute.xlu0 %2658
      %2662 = vset.pattern.permute.xlu0 0
      %2663 = vperm.xlu0 %2662, %v2533
      %v2664 = vpop.permute.xlu0 %2663
      %2667 = vset.pattern.permute.xlu0 0
      %2668 = vperm.xlu0 %2667, %v2534
      %v2669 = vpop.permute.xlu0 %2668
      %2672 = vset.pattern.permute.xlu0 0
      %2673 = vperm.xlu0 %2672, %v2535
      %v2674 = vpop.permute.xlu0 %2673
      %2677 = vset.pattern.permute.xlu0 0
      %2678 = vperm.xlu0 %2677, %v2536
      %v2679 = vpop.permute.xlu0 %2678
      %2682 = vset.pattern.permute.xlu0 0
      %2683 = vperm.xlu0 %2682, %v2537
      %v2684 = vpop.permute.xlu0 %2683
      %2687 = vset.pattern.permute.xlu0 0
      %2688 = vperm.xlu0 %2687, %v2538
      %v2689 = vpop.permute.xlu0 %2688
      %2692 = vset.pattern.permute.xlu0 0
      %2693 = vperm.xlu0 %2692, %v2539
      %v2694 = vpop.permute.xlu0 %2693
      %2697 = vset.pattern.permute.xlu0 0
      %2698 = vperm.xlu0 %2697, %v2540
      %v2699 = vpop.permute.xlu0 %2698
      %v2701 = vadd.f32 %v2477, %v2544
      %v2702 = vadd.f32 %v2478, %v2549
      %v2703 = vadd.f32 %v2479, %v2554
      %v2704 = vadd.f32 %v2480, %v2559
      %v2705 = vadd.f32 %v2481, %v2564
      %v2706 = vadd.f32 %v2482, %v2569
      %v2707 = vadd.f32 %v2483, %v2574
      %v2708 = vadd.f32 %v2484, %v2579
      %v2709 = vadd.f32 %v2485, %v2584
      %v2710 = vadd.f32 %v2486, %v2589
      %v2711 = vadd.f32 %v2487, %v2594
      %v2712 = vadd.f32 %v2488, %v2599
      %v2713 = vadd.f32 %v2489, %v2604
      %v2714 = vadd.f32 %v2490, %v2609
      %v2715 = vadd.f32 %v2491, %v2614
      %v2716 = vadd.f32 %v2492, %v2619
      %v2717 = vadd.f32 %v2493, %v2624
      %v2718 = vadd.f32 %v2494, %v2629
      %v2719 = vadd.f32 %v2495, %v2634
      %v2720 = vadd.f32 %v2496, %v2639
      %v2721 = vadd.f32 %v2497, %v2644
      %v2722 = vadd.f32 %v2498, %v2649
      %v2723 = vadd.f32 %v2499, %v2654
      %v2724 = vadd.f32 %v2500, %v2659
      %v2725 = vadd.f32 %v2501, %v2664
      %v2726 = vadd.f32 %v2502, %v2669
      %v2727 = vadd.f32 %v2503, %v2674
      %v2728 = vadd.f32 %v2504, %v2679
      %v2729 = vadd.f32 %v2505, %v2684
      %v2730 = vadd.f32 %v2506, %v2689
      %v2731 = vadd.f32 %v2507, %v2694
      %v2732 = vadd.f32 %v2508, %v2699
      %v2733 = vmax.f32 %v2413, %v2701
      %v2734 = vmax.f32 %v2414, %v2702
      %v2735 = vmax.f32 %v2415, %v2703
      %v2736 = vmax.f32 %v2416, %v2704
      %v2737 = vmax.f32 %v2417, %v2705
      %v2738 = vmax.f32 %v2418, %v2706
      %v2739 = vmax.f32 %v2419, %v2707
      %v2740 = vmax.f32 %v2420, %v2708
      %v2741 = vmax.f32 %v2421, %v2709
      %v2742 = vmax.f32 %v2422, %v2710
      %v2743 = vmax.f32 %v2423, %v2711
      %v2744 = vmax.f32 %v2424, %v2712
      %v2745 = vmax.f32 %v2425, %v2713
      %v2746 = vmax.f32 %v2426, %v2714
      %v2747 = vmax.f32 %v2427, %v2715
      %v2748 = vmax.f32 %v2428, %v2716
      %v2749 = vmax.f32 %v2429, %v2717
      %v2750 = vmax.f32 %v2430, %v2718
      %v2751 = vmax.f32 %v2431, %v2719
      %v2752 = vmax.f32 %v2432, %v2720
      %v2753 = vmax.f32 %v2433, %v2721
      %v2754 = vmax.f32 %v2434, %v2722
      %v2755 = vmax.f32 %v2435, %v2723
      %v2756 = vmax.f32 %v2436, %v2724
      %v2757 = vmax.f32 %v2437, %v2725
      %v2758 = vmax.f32 %v2438, %v2726
      %v2759 = vmax.f32 %v2439, %v2727
      %v2760 = vmax.f32 %v2440, %v2728
      %v2761 = vmax.f32 %v2441, %v2729
      %v2762 = vmax.f32 %v2442, %v2730
      %v2763 = vmax.f32 %v2443, %v2731
      %v2764 = vmax.f32 %v2444, %v2732
      %v2765 = vld [vmem:[#allocation2 + $0x1f] sm:$0xff]
      %v2766 = vld [vmem:[#allocation2 + $0x27] sm:$0xff]
      %v2767 = vld [vmem:[#allocation2 + $0x2f] sm:$0xff]
      %v2768 = vld [vmem:[#allocation2 + $0x37] sm:$0xff]
      %v2769 = vld [vmem:[#allocation2 + $0x3f] sm:$0xff]
      %v2770 = vld [vmem:[#allocation2 + $0x47] sm:$0xff]
      %v2771 = vld [vmem:[#allocation2 + $0x4f] sm:$0xff]
      %v2772 = vld [vmem:[#allocation2 + $0x57] sm:$0xff]
      %v2773 = vld [vmem:[#allocation2 + $0x5f] sm:$0xff]
      %v2774 = vld [vmem:[#allocation2 + $0x67] sm:$0xff]
      %v2775 = vld [vmem:[#allocation2 + $0x6f] sm:$0xff]
      %v2776 = vld [vmem:[#allocation2 + $0x77] sm:$0xff]
      %v2777 = vld [vmem:[#allocation2 + $0x7f] sm:$0xff]
      %v2778 = vld [vmem:[#allocation2 + $0x87] sm:$0xff]
      %v2779 = vld [vmem:[#allocation2 + $0x8f] sm:$0xff]
      %v2780 = vld [vmem:[#allocation2 + $0x97] sm:$0xff]
      %v2781 = vld [vmem:[#allocation2 + $0x9f] sm:$0xff]
      %v2782 = vld [vmem:[#allocation2 + $0xa7] sm:$0xff]
      %v2783 = vld [vmem:[#allocation2 + $0xaf] sm:$0xff]
      %v2784 = vld [vmem:[#allocation2 + $0xb7] sm:$0xff]
      %v2785 = vld [vmem:[#allocation2 + $0xbf] sm:$0xff]
      %v2786 = vld [vmem:[#allocation2 + $0xc7] sm:$0xff]
      %v2787 = vld [vmem:[#allocation2 + $0xcf] sm:$0xff]
      %v2788 = vld [vmem:[#allocation2 + $0xd7] sm:$0xff]
      %v2789 = vld [vmem:[#allocation2 + $0xdf] sm:$0xff]
      %v2790 = vld [vmem:[#allocation2 + $0xe7] sm:$0xff]
      %v2791 = vld [vmem:[#allocation2 + $0xef] sm:$0xff]
      %v2792 = vld [vmem:[#allocation2 + $0xf7] sm:$0xff]
      %v2793 = vld [vmem:[#allocation2 + $0xff] sm:$0xff]
      %v2794 = vld [vmem:[#allocation2 + $0x107] sm:$0xff]
      %v2795 = vld [vmem:[#allocation2 + $0x10f] sm:$0xff]
      %v2796 = vld [vmem:[#allocation2 + $0x117] sm:$0xff]
      %2797 = vset.pattern.permute.xlu0 1
      %2798 = vperm.xlu0 %2797, %v2509
      %v2799 = vpop.permute.xlu0 %2798
      %2801 = vset.pattern.permute.xlu0 1
      %2802 = vperm.xlu0 %2801, %v2510
      %v2803 = vpop.permute.xlu0 %2802
      %2805 = vset.pattern.permute.xlu0 1
      %2806 = vperm.xlu0 %2805, %v2511
      %v2807 = vpop.permute.xlu0 %2806
      %2809 = vset.pattern.permute.xlu0 1
      %2810 = vperm.xlu0 %2809, %v2512
      %v2811 = vpop.permute.xlu0 %2810
      %2813 = vset.pattern.permute.xlu0 1
      %2814 = vperm.xlu0 %2813, %v2513
      %v2815 = vpop.permute.xlu0 %2814
      %2817 = vset.pattern.permute.xlu0 1
      %2818 = vperm.xlu0 %2817, %v2514
      %v2819 = vpop.permute.xlu0 %2818
      %2821 = vset.pattern.permute.xlu0 1
      %2822 = vperm.xlu0 %2821, %v2515
      %v2823 = vpop.permute.xlu0 %2822
      %2825 = vset.pattern.permute.xlu0 1
      %2826 = vperm.xlu0 %2825, %v2516
      %v2827 = vpop.permute.xlu0 %2826
      %2829 = vset.pattern.permute.xlu0 1
      %2830 = vperm.xlu0 %2829, %v2517
      %v2831 = vpop.permute.xlu0 %2830
      %2833 = vset.pattern.permute.xlu0 1
      %2834 = vperm.xlu0 %2833, %v2518
      %v2835 = vpop.permute.xlu0 %2834
      %2837 = vset.pattern.permute.xlu0 1
      %2838 = vperm.xlu0 %2837, %v2519
      %v2839 = vpop.permute.xlu0 %2838
      %2841 = vset.pattern.permute.xlu0 1
      %2842 = vperm.xlu0 %2841, %v2520
      %v2843 = vpop.permute.xlu0 %2842
      %2845 = vset.pattern.permute.xlu0 1
      %2846 = vperm.xlu0 %2845, %v2521
      %v2847 = vpop.permute.xlu0 %2846
      %2849 = vset.pattern.permute.xlu0 1
      %2850 = vperm.xlu0 %2849, %v2522
      %v2851 = vpop.permute.xlu0 %2850
      %2853 = vset.pattern.permute.xlu0 1
      %2854 = vperm.xlu0 %2853, %v2523
      %v2855 = vpop.permute.xlu0 %2854
      %2857 = vset.pattern.permute.xlu0 1
      %2858 = vperm.xlu0 %2857, %v2524
      %v2859 = vpop.permute.xlu0 %2858
      %2861 = vset.pattern.permute.xlu0 1
      %2862 = vperm.xlu0 %2861, %v2525
      %v2863 = vpop.permute.xlu0 %2862
      %2865 = vset.pattern.permute.xlu0 1
      %2866 = vperm.xlu0 %2865, %v2526
      %v2867 = vpop.permute.xlu0 %2866
      %2869 = vset.pattern.permute.xlu0 1
      %2870 = vperm.xlu0 %2869, %v2527
      %v2871 = vpop.permute.xlu0 %2870
      %2873 = vset.pattern.permute.xlu0 1
      %2874 = vperm.xlu0 %2873, %v2528
      %v2875 = vpop.permute.xlu0 %2874
      %2877 = vset.pattern.permute.xlu0 1
      %2878 = vperm.xlu0 %2877, %v2529
      %v2879 = vpop.permute.xlu0 %2878
      %2881 = vset.pattern.permute.xlu0 1
      %2882 = vperm.xlu0 %2881, %v2530
      %v2883 = vpop.permute.xlu0 %2882
      %2885 = vset.pattern.permute.xlu0 1
      %2886 = vperm.xlu0 %2885, %v2531
      %v2887 = vpop.permute.xlu0 %2886
      %2889 = vset.pattern.permute.xlu0 1
      %2890 = vperm.xlu0 %2889, %v2532
      %v2891 = vpop.permute.xlu0 %2890
      %2893 = vset.pattern.permute.xlu0 1
      %2894 = vperm.xlu0 %2893, %v2533
      %v2895 = vpop.permute.xlu0 %2894
      %2897 = vset.pattern.permute.xlu0 1
      %2898 = vperm.xlu0 %2897, %v2534
      %v2899 = vpop.permute.xlu0 %2898
      %2901 = vset.pattern.permute.xlu0 1
      %2902 = vperm.xlu0 %2901, %v2535
      %v2903 = vpop.permute.xlu0 %2902
      %2905 = vset.pattern.permute.xlu0 1
      %2906 = vperm.xlu0 %2905, %v2536
      %v2907 = vpop.permute.xlu0 %2906
      %2909 = vset.pattern.permute.xlu0 1
      %2910 = vperm.xlu0 %2909, %v2537
      %v2911 = vpop.permute.xlu0 %2910
      %2913 = vset.pattern.permute.xlu0 1
      %2914 = vperm.xlu0 %2913, %v2538
      %v2915 = vpop.permute.xlu0 %2914
      %2917 = vset.pattern.permute.xlu0 1
      %2918 = vperm.xlu0 %2917, %v2539
      %v2919 = vpop.permute.xlu0 %2918
      %2921 = vset.pattern.permute.xlu0 1
      %2922 = vperm.xlu0 %2921, %v2540
      %v2923 = vpop.permute.xlu0 %2922
      %v2925 = vadd.f32 %v2765, %v2799
      %v2926 = vadd.f32 %v2766, %v2803
      %v2927 = vadd.f32 %v2767, %v2807
      %v2928 = vadd.f32 %v2768, %v2811
      %v2929 = vadd.f32 %v2769, %v2815
      %v2930 = vadd.f32 %v2770, %v2819
      %v2931 = vadd.f32 %v2771, %v2823
      %v2932 = vadd.f32 %v2772, %v2827
      %v2933 = vadd.f32 %v2773, %v2831
      %v2934 = vadd.f32 %v2774, %v2835
      %v2935 = vadd.f32 %v2775, %v2839
      %v2936 = vadd.f32 %v2776, %v2843
      %v2937 = vadd.f32 %v2777, %v2847
      %v2938 = vadd.f32 %v2778, %v2851
      %v2939 = vadd.f32 %v2779, %v2855
      %v2940 = vadd.f32 %v2780, %v2859
      %v2941 = vadd.f32 %v2781, %v2863
      %v2942 = vadd.f32 %v2782, %v2867
      %v2943 = vadd.f32 %v2783, %v2871
      %v2944 = vadd.f32 %v2784, %v2875
      %v2945 = vadd.f32 %v2785, %v2879
      %v2946 = vadd.f32 %v2786, %v2883
      %v2947 = vadd.f32 %v2787, %v2887
      %v2948 = vadd.f32 %v2788, %v2891
      %v2949 = vadd.f32 %v2789, %v2895
      %v2950 = vadd.f32 %v2790, %v2899
      %v2951 = vadd.f32 %v2791, %v2903
      %v2952 = vadd.f32 %v2792, %v2907
      %v2953 = vadd.f32 %v2793, %v2911
      %v2954 = vadd.f32 %v2794, %v2915
      %v2955 = vadd.f32 %v2795, %v2919
      %v2956 = vadd.f32 %v2796, %v2923
      %v2957 = vmax.f32 %v2733, %v2925
      %v2958 = vmax.f32 %v2734, %v2926
      %v2959 = vmax.f32 %v2735, %v2927
      %v2960 = vmax.f32 %v2736, %v2928
      %v2961 = vmax.f32 %v2737, %v2929
      %v2962 = vmax.f32 %v2738, %v2930
      %v2963 = vmax.f32 %v2739, %v2931
      %v2964 = vmax.f32 %v2740, %v2932
      %v2965 = vmax.f32 %v2741, %v2933
      %v2966 = vmax.f32 %v2742, %v2934
      %v2967 = vmax.f32 %v2743, %v2935
      %v2968 = vmax.f32 %v2744, %v2936
      %v2969 = vmax.f32 %v2745, %v2937
      %v2970 = vmax.f32 %v2746, %v2938
      %v2971 = vmax.f32 %v2747, %v2939
      %v2972 = vmax.f32 %v2748, %v2940
      %v2973 = vmax.f32 %v2749, %v2941
      %v2974 = vmax.f32 %v2750, %v2942
      %v2975 = vmax.f32 %v2751, %v2943
      %v2976 = vmax.f32 %v2752, %v2944
      %v2977 = vmax.f32 %v2753, %v2945
      %v2978 = vmax.f32 %v2754, %v2946
      %v2979 = vmax.f32 %v2755, %v2947
      %v2980 = vmax.f32 %v2756, %v2948
      %v2981 = vmax.f32 %v2757, %v2949
      %v2982 = vmax.f32 %v2758, %v2950
      %v2983 = vmax.f32 %v2759, %v2951
      %v2984 = vmax.f32 %v2760, %v2952
      %v2985 = vmax.f32 %v2761, %v2953
      %v2986 = vmax.f32 %v2762, %v2954
      %v2987 = vmax.f32 %v2763, %v2955
      %v2988 = vmax.f32 %v2764, %v2956
      %v2989 = vld [vmem:[#allocation2 + $0x21] sm:$0xff]
      %v2990 = vld [vmem:[#allocation2 + $0x29] sm:$0xff]
      %v2991 = vld [vmem:[#allocation2 + $0x31] sm:$0xff]
      %v2992 = vld [vmem:[#allocation2 + $0x39] sm:$0xff]
      %v2993 = vld [vmem:[#allocation2 + $0x41] sm:$0xff]
      %v2994 = vld [vmem:[#allocation2 + $0x49] sm:$0xff]
      %v2995 = vld [vmem:[#allocation2 + $0x51] sm:$0xff]
      %v2996 = vld [vmem:[#allocation2 + $0x59] sm:$0xff]
      %v2997 = vld [vmem:[#allocation2 + $0x61] sm:$0xff]
      %v2998 = vld [vmem:[#allocation2 + $0x69] sm:$0xff]
      %v2999 = vld [vmem:[#allocation2 + $0x71] sm:$0xff]
      %v3000 = vld [vmem:[#allocation2 + $0x79] sm:$0xff]
      %v3001 = vld [vmem:[#allocation2 + $0x81] sm:$0xff]
      %v3002 = vld [vmem:[#allocation2 + $0x89] sm:$0xff]
      %v3003 = vld [vmem:[#allocation2 + $0x91] sm:$0xff]
      %v3004 = vld [vmem:[#allocation2 + $0x99] sm:$0xff]
      %v3005 = vld [vmem:[#allocation2 + $0xa1] sm:$0xff]
      %v3006 = vld [vmem:[#allocation2 + $0xa9] sm:$0xff]
      %v3007 = vld [vmem:[#allocation2 + $0xb1] sm:$0xff]
      %v3008 = vld [vmem:[#allocation2 + $0xb9] sm:$0xff]
      %v3009 = vld [vmem:[#allocation2 + $0xc1] sm:$0xff]
      %v3010 = vld [vmem:[#allocation2 + $0xc9] sm:$0xff]
      %v3011 = vld [vmem:[#allocation2 + $0xd1] sm:$0xff]
      %v3012 = vld [vmem:[#allocation2 + $0xd9] sm:$0xff]
      %v3013 = vld [vmem:[#allocation2 + $0xe1] sm:$0xff]
      %v3014 = vld [vmem:[#allocation2 + $0xe9] sm:$0xff]
      %v3015 = vld [vmem:[#allocation2 + $0xf1] sm:$0xff]
      %v3016 = vld [vmem:[#allocation2 + $0xf9] sm:$0xff]
      %v3017 = vld [vmem:[#allocation2 + $0x101] sm:$0xff]
      %v3018 = vld [vmem:[#allocation2 + $0x109] sm:$0xff]
      %v3019 = vld [vmem:[#allocation2 + $0x111] sm:$0xff]
      %v3020 = vld [vmem:[#allocation2 + $0x119] sm:$0xff]
      %3021 = vset.pattern.permute.xlu0 2
      %3022 = vperm.xlu0 %3021, %v2509
      %v3023 = vpop.permute.xlu0 %3022
      %3025 = vset.pattern.permute.xlu0 2
      %3026 = vperm.xlu0 %3025, %v2510
      %v3027 = vpop.permute.xlu0 %3026
      %3029 = vset.pattern.permute.xlu0 2
      %3030 = vperm.xlu0 %3029, %v2511
      %v3031 = vpop.permute.xlu0 %3030
      %3033 = vset.pattern.permute.xlu0 2
      %3034 = vperm.xlu0 %3033, %v2512
      %v3035 = vpop.permute.xlu0 %3034
      %3037 = vset.pattern.permute.xlu0 2
      %3038 = vperm.xlu0 %3037, %v2513
      %v3039 = vpop.permute.xlu0 %3038
      %3041 = vset.pattern.permute.xlu0 2
      %3042 = vperm.xlu0 %3041, %v2514
      %v3043 = vpop.permute.xlu0 %3042
      %3045 = vset.pattern.permute.xlu0 2
      %3046 = vperm.xlu0 %3045, %v2515
      %v3047 = vpop.permute.xlu0 %3046
      %3049 = vset.pattern.permute.xlu0 2
      %3050 = vperm.xlu0 %3049, %v2516
      %v3051 = vpop.permute.xlu0 %3050
      %3053 = vset.pattern.permute.xlu0 2
      %3054 = vperm.xlu0 %3053, %v2517
      %v3055 = vpop.permute.xlu0 %3054
      %3057 = vset.pattern.permute.xlu0 2
      %3058 = vperm.xlu0 %3057, %v2518
      %v3059 = vpop.permute.xlu0 %3058
      %3061 = vset.pattern.permute.xlu0 2
      %3062 = vperm.xlu0 %3061, %v2519
      %v3063 = vpop.permute.xlu0 %3062
      %3065 = vset.pattern.permute.xlu0 2
      %3066 = vperm.xlu0 %3065, %v2520
      %v3067 = vpop.permute.xlu0 %3066
      %3069 = vset.pattern.permute.xlu0 2
      %3070 = vperm.xlu0 %3069, %v2521
      %v3071 = vpop.permute.xlu0 %3070
      %3073 = vset.pattern.permute.xlu0 2
      %3074 = vperm.xlu0 %3073, %v2522
      %v3075 = vpop.permute.xlu0 %3074
      %3077 = vset.pattern.permute.xlu0 2
      %3078 = vperm.xlu0 %3077, %v2523
      %v3079 = vpop.permute.xlu0 %3078
      %3081 = vset.pattern.permute.xlu0 2
      %3082 = vperm.xlu0 %3081, %v2524
      %v3083 = vpop.permute.xlu0 %3082
      %3085 = vset.pattern.permute.xlu0 2
      %3086 = vperm.xlu0 %3085, %v2525
      %v3087 = vpop.permute.xlu0 %3086
      %3089 = vset.pattern.permute.xlu0 2
      %3090 = vperm.xlu0 %3089, %v2526
      %v3091 = vpop.permute.xlu0 %3090
      %3093 = vset.pattern.permute.xlu0 2
      %3094 = vperm.xlu0 %3093, %v2527
      %v3095 = vpop.permute.xlu0 %3094
      %3097 = vset.pattern.permute.xlu0 2
      %3098 = vperm.xlu0 %3097, %v2528
      %v3099 = vpop.permute.xlu0 %3098
      %3101 = vset.pattern.permute.xlu0 2
      %3102 = vperm.xlu0 %3101, %v2529
      %v3103 = vpop.permute.xlu0 %3102
      %3105 = vset.pattern.permute.xlu0 2
      %3106 = vperm.xlu0 %3105, %v2530
      %v3107 = vpop.permute.xlu0 %3106
      %3109 = vset.pattern.permute.xlu0 2
      %3110 = vperm.xlu0 %3109, %v2531
      %v3111 = vpop.permute.xlu0 %3110
      %3113 = vset.pattern.permute.xlu0 2
      %3114 = vperm.xlu0 %3113, %v2532
      %v3115 = vpop.permute.xlu0 %3114
      %3117 = vset.pattern.permute.xlu0 2
      %3118 = vperm.xlu0 %3117, %v2533
      %v3119 = vpop.permute.xlu0 %3118
      %3121 = vset.pattern.permute.xlu0 2
      %3122 = vperm.xlu0 %3121, %v2534
      %v3123 = vpop.permute.xlu0 %3122
      %3125 = vset.pattern.permute.xlu0 2
      %3126 = vperm.xlu0 %3125, %v2535
      %v3127 = vpop.permute.xlu0 %3126
      %3129 = vset.pattern.permute.xlu0 2
      %3130 = vperm.xlu0 %3129, %v2536
      %v3131 = vpop.permute.xlu0 %3130
      %3133 = vset.pattern.permute.xlu0 2
      %3134 = vperm.xlu0 %3133, %v2537
      %v3135 = vpop.permute.xlu0 %3134
      %3137 = vset.pattern.permute.xlu0 2
      %3138 = vperm.xlu0 %3137, %v2538
      %v3139 = vpop.permute.xlu0 %3138
      %3141 = vset.pattern.permute.xlu0 2
      %3142 = vperm.xlu0 %3141, %v2539
      %v3143 = vpop.permute.xlu0 %3142
      %3145 = vset.pattern.permute.xlu0 2
      %3146 = vperm.xlu0 %3145, %v2540
      %v3147 = vpop.permute.xlu0 %3146
      %v3149 = vadd.f32 %v2989, %v3023
      %v3150 = vadd.f32 %v2990, %v3027
      %v3151 = vadd.f32 %v2991, %v3031
      %v3152 = vadd.f32 %v2992, %v3035
      %v3153 = vadd.f32 %v2993, %v3039
      %v3154 = vadd.f32 %v2994, %v3043
      %v3155 = vadd.f32 %v2995, %v3047
      %v3156 = vadd.f32 %v2996, %v3051
      %v3157 = vadd.f32 %v2997, %v3055
      %v3158 = vadd.f32 %v2998, %v3059
      %v3159 = vadd.f32 %v2999, %v3063
      %v3160 = vadd.f32 %v3000, %v3067
      %v3161 = vadd.f32 %v3001, %v3071
      %v3162 = vadd.f32 %v3002, %v3075
      %v3163 = vadd.f32 %v3003, %v3079
      %v3164 = vadd.f32 %v3004, %v3083
      %v3165 = vadd.f32 %v3005, %v3087
      %v3166 = vadd.f32 %v3006, %v3091
      %v3167 = vadd.f32 %v3007, %v3095
      %v3168 = vadd.f32 %v3008, %v3099
      %v3169 = vadd.f32 %v3009, %v3103
      %v3170 = vadd.f32 %v3010, %v3107
      %v3171 = vadd.f32 %v3011, %v3111
      %v3172 = vadd.f32 %v3012, %v3115
      %v3173 = vadd.f32 %v3013, %v3119
      %v3174 = vadd.f32 %v3014, %v3123
      %v3175 = vadd.f32 %v3015, %v3127
      %v3176 = vadd.f32 %v3016, %v3131
      %v3177 = vadd.f32 %v3017, %v3135
      %v3178 = vadd.f32 %v3018, %v3139
      %v3179 = vadd.f32 %v3019, %v3143
      %v3180 = vadd.f32 %v3020, %v3147
      %v3181 = vmax.f32 %v2957, %v3149
      %v3182 = vmax.f32 %v2958, %v3150
      %v3183 = vmax.f32 %v2959, %v3151
      %v3184 = vmax.f32 %v2960, %v3152
      %v3185 = vmax.f32 %v2961, %v3153
      %v3186 = vmax.f32 %v2962, %v3154
      %v3187 = vmax.f32 %v2963, %v3155
      %v3188 = vmax.f32 %v2964, %v3156
      %v3189 = vmax.f32 %v2965, %v3157
      %v3190 = vmax.f32 %v2966, %v3158
      %v3191 = vmax.f32 %v2967, %v3159
      %v3192 = vmax.f32 %v2968, %v3160
      %v3193 = vmax.f32 %v2969, %v3161
      %v3194 = vmax.f32 %v2970, %v3162
      %v3195 = vmax.f32 %v2971, %v3163
      %v3196 = vmax.f32 %v2972, %v3164
      %v3197 = vmax.f32 %v2973, %v3165
      %v3198 = vmax.f32 %v2974, %v3166
      %v3199 = vmax.f32 %v2975, %v3167
      %v3200 = vmax.f32 %v2976, %v3168
      %v3201 = vmax.f32 %v2977, %v3169
      %v3202 = vmax.f32 %v2978, %v3170
      %v3203 = vmax.f32 %v2979, %v3171
      %v3204 = vmax.f32 %v2980, %v3172
      %v3205 = vmax.f32 %v2981, %v3173
      %v3206 = vmax.f32 %v2982, %v3174
      %v3207 = vmax.f32 %v2983, %v3175
      %v3208 = vmax.f32 %v2984, %v3176
      %v3209 = vmax.f32 %v2985, %v3177
      %v3210 = vmax.f32 %v2986, %v3178
      %v3211 = vmax.f32 %v2987, %v3179
      %v3212 = vmax.f32 %v2988, %v3180
      %v3213 = vld [vmem:[#allocation2 + $0x22] sm:$0xff]
      %v3214 = vld [vmem:[#allocation2 + $0x2a] sm:$0xff]
      %v3215 = vld [vmem:[#allocation2 + $0x32] sm:$0xff]
      %v3216 = vld [vmem:[#allocation2 + $0x3a] sm:$0xff]
      %v3217 = vld [vmem:[#allocation2 + $0x42] sm:$0xff]
      %v3218 = vld [vmem:[#allocation2 + $0x4a] sm:$0xff]
      %v3219 = vld [vmem:[#allocation2 + $0x52] sm:$0xff]
      %v3220 = vld [vmem:[#allocation2 + $0x5a] sm:$0xff]
      %v3221 = vld [vmem:[#allocation2 + $0x62] sm:$0xff]
      %v3222 = vld [vmem:[#allocation2 + $0x6a] sm:$0xff]
      %v3223 = vld [vmem:[#allocation2 + $0x72] sm:$0xff]
      %v3224 = vld [vmem:[#allocation2 + $0x7a] sm:$0xff]
      %v3225 = vld [vmem:[#allocation2 + $0x82] sm:$0xff]
      %v3226 = vld [vmem:[#allocation2 + $0x8a] sm:$0xff]
      %v3227 = vld [vmem:[#allocation2 + $0x92] sm:$0xff]
      %v3228 = vld [vmem:[#allocation2 + $0x9a] sm:$0xff]
      %v3229 = vld [vmem:[#allocation2 + $0xa2] sm:$0xff]
      %v3230 = vld [vmem:[#allocation2 + $0xaa] sm:$0xff]
      %v3231 = vld [vmem:[#allocation2 + $0xb2] sm:$0xff]
      %v3232 = vld [vmem:[#allocation2 + $0xba] sm:$0xff]
      %v3233 = vld [vmem:[#allocation2 + $0xc2] sm:$0xff]
      %v3234 = vld [vmem:[#allocation2 + $0xca] sm:$0xff]
      %v3235 = vld [vmem:[#allocation2 + $0xd2] sm:$0xff]
      %v3236 = vld [vmem:[#allocation2 + $0xda] sm:$0xff]
      %v3237 = vld [vmem:[#allocation2 + $0xe2] sm:$0xff]
      %v3238 = vld [vmem:[#allocation2 + $0xea] sm:$0xff]
      %v3239 = vld [vmem:[#allocation2 + $0xf2] sm:$0xff]
      %v3240 = vld [vmem:[#allocation2 + $0xfa] sm:$0xff]
      %v3241 = vld [vmem:[#allocation2 + $0x102] sm:$0xff]
      %v3242 = vld [vmem:[#allocation2 + $0x10a] sm:$0xff]
      %v3243 = vld [vmem:[#allocation2 + $0x112] sm:$0xff]
      %v3244 = vld [vmem:[#allocation2 + $0x11a] sm:$0xff]
      %3245 = vset.pattern.permute.xlu0 3
      %3246 = vperm.xlu0 %3245, %v2509
      %v3247 = vpop.permute.xlu0 %3246
      %3249 = vset.pattern.permute.xlu0 3
      %3250 = vperm.xlu0 %3249, %v2510
      %v3251 = vpop.permute.xlu0 %3250
      %3253 = vset.pattern.permute.xlu0 3
      %3254 = vperm.xlu0 %3253, %v2511
      %v3255 = vpop.permute.xlu0 %3254
      %3257 = vset.pattern.permute.xlu0 3
      %3258 = vperm.xlu0 %3257, %v2512
      %v3259 = vpop.permute.xlu0 %3258
      %3261 = vset.pattern.permute.xlu0 3
      %3262 = vperm.xlu0 %3261, %v2513
      %v3263 = vpop.permute.xlu0 %3262
      %3265 = vset.pattern.permute.xlu0 3
      %3266 = vperm.xlu0 %3265, %v2514
      %v3267 = vpop.permute.xlu0 %3266
      %3269 = vset.pattern.permute.xlu0 3
      %3270 = vperm.xlu0 %3269, %v2515
      %v3271 = vpop.permute.xlu0 %3270
      %3273 = vset.pattern.permute.xlu0 3
      %3274 = vperm.xlu0 %3273, %v2516
      %v3275 = vpop.permute.xlu0 %3274
      %3277 = vset.pattern.permute.xlu0 3
      %3278 = vperm.xlu0 %3277, %v2517
      %v3279 = vpop.permute.xlu0 %3278
      %3281 = vset.pattern.permute.xlu0 3
      %3282 = vperm.xlu0 %3281, %v2518
      %v3283 = vpop.permute.xlu0 %3282
      %3285 = vset.pattern.permute.xlu0 3
      %3286 = vperm.xlu0 %3285, %v2519
      %v3287 = vpop.permute.xlu0 %3286
      %3289 = vset.pattern.permute.xlu0 3
      %3290 = vperm.xlu0 %3289, %v2520
      %v3291 = vpop.permute.xlu0 %3290
      %3293 = vset.pattern.permute.xlu0 3
      %3294 = vperm.xlu0 %3293, %v2521
      %v3295 = vpop.permute.xlu0 %3294
      %3297 = vset.pattern.permute.xlu0 3
      %3298 = vperm.xlu0 %3297, %v2522
      %v3299 = vpop.permute.xlu0 %3298
      %3301 = vset.pattern.permute.xlu0 3
      %3302 = vperm.xlu0 %3301, %v2523
      %v3303 = vpop.permute.xlu0 %3302
      %3305 = vset.pattern.permute.xlu0 3
      %3306 = vperm.xlu0 %3305, %v2524
      %v3307 = vpop.permute.xlu0 %3306
      %3309 = vset.pattern.permute.xlu0 3
      %3310 = vperm.xlu0 %3309, %v2525
      %v3311 = vpop.permute.xlu0 %3310
      %3313 = vset.pattern.permute.xlu0 3
      %3314 = vperm.xlu0 %3313, %v2526
      %v3315 = vpop.permute.xlu0 %3314
      %3317 = vset.pattern.permute.xlu0 3
      %3318 = vperm.xlu0 %3317, %v2527
      %v3319 = vpop.permute.xlu0 %3318
      %3321 = vset.pattern.permute.xlu0 3
      %3322 = vperm.xlu0 %3321, %v2528
      %v3323 = vpop.permute.xlu0 %3322
      %3325 = vset.pattern.permute.xlu0 3
      %3326 = vperm.xlu0 %3325, %v2529
      %v3327 = vpop.permute.xlu0 %3326
      %3329 = vset.pattern.permute.xlu0 3
      %3330 = vperm.xlu0 %3329, %v2530
      %v3331 = vpop.permute.xlu0 %3330
      %3333 = vset.pattern.permute.xlu0 3
      %3334 = vperm.xlu0 %3333, %v2531
      %v3335 = vpop.permute.xlu0 %3334
      %3337 = vset.pattern.permute.xlu0 3
      %3338 = vperm.xlu0 %3337, %v2532
      %v3339 = vpop.permute.xlu0 %3338
      %3341 = vset.pattern.permute.xlu0 3
      %3342 = vperm.xlu0 %3341, %v2533
      %v3343 = vpop.permute.xlu0 %3342
      %3345 = vset.pattern.permute.xlu0 3
      %3346 = vperm.xlu0 %3345, %v2534
      %v3347 = vpop.permute.xlu0 %3346
      %3349 = vset.pattern.permute.xlu0 3
      %3350 = vperm.xlu0 %3349, %v2535
      %v3351 = vpop.permute.xlu0 %3350
      %3353 = vset.pattern.permute.xlu0 3
      %3354 = vperm.xlu0 %3353, %v2536
      %v3355 = vpop.permute.xlu0 %3354
      %3357 = vset.pattern.permute.xlu0 3
      %3358 = vperm.xlu0 %3357, %v2537
      %v3359 = vpop.permute.xlu0 %3358
      %3361 = vset.pattern.permute.xlu0 3
      %3362 = vperm.xlu0 %3361, %v2538
      %v3363 = vpop.permute.xlu0 %3362
      %3365 = vset.pattern.permute.xlu0 3
      %3366 = vperm.xlu0 %3365, %v2539
      %v3367 = vpop.permute.xlu0 %3366
      %3369 = vset.pattern.permute.xlu0 3
      %3370 = vperm.xlu0 %3369, %v2540
      %v3371 = vpop.permute.xlu0 %3370
      %v3373 = vadd.f32 %v3213, %v3247
      %v3374 = vadd.f32 %v3214, %v3251
      %v3375 = vadd.f32 %v3215, %v3255
      %v3376 = vadd.f32 %v3216, %v3259
      %v3377 = vadd.f32 %v3217, %v3263
      %v3378 = vadd.f32 %v3218, %v3267
      %v3379 = vadd.f32 %v3219, %v3271
      %v3380 = vadd.f32 %v3220, %v3275
      %v3381 = vadd.f32 %v3221, %v3279
      %v3382 = vadd.f32 %v3222, %v3283
      %v3383 = vadd.f32 %v3223, %v3287
      %v3384 = vadd.f32 %v3224, %v3291
      %v3385 = vadd.f32 %v3225, %v3295
      %v3386 = vadd.f32 %v3226, %v3299
      %v3387 = vadd.f32 %v3227, %v3303
      %v3388 = vadd.f32 %v3228, %v3307
      %v3389 = vadd.f32 %v3229, %v3311
      %v3390 = vadd.f32 %v3230, %v3315
      %v3391 = vadd.f32 %v3231, %v3319
      %v3392 = vadd.f32 %v3232, %v3323
      %v3393 = vadd.f32 %v3233, %v3327
      %v3394 = vadd.f32 %v3234, %v3331
      %v3395 = vadd.f32 %v3235, %v3335
      %v3396 = vadd.f32 %v3236, %v3339
      %v3397 = vadd.f32 %v3237, %v3343
      %v3398 = vadd.f32 %v3238, %v3347
      %v3399 = vadd.f32 %v3239, %v3351
      %v3400 = vadd.f32 %v3240, %v3355
      %v3401 = vadd.f32 %v3241, %v3359
      %v3402 = vadd.f32 %v3242, %v3363
      %v3403 = vadd.f32 %v3243, %v3367
      %v3404 = vadd.f32 %v3244, %v3371
      %v3405 = vmax.f32 %v3181, %v3373
      %v3406 = vmax.f32 %v3182, %v3374
      %v3407 = vmax.f32 %v3183, %v3375
      %v3408 = vmax.f32 %v3184, %v3376
      %v3409 = vmax.f32 %v3185, %v3377
      %v3410 = vmax.f32 %v3186, %v3378
      %v3411 = vmax.f32 %v3187, %v3379
      %v3412 = vmax.f32 %v3188, %v3380
      %v3413 = vmax.f32 %v3189, %v3381
      %v3414 = vmax.f32 %v3190, %v3382
      %v3415 = vmax.f32 %v3191, %v3383
      %v3416 = vmax.f32 %v3192, %v3384
      %v3417 = vmax.f32 %v3193, %v3385
      %v3418 = vmax.f32 %v3194, %v3386
      %v3419 = vmax.f32 %v3195, %v3387
      %v3420 = vmax.f32 %v3196, %v3388
      %v3421 = vmax.f32 %v3197, %v3389
      %v3422 = vmax.f32 %v3198, %v3390
      %v3423 = vmax.f32 %v3199, %v3391
      %v3424 = vmax.f32 %v3200, %v3392
      %v3425 = vmax.f32 %v3201, %v3393
      %v3426 = vmax.f32 %v3202, %v3394
      %v3427 = vmax.f32 %v3203, %v3395
      %v3428 = vmax.f32 %v3204, %v3396
      %v3429 = vmax.f32 %v3205, %v3397
      %v3430 = vmax.f32 %v3206, %v3398
      %v3431 = vmax.f32 %v3207, %v3399
      %v3432 = vmax.f32 %v3208, %v3400
      %v3433 = vmax.f32 %v3209, %v3401
      %v3434 = vmax.f32 %v3210, %v3402
      %v3435 = vmax.f32 %v3211, %v3403
      %v3436 = vmax.f32 %v3212, %v3404
      %3437 = vst [vmem:[#allocation2 + $0x20] sm:$0xff] %v3405
      %3438 = vst [vmem:[#allocation2 + $0x28] sm:$0xff] %v3406
      %3439 = vst [vmem:[#allocation2 + $0x30] sm:$0xff] %v3407
      %3440 = vst [vmem:[#allocation2 + $0x38] sm:$0xff] %v3408
      %3441 = vst [vmem:[#allocation2 + $0x40] sm:$0xff] %v3409
      %3442 = vst [vmem:[#allocation2 + $0x48] sm:$0xff] %v3410
      %3443 = vst [vmem:[#allocation2 + $0x50] sm:$0xff] %v3411
      %3444 = vst [vmem:[#allocation2 + $0x58] sm:$0xff] %v3412
      %3445 = vst [vmem:[#allocation2 + $0x60] sm:$0xff] %v3413
      %3446 = vst [vmem:[#allocation2 + $0x68] sm:$0xff] %v3414
      %3447 = vst [vmem:[#allocation2 + $0x70] sm:$0xff] %v3415
      %3448 = vst [vmem:[#allocation2 + $0x78] sm:$0xff] %v3416
      %3449 = vst [vmem:[#allocation2 + $0x80] sm:$0xff] %v3417
      %3450 = vst [vmem:[#allocation2 + $0x88] sm:$0xff] %v3418
      %3451 = vst [vmem:[#allocation2 + $0x90] sm:$0xff] %v3419
      %3452 = vst [vmem:[#allocation2 + $0x98] sm:$0xff] %v3420
      %3453 = vst [vmem:[#allocation2 + $0xa0] sm:$0xff] %v3421
      %3454 = vst [vmem:[#allocation2 + $0xa8] sm:$0xff] %v3422
      %3455 = vst [vmem:[#allocation2 + $0xb0] sm:$0xff] %v3423
      %3456 = vst [vmem:[#allocation2 + $0xb8] sm:$0xff] %v3424
      %3457 = vst [vmem:[#allocation2 + $0xc0] sm:$0xff] %v3425
      %3458 = vst [vmem:[#allocation2 + $0xc8] sm:$0xff] %v3426
      %3459 = vst [vmem:[#allocation2 + $0xd0] sm:$0xff] %v3427
      %3460 = vst [vmem:[#allocation2 + $0xd8] sm:$0xff] %v3428
      %3461 = vst [vmem:[#allocation2 + $0xe0] sm:$0xff] %v3429
      %3462 = vst [vmem:[#allocation2 + $0xe8] sm:$0xff] %v3430
      %3463 = vst [vmem:[#allocation2 + $0xf0] sm:$0xff] %v3431
      %3464 = vst [vmem:[#allocation2 + $0xf8] sm:$0xff] %v3432
      %3465 = vst [vmem:[#allocation2 + $0x100] sm:$0xff] %v3433
      %3466 = vst [vmem:[#allocation2 + $0x108] sm:$0xff] %v3434
      %3467 = vst [vmem:[#allocation2 + $0x110] sm:$0xff] %v3435
      %3468 = vst [vmem:[#allocation2 + $0x118] sm:$0xff] %v3436
      %v3469 = vld [vmem:[#allocation3] sm:$0xff]
      %v3470 = vld [vmem:[#allocation3 + $0x8] sm:$0xff]
      %v3471 = vld [vmem:[#allocation3 + $0x10] sm:$0xff]
      %v3472 = vld [vmem:[#allocation3 + $0x18] sm:$0xff]
      %v3473 = vld [vmem:[#allocation3 + $0x20] sm:$0xff]
      %v3474 = vld [vmem:[#allocation3 + $0x28] sm:$0xff]
      %v3475 = vld [vmem:[#allocation3 + $0x30] sm:$0xff]
      %v3476 = vld [vmem:[#allocation3 + $0x38] sm:$0xff]
      %v3477 = vld [vmem:[#allocation3 + $0x40] sm:$0xff]
      %v3478 = vld [vmem:[#allocation3 + $0x48] sm:$0xff]
      %v3479 = vld [vmem:[#allocation3 + $0x50] sm:$0xff]
      %v3480 = vld [vmem:[#allocation3 + $0x58] sm:$0xff]
      %v3481 = vld [vmem:[#allocation3 + $0x60] sm:$0xff]
      %v3482 = vld [vmem:[#allocation3 + $0x68] sm:$0xff]
      %v3483 = vld [vmem:[#allocation3 + $0x70] sm:$0xff]
      %v3484 = vld [vmem:[#allocation3 + $0x78] sm:$0xff]
      %v3485 = vld [vmem:[#allocation3 + $0x80] sm:$0xff]
      %v3486 = vld [vmem:[#allocation3 + $0x88] sm:$0xff]
      %v3487 = vld [vmem:[#allocation3 + $0x90] sm:$0xff]
      %v3488 = vld [vmem:[#allocation3 + $0x98] sm:$0xff]
      %v3489 = vld [vmem:[#allocation3 + $0xa0] sm:$0xff]
      %v3490 = vld [vmem:[#allocation3 + $0xa8] sm:$0xff]
      %v3491 = vld [vmem:[#allocation3 + $0xb0] sm:$0xff]
      %v3492 = vld [vmem:[#allocation3 + $0xb8] sm:$0xff]
      %v3493 = vld [vmem:[#allocation3 + $0xc0] sm:$0xff]
      %v3494 = vld [vmem:[#allocation3 + $0xc8] sm:$0xff]
      %v3495 = vld [vmem:[#allocation3 + $0xd0] sm:$0xff]
      %v3496 = vld [vmem:[#allocation3 + $0xd8] sm:$0xff]
      %v3497 = vld [vmem:[#allocation3 + $0xe0] sm:$0xff]
      %v3498 = vld [vmem:[#allocation3 + $0xe8] sm:$0xff]
      %v3499 = vld [vmem:[#allocation3 + $0xf0] sm:$0xff]
      %v3500 = vld [vmem:[#allocation3 + $0xf8] sm:$0xff]
      %v3501 = vpack.c.bf16 %v3406, %v3405
      %v3502 = vpack.c.bf16 %v3408, %v3407
      %v3503 = vpack.c.bf16 %v3410, %v3409
      %v3504 = vpack.c.bf16 %v3412, %v3411
      %v3505 = vpack.c.bf16 %v3414, %v3413
      %v3506 = vpack.c.bf16 %v3416, %v3415
      %v3507 = vpack.c.bf16 %v3418, %v3417
      %v3508 = vpack.c.bf16 %v3420, %v3419
      %v3509 = vpack.c.bf16 %v3422, %v3421
      %v3510 = vpack.c.bf16 %v3424, %v3423
      %v3511 = vpack.c.bf16 %v3426, %v3425
      %v3512 = vpack.c.bf16 %v3428, %v3427
      %v3513 = vpack.c.bf16 %v3430, %v3429
      %v3514 = vpack.c.bf16 %v3432, %v3431
      %v3515 = vpack.c.bf16 %v3434, %v3433
      %v3516 = vpack.c.bf16 %v3436, %v3435
      %v3517 = vld [vmem:[%s1 + $0x80] sm:$0xf]
      %v3518 = vld [vmem:[%s1 + $0x84] sm:$0xf]
      %v3519 = vld [vmem:[%s1 + $0x88] sm:$0xf]
      %v3520 = vld [vmem:[%s1 + $0x8c] sm:$0xf]
      %v3521 = vld [vmem:[%s1 + $0x90] sm:$0xf]
      %v3522 = vld [vmem:[%s1 + $0x94] sm:$0xf]
      %v3523 = vld [vmem:[%s1 + $0x98] sm:$0xf]
      %v3524 = vld [vmem:[%s1 + $0x9c] sm:$0xf]
      %v3525 = vld [vmem:[%s1 + $0xa0] sm:$0xf]
      %v3526 = vld [vmem:[%s1 + $0xa4] sm:$0xf]
      %v3527 = vld [vmem:[%s1 + $0xa8] sm:$0xf]
      %v3528 = vld [vmem:[%s1 + $0xac] sm:$0xf]
      %v3529 = vld [vmem:[%s1 + $0xb0] sm:$0xf]
      %v3530 = vld [vmem:[%s1 + $0xb4] sm:$0xf]
      %v3531 = vld [vmem:[%s1 + $0xb8] sm:$0xf]
      %v3532 = vld [vmem:[%s1 + $0xbc] sm:$0xf]
      %v3549 = vunpack.c.l.b16 %v3517
      %v3550 = vunpack.c.l.b16 %v3518
      %v3551 = vunpack.c.l.b16 %v3519
      %v3552 = vunpack.c.l.b16 %v3520
      %v3553 = vunpack.c.l.b16 %v3521
      %v3554 = vunpack.c.l.b16 %v3522
      %v3555 = vunpack.c.l.b16 %v3523
      %v3556 = vunpack.c.l.b16 %v3524
      %v3557 = vunpack.c.l.b16 %v3525
      %v3558 = vunpack.c.l.b16 %v3526
      %v3559 = vunpack.c.l.b16 %v3527
      %v3560 = vunpack.c.l.b16 %v3528
      %v3561 = vunpack.c.l.b16 %v3529
      %v3562 = vunpack.c.l.b16 %v3530
      %v3563 = vunpack.c.l.b16 %v3531
      %v3564 = vunpack.c.l.b16 %v3532
      %v3565 = vpack.c.b16 %v3550, %v3549
      %v3566 = vpack.c.b16 %v3552, %v3551
      %v3567 = vpack.c.b16 %v3554, %v3553
      %v3568 = vpack.c.b16 %v3556, %v3555
      %v3569 = vpack.c.b16 %v3558, %v3557
      %v3570 = vpack.c.b16 %v3560, %v3559
      %v3571 = vpack.c.b16 %v3562, %v3561
      %v3572 = vpack.c.b16 %v3564, %v3563
      %3581 = vmatprep.subr.bf16.mxu0 0
      %3582 = vmatpush1.bf16.msra.mxu0 %v3565
      %3583 = vmatprep.subr.bf16.mxu0 0
      %3584 = vmatpush1.bf16.msra.mxu0 %v3566
      %3585 = vmatprep.subr.bf16.mxu0 0
      %3586 = vmatpush1.bf16.msra.mxu0 %v3567
      %3587 = vmatprep.subr.bf16.mxu0 0
      %3588 = vmatpush1.bf16.msra.mxu0 %v3568
      %3589 = vmatprep.subr.bf16.mxu0 0
      %3590 = vmatpush1.bf16.msra.mxu0 %v3569
      %3591 = vmatprep.subr.bf16.mxu0 0
      %3592 = vmatpush1.bf16.msra.mxu0 %v3570
      %3593 = vmatprep.subr.bf16.mxu0 0
      %3594 = vmatpush1.bf16.msra.mxu0 %v3571
      %3595 = vmatprep.subr.bf16.mxu0 0
      %3596 = vmatpush1.bf16.msra.mxu0 %v3572
      %3597 = vmatprep.subr.bf16.mxu0 0
      %3598 = vmatpush1.bf16.msra.mxu0 0
      %3599 = vmatprep.subr.bf16.mxu0 0
      %3600 = vmatpush1.bf16.msra.mxu0 0
      %3601 = vmatprep.subr.bf16.mxu0 0
      %3602 = vmatpush1.bf16.msra.mxu0 0
      %3603 = vmatprep.subr.bf16.mxu0 0
      %3604 = vmatpush1.bf16.msra.mxu0 0
      %3605 = vmatprep.subr.bf16.mxu0 0
      %3606 = vmatpush1.bf16.msra.mxu0 0
      %3607 = vmatprep.subr.bf16.mxu0 0
      %3608 = vmatpush1.bf16.msra.mxu0 0
      %3609 = vmatprep.subr.bf16.mxu0 0
      %3610 = vmatpush1.bf16.msra.mxu0 0
      %3611 = vmatprep.subr.bf16.mxu0 0
      %3612 = vmatpush1.bf16.msra.mxu0 0
      %3613 = vmatprep.mubr.bf16.mxu0 0
      %3614 = vmatmul.mubr.bf16.gmra.mrb[0].mxu0 %v3501
      %v3615 = vpop.f32.mrb[0].mxu0
      %v3616 = vadd.f32 0.0, %v3615
      %v3617 = vpop.f32.mrb[0].mxu0
      %v3618 = vpop.f32.mrb[0].mxu0
      %v3619 = vadd.f32 0.0, %v3618
      %v3620 = vpop.f32.mrb[0].mxu0
      %3621 = vmatprep.mubr.bf16.mxu0 0
      %3622 = vmatmul.mubr.bf16.gmra.mrb[0].mxu0 %v3502
      %v3623 = vpop.f32.mrb[0].mxu0
      %v3624 = vadd.f32 0.0, %v3623
      %v3625 = vpop.f32.mrb[0].mxu0
      %v3626 = vpop.f32.mrb[0].mxu0
      %v3627 = vadd.f32 0.0, %v3626
      %v3628 = vpop.f32.mrb[0].mxu0
      %3629 = vmatprep.mubr.bf16.mxu0 0
      %3630 = vmatmul.mubr.bf16.gmra.mrb[0].mxu0 %v3503
      %v3631 = vpop.f32.mrb[0].mxu0
      %v3632 = vadd.f32 0.0, %v3631
      %v3633 = vpop.f32.mrb[0].mxu0
      %v3634 = vpop.f32.mrb[0].mxu0
      %v3635 = vadd.f32 0.0, %v3634
      %v3636 = vpop.f32.mrb[0].mxu0
      %3637 = vmatprep.mubr.bf16.mxu0 0
      %3638 = vmatmul.mubr.bf16.gmra.mrb[0].mxu0 %v3504
      %v3639 = vpop.f32.mrb[0].mxu0
      %v3640 = vadd.f32 0.0, %v3639
      %v3641 = vpop.f32.mrb[0].mxu0
      %v3642 = vpop.f32.mrb[0].mxu0
      %v3643 = vadd.f32 0.0, %v3642
      %v3644 = vpop.f32.mrb[0].mxu0
      %3645 = vmatprep.mubr.bf16.mxu0 0
      %3646 = vmatmul.mubr.bf16.gmra.mrb[0].mxu0 %v3505
      %v3647 = vpop.f32.mrb[0].mxu0
      %v3648 = vadd.f32 0.0, %v3647
      %v3649 = vpop.f32.mrb[0].mxu0
      %v3650 = vpop.f32.mrb[0].mxu0
      %v3651 = vadd.f32 0.0, %v3650
      %v3652 = vpop.f32.mrb[0].mxu0
      %3653 = vmatprep.mubr.bf16.mxu0 0
      %3654 = vmatmul.mubr.bf16.gmra.mrb[0].mxu0 %v3506
      %v3655 = vpop.f32.mrb[0].mxu0
      %v3656 = vadd.f32 0.0, %v3655
      %v3657 = vpop.f32.mrb[0].mxu0
      %v3658 = vpop.f32.mrb[0].mxu0
      %v3659 = vadd.f32 0.0, %v3658
      %v3660 = vpop.f32.mrb[0].mxu0
      %3661 = vmatprep.mubr.bf16.mxu0 0
      %3662 = vmatmul.mubr.bf16.gmra.mrb[0].mxu0 %v3507
      %v3663 = vpop.f32.mrb[0].mxu0
      %v3664 = vadd.f32 0.0, %v3663
      %v3665 = vpop.f32.mrb[0].mxu0
      %v3666 = vpop.f32.mrb[0].mxu0
      %v3667 = vadd.f32 0.0, %v3666
      %v3668 = vpop.f32.mrb[0].mxu0
      %3669 = vmatprep.mubr.bf16.mxu0 0
      %3670 = vmatmul.mubr.bf16.gmra.mrb[0].mxu0 %v3508
      %v3671 = vpop.f32.mrb[0].mxu0
      %v3672 = vadd.f32 0.0, %v3671
      %v3673 = vpop.f32.mrb[0].mxu0
      %v3674 = vpop.f32.mrb[0].mxu0
      %v3675 = vadd.f32 0.0, %v3674
      %v3676 = vpop.f32.mrb[0].mxu0
      %3677 = vmatprep.mubr.bf16.mxu0 0
      %3678 = vmatmul.mubr.bf16.gmra.mrb[0].mxu0 %v3509
      %v3679 = vpop.f32.mrb[0].mxu0
      %v3680 = vadd.f32 0.0, %v3679
      %v3681 = vpop.f32.mrb[0].mxu0
      %v3682 = vpop.f32.mrb[0].mxu0
      %v3683 = vadd.f32 0.0, %v3682
      %v3684 = vpop.f32.mrb[0].mxu0
      %3685 = vmatprep.mubr.bf16.mxu0 0
      %3686 = vmatmul.mubr.bf16.gmra.mrb[0].mxu0 %v3510
      %v3687 = vpop.f32.mrb[0].mxu0
      %v3688 = vadd.f32 0.0, %v3687
      %v3689 = vpop.f32.mrb[0].mxu0
      %v3690 = vpop.f32.mrb[0].mxu0
      %v3691 = vadd.f32 0.0, %v3690
      %v3692 = vpop.f32.mrb[0].mxu0
      %3693 = vmatprep.mubr.bf16.mxu0 0
      %3694 = vmatmul.mubr.bf16.gmra.mrb[0].mxu0 %v3511
      %v3695 = vpop.f32.mrb[0].mxu0
      %v3696 = vadd.f32 0.0, %v3695
      %v3697 = vpop.f32.mrb[0].mxu0
      %v3698 = vpop.f32.mrb[0].mxu0
      %v3699 = vadd.f32 0.0, %v3698
      %v3700 = vpop.f32.mrb[0].mxu0
      %3701 = vmatprep.mubr.bf16.mxu0 0
      %3702 = vmatmul.mubr.bf16.gmra.mrb[0].mxu0 %v3512
      %v3703 = vpop.f32.mrb[0].mxu0
      %v3704 = vadd.f32 0.0, %v3703
      %v3705 = vpop.f32.mrb[0].mxu0
      %v3706 = vpop.f32.mrb[0].mxu0
      %v3707 = vadd.f32 0.0, %v3706
      %v3708 = vpop.f32.mrb[0].mxu0
      %3709 = vmatprep.mubr.bf16.mxu0 0
      %3710 = vmatmul.mubr.bf16.gmra.mrb[0].mxu0 %v3513
      %v3711 = vpop.f32.mrb[0].mxu0
      %v3712 = vadd.f32 0.0, %v3711
      %v3713 = vpop.f32.mrb[0].mxu0
      %v3714 = vpop.f32.mrb[0].mxu0
      %v3715 = vadd.f32 0.0, %v3714
      %v3716 = vpop.f32.mrb[0].mxu0
      %3717 = vmatprep.mubr.bf16.mxu0 0
      %3718 = vmatmul.mubr.bf16.gmra.mrb[0].mxu0 %v3514
      %v3719 = vpop.f32.mrb[0].mxu0
      %v3720 = vadd.f32 0.0, %v3719
      %v3721 = vpop.f32.mrb[0].mxu0
      %v3722 = vpop.f32.mrb[0].mxu0
      %v3723 = vadd.f32 0.0, %v3722
      %v3724 = vpop.f32.mrb[0].mxu0
      %3725 = vmatprep.mubr.bf16.mxu0 0
      %3726 = vmatmul.mubr.bf16.gmra.mrb[0].mxu0 %v3515
      %v3727 = vpop.f32.mrb[0].mxu0
      %v3728 = vadd.f32 0.0, %v3727
      %v3729 = vpop.f32.mrb[0].mxu0
      %v3730 = vpop.f32.mrb[0].mxu0
      %v3731 = vadd.f32 0.0, %v3730
      %v3732 = vpop.f32.mrb[0].mxu0
      %3733 = vmatprep.mubr.bf16.mxu0 0
      %3734 = vmatmul.mubr.bf16.gmra.mrb[0].mxu0 %v3516
      %v3735 = vpop.f32.mrb[0].mxu0
      %v3736 = vadd.f32 0.0, %v3735
      %v3737 = vpop.f32.mrb[0].mxu0
      %v3738 = vpop.f32.mrb[0].mxu0
      %v3739 = vadd.f32 0.0, %v3738
      %v3740 = vpop.f32.mrb[0].mxu0
      %3741 = vdwg.mxu0
      %v3742 = vadd.f32 %v3469, %v3616
      %v3743 = vadd.f32 %v3470, %v3619
      %v3744 = vadd.f32 %v3471, %v3624
      %v3745 = vadd.f32 %v3472, %v3627
      %v3746 = vadd.f32 %v3473, %v3632
      %v3747 = vadd.f32 %v3474, %v3635
      %v3748 = vadd.f32 %v3475, %v3640
      %v3749 = vadd.f32 %v3476, %v3643
      %v3750 = vadd.f32 %v3477, %v3648
      %v3751 = vadd.f32 %v3478, %v3651
      %v3752 = vadd.f32 %v3479, %v3656
      %v3753 = vadd.f32 %v3480, %v3659
      %v3754 = vadd.f32 %v3481, %v3664
      %v3755 = vadd.f32 %v3482, %v3667
      %v3756 = vadd.f32 %v3483, %v3672
      %v3757 = vadd.f32 %v3484, %v3675
      %v3758 = vadd.f32 %v3485, %v3680
      %v3759 = vadd.f32 %v3486, %v3683
      %v3760 = vadd.f32 %v3487, %v3688
      %v3761 = vadd.f32 %v3488, %v3691
      %v3762 = vadd.f32 %v3489, %v3696
      %v3763 = vadd.f32 %v3490, %v3699
      %v3764 = vadd.f32 %v3491, %v3704
      %v3765 = vadd.f32 %v3492, %v3707
      %v3766 = vadd.f32 %v3493, %v3712
      %v3767 = vadd.f32 %v3494, %v3715
      %v3768 = vadd.f32 %v3495, %v3720
      %v3769 = vadd.f32 %v3496, %v3723
      %v3770 = vadd.f32 %v3497, %v3728
      %v3771 = vadd.f32 %v3498, %v3731
      %v3772 = vadd.f32 %v3499, %v3736
      %v3773 = vadd.f32 %v3500, %v3739
      %3774 = vst [vmem:[#allocation3] sm:$0xff] %v3742
      %3775 = vst [vmem:[#allocation3 + $0x8] sm:$0xff] %v3743
      %3776 = vst [vmem:[#allocation3 + $0x10] sm:$0xff] %v3744
      %3777 = vst [vmem:[#allocation3 + $0x18] sm:$0xff] %v3745
      %3778 = vst [vmem:[#allocation3 + $0x20] sm:$0xff] %v3746
      %3779 = vst [vmem:[#allocation3 + $0x28] sm:$0xff] %v3747
      %3780 = vst [vmem:[#allocation3 + $0x30] sm:$0xff] %v3748
      %3781 = vst [vmem:[#allocation3 + $0x38] sm:$0xff] %v3749
      %3782 = vst [vmem:[#allocation3 + $0x40] sm:$0xff] %v3750
      %3783 = vst [vmem:[#allocation3 + $0x48] sm:$0xff] %v3751
      %3784 = vst [vmem:[#allocation3 + $0x50] sm:$0xff] %v3752
      %3785 = vst [vmem:[#allocation3 + $0x58] sm:$0xff] %v3753
      %3786 = vst [vmem:[#allocation3 + $0x60] sm:$0xff] %v3754
      %3787 = vst [vmem:[#allocation3 + $0x68] sm:$0xff] %v3755
      %3788 = vst [vmem:[#allocation3 + $0x70] sm:$0xff] %v3756
      %3789 = vst [vmem:[#allocation3 + $0x78] sm:$0xff] %v3757
      %3790 = vst [vmem:[#allocation3 + $0x80] sm:$0xff] %v3758
      %3791 = vst [vmem:[#allocation3 + $0x88] sm:$0xff] %v3759
      %3792 = vst [vmem:[#allocation3 + $0x90] sm:$0xff] %v3760
      %3793 = vst [vmem:[#allocation3 + $0x98] sm:$0xff] %v3761
      %3794 = vst [vmem:[#allocation3 + $0xa0] sm:$0xff] %v3762
      %3795 = vst [vmem:[#allocation3 + $0xa8] sm:$0xff] %v3763
      %3796 = vst [vmem:[#allocation3 + $0xb0] sm:$0xff] %v3764
      %3797 = vst [vmem:[#allocation3 + $0xb8] sm:$0xff] %v3765
      %3798 = vst [vmem:[#allocation3 + $0xc0] sm:$0xff] %v3766
      %3799 = vst [vmem:[#allocation3 + $0xc8] sm:$0xff] %v3767
      %3800 = vst [vmem:[#allocation3 + $0xd0] sm:$0xff] %v3768
      %3801 = vst [vmem:[#allocation3 + $0xd8] sm:$0xff] %v3769
      %3802 = vst [vmem:[#allocation3 + $0xe0] sm:$0xff] %v3770
      %3803 = vst [vmem:[#allocation3 + $0xe8] sm:$0xff] %v3771
      %3804 = vst [vmem:[#allocation3 + $0xf0] sm:$0xff] %v3772
      %3805 = vst [vmem:[#allocation3 + $0xf8] sm:$0xff] %v3773
      %v3806 = vld [vmem:[#allocation2 + $0x20] sm:$0xff]
      %v3807 = vld [vmem:[#allocation2 + $0x28] sm:$0xff]
      %v3808 = vld [vmem:[#allocation2 + $0x30] sm:$0xff]
      %v3809 = vld [vmem:[#allocation2 + $0x38] sm:$0xff]
      %v3810 = vld [vmem:[#allocation2 + $0x40] sm:$0xff]
      %v3811 = vld [vmem:[#allocation2 + $0x48] sm:$0xff]
      %v3812 = vld [vmem:[#allocation2 + $0x50] sm:$0xff]
      %v3813 = vld [vmem:[#allocation2 + $0x58] sm:$0xff]
      %v3814 = vld [vmem:[#allocation2 + $0x60] sm:$0xff]
      %v3815 = vld [vmem:[#allocation2 + $0x68] sm:$0xff]
      %v3816 = vld [vmem:[#allocation2 + $0x70] sm:$0xff]
      %v3817 = vld [vmem:[#allocation2 + $0x78] sm:$0xff]
      %v3818 = vld [vmem:[#allocation2 + $0x80] sm:$0xff]
      %v3819 = vld [vmem:[#allocation2 + $0x88] sm:$0xff]
      %v3820 = vld [vmem:[#allocation2 + $0x90] sm:$0xff]
      %v3821 = vld [vmem:[#allocation2 + $0x98] sm:$0xff]
      %v3822 = vld [vmem:[#allocation2 + $0xa0] sm:$0xff]
      %v3823 = vld [vmem:[#allocation2 + $0xa8] sm:$0xff]
      %v3824 = vld [vmem:[#allocation2 + $0xb0] sm:$0xff]
      %v3825 = vld [vmem:[#allocation2 + $0xb8] sm:$0xff]
      %v3826 = vld [vmem:[#allocation2 + $0xc0] sm:$0xff]
      %v3827 = vld [vmem:[#allocation2 + $0xc8] sm:$0xff]
      %v3828 = vld [vmem:[#allocation2 + $0xd0] sm:$0xff]
      %v3829 = vld [vmem:[#allocation2 + $0xd8] sm:$0xff]
      %v3830 = vld [vmem:[#allocation2 + $0xe0] sm:$0xff]
      %v3831 = vld [vmem:[#allocation2 + $0xe8] sm:$0xff]
      %v3832 = vld [vmem:[#allocation2 + $0xf0] sm:$0xff]
      %v3833 = vld [vmem:[#allocation2 + $0xf8] sm:$0xff]
      %v3834 = vld [vmem:[#allocation2 + $0x100] sm:$0xff]
      %v3835 = vld [vmem:[#allocation2 + $0x108] sm:$0xff]
      %v3836 = vld [vmem:[#allocation2 + $0x110] sm:$0xff]
      %v3837 = vld [vmem:[#allocation2 + $0x118] sm:$0xff]
      %v3838 = vld [vmem:[#allocation2] sm:$0xff]
      %v3839 = vld [vmem:[#allocation2 + $0x8] sm:$0xff]
      %v3840 = vld [vmem:[#allocation2 + $0x10] sm:$0xff]
      %v3841 = vld [vmem:[#allocation2 + $0x18] sm:$0xff]
      %v3842 = vmax.f32 %v3806, %v3838
      %v3843 = vmax.f32 %v3807, %v3839
      %v3844 = vmax.f32 %v3808, %v3840
      %v3845 = vmax.f32 %v3809, %v3841
      %v3846 = vmax.f32 %v3810, %v3806
      %v3847 = vmax.f32 %v3811, %v3807
      %v3848 = vmax.f32 %v3812, %v3808
      %v3849 = vmax.f32 %v3813, %v3809
      %v3850 = vmax.f32 %v3814, %v3810
      %v3851 = vmax.f32 %v3815, %v3811
      %v3852 = vmax.f32 %v3816, %v3812
      %v3853 = vmax.f32 %v3817, %v3813
      %v3854 = vmax.f32 %v3818, %v3814
      %v3855 = vmax.f32 %v3819, %v3815
      %v3856 = vmax.f32 %v3820, %v3816
      %v3857 = vmax.f32 %v3821, %v3817
      %v3858 = vmax.f32 %v3822, %v3818
      %v3859 = vmax.f32 %v3823, %v3819
      %v3860 = vmax.f32 %v3824, %v3820
      %v3861 = vmax.f32 %v3825, %v3821
      %v3862 = vmax.f32 %v3826, %v3822
      %v3863 = vmax.f32 %v3827, %v3823
      %v3864 = vmax.f32 %v3828, %v3824
      %v3865 = vmax.f32 %v3829, %v3825
      %v3866 = vmax.f32 %v3830, %v3826
      %v3867 = vmax.f32 %v3831, %v3827
      %v3868 = vmax.f32 %v3832, %v3828
      %v3869 = vmax.f32 %v3833, %v3829
      %v3870 = vmax.f32 %v3834, %v3830
      %v3871 = vmax.f32 %v3835, %v3831
      %v3872 = vmax.f32 %v3836, %v3832
      %v3873 = vmax.f32 %v3837, %v3833
      %v3874 = vmax.f32 %v3842, %v3840
      %v3875 = vmax.f32 %v3843, %v3841
      %v3876 = vmax.f32 %v3844, %v3806
      %v3877 = vmax.f32 %v3845, %v3807
      %v3878 = vmax.f32 %v3846, %v3808
      %v3879 = vmax.f32 %v3847, %v3809
      %v3880 = vmax.f32 %v3848, %v3810
      %v3881 = vmax.f32 %v3849, %v3811
      %v3882 = vmax.f32 %v3850, %v3812
      %v3883 = vmax.f32 %v3851, %v3813
      %v3884 = vmax.f32 %v3852, %v3814
      %v3885 = vmax.f32 %v3853, %v3815
      %v3886 = vmax.f32 %v3854, %v3816
      %v3887 = vmax.f32 %v3855, %v3817
      %v3888 = vmax.f32 %v3856, %v3818
      %v3889 = vmax.f32 %v3857, %v3819
      %v3890 = vmax.f32 %v3858, %v3820
      %v3891 = vmax.f32 %v3859, %v3821
      %v3892 = vmax.f32 %v3860, %v3822
      %v3893 = vmax.f32 %v3861, %v3823
      %v3894 = vmax.f32 %v3862, %v3824
      %v3895 = vmax.f32 %v3863, %v3825
      %v3896 = vmax.f32 %v3864, %v3826
      %v3897 = vmax.f32 %v3865, %v3827
      %v3898 = vmax.f32 %v3866, %v3828
      %v3899 = vmax.f32 %v3867, %v3829
      %v3900 = vmax.f32 %v3868, %v3830
      %v3901 = vmax.f32 %v3869, %v3831
      %v3902 = vmax.f32 %v3870, %v3832
      %v3903 = vmax.f32 %v3871, %v3833
      %v3904 = vmax.f32 %v3872, %v3834
      %v3905 = vmax.f32 %v3873, %v3835
      %v3906 = vld [vmem:[#allocation2 + $0x120] sm:$0xff]
      %v3907 = vld [vmem:[#allocation2 + $0x128] sm:$0xff]
      %v3908 = vmax.f32 %v3874, %v3808
      %v3909 = vmax.f32 %v3875, %v3809
      %v3910 = vmax.f32 %v3876, %v3810
      %v3911 = vmax.f32 %v3877, %v3811
      %v3912 = vmax.f32 %v3878, %v3812
      %v3913 = vmax.f32 %v3879, %v3813
      %v3914 = vmax.f32 %v3880, %v3814
      %v3915 = vmax.f32 %v3881, %v3815
      %v3916 = vmax.f32 %v3882, %v3816
      %v3917 = vmax.f32 %v3883, %v3817
      %v3918 = vmax.f32 %v3884, %v3818
      %v3919 = vmax.f32 %v3885, %v3819
      %v3920 = vmax.f32 %v3886, %v3820
      %v3921 = vmax.f32 %v3887, %v3821
      %v3922 = vmax.f32 %v3888, %v3822
      %v3923 = vmax.f32 %v3889, %v3823
      %v3924 = vmax.f32 %v3890, %v3824
      %v3925 = vmax.f32 %v3891, %v3825
      %v3926 = vmax.f32 %v3892, %v3826
      %v3927 = vmax.f32 %v3893, %v3827
      %v3928 = vmax.f32 %v3894, %v3828
      %v3929 = vmax.f32 %v3895, %v3829
      %v3930 = vmax.f32 %v3896, %v3830
      %v3931 = vmax.f32 %v3897, %v3831
      %v3932 = vmax.f32 %v3898, %v3832
      %v3933 = vmax.f32 %v3899, %v3833
      %v3934 = vmax.f32 %v3900, %v3834
      %v3935 = vmax.f32 %v3901, %v3835
      %v3936 = vmax.f32 %v3902, %v3836
      %v3937 = vmax.f32 %v3903, %v3837
      %v3938 = vmax.f32 %v3904, %v3906
      %v3939 = vmax.f32 %v3905, %v3907
      %v3940 = vld [vmem:[#allocation2 + $0x40] sm:$0xff]
      %v3941 = vld [vmem:[#allocation2 + $0x48] sm:$0xff]
      %v3942 = vld [vmem:[#allocation2 + $0x50] sm:$0xff]
      %v3943 = vld [vmem:[#allocation2 + $0x58] sm:$0xff]
      %v3944 = vld [vmem:[#allocation2 + $0x60] sm:$0xff]
      %v3945 = vld [vmem:[#allocation2 + $0x68] sm:$0xff]
      %v3946 = vld [vmem:[#allocation2 + $0x70] sm:$0xff]
      %v3947 = vld [vmem:[#allocation2 + $0x78] sm:$0xff]
      %v3948 = vld [vmem:[#allocation2 + $0x80] sm:$0xff]
      %v3949 = vld [vmem:[#allocation2 + $0x88] sm:$0xff]
      %v3950 = vld [vmem:[#allocation2 + $0x90] sm:$0xff]
      %v3951 = vld [vmem:[#allocation2 + $0x98] sm:$0xff]
      %v3952 = vld [vmem:[#allocation2 + $0xa0] sm:$0xff]
      %v3953 = vld [vmem:[#allocation2 + $0xa8] sm:$0xff]
      %v3954 = vld [vmem:[#allocation2 + $0xb0] sm:$0xff]
      %v3955 = vld [vmem:[#allocation2 + $0xb8] sm:$0xff]
      %v3956 = vld [vmem:[#allocation2 + $0xc0] sm:$0xff]
      %v3957 = vld [vmem:[#allocation2 + $0xc8] sm:$0xff]
      %v3958 = vld [vmem:[#allocation2 + $0xd0] sm:$0xff]
      %v3959 = vld [vmem:[#allocation2 + $0xd8] sm:$0xff]
      %v3960 = vld [vmem:[#allocation2 + $0xe0] sm:$0xff]
      %v3961 = vld [vmem:[#allocation2 + $0xe8] sm:$0xff]
      %v3962 = vld [vmem:[#allocation2 + $0xf0] sm:$0xff]
      %v3963 = vld [vmem:[#allocation2 + $0xf8] sm:$0xff]
      %v3964 = vld [vmem:[#allocation2 + $0x100] sm:$0xff]
      %v3965 = vld [vmem:[#allocation2 + $0x108] sm:$0xff]
      %v3966 = vld [vmem:[#allocation2 + $0x110] sm:$0xff]
      %v3967 = vld [vmem:[#allocation2 + $0x118] sm:$0xff]
      %v3968 = vld [vmem:[#allocation2 + $0x120] sm:$0xff]
      %v3969 = vld [vmem:[#allocation2 + $0x128] sm:$0xff]
      %v3970 = vld [vmem:[#allocation2 + $0x130] sm:$0xff]
      %v3971 = vld [vmem:[#allocation2 + $0x138] sm:$0xff]
      %v3972 = vmax.f32 %v3908, %v3940
      %v3973 = vmax.f32 %v3909, %v3941
      %v3974 = vmax.f32 %v3910, %v3942
      %v3975 = vmax.f32 %v3911, %v3943
      %v3976 = vmax.f32 %v3912, %v3944
      %v3977 = vmax.f32 %v3913, %v3945
      %v3978 = vmax.f32 %v3914, %v3946
      %v3979 = vmax.f32 %v3915, %v3947
      %v3980 = vmax.f32 %v3916, %v3948
      %v3981 = vmax.f32 %v3917, %v3949
      %v3982 = vmax.f32 %v3918, %v3950
      %v3983 = vmax.f32 %v3919, %v3951
      %v3984 = vmax.f32 %v3920, %v3952
      %v3985 = vmax.f32 %v3921, %v3953
      %v3986 = vmax.f32 %v3922, %v3954
      %v3987 = vmax.f32 %v3923, %v3955
      %v3988 = vmax.f32 %v3924, %v3956
      %v3989 = vmax.f32 %v3925, %v3957
      %v3990 = vmax.f32 %v3926, %v3958
      %v3991 = vmax.f32 %v3927, %v3959
      %v3992 = vmax.f32 %v3928, %v3960
      %v3993 = vmax.f32 %v3929, %v3961
      %v3994 = vmax.f32 %v3930, %v3962
      %v3995 = vmax.f32 %v3931, %v3963
      %v3996 = vmax.f32 %v3932, %v3964
      %v3997 = vmax.f32 %v3933, %v3965
      %v3998 = vmax.f32 %v3934, %v3966
      %v3999 = vmax.f32 %v3935, %v3967
      %v4000 = vmax.f32 %v3936, %v3968
      %v4001 = vmax.f32 %v3937, %v3969
      %v4002 = vmax.f32 %v3938, %v3970
      %v4003 = vmax.f32 %v3939, %v3971
      %4004 = vst [vmem:[#allocation2 + $0x20] sm:$0xff] %v3972
      %4005 = vst [vmem:[#allocation2 + $0x28] sm:$0xff] %v3973
      %4006 = vst [vmem:[#allocation2 + $0x30] sm:$0xff] %v3974
      %4007 = vst [vmem:[#allocation2 + $0x38] sm:$0xff] %v3975
      %4008 = vst [vmem:[#allocation2 + $0x40] sm:$0xff] %v3976
      %4009 = vst [vmem:[#allocation2 + $0x48] sm:$0xff] %v3977
      %4010 = vst [vmem:[#allocation2 + $0x50] sm:$0xff] %v3978
      %4011 = vst [vmem:[#allocation2 + $0x58] sm:$0xff] %v3979
      %4012 = vst [vmem:[#allocation2 + $0x60] sm:$0xff] %v3980
      %4013 = vst [vmem:[#allocation2 + $0x68] sm:$0xff] %v3981
      %4014 = vst [vmem:[#allocation2 + $0x70] sm:$0xff] %v3982
      %4015 = vst [vmem:[#allocation2 + $0x78] sm:$0xff] %v3983
      %4016 = vst [vmem:[#allocation2 + $0x80] sm:$0xff] %v3984
      %4017 = vst [vmem:[#allocation2 + $0x88] sm:$0xff] %v3985
      %4018 = vst [vmem:[#allocation2 + $0x90] sm:$0xff] %v3986
      %4019 = vst [vmem:[#allocation2 + $0x98] sm:$0xff] %v3987
      %4020 = vst [vmem:[#allocation2 + $0xa0] sm:$0xff] %v3988
      %4021 = vst [vmem:[#allocation2 + $0xa8] sm:$0xff] %v3989
      %4022 = vst [vmem:[#allocation2 + $0xb0] sm:$0xff] %v3990
      %4023 = vst [vmem:[#allocation2 + $0xb8] sm:$0xff] %v3991
      %4024 = vst [vmem:[#allocation2 + $0xc0] sm:$0xff] %v3992
      %4025 = vst [vmem:[#allocation2 + $0xc8] sm:$0xff] %v3993
      %4026 = vst [vmem:[#allocation2 + $0xd0] sm:$0xff] %v3994
      %4027 = vst [vmem:[#allocation2 + $0xd8] sm:$0xff] %v3995
      %4028 = vst [vmem:[#allocation2 + $0xe0] sm:$0xff] %v3996
      %4029 = vst [vmem:[#allocation2 + $0xe8] sm:$0xff] %v3997
      %4030 = vst [vmem:[#allocation2 + $0xf0] sm:$0xff] %v3998
      %4031 = vst [vmem:[#allocation2 + $0xf8] sm:$0xff] %v3999
      %4032 = vst [vmem:[#allocation2 + $0x100] sm:$0xff] %v4000
      %4033 = vst [vmem:[#allocation2 + $0x108] sm:$0xff] %v4001
      %4034 = vst [vmem:[#allocation2 + $0x110] sm:$0xff] %v4002
      %4035 = vst [vmem:[#allocation2 + $0x118] sm:$0xff] %v4003
      %v4036 = vld [vmem:[#allocation2 + $0x1e] sm:$0xff]
      %v4037 = vld [vmem:[#allocation2 + $0x26] sm:$0xff]
      %v4038 = vld [vmem:[#allocation2 + $0x2e] sm:$0xff]
      %v4039 = vld [vmem:[#allocation2 + $0x36] sm:$0xff]
      %v4040 = vld [vmem:[#allocation2 + $0x3e] sm:$0xff]
      %v4041 = vld [vmem:[#allocation2 + $0x46] sm:$0xff]
      %v4042 = vld [vmem:[#allocation2 + $0x4e] sm:$0xff]
      %v4043 = vld [vmem:[#allocation2 + $0x56] sm:$0xff]
      %v4044 = vld [vmem:[#allocation2 + $0x5e] sm:$0xff]
      %v4045 = vld [vmem:[#allocation2 + $0x66] sm:$0xff]
      %v4046 = vld [vmem:[#allocation2 + $0x6e] sm:$0xff]
      %v4047 = vld [vmem:[#allocation2 + $0x76] sm:$0xff]
      %v4048 = vld [vmem:[#allocation2 + $0x7e] sm:$0xff]
      %v4049 = vld [vmem:[#allocation2 + $0x86] sm:$0xff]
      %v4050 = vld [vmem:[#allocation2 + $0x8e] sm:$0xff]
      %v4051 = vld [vmem:[#allocation2 + $0x96] sm:$0xff]
      %v4052 = vld [vmem:[#allocation2 + $0x9e] sm:$0xff]
      %v4053 = vld [vmem:[#allocation2 + $0xa6] sm:$0xff]
      %v4054 = vld [vmem:[#allocation2 + $0xae] sm:$0xff]
      %v4055 = vld [vmem:[#allocation2 + $0xb6] sm:$0xff]
      %v4056 = vld [vmem:[#allocation2 + $0xbe] sm:$0xff]
      %v4057 = vld [vmem:[#allocation2 + $0xc6] sm:$0xff]
      %v4058 = vld [vmem:[#allocation2 + $0xce] sm:$0xff]
      %v4059 = vld [vmem:[#allocation2 + $0xd6] sm:$0xff]
      %v4060 = vld [vmem:[#allocation2 + $0xde] sm:$0xff]
      %v4061 = vld [vmem:[#allocation2 + $0xe6] sm:$0xff]
      %v4062 = vld [vmem:[#allocation2 + $0xee] sm:$0xff]
      %v4063 = vld [vmem:[#allocation2 + $0xf6] sm:$0xff]
      %v4064 = vld [vmem:[#allocation2 + $0xfe] sm:$0xff]
      %v4065 = vld [vmem:[#allocation2 + $0x106] sm:$0xff]
      %v4066 = vld [vmem:[#allocation2 + $0x10e] sm:$0xff]
      %v4067 = vld [vmem:[#allocation2 + $0x116] sm:$0xff]
      %v4068 = vld [vmem:[%s3] sm:$0xff]
      %v4069 = vld [vmem:[%s3 + $0x8] sm:$0xff]
      %v4070 = vld [vmem:[%s3 + $0x10] sm:$0xff]
      %v4071 = vld [vmem:[%s3 + $0x18] sm:$0xff]
      %v4072 = vld [vmem:[%s3 + $0x20] sm:$0xff]
      %v4073 = vld [vmem:[%s3 + $0x28] sm:$0xff]
      %v4074 = vld [vmem:[%s3 + $0x30] sm:$0xff]
      %v4075 = vld [vmem:[%s3 + $0x38] sm:$0xff]
      %v4076 = vld [vmem:[%s3 + $0x40] sm:$0xff]
      %v4077 = vld [vmem:[%s3 + $0x48] sm:$0xff]
      %v4078 = vld [vmem:[%s3 + $0x50] sm:$0xff]
      %v4079 = vld [vmem:[%s3 + $0x58] sm:$0xff]
      %v4080 = vld [vmem:[%s3 + $0x60] sm:$0xff]
      %v4081 = vld [vmem:[%s3 + $0x68] sm:$0xff]
      %v4082 = vld [vmem:[%s3 + $0x70] sm:$0xff]
      %v4083 = vld [vmem:[%s3 + $0x78] sm:$0xff]
      %v4084 = vld [vmem:[%s3 + $0x80] sm:$0xff]
      %v4085 = vld [vmem:[%s3 + $0x88] sm:$0xff]
      %v4086 = vld [vmem:[%s3 + $0x90] sm:$0xff]
      %v4087 = vld [vmem:[%s3 + $0x98] sm:$0xff]
      %v4088 = vld [vmem:[%s3 + $0xa0] sm:$0xff]
      %v4089 = vld [vmem:[%s3 + $0xa8] sm:$0xff]
      %v4090 = vld [vmem:[%s3 + $0xb0] sm:$0xff]
      %v4091 = vld [vmem:[%s3 + $0xb8] sm:$0xff]
      %v4092 = vld [vmem:[%s3 + $0xc0] sm:$0xff]
      %v4093 = vld [vmem:[%s3 + $0xc8] sm:$0xff]
      %v4094 = vld [vmem:[%s3 + $0xd0] sm:$0xff]
      %v4095 = vld [vmem:[%s3 + $0xd8] sm:$0xff]
      %v4096 = vld [vmem:[%s3 + $0xe0] sm:$0xff]
      %v4097 = vld [vmem:[%s3 + $0xe8] sm:$0xff]
      %v4098 = vld [vmem:[%s3 + $0xf0] sm:$0xff]
      %v4099 = vld [vmem:[%s3 + $0xf8] sm:$0xff]
      %4101 = vset.pattern.permute.xlu0 0
      %4102 = vperm.xlu0 %4101, %v4068
      %v4103 = vpop.permute.xlu0 %4102
      %4106 = vset.pattern.permute.xlu0 0
      %4107 = vperm.xlu0 %4106, %v4069
      %v4108 = vpop.permute.xlu0 %4107
      %4111 = vset.pattern.permute.xlu0 0
      %4112 = vperm.xlu0 %4111, %v4070
      %v4113 = vpop.permute.xlu0 %4112
      %4116 = vset.pattern.permute.xlu0 0
      %4117 = vperm.xlu0 %4116, %v4071
      %v4118 = vpop.permute.xlu0 %4117
      %4121 = vset.pattern.permute.xlu0 0
      %4122 = vperm.xlu0 %4121, %v4072
      %v4123 = vpop.permute.xlu0 %4122
      %4126 = vset.pattern.permute.xlu0 0
      %4127 = vperm.xlu0 %4126, %v4073
      %v4128 = vpop.permute.xlu0 %4127
      %4131 = vset.pattern.permute.xlu0 0
      %4132 = vperm.xlu0 %4131, %v4074
      %v4133 = vpop.permute.xlu0 %4132
      %4136 = vset.pattern.permute.xlu0 0
      %4137 = vperm.xlu0 %4136, %v4075
      %v4138 = vpop.permute.xlu0 %4137
      %4141 = vset.pattern.permute.xlu0 0
      %4142 = vperm.xlu0 %4141, %v4076
      %v4143 = vpop.permute.xlu0 %4142
      %4146 = vset.pattern.permute.xlu0 0
      %4147 = vperm.xlu0 %4146, %v4077
      %v4148 = vpop.permute.xlu0 %4147
      %4151 = vset.pattern.permute.xlu0 0
      %4152 = vperm.xlu0 %4151, %v4078
      %v4153 = vpop.permute.xlu0 %4152
      %4156 = vset.pattern.permute.xlu0 0
      %4157 = vperm.xlu0 %4156, %v4079
      %v4158 = vpop.permute.xlu0 %4157
      %4161 = vset.pattern.permute.xlu0 0
      %4162 = vperm.xlu0 %4161, %v4080
      %v4163 = vpop.permute.xlu0 %4162
      %4166 = vset.pattern.permute.xlu0 0
      %4167 = vperm.xlu0 %4166, %v4081
      %v4168 = vpop.permute.xlu0 %4167
      %4171 = vset.pattern.permute.xlu0 0
      %4172 = vperm.xlu0 %4171, %v4082
      %v4173 = vpop.permute.xlu0 %4172
      %4176 = vset.pattern.permute.xlu0 0
      %4177 = vperm.xlu0 %4176, %v4083
      %v4178 = vpop.permute.xlu0 %4177
      %4181 = vset.pattern.permute.xlu0 0
      %4182 = vperm.xlu0 %4181, %v4084
      %v4183 = vpop.permute.xlu0 %4182
      %4186 = vset.pattern.permute.xlu0 0
      %4187 = vperm.xlu0 %4186, %v4085
      %v4188 = vpop.permute.xlu0 %4187
      %4191 = vset.pattern.permute.xlu0 0
      %4192 = vperm.xlu0 %4191, %v4086
      %v4193 = vpop.permute.xlu0 %4192
      %4196 = vset.pattern.permute.xlu0 0
      %4197 = vperm.xlu0 %4196, %v4087
      %v4198 = vpop.permute.xlu0 %4197
      %4201 = vset.pattern.permute.xlu0 0
      %4202 = vperm.xlu0 %4201, %v4088
      %v4203 = vpop.permute.xlu0 %4202
      %4206 = vset.pattern.permute.xlu0 0
      %4207 = vperm.xlu0 %4206, %v4089
      %v4208 = vpop.permute.xlu0 %4207
      %4211 = vset.pattern.permute.xlu0 0
      %4212 = vperm.xlu0 %4211, %v4090
      %v4213 = vpop.permute.xlu0 %4212
      %4216 = vset.pattern.permute.xlu0 0
      %4217 = vperm.xlu0 %4216, %v4091
      %v4218 = vpop.permute.xlu0 %4217
      %4221 = vset.pattern.permute.xlu0 0
      %4222 = vperm.xlu0 %4221, %v4092
      %v4223 = vpop.permute.xlu0 %4222
      %4226 = vset.pattern.permute.xlu0 0
      %4227 = vperm.xlu0 %4226, %v4093
      %v4228 = vpop.permute.xlu0 %4227
      %4231 = vset.pattern.permute.xlu0 0
      %4232 = vperm.xlu0 %4231, %v4094
      %v4233 = vpop.permute.xlu0 %4232
      %4236 = vset.pattern.permute.xlu0 0
      %4237 = vperm.xlu0 %4236, %v4095
      %v4238 = vpop.permute.xlu0 %4237
      %4241 = vset.pattern.permute.xlu0 0
      %4242 = vperm.xlu0 %4241, %v4096
      %v4243 = vpop.permute.xlu0 %4242
      %4246 = vset.pattern.permute.xlu0 0
      %4247 = vperm.xlu0 %4246, %v4097
      %v4248 = vpop.permute.xlu0 %4247
      %4251 = vset.pattern.permute.xlu0 0
      %4252 = vperm.xlu0 %4251, %v4098
      %v4253 = vpop.permute.xlu0 %4252
      %4256 = vset.pattern.permute.xlu0 0
      %4257 = vperm.xlu0 %4256, %v4099
      %v4258 = vpop.permute.xlu0 %4257
      %v4260 = vadd.f32 %v4036, %v4103
      %v4261 = vadd.f32 %v4037, %v4108
      %v4262 = vadd.f32 %v4038, %v4113
      %v4263 = vadd.f32 %v4039, %v4118
      %v4264 = vadd.f32 %v4040, %v4123
      %v4265 = vadd.f32 %v4041, %v4128
      %v4266 = vadd.f32 %v4042, %v4133
      %v4267 = vadd.f32 %v4043, %v4138
      %v4268 = vadd.f32 %v4044, %v4143
      %v4269 = vadd.f32 %v4045, %v4148
      %v4270 = vadd.f32 %v4046, %v4153
      %v4271 = vadd.f32 %v4047, %v4158
      %v4272 = vadd.f32 %v4048, %v4163
      %v4273 = vadd.f32 %v4049, %v4168
      %v4274 = vadd.f32 %v4050, %v4173
      %v4275 = vadd.f32 %v4051, %v4178
      %v4276 = vadd.f32 %v4052, %v4183
      %v4277 = vadd.f32 %v4053, %v4188
      %v4278 = vadd.f32 %v4054, %v4193
      %v4279 = vadd.f32 %v4055, %v4198
      %v4280 = vadd.f32 %v4056, %v4203
      %v4281 = vadd.f32 %v4057, %v4208
      %v4282 = vadd.f32 %v4058, %v4213
      %v4283 = vadd.f32 %v4059, %v4218
      %v4284 = vadd.f32 %v4060, %v4223
      %v4285 = vadd.f32 %v4061, %v4228
      %v4286 = vadd.f32 %v4062, %v4233
      %v4287 = vadd.f32 %v4063, %v4238
      %v4288 = vadd.f32 %v4064, %v4243
      %v4289 = vadd.f32 %v4065, %v4248
      %v4290 = vadd.f32 %v4066, %v4253
      %v4291 = vadd.f32 %v4067, %v4258
      %v4292 = vmax.f32 %v3972, %v4260
      %v4293 = vmax.f32 %v3973, %v4261
      %v4294 = vmax.f32 %v3974, %v4262
      %v4295 = vmax.f32 %v3975, %v4263
      %v4296 = vmax.f32 %v3976, %v4264
      %v4297 = vmax.f32 %v3977, %v4265
      %v4298 = vmax.f32 %v3978, %v4266
      %v4299 = vmax.f32 %v3979, %v4267
      %v4300 = vmax.f32 %v3980, %v4268
      %v4301 = vmax.f32 %v3981, %v4269
      %v4302 = vmax.f32 %v3982, %v4270
      %v4303 = vmax.f32 %v3983, %v4271
      %v4304 = vmax.f32 %v3984, %v4272
      %v4305 = vmax.f32 %v3985, %v4273
      %v4306 = vmax.f32 %v3986, %v4274
      %v4307 = vmax.f32 %v3987, %v4275
      %v4308 = vmax.f32 %v3988, %v4276
      %v4309 = vmax.f32 %v3989, %v4277
      %v4310 = vmax.f32 %v3990, %v4278
      %v4311 = vmax.f32 %v3991, %v4279
      %v4312 = vmax.f32 %v3992, %v4280
      %v4313 = vmax.f32 %v3993, %v4281
      %v4314 = vmax.f32 %v3994, %v4282
      %v4315 = vmax.f32 %v3995, %v4283
      %v4316 = vmax.f32 %v3996, %v4284
      %v4317 = vmax.f32 %v3997, %v4285
      %v4318 = vmax.f32 %v3998, %v4286
      %v4319 = vmax.f32 %v3999, %v4287
      %v4320 = vmax.f32 %v4000, %v4288
      %v4321 = vmax.f32 %v4001, %v4289
      %v4322 = vmax.f32 %v4002, %v4290
      %v4323 = vmax.f32 %v4003, %v4291
      %v4324 = vld [vmem:[#allocation2 + $0x1f] sm:$0xff]
      %v4325 = vld [vmem:[#allocation2 + $0x27] sm:$0xff]
      %v4326 = vld [vmem:[#allocation2 + $0x2f] sm:$0xff]
      %v4327 = vld [vmem:[#allocation2 + $0x37] sm:$0xff]
      %v4328 = vld [vmem:[#allocation2 + $0x3f] sm:$0xff]
      %v4329 = vld [vmem:[#allocation2 + $0x47] sm:$0xff]
      %v4330 = vld [vmem:[#allocation2 + $0x4f] sm:$0xff]
      %v4331 = vld [vmem:[#allocation2 + $0x57] sm:$0xff]
      %v4332 = vld [vmem:[#allocation2 + $0x5f] sm:$0xff]
      %v4333 = vld [vmem:[#allocation2 + $0x67] sm:$0xff]
      %v4334 = vld [vmem:[#allocation2 + $0x6f] sm:$0xff]
      %v4335 = vld [vmem:[#allocation2 + $0x77] sm:$0xff]
      %v4336 = vld [vmem:[#allocation2 + $0x7f] sm:$0xff]
      %v4337 = vld [vmem:[#allocation2 + $0x87] sm:$0xff]
      %v4338 = vld [vmem:[#allocation2 + $0x8f] sm:$0xff]
      %v4339 = vld [vmem:[#allocation2 + $0x97] sm:$0xff]
      %v4340 = vld [vmem:[#allocation2 + $0x9f] sm:$0xff]
      %v4341 = vld [vmem:[#allocation2 + $0xa7] sm:$0xff]
      %v4342 = vld [vmem:[#allocation2 + $0xaf] sm:$0xff]
      %v4343 = vld [vmem:[#allocation2 + $0xb7] sm:$0xff]
      %v4344 = vld [vmem:[#allocation2 + $0xbf] sm:$0xff]
      %v4345 = vld [vmem:[#allocation2 + $0xc7] sm:$0xff]
      %v4346 = vld [vmem:[#allocation2 + $0xcf] sm:$0xff]
      %v4347 = vld [vmem:[#allocation2 + $0xd7] sm:$0xff]
      %v4348 = vld [vmem:[#allocation2 + $0xdf] sm:$0xff]
      %v4349 = vld [vmem:[#allocation2 + $0xe7] sm:$0xff]
      %v4350 = vld [vmem:[#allocation2 + $0xef] sm:$0xff]
      %v4351 = vld [vmem:[#allocation2 + $0xf7] sm:$0xff]
      %v4352 = vld [vmem:[#allocation2 + $0xff] sm:$0xff]
      %v4353 = vld [vmem:[#allocation2 + $0x107] sm:$0xff]
      %v4354 = vld [vmem:[#allocation2 + $0x10f] sm:$0xff]
      %v4355 = vld [vmem:[#allocation2 + $0x117] sm:$0xff]
      %4356 = vset.pattern.permute.xlu0 1
      %4357 = vperm.xlu0 %4356, %v4068
      %v4358 = vpop.permute.xlu0 %4357
      %4360 = vset.pattern.permute.xlu0 1
      %4361 = vperm.xlu0 %4360, %v4069
      %v4362 = vpop.permute.xlu0 %4361
      %4364 = vset.pattern.permute.xlu0 1
      %4365 = vperm.xlu0 %4364, %v4070
      %v4366 = vpop.permute.xlu0 %4365
      %4368 = vset.pattern.permute.xlu0 1
      %4369 = vperm.xlu0 %4368, %v4071
      %v4370 = vpop.permute.xlu0 %4369
      %4372 = vset.pattern.permute.xlu0 1
      %4373 = vperm.xlu0 %4372, %v4072
      %v4374 = vpop.permute.xlu0 %4373
      %4376 = vset.pattern.permute.xlu0 1
      %4377 = vperm.xlu0 %4376, %v4073
      %v4378 = vpop.permute.xlu0 %4377
      %4380 = vset.pattern.permute.xlu0 1
      %4381 = vperm.xlu0 %4380, %v4074
      %v4382 = vpop.permute.xlu0 %4381
      %4384 = vset.pattern.permute.xlu0 1
      %4385 = vperm.xlu0 %4384, %v4075
      %v4386 = vpop.permute.xlu0 %4385
      %4388 = vset.pattern.permute.xlu0 1
      %4389 = vperm.xlu0 %4388, %v4076
      %v4390 = vpop.permute.xlu0 %4389
      %4392 = vset.pattern.permute.xlu0 1
      %4393 = vperm.xlu0 %4392, %v4077
      %v4394 = vpop.permute.xlu0 %4393
      %4396 = vset.pattern.permute.xlu0 1
      %4397 = vperm.xlu0 %4396, %v4078
      %v4398 = vpop.permute.xlu0 %4397
      %4400 = vset.pattern.permute.xlu0 1
      %4401 = vperm.xlu0 %4400, %v4079
      %v4402 = vpop.permute.xlu0 %4401
      %4404 = vset.pattern.permute.xlu0 1
      %4405 = vperm.xlu0 %4404, %v4080
      %v4406 = vpop.permute.xlu0 %4405
      %4408 = vset.pattern.permute.xlu0 1
      %4409 = vperm.xlu0 %4408, %v4081
      %v4410 = vpop.permute.xlu0 %4409
      %4412 = vset.pattern.permute.xlu0 1
      %4413 = vperm.xlu0 %4412, %v4082
      %v4414 = vpop.permute.xlu0 %4413
      %4416 = vset.pattern.permute.xlu0 1
      %4417 = vperm.xlu0 %4416, %v4083
      %v4418 = vpop.permute.xlu0 %4417
      %4420 = vset.pattern.permute.xlu0 1
      %4421 = vperm.xlu0 %4420, %v4084
      %v4422 = vpop.permute.xlu0 %4421
      %4424 = vset.pattern.permute.xlu0 1
      %4425 = vperm.xlu0 %4424, %v4085
      %v4426 = vpop.permute.xlu0 %4425
      %4428 = vset.pattern.permute.xlu0 1
      %4429 = vperm.xlu0 %4428, %v4086
      %v4430 = vpop.permute.xlu0 %4429
      %4432 = vset.pattern.permute.xlu0 1
      %4433 = vperm.xlu0 %4432, %v4087
      %v4434 = vpop.permute.xlu0 %4433
      %4436 = vset.pattern.permute.xlu0 1
      %4437 = vperm.xlu0 %4436, %v4088
      %v4438 = vpop.permute.xlu0 %4437
      %4440 = vset.pattern.permute.xlu0 1
      %4441 = vperm.xlu0 %4440, %v4089
      %v4442 = vpop.permute.xlu0 %4441
      %4444 = vset.pattern.permute.xlu0 1
      %4445 = vperm.xlu0 %4444, %v4090
      %v4446 = vpop.permute.xlu0 %4445
      %4448 = vset.pattern.permute.xlu0 1
      %4449 = vperm.xlu0 %4448, %v4091
      %v4450 = vpop.permute.xlu0 %4449
      %4452 = vset.pattern.permute.xlu0 1
      %4453 = vperm.xlu0 %4452, %v4092
      %v4454 = vpop.permute.xlu0 %4453
      %4456 = vset.pattern.permute.xlu0 1
      %4457 = vperm.xlu0 %4456, %v4093
      %v4458 = vpop.permute.xlu0 %4457
      %4460 = vset.pattern.permute.xlu0 1
      %4461 = vperm.xlu0 %4460, %v4094
      %v4462 = vpop.permute.xlu0 %4461
      %4464 = vset.pattern.permute.xlu0 1
      %4465 = vperm.xlu0 %4464, %v4095
      %v4466 = vpop.permute.xlu0 %4465
      %4468 = vset.pattern.permute.xlu0 1
      %4469 = vperm.xlu0 %4468, %v4096
      %v4470 = vpop.permute.xlu0 %4469
      %4472 = vset.pattern.permute.xlu0 1
      %4473 = vperm.xlu0 %4472, %v4097
      %v4474 = vpop.permute.xlu0 %4473
      %4476 = vset.pattern.permute.xlu0 1
      %4477 = vperm.xlu0 %4476, %v4098
      %v4478 = vpop.permute.xlu0 %4477
      %4480 = vset.pattern.permute.xlu0 1
      %4481 = vperm.xlu0 %4480, %v4099
      %v4482 = vpop.permute.xlu0 %4481
      %v4484 = vadd.f32 %v4324, %v4358
      %v4485 = vadd.f32 %v4325, %v4362
      %v4486 = vadd.f32 %v4326, %v4366
      %v4487 = vadd.f32 %v4327, %v4370
      %v4488 = vadd.f32 %v4328, %v4374
      %v4489 = vadd.f32 %v4329, %v4378
      %v4490 = vadd.f32 %v4330, %v4382
      %v4491 = vadd.f32 %v4331, %v4386
      %v4492 = vadd.f32 %v4332, %v4390
      %v4493 = vadd.f32 %v4333, %v4394
      %v4494 = vadd.f32 %v4334, %v4398
      %v4495 = vadd.f32 %v4335, %v4402
      %v4496 = vadd.f32 %v4336, %v4406
      %v4497 = vadd.f32 %v4337, %v4410
      %v4498 = vadd.f32 %v4338, %v4414
      %v4499 = vadd.f32 %v4339, %v4418
      %v4500 = vadd.f32 %v4340, %v4422
      %v4501 = vadd.f32 %v4341, %v4426
      %v4502 = vadd.f32 %v4342, %v4430
      %v4503 = vadd.f32 %v4343, %v4434
      %v4504 = vadd.f32 %v4344, %v4438
      %v4505 = vadd.f32 %v4345, %v4442
      %v4506 = vadd.f32 %v4346, %v4446
      %v4507 = vadd.f32 %v4347, %v4450
      %v4508 = vadd.f32 %v4348, %v4454
      %v4509 = vadd.f32 %v4349, %v4458
      %v4510 = vadd.f32 %v4350, %v4462
      %v4511 = vadd.f32 %v4351, %v4466
      %v4512 = vadd.f32 %v4352, %v4470
      %v4513 = vadd.f32 %v4353, %v4474
      %v4514 = vadd.f32 %v4354, %v4478
      %v4515 = vadd.f32 %v4355, %v4482
      %v4516 = vmax.f32 %v4292, %v4484
      %v4517 = vmax.f32 %v4293, %v4485
      %v4518 = vmax.f32 %v4294, %v4486
      %v4519 = vmax.f32 %v4295, %v4487
      %v4520 = vmax.f32 %v4296, %v4488
      %v4521 = vmax.f32 %v4297, %v4489
      %v4522 = vmax.f32 %v4298, %v4490
      %v4523 = vmax.f32 %v4299, %v4491
      %v4524 = vmax.f32 %v4300, %v4492
      %v4525 = vmax.f32 %v4301, %v4493
      %v4526 = vmax.f32 %v4302, %v4494
      %v4527 = vmax.f32 %v4303, %v4495
      %v4528 = vmax.f32 %v4304, %v4496
      %v4529 = vmax.f32 %v4305, %v4497
      %v4530 = vmax.f32 %v4306, %v4498
      %v4531 = vmax.f32 %v4307, %v4499
      %v4532 = vmax.f32 %v4308, %v4500
      %v4533 = vmax.f32 %v4309, %v4501
      %v4534 = vmax.f32 %v4310, %v4502
      %v4535 = vmax.f32 %v4311, %v4503
      %v4536 = vmax.f32 %v4312, %v4504
      %v4537 = vmax.f32 %v4313, %v4505
      %v4538 = vmax.f32 %v4314, %v4506
      %v4539 = vmax.f32 %v4315, %v4507
      %v4540 = vmax.f32 %v4316, %v4508
      %v4541 = vmax.f32 %v4317, %v4509
      %v4542 = vmax.f32 %v4318, %v4510
      %v4543 = vmax.f32 %v4319, %v4511
      %v4544 = vmax.f32 %v4320, %v4512
      %v4545 = vmax.f32 %v4321, %v4513
      %v4546 = vmax.f32 %v4322, %v4514
      %v4547 = vmax.f32 %v4323, %v4515
      %v4548 = vld [vmem:[#allocation2 + $0x21] sm:$0xff]
      %v4549 = vld [vmem:[#allocation2 + $0x29] sm:$0xff]
      %v4550 = vld [vmem:[#allocation2 + $0x31] sm:$0xff]
      %v4551 = vld [vmem:[#allocation2 + $0x39] sm:$0xff]
      %v4552 = vld [vmem:[#allocation2 + $0x41] sm:$0xff]
      %v4553 = vld [vmem:[#allocation2 + $0x49] sm:$0xff]
      %v4554 = vld [vmem:[#allocation2 + $0x51] sm:$0xff]
      %v4555 = vld [vmem:[#allocation2 + $0x59] sm:$0xff]
      %v4556 = vld [vmem:[#allocation2 + $0x61] sm:$0xff]
      %v4557 = vld [vmem:[#allocation2 + $0x69] sm:$0xff]
      %v4558 = vld [vmem:[#allocation2 + $0x71] sm:$0xff]
      %v4559 = vld [vmem:[#allocation2 + $0x79] sm:$0xff]
      %v4560 = vld [vmem:[#allocation2 + $0x81] sm:$0xff]
      %v4561 = vld [vmem:[#allocation2 + $0x89] sm:$0xff]
      %v4562 = vld [vmem:[#allocation2 + $0x91] sm:$0xff]
      %v4563 = vld [vmem:[#allocation2 + $0x99] sm:$0xff]
      %v4564 = vld [vmem:[#allocation2 + $0xa1] sm:$0xff]
      %v4565 = vld [vmem:[#allocation2 + $0xa9] sm:$0xff]
      %v4566 = vld [vmem:[#allocation2 + $0xb1] sm:$0xff]
      %v4567 = vld [vmem:[#allocation2 + $0xb9] sm:$0xff]
      %v4568 = vld [vmem:[#allocation2 + $0xc1] sm:$0xff]
      %v4569 = vld [vmem:[#allocation2 + $0xc9] sm:$0xff]
      %v4570 = vld [vmem:[#allocation2 + $0xd1] sm:$0xff]
      %v4571 = vld [vmem:[#allocation2 + $0xd9] sm:$0xff]
      %v4572 = vld [vmem:[#allocation2 + $0xe1] sm:$0xff]
      %v4573 = vld [vmem:[#allocation2 + $0xe9] sm:$0xff]
      %v4574 = vld [vmem:[#allocation2 + $0xf1] sm:$0xff]
      %v4575 = vld [vmem:[#allocation2 + $0xf9] sm:$0xff]
      %v4576 = vld [vmem:[#allocation2 + $0x101] sm:$0xff]
      %v4577 = vld [vmem:[#allocation2 + $0x109] sm:$0xff]
      %v4578 = vld [vmem:[#allocation2 + $0x111] sm:$0xff]
      %v4579 = vld [vmem:[#allocation2 + $0x119] sm:$0xff]
      %4580 = vset.pattern.permute.xlu0 2
      %4581 = vperm.xlu0 %4580, %v4068
      %v4582 = vpop.permute.xlu0 %4581
      %4584 = vset.pattern.permute.xlu0 2
      %4585 = vperm.xlu0 %4584, %v4069
      %v4586 = vpop.permute.xlu0 %4585
      %4588 = vset.pattern.permute.xlu0 2
      %4589 = vperm.xlu0 %4588, %v4070
      %v4590 = vpop.permute.xlu0 %4589
      %4592 = vset.pattern.permute.xlu0 2
      %4593 = vperm.xlu0 %4592, %v4071
      %v4594 = vpop.permute.xlu0 %4593
      %4596 = vset.pattern.permute.xlu0 2
      %4597 = vperm.xlu0 %4596, %v4072
      %v4598 = vpop.permute.xlu0 %4597
      %4600 = vset.pattern.permute.xlu0 2
      %4601 = vperm.xlu0 %4600, %v4073
      %v4602 = vpop.permute.xlu0 %4601
      %4604 = vset.pattern.permute.xlu0 2
      %4605 = vperm.xlu0 %4604, %v4074
      %v4606 = vpop.permute.xlu0 %4605
      %4608 = vset.pattern.permute.xlu0 2
      %4609 = vperm.xlu0 %4608, %v4075
      %v4610 = vpop.permute.xlu0 %4609
      %4612 = vset.pattern.permute.xlu0 2
      %4613 = vperm.xlu0 %4612, %v4076
      %v4614 = vpop.permute.xlu0 %4613
      %4616 = vset.pattern.permute.xlu0 2
      %4617 = vperm.xlu0 %4616, %v4077
      %v4618 = vpop.permute.xlu0 %4617
      %4620 = vset.pattern.permute.xlu0 2
      %4621 = vperm.xlu0 %4620, %v4078
      %v4622 = vpop.permute.xlu0 %4621
      %4624 = vset.pattern.permute.xlu0 2
      %4625 = vperm.xlu0 %4624, %v4079
      %v4626 = vpop.permute.xlu0 %4625
      %4628 = vset.pattern.permute.xlu0 2
      %4629 = vperm.xlu0 %4628, %v4080
      %v4630 = vpop.permute.xlu0 %4629
      %4632 = vset.pattern.permute.xlu0 2
      %4633 = vperm.xlu0 %4632, %v4081
      %v4634 = vpop.permute.xlu0 %4633
      %4636 = vset.pattern.permute.xlu0 2
      %4637 = vperm.xlu0 %4636, %v4082
      %v4638 = vpop.permute.xlu0 %4637
      %4640 = vset.pattern.permute.xlu0 2
      %4641 = vperm.xlu0 %4640, %v4083
      %v4642 = vpop.permute.xlu0 %4641
      %4644 = vset.pattern.permute.xlu0 2
      %4645 = vperm.xlu0 %4644, %v4084
      %v4646 = vpop.permute.xlu0 %4645
      %4648 = vset.pattern.permute.xlu0 2
      %4649 = vperm.xlu0 %4648, %v4085
      %v4650 = vpop.permute.xlu0 %4649
      %4652 = vset.pattern.permute.xlu0 2
      %4653 = vperm.xlu0 %4652, %v4086
      %v4654 = vpop.permute.xlu0 %4653
      %4656 = vset.pattern.permute.xlu0 2
      %4657 = vperm.xlu0 %4656, %v4087
      %v4658 = vpop.permute.xlu0 %4657
      %4660 = vset.pattern.permute.xlu0 2
      %4661 = vperm.xlu0 %4660, %v4088
      %v4662 = vpop.permute.xlu0 %4661
      %4664 = vset.pattern.permute.xlu0 2
      %4665 = vperm.xlu0 %4664, %v4089
      %v4666 = vpop.permute.xlu0 %4665
      %4668 = vset.pattern.permute.xlu0 2
      %4669 = vperm.xlu0 %4668, %v4090
      %v4670 = vpop.permute.xlu0 %4669
      %4672 = vset.pattern.permute.xlu0 2
      %4673 = vperm.xlu0 %4672, %v4091
      %v4674 = vpop.permute.xlu0 %4673
      %4676 = vset.pattern.permute.xlu0 2
      %4677 = vperm.xlu0 %4676, %v4092
      %v4678 = vpop.permute.xlu0 %4677
      %4680 = vset.pattern.permute.xlu0 2
      %4681 = vperm.xlu0 %4680, %v4093
      %v4682 = vpop.permute.xlu0 %4681
      %4684 = vset.pattern.permute.xlu0 2
      %4685 = vperm.xlu0 %4684, %v4094
      %v4686 = vpop.permute.xlu0 %4685
      %4688 = vset.pattern.permute.xlu0 2
      %4689 = vperm.xlu0 %4688, %v4095
      %v4690 = vpop.permute.xlu0 %4689
      %4692 = vset.pattern.permute.xlu0 2
      %4693 = vperm.xlu0 %4692, %v4096
      %v4694 = vpop.permute.xlu0 %4693
      %4696 = vset.pattern.permute.xlu0 2
      %4697 = vperm.xlu0 %4696, %v4097
      %v4698 = vpop.permute.xlu0 %4697
      %4700 = vset.pattern.permute.xlu0 2
      %4701 = vperm.xlu0 %4700, %v4098
      %v4702 = vpop.permute.xlu0 %4701
      %4704 = vset.pattern.permute.xlu0 2
      %4705 = vperm.xlu0 %4704, %v4099
      %v4706 = vpop.permute.xlu0 %4705
      %v4708 = vadd.f32 %v4548, %v4582
      %v4709 = vadd.f32 %v4549, %v4586
      %v4710 = vadd.f32 %v4550, %v4590
      %v4711 = vadd.f32 %v4551, %v4594
      %v4712 = vadd.f32 %v4552, %v4598
      %v4713 = vadd.f32 %v4553, %v4602
      %v4714 = vadd.f32 %v4554, %v4606
      %v4715 = vadd.f32 %v4555, %v4610
      %v4716 = vadd.f32 %v4556, %v4614
      %v4717 = vadd.f32 %v4557, %v4618
      %v4718 = vadd.f32 %v4558, %v4622
      %v4719 = vadd.f32 %v4559, %v4626
      %v4720 = vadd.f32 %v4560, %v4630
      %v4721 = vadd.f32 %v4561, %v4634
      %v4722 = vadd.f32 %v4562, %v4638
      %v4723 = vadd.f32 %v4563, %v4642
      %v4724 = vadd.f32 %v4564, %v4646
      %v4725 = vadd.f32 %v4565, %v4650
      %v4726 = vadd.f32 %v4566, %v4654
      %v4727 = vadd.f32 %v4567, %v4658
      %v4728 = vadd.f32 %v4568, %v4662
      %v4729 = vadd.f32 %v4569, %v4666
      %v4730 = vadd.f32 %v4570, %v4670
      %v4731 = vadd.f32 %v4571, %v4674
      %v4732 = vadd.f32 %v4572, %v4678
      %v4733 = vadd.f32 %v4573, %v4682
      %v4734 = vadd.f32 %v4574, %v4686
      %v4735 = vadd.f32 %v4575, %v4690
      %v4736 = vadd.f32 %v4576, %v4694
      %v4737 = vadd.f32 %v4577, %v4698
      %v4738 = vadd.f32 %v4578, %v4702
      %v4739 = vadd.f32 %v4579, %v4706
      %v4740 = vmax.f32 %v4516, %v4708
      %v4741 = vmax.f32 %v4517, %v4709
      %v4742 = vmax.f32 %v4518, %v4710
      %v4743 = vmax.f32 %v4519, %v4711
      %v4744 = vmax.f32 %v4520, %v4712
      %v4745 = vmax.f32 %v4521, %v4713
      %v4746 = vmax.f32 %v4522, %v4714
      %v4747 = vmax.f32 %v4523, %v4715
      %v4748 = vmax.f32 %v4524, %v4716
      %v4749 = vmax.f32 %v4525, %v4717
      %v4750 = vmax.f32 %v4526, %v4718
      %v4751 = vmax.f32 %v4527, %v4719
      %v4752 = vmax.f32 %v4528, %v4720
      %v4753 = vmax.f32 %v4529, %v4721
      %v4754 = vmax.f32 %v4530, %v4722
      %v4755 = vmax.f32 %v4531, %v4723
      %v4756 = vmax.f32 %v4532, %v4724
      %v4757 = vmax.f32 %v4533, %v4725
      %v4758 = vmax.f32 %v4534, %v4726
      %v4759 = vmax.f32 %v4535, %v4727
      %v4760 = vmax.f32 %v4536, %v4728
      %v4761 = vmax.f32 %v4537, %v4729
      %v4762 = vmax.f32 %v4538, %v4730
      %v4763 = vmax.f32 %v4539, %v4731
      %v4764 = vmax.f32 %v4540, %v4732
      %v4765 = vmax.f32 %v4541, %v4733
      %v4766 = vmax.f32 %v4542, %v4734
      %v4767 = vmax.f32 %v4543, %v4735
      %v4768 = vmax.f32 %v4544, %v4736
      %v4769 = vmax.f32 %v4545, %v4737
      %v4770 = vmax.f32 %v4546, %v4738
      %v4771 = vmax.f32 %v4547, %v4739
      %v4772 = vld [vmem:[#allocation2 + $0x22] sm:$0xff]
      %v4773 = vld [vmem:[#allocation2 + $0x2a] sm:$0xff]
      %v4774 = vld [vmem:[#allocation2 + $0x32] sm:$0xff]
      %v4775 = vld [vmem:[#allocation2 + $0x3a] sm:$0xff]
      %v4776 = vld [vmem:[#allocation2 + $0x42] sm:$0xff]
      %v4777 = vld [vmem:[#allocation2 + $0x4a] sm:$0xff]
      %v4778 = vld [vmem:[#allocation2 + $0x52] sm:$0xff]
      %v4779 = vld [vmem:[#allocation2 + $0x5a] sm:$0xff]
      %v4780 = vld [vmem:[#allocation2 + $0x62] sm:$0xff]
      %v4781 = vld [vmem:[#allocation2 + $0x6a] sm:$0xff]
      %v4782 = vld [vmem:[#allocation2 + $0x72] sm:$0xff]
      %v4783 = vld [vmem:[#allocation2 + $0x7a] sm:$0xff]
      %v4784 = vld [vmem:[#allocation2 + $0x82] sm:$0xff]
      %v4785 = vld [vmem:[#allocation2 + $0x8a] sm:$0xff]
      %v4786 = vld [vmem:[#allocation2 + $0x92] sm:$0xff]
      %v4787 = vld [vmem:[#allocation2 + $0x9a] sm:$0xff]
      %v4788 = vld [vmem:[#allocation2 + $0xa2] sm:$0xff]
      %v4789 = vld [vmem:[#allocation2 + $0xaa] sm:$0xff]
      %v4790 = vld [vmem:[#allocation2 + $0xb2] sm:$0xff]
      %v4791 = vld [vmem:[#allocation2 + $0xba] sm:$0xff]
      %v4792 = vld [vmem:[#allocation2 + $0xc2] sm:$0xff]
      %v4793 = vld [vmem:[#allocation2 + $0xca] sm:$0xff]
      %v4794 = vld [vmem:[#allocation2 + $0xd2] sm:$0xff]
      %v4795 = vld [vmem:[#allocation2 + $0xda] sm:$0xff]
      %v4796 = vld [vmem:[#allocation2 + $0xe2] sm:$0xff]
      %v4797 = vld [vmem:[#allocation2 + $0xea] sm:$0xff]
      %v4798 = vld [vmem:[#allocation2 + $0xf2] sm:$0xff]
      %v4799 = vld [vmem:[#allocation2 + $0xfa] sm:$0xff]
      %v4800 = vld [vmem:[#allocation2 + $0x102] sm:$0xff]
      %v4801 = vld [vmem:[#allocation2 + $0x10a] sm:$0xff]
      %v4802 = vld [vmem:[#allocation2 + $0x112] sm:$0xff]
      %v4803 = vld [vmem:[#allocation2 + $0x11a] sm:$0xff]
      %4804 = vset.pattern.permute.xlu0 3
      %4805 = vperm.xlu0 %4804, %v4068
      %v4806 = vpop.permute.xlu0 %4805
      %4808 = vset.pattern.permute.xlu0 3
      %4809 = vperm.xlu0 %4808, %v4069
      %v4810 = vpop.permute.xlu0 %4809
      %4812 = vset.pattern.permute.xlu0 3
      %4813 = vperm.xlu0 %4812, %v4070
      %v4814 = vpop.permute.xlu0 %4813
      %4816 = vset.pattern.permute.xlu0 3
      %4817 = vperm.xlu0 %4816, %v4071
      %v4818 = vpop.permute.xlu0 %4817
      %4820 = vset.pattern.permute.xlu0 3
      %4821 = vperm.xlu0 %4820, %v4072
      %v4822 = vpop.permute.xlu0 %4821
      %4824 = vset.pattern.permute.xlu0 3
      %4825 = vperm.xlu0 %4824, %v4073
      %v4826 = vpop.permute.xlu0 %4825
      %4828 = vset.pattern.permute.xlu0 3
      %4829 = vperm.xlu0 %4828, %v4074
      %v4830 = vpop.permute.xlu0 %4829
      %4832 = vset.pattern.permute.xlu0 3
      %4833 = vperm.xlu0 %4832, %v4075
      %v4834 = vpop.permute.xlu0 %4833
      %4836 = vset.pattern.permute.xlu0 3
      %4837 = vperm.xlu0 %4836, %v4076
      %v4838 = vpop.permute.xlu0 %4837
      %4840 = vset.pattern.permute.xlu0 3
      %4841 = vperm.xlu0 %4840, %v4077
      %v4842 = vpop.permute.xlu0 %4841
      %4844 = vset.pattern.permute.xlu0 3
      %4845 = vperm.xlu0 %4844, %v4078
      %v4846 = vpop.permute.xlu0 %4845
      %4848 = vset.pattern.permute.xlu0 3
      %4849 = vperm.xlu0 %4848, %v4079
      %v4850 = vpop.permute.xlu0 %4849
      %4852 = vset.pattern.permute.xlu0 3
      %4853 = vperm.xlu0 %4852, %v4080
      %v4854 = vpop.permute.xlu0 %4853
      %4856 = vset.pattern.permute.xlu0 3
      %4857 = vperm.xlu0 %4856, %v4081
      %v4858 = vpop.permute.xlu0 %4857
      %4860 = vset.pattern.permute.xlu0 3
      %4861 = vperm.xlu0 %4860, %v4082
      %v4862 = vpop.permute.xlu0 %4861
      %4864 = vset.pattern.permute.xlu0 3
      %4865 = vperm.xlu0 %4864, %v4083
      %v4866 = vpop.permute.xlu0 %4865
      %4868 = vset.pattern.permute.xlu0 3
      %4869 = vperm.xlu0 %4868, %v4084
      %v4870 = vpop.permute.xlu0 %4869
      %4872 = vset.pattern.permute.xlu0 3
      %4873 = vperm.xlu0 %4872, %v4085
      %v4874 = vpop.permute.xlu0 %4873
      %4876 = vset.pattern.permute.xlu0 3
      %4877 = vperm.xlu0 %4876, %v4086
      %v4878 = vpop.permute.xlu0 %4877
      %4880 = vset.pattern.permute.xlu0 3
      %4881 = vperm.xlu0 %4880, %v4087
      %v4882 = vpop.permute.xlu0 %4881
      %4884 = vset.pattern.permute.xlu0 3
      %4885 = vperm.xlu0 %4884, %v4088
      %v4886 = vpop.permute.xlu0 %4885
      %4888 = vset.pattern.permute.xlu0 3
      %4889 = vperm.xlu0 %4888, %v4089
      %v4890 = vpop.permute.xlu0 %4889
      %4892 = vset.pattern.permute.xlu0 3
      %4893 = vperm.xlu0 %4892, %v4090
      %v4894 = vpop.permute.xlu0 %4893
      %4896 = vset.pattern.permute.xlu0 3
      %4897 = vperm.xlu0 %4896, %v4091
      %v4898 = vpop.permute.xlu0 %4897
      %4900 = vset.pattern.permute.xlu0 3
      %4901 = vperm.xlu0 %4900, %v4092
      %v4902 = vpop.permute.xlu0 %4901
      %4904 = vset.pattern.permute.xlu0 3
      %4905 = vperm.xlu0 %4904, %v4093
      %v4906 = vpop.permute.xlu0 %4905
      %4908 = vset.pattern.permute.xlu0 3
      %4909 = vperm.xlu0 %4908, %v4094
      %v4910 = vpop.permute.xlu0 %4909
      %4912 = vset.pattern.permute.xlu0 3
      %4913 = vperm.xlu0 %4912, %v4095
      %v4914 = vpop.permute.xlu0 %4913
      %4916 = vset.pattern.permute.xlu0 3
      %4917 = vperm.xlu0 %4916, %v4096
      %v4918 = vpop.permute.xlu0 %4917
      %4920 = vset.pattern.permute.xlu0 3
      %4921 = vperm.xlu0 %4920, %v4097
      %v4922 = vpop.permute.xlu0 %4921
      %4924 = vset.pattern.permute.xlu0 3
      %4925 = vperm.xlu0 %4924, %v4098
      %v4926 = vpop.permute.xlu0 %4925
      %4928 = vset.pattern.permute.xlu0 3
      %4929 = vperm.xlu0 %4928, %v4099
      %v4930 = vpop.permute.xlu0 %4929
      %v4932 = vadd.f32 %v4772, %v4806
      %v4933 = vadd.f32 %v4773, %v4810
      %v4934 = vadd.f32 %v4774, %v4814
      %v4935 = vadd.f32 %v4775, %v4818
      %v4936 = vadd.f32 %v4776, %v4822
      %v4937 = vadd.f32 %v4777, %v4826
      %v4938 = vadd.f32 %v4778, %v4830
      %v4939 = vadd.f32 %v4779, %v4834
      %v4940 = vadd.f32 %v4780, %v4838
      %v4941 = vadd.f32 %v4781, %v4842
      %v4942 = vadd.f32 %v4782, %v4846
      %v4943 = vadd.f32 %v4783, %v4850
      %v4944 = vadd.f32 %v4784, %v4854
      %v4945 = vadd.f32 %v4785, %v4858
      %v4946 = vadd.f32 %v4786, %v4862
      %v4947 = vadd.f32 %v4787, %v4866
      %v4948 = vadd.f32 %v4788, %v4870
      %v4949 = vadd.f32 %v4789, %v4874
      %v4950 = vadd.f32 %v4790, %v4878
      %v4951 = vadd.f32 %v4791, %v4882
      %v4952 = vadd.f32 %v4792, %v4886
      %v4953 = vadd.f32 %v4793, %v4890
      %v4954 = vadd.f32 %v4794, %v4894
      %v4955 = vadd.f32 %v4795, %v4898
      %v4956 = vadd.f32 %v4796, %v4902
      %v4957 = vadd.f32 %v4797, %v4906
      %v4958 = vadd.f32 %v4798, %v4910
      %v4959 = vadd.f32 %v4799, %v4914
      %v4960 = vadd.f32 %v4800, %v4918
      %v4961 = vadd.f32 %v4801, %v4922
      %v4962 = vadd.f32 %v4802, %v4926
      %v4963 = vadd.f32 %v4803, %v4930
      %v4964 = vmax.f32 %v4740, %v4932
      %v4965 = vmax.f32 %v4741, %v4933
      %v4966 = vmax.f32 %v4742, %v4934
      %v4967 = vmax.f32 %v4743, %v4935
      %v4968 = vmax.f32 %v4744, %v4936
      %v4969 = vmax.f32 %v4745, %v4937
      %v4970 = vmax.f32 %v4746, %v4938
      %v4971 = vmax.f32 %v4747, %v4939
      %v4972 = vmax.f32 %v4748, %v4940
      %v4973 = vmax.f32 %v4749, %v4941
      %v4974 = vmax.f32 %v4750, %v4942
      %v4975 = vmax.f32 %v4751, %v4943
      %v4976 = vmax.f32 %v4752, %v4944
      %v4977 = vmax.f32 %v4753, %v4945
      %v4978 = vmax.f32 %v4754, %v4946
      %v4979 = vmax.f32 %v4755, %v4947
      %v4980 = vmax.f32 %v4756, %v4948
      %v4981 = vmax.f32 %v4757, %v4949
      %v4982 = vmax.f32 %v4758, %v4950
      %v4983 = vmax.f32 %v4759, %v4951
      %v4984 = vmax.f32 %v4760, %v4952
      %v4985 = vmax.f32 %v4761, %v4953
      %v4986 = vmax.f32 %v4762, %v4954
      %v4987 = vmax.f32 %v4763, %v4955
      %v4988 = vmax.f32 %v4764, %v4956
      %v4989 = vmax.f32 %v4765, %v4957
      %v4990 = vmax.f32 %v4766, %v4958
      %v4991 = vmax.f32 %v4767, %v4959
      %v4992 = vmax.f32 %v4768, %v4960
      %v4993 = vmax.f32 %v4769, %v4961
      %v4994 = vmax.f32 %v4770, %v4962
      %v4995 = vmax.f32 %v4771, %v4963
      %4996 = vst [vmem:[#allocation2 + $0x20] sm:$0xff] %v4964
      %4997 = vst [vmem:[#allocation2 + $0x28] sm:$0xff] %v4965
      %4998 = vst [vmem:[#allocation2 + $0x30] sm:$0xff] %v4966
      %4999 = vst [vmem:[#allocation2 + $0x38] sm:$0xff] %v4967
      %5000 = vst [vmem:[#allocation2 + $0x40] sm:$0xff] %v4968
      %5001 = vst [vmem:[#allocation2 + $0x48] sm:$0xff] %v4969
      %5002 = vst [vmem:[#allocation2 + $0x50] sm:$0xff] %v4970
      %5003 = vst [vmem:[#allocation2 + $0x58] sm:$0xff] %v4971
      %5004 = vst [vmem:[#allocation2 + $0x60] sm:$0xff] %v4972
      %5005 = vst [vmem:[#allocation2 + $0x68] sm:$0xff] %v4973
      %5006 = vst [vmem:[#allocation2 + $0x70] sm:$0xff] %v4974
      %5007 = vst [vmem:[#allocation2 + $0x78] sm:$0xff] %v4975
      %5008 = vst [vmem:[#allocation2 + $0x80] sm:$0xff] %v4976
      %5009 = vst [vmem:[#allocation2 + $0x88] sm:$0xff] %v4977
      %5010 = vst [vmem:[#allocation2 + $0x90] sm:$0xff] %v4978
      %5011 = vst [vmem:[#allocation2 + $0x98] sm:$0xff] %v4979
      %5012 = vst [vmem:[#allocation2 + $0xa0] sm:$0xff] %v4980
      %5013 = vst [vmem:[#allocation2 + $0xa8] sm:$0xff] %v4981
      %5014 = vst [vmem:[#allocation2 + $0xb0] sm:$0xff] %v4982
      %5015 = vst [vmem:[#allocation2 + $0xb8] sm:$0xff] %v4983
      %5016 = vst [vmem:[#allocation2 + $0xc0] sm:$0xff] %v4984
      %5017 = vst [vmem:[#allocation2 + $0xc8] sm:$0xff] %v4985
      %5018 = vst [vmem:[#allocation2 + $0xd0] sm:$0xff] %v4986
      %5019 = vst [vmem:[#allocation2 + $0xd8] sm:$0xff] %v4987
      %5020 = vst [vmem:[#allocation2 + $0xe0] sm:$0xff] %v4988
      %5021 = vst [vmem:[#allocation2 + $0xe8] sm:$0xff] %v4989
      %5022 = vst [vmem:[#allocation2 + $0xf0] sm:$0xff] %v4990
      %5023 = vst [vmem:[#allocation2 + $0xf8] sm:$0xff] %v4991
      %5024 = vst [vmem:[#allocation2 + $0x100] sm:$0xff] %v4992
      %5025 = vst [vmem:[#allocation2 + $0x108] sm:$0xff] %v4993
      %5026 = vst [vmem:[#allocation2 + $0x110] sm:$0xff] %v4994
      %5027 = vst [vmem:[#allocation2 + $0x118] sm:$0xff] %v4995
      %v5028 = vld [vmem:[#allocation3] sm:$0xff]
      %v5029 = vld [vmem:[#allocation3 + $0x8] sm:$0xff]
      %v5030 = vld [vmem:[#allocation3 + $0x10] sm:$0xff]
      %v5031 = vld [vmem:[#allocation3 + $0x18] sm:$0xff]
      %v5032 = vld [vmem:[#allocation3 + $0x20] sm:$0xff]
      %v5033 = vld [vmem:[#allocation3 + $0x28] sm:$0xff]
      %v5034 = vld [vmem:[#allocation3 + $0x30] sm:$0xff]
      %v5035 = vld [vmem:[#allocation3 + $0x38] sm:$0xff]
      %v5036 = vld [vmem:[#allocation3 + $0x40] sm:$0xff]
      %v5037 = vld [vmem:[#allocation3 + $0x48] sm:$0xff]
      %v5038 = vld [vmem:[#allocation3 + $0x50] sm:$0xff]
      %v5039 = vld [vmem:[#allocation3 + $0x58] sm:$0xff]
      %v5040 = vld [vmem:[#allocation3 + $0x60] sm:$0xff]
      %v5041 = vld [vmem:[#allocation3 + $0x68] sm:$0xff]
      %v5042 = vld [vmem:[#allocation3 + $0x70] sm:$0xff]
      %v5043 = vld [vmem:[#allocation3 + $0x78] sm:$0xff]
      %v5044 = vld [vmem:[#allocation3 + $0x80] sm:$0xff]
      %v5045 = vld [vmem:[#allocation3 + $0x88] sm:$0xff]
      %v5046 = vld [vmem:[#allocation3 + $0x90] sm:$0xff]
      %v5047 = vld [vmem:[#allocation3 + $0x98] sm:$0xff]
      %v5048 = vld [vmem:[#allocation3 + $0xa0] sm:$0xff]
      %v5049 = vld [vmem:[#allocation3 + $0xa8] sm:$0xff]
      %v5050 = vld [vmem:[#allocation3 + $0xb0] sm:$0xff]
      %v5051 = vld [vmem:[#allocation3 + $0xb8] sm:$0xff]
      %v5052 = vld [vmem:[#allocation3 + $0xc0] sm:$0xff]
      %v5053 = vld [vmem:[#allocation3 + $0xc8] sm:$0xff]
      %v5054 = vld [vmem:[#allocation3 + $0xd0] sm:$0xff]
      %v5055 = vld [vmem:[#allocation3 + $0xd8] sm:$0xff]
      %v5056 = vld [vmem:[#allocation3 + $0xe0] sm:$0xff]
      %v5057 = vld [vmem:[#allocation3 + $0xe8] sm:$0xff]
      %v5058 = vld [vmem:[#allocation3 + $0xf0] sm:$0xff]
      %v5059 = vld [vmem:[#allocation3 + $0xf8] sm:$0xff]
      %v5060 = vpack.c.bf16 %v4965, %v4964
      %v5061 = vpack.c.bf16 %v4967, %v4966
      %v5062 = vpack.c.bf16 %v4969, %v4968
      %v5063 = vpack.c.bf16 %v4971, %v4970
      %v5064 = vpack.c.bf16 %v4973, %v4972
      %v5065 = vpack.c.bf16 %v4975, %v4974
      %v5066 = vpack.c.bf16 %v4977, %v4976
      %v5067 = vpack.c.bf16 %v4979, %v4978
      %v5068 = vpack.c.bf16 %v4981, %v4980
      %v5069 = vpack.c.bf16 %v4983, %v4982
      %v5070 = vpack.c.bf16 %v4985, %v4984
      %v5071 = vpack.c.bf16 %v4987, %v4986
      %v5072 = vpack.c.bf16 %v4989, %v4988
      %v5073 = vpack.c.bf16 %v4991, %v4990
      %v5074 = vpack.c.bf16 %v4993, %v4992
      %v5075 = vpack.c.bf16 %v4995, %v4994
      %v5076 = vld [vmem:[%s1 + $0xc0] sm:$0xf]
      %v5077 = vld [vmem:[%s1 + $0xc4] sm:$0xf]
      %v5078 = vld [vmem:[%s1 + $0xc8] sm:$0xf]
      %v5079 = vld [vmem:[%s1 + $0xcc] sm:$0xf]
      %v5080 = vld [vmem:[%s1 + $0xd0] sm:$0xf]
      %v5081 = vld [vmem:[%s1 + $0xd4] sm:$0xf]
      %v5082 = vld [vmem:[%s1 + $0xd8] sm:$0xf]
      %v5083 = vld [vmem:[%s1 + $0xdc] sm:$0xf]
      %v5084 = vld [vmem:[%s1 + $0xe0] sm:$0xf]
      %v5085 = vld [vmem:[%s1 + $0xe4] sm:$0xf]
      %v5086 = vld [vmem:[%s1 + $0xe8] sm:$0xf]
      %v5087 = vld [vmem:[%s1 + $0xec] sm:$0xf]
      %v5088 = vld [vmem:[%s1 + $0xf0] sm:$0xf]
      %v5089 = vld [vmem:[%s1 + $0xf4] sm:$0xf]
      %v5090 = vld [vmem:[%s1 + $0xf8] sm:$0xf]
      %v5091 = vld [vmem:[%s1 + $0xfc] sm:$0xf]
      %v5108 = vunpack.c.l.b16 %v5076
      %v5109 = vunpack.c.l.b16 %v5077
      %v5110 = vunpack.c.l.b16 %v5078
      %v5111 = vunpack.c.l.b16 %v5079
      %v5112 = vunpack.c.l.b16 %v5080
      %v5113 = vunpack.c.l.b16 %v5081
      %v5114 = vunpack.c.l.b16 %v5082
      %v5115 = vunpack.c.l.b16 %v5083
      %v5116 = vunpack.c.l.b16 %v5084
      %v5117 = vunpack.c.l.b16 %v5085
      %v5118 = vunpack.c.l.b16 %v5086
      %v5119 = vunpack.c.l.b16 %v5087
      %v5120 = vunpack.c.l.b16 %v5088
      %v5121 = vunpack.c.l.b16 %v5089
      %v5122 = vunpack.c.l.b16 %v5090
      %v5123 = vunpack.c.l.b16 %v5091
      %v5124 = vpack.c.b16 %v5109, %v5108
      %v5125 = vpack.c.b16 %v5111, %v5110
      %v5126 = vpack.c.b16 %v5113, %v5112
      %v5127 = vpack.c.b16 %v5115, %v5114
      %v5128 = vpack.c.b16 %v5117, %v5116
      %v5129 = vpack.c.b16 %v5119, %v5118
      %v5130 = vpack.c.b16 %v5121, %v5120
      %v5131 = vpack.c.b16 %v5123, %v5122
      %5140 = vmatprep.subr.bf16.mxu0 0
      %5141 = vmatpush1.bf16.msra.mxu0 %v5124
      %5142 = vmatprep.subr.bf16.mxu0 0
      %5143 = vmatpush1.bf16.msra.mxu0 %v5125
      %5144 = vmatprep.subr.bf16.mxu0 0
      %5145 = vmatpush1.bf16.msra.mxu0 %v5126
      %5146 = vmatprep.subr.bf16.mxu0 0
      %5147 = vmatpush1.bf16.msra.mxu0 %v5127
      %5148 = vmatprep.subr.bf16.mxu0 0
      %5149 = vmatpush1.bf16.msra.mxu0 %v5128
      %5150 = vmatprep.subr.bf16.mxu0 0
      %5151 = vmatpush1.bf16.msra.mxu0 %v5129
      %5152 = vmatprep.subr.bf16.mxu0 0
      %5153 = vmatpush1.bf16.msra.mxu0 %v5130
      %5154 = vmatprep.subr.bf16.mxu0 0
      %5155 = vmatpush1.bf16.msra.mxu0 %v5131
      %5156 = vmatprep.subr.bf16.mxu0 0
      %5157 = vmatpush1.bf16.msra.mxu0 0
      %5158 = vmatprep.subr.bf16.mxu0 0
      %5159 = vmatpush1.bf16.msra.mxu0 0
      %5160 = vmatprep.subr.bf16.mxu0 0
      %5161 = vmatpush1.bf16.msra.mxu0 0
      %5162 = vmatprep.subr.bf16.mxu0 0
      %5163 = vmatpush1.bf16.msra.mxu0 0
      %5164 = vmatprep.subr.bf16.mxu0 0
      %5165 = vmatpush1.bf16.msra.mxu0 0
      %5166 = vmatprep.subr.bf16.mxu0 0
      %5167 = vmatpush1.bf16.msra.mxu0 0
      %5168 = vmatprep.subr.bf16.mxu0 0
      %5169 = vmatpush1.bf16.msra.mxu0 0
      %5170 = vmatprep.subr.bf16.mxu0 0
      %5171 = vmatpush1.bf16.msra.mxu0 0
      %5172 = vmatprep.mubr.bf16.mxu0 0
      %5173 = vmatmul.mubr.bf16.gmra.mrb[0].mxu0 %v5060
      %v5174 = vpop.f32.mrb[0].mxu0
      %v5175 = vadd.f32 0.0, %v5174
      %v5176 = vpop.f32.mrb[0].mxu0
      %v5177 = vpop.f32.mrb[0].mxu0
      %v5178 = vadd.f32 0.0, %v5177
      %v5179 = vpop.f32.mrb[0].mxu0
      %5180 = vmatprep.mubr.bf16.mxu0 0
      %5181 = vmatmul.mubr.bf16.gmra.mrb[0].mxu0 %v5061
      %v5182 = vpop.f32.mrb[0].mxu0
      %v5183 = vadd.f32 0.0, %v5182
      %v5184 = vpop.f32.mrb[0].mxu0
      %v5185 = vpop.f32.mrb[0].mxu0
      %v5186 = vadd.f32 0.0, %v5185
      %v5187 = vpop.f32.mrb[0].mxu0
      %5188 = vmatprep.mubr.bf16.mxu0 0
      %5189 = vmatmul.mubr.bf16.gmra.mrb[0].mxu0 %v5062
      %v5190 = vpop.f32.mrb[0].mxu0
      %v5191 = vadd.f32 0.0, %v5190
      %v5192 = vpop.f32.mrb[0].mxu0
      %v5193 = vpop.f32.mrb[0].mxu0
      %v5194 = vadd.f32 0.0, %v5193
      %v5195 = vpop.f32.mrb[0].mxu0
      %5196 = vmatprep.mubr.bf16.mxu0 0
      %5197 = vmatmul.mubr.bf16.gmra.mrb[0].mxu0 %v5063
      %v5198 = vpop.f32.mrb[0].mxu0
      %v5199 = vadd.f32 0.0, %v5198
      %v5200 = vpop.f32.mrb[0].mxu0
      %v5201 = vpop.f32.mrb[0].mxu0
      %v5202 = vadd.f32 0.0, %v5201
      %v5203 = vpop.f32.mrb[0].mxu0
      %5204 = vmatprep.mubr.bf16.mxu0 0
      %5205 = vmatmul.mubr.bf16.gmra.mrb[0].mxu0 %v5064
      %v5206 = vpop.f32.mrb[0].mxu0
      %v5207 = vadd.f32 0.0, %v5206
      %v5208 = vpop.f32.mrb[0].mxu0
      %v5209 = vpop.f32.mrb[0].mxu0
      %v5210 = vadd.f32 0.0, %v5209
      %v5211 = vpop.f32.mrb[0].mxu0
      %5212 = vmatprep.mubr.bf16.mxu0 0
      %5213 = vmatmul.mubr.bf16.gmra.mrb[0].mxu0 %v5065
      %v5214 = vpop.f32.mrb[0].mxu0
      %v5215 = vadd.f32 0.0, %v5214
      %v5216 = vpop.f32.mrb[0].mxu0
      %v5217 = vpop.f32.mrb[0].mxu0
      %v5218 = vadd.f32 0.0, %v5217
      %v5219 = vpop.f32.mrb[0].mxu0
      %5220 = vmatprep.mubr.bf16.mxu0 0
      %5221 = vmatmul.mubr.bf16.gmra.mrb[0].mxu0 %v5066
      %v5222 = vpop.f32.mrb[0].mxu0
      %v5223 = vadd.f32 0.0, %v5222
      %v5224 = vpop.f32.mrb[0].mxu0
      %v5225 = vpop.f32.mrb[0].mxu0
      %v5226 = vadd.f32 0.0, %v5225
      %v5227 = vpop.f32.mrb[0].mxu0
      %5228 = vmatprep.mubr.bf16.mxu0 0
      %5229 = vmatmul.mubr.bf16.gmra.mrb[0].mxu0 %v5067
      %v5230 = vpop.f32.mrb[0].mxu0
      %v5231 = vadd.f32 0.0, %v5230
      %v5232 = vpop.f32.mrb[0].mxu0
      %v5233 = vpop.f32.mrb[0].mxu0
      %v5234 = vadd.f32 0.0, %v5233
      %v5235 = vpop.f32.mrb[0].mxu0
      %5236 = vmatprep.mubr.bf16.mxu0 0
      %5237 = vmatmul.mubr.bf16.gmra.mrb[0].mxu0 %v5068
      %v5238 = vpop.f32.mrb[0].mxu0
      %v5239 = vadd.f32 0.0, %v5238
      %v5240 = vpop.f32.mrb[0].mxu0
      %v5241 = vpop.f32.mrb[0].mxu0
      %v5242 = vadd.f32 0.0, %v5241
      %v5243 = vpop.f32.mrb[0].mxu0
      %5244 = vmatprep.mubr.bf16.mxu0 0
      %5245 = vmatmul.mubr.bf16.gmra.mrb[0].mxu0 %v5069
      %v5246 = vpop.f32.mrb[0].mxu0
      %v5247 = vadd.f32 0.0, %v5246
      %v5248 = vpop.f32.mrb[0].mxu0
      %v5249 = vpop.f32.mrb[0].mxu0
      %v5250 = vadd.f32 0.0, %v5249
      %v5251 = vpop.f32.mrb[0].mxu0
      %5252 = vmatprep.mubr.bf16.mxu0 0
      %5253 = vmatmul.mubr.bf16.gmra.mrb[0].mxu0 %v5070
      %v5254 = vpop.f32.mrb[0].mxu0
      %v5255 = vadd.f32 0.0, %v5254
      %v5256 = vpop.f32.mrb[0].mxu0
      %v5257 = vpop.f32.mrb[0].mxu0
      %v5258 = vadd.f32 0.0, %v5257
      %v5259 = vpop.f32.mrb[0].mxu0
      %5260 = vmatprep.mubr.bf16.mxu0 0
      %5261 = vmatmul.mubr.bf16.gmra.mrb[0].mxu0 %v5071
      %v5262 = vpop.f32.mrb[0].mxu0
      %v5263 = vadd.f32 0.0, %v5262
      %v5264 = vpop.f32.mrb[0].mxu0
      %v5265 = vpop.f32.mrb[0].mxu0
      %v5266 = vadd.f32 0.0, %v5265
      %v5267 = vpop.f32.mrb[0].mxu0
      %5268 = vmatprep.mubr.bf16.mxu0 0
      %5269 = vmatmul.mubr.bf16.gmra.mrb[0].mxu0 %v5072
      %v5270 = vpop.f32.mrb[0].mxu0
      %v5271 = vadd.f32 0.0, %v5270
      %v5272 = vpop.f32.mrb[0].mxu0
      %v5273 = vpop.f32.mrb[0].mxu0
      %v5274 = vadd.f32 0.0, %v5273
      %v5275 = vpop.f32.mrb[0].mxu0
      %5276 = vmatprep.mubr.bf16.mxu0 0
      %5277 = vmatmul.mubr.bf16.gmra.mrb[0].mxu0 %v5073
      %v5278 = vpop.f32.mrb[0].mxu0
      %v5279 = vadd.f32 0.0, %v5278
      %v5280 = vpop.f32.mrb[0].mxu0
      %v5281 = vpop.f32.mrb[0].mxu0
      %v5282 = vadd.f32 0.0, %v5281
      %v5283 = vpop.f32.mrb[0].mxu0
      %5284 = vmatprep.mubr.bf16.mxu0 0
      %5285 = vmatmul.mubr.bf16.gmra.mrb[0].mxu0 %v5074
      %v5286 = vpop.f32.mrb[0].mxu0
      %v5287 = vadd.f32 0.0, %v5286
      %v5288 = vpop.f32.mrb[0].mxu0
      %v5289 = vpop.f32.mrb[0].mxu0
      %v5290 = vadd.f32 0.0, %v5289
      %v5291 = vpop.f32.mrb[0].mxu0
      %5292 = vmatprep.mubr.bf16.mxu0 0
      %5293 = vmatmul.mubr.bf16.gmra.mrb[0].mxu0 %v5075
      %v5294 = vpop.f32.mrb[0].mxu0
      %v5295 = vadd.f32 0.0, %v5294
      %v5296 = vpop.f32.mrb[0].mxu0
      %v5297 = vpop.f32.mrb[0].mxu0
      %v5298 = vadd.f32 0.0, %v5297
      %v5299 = vpop.f32.mrb[0].mxu0
      %5300 = vdwg.mxu0
      %v5301 = vadd.f32 %v5028, %v5175
      %v5302 = vadd.f32 %v5029, %v5178
      %v5303 = vadd.f32 %v5030, %v5183
      %v5304 = vadd.f32 %v5031, %v5186
      %v5305 = vadd.f32 %v5032, %v5191
      %v5306 = vadd.f32 %v5033, %v5194
      %v5307 = vadd.f32 %v5034, %v5199
      %v5308 = vadd.f32 %v5035, %v5202
      %v5309 = vadd.f32 %v5036, %v5207
      %v5310 = vadd.f32 %v5037, %v5210
      %v5311 = vadd.f32 %v5038, %v5215
      %v5312 = vadd.f32 %v5039, %v5218
      %v5313 = vadd.f32 %v5040, %v5223
      %v5314 = vadd.f32 %v5041, %v5226
      %v5315 = vadd.f32 %v5042, %v5231
      %v5316 = vadd.f32 %v5043, %v5234
      %v5317 = vadd.f32 %v5044, %v5239
      %v5318 = vadd.f32 %v5045, %v5242
      %v5319 = vadd.f32 %v5046, %v5247
      %v5320 = vadd.f32 %v5047, %v5250
      %v5321 = vadd.f32 %v5048, %v5255
      %v5322 = vadd.f32 %v5049, %v5258
      %v5323 = vadd.f32 %v5050, %v5263
      %v5324 = vadd.f32 %v5051, %v5266
      %v5325 = vadd.f32 %v5052, %v5271
      %v5326 = vadd.f32 %v5053, %v5274
      %v5327 = vadd.f32 %v5054, %v5279
      %v5328 = vadd.f32 %v5055, %v5282
      %v5329 = vadd.f32 %v5056, %v5287
      %v5330 = vadd.f32 %v5057, %v5290
      %v5331 = vadd.f32 %v5058, %v5295
      %v5332 = vadd.f32 %v5059, %v5298
      %5333 = vst [vmem:[#allocation3] sm:$0xff] %v5301
      %5334 = vst [vmem:[#allocation3 + $0x8] sm:$0xff] %v5302
      %5335 = vst [vmem:[#allocation3 + $0x10] sm:$0xff] %v5303
      %5336 = vst [vmem:[#allocation3 + $0x18] sm:$0xff] %v5304
      %5337 = vst [vmem:[#allocation3 + $0x20] sm:$0xff] %v5305
      %5338 = vst [vmem:[#allocation3 + $0x28] sm:$0xff] %v5306
      %5339 = vst [vmem:[#allocation3 + $0x30] sm:$0xff] %v5307
      %5340 = vst [vmem:[#allocation3 + $0x38] sm:$0xff] %v5308
      %5341 = vst [vmem:[#allocation3 + $0x40] sm:$0xff] %v5309
      %5342 = vst [vmem:[#allocation3 + $0x48] sm:$0xff] %v5310
      %5343 = vst [vmem:[#allocation3 + $0x50] sm:$0xff] %v5311
      %5344 = vst [vmem:[#allocation3 + $0x58] sm:$0xff] %v5312
      %5345 = vst [vmem:[#allocation3 + $0x60] sm:$0xff] %v5313
      %5346 = vst [vmem:[#allocation3 + $0x68] sm:$0xff] %v5314
      %5347 = vst [vmem:[#allocation3 + $0x70] sm:$0xff] %v5315
      %5348 = vst [vmem:[#allocation3 + $0x78] sm:$0xff] %v5316
      %5349 = vst [vmem:[#allocation3 + $0x80] sm:$0xff] %v5317
      %5350 = vst [vmem:[#allocation3 + $0x88] sm:$0xff] %v5318
      %5351 = vst [vmem:[#allocation3 + $0x90] sm:$0xff] %v5319
      %5352 = vst [vmem:[#allocation3 + $0x98] sm:$0xff] %v5320
      %5353 = vst [vmem:[#allocation3 + $0xa0] sm:$0xff] %v5321
      %5354 = vst [vmem:[#allocation3 + $0xa8] sm:$0xff] %v5322
      %5355 = vst [vmem:[#allocation3 + $0xb0] sm:$0xff] %v5323
      %5356 = vst [vmem:[#allocation3 + $0xb8] sm:$0xff] %v5324
      %5357 = vst [vmem:[#allocation3 + $0xc0] sm:$0xff] %v5325
      %5358 = vst [vmem:[#allocation3 + $0xc8] sm:$0xff] %v5326
      %5359 = vst [vmem:[#allocation3 + $0xd0] sm:$0xff] %v5327
      %5360 = vst [vmem:[#allocation3 + $0xd8] sm:$0xff] %v5328
      %5361 = vst [vmem:[#allocation3 + $0xe0] sm:$0xff] %v5329
      %5362 = vst [vmem:[#allocation3 + $0xe8] sm:$0xff] %v5330
      %5363 = vst [vmem:[#allocation3 + $0xf0] sm:$0xff] %v5331
      %5364 = vst [vmem:[#allocation3 + $0xf8] sm:$0xff] %v5332
      %v5365 = vld [vmem:[#allocation3] sm:$0xff]
      %v5366 = vld [vmem:[#allocation3 + $0x8] sm:$0xff]
      %v5367 = vld [vmem:[#allocation3 + $0x10] sm:$0xff]
      %v5368 = vld [vmem:[#allocation3 + $0x18] sm:$0xff]
      %v5369 = vld [vmem:[#allocation3 + $0x20] sm:$0xff]
      %v5370 = vld [vmem:[#allocation3 + $0x28] sm:$0xff]
      %v5371 = vld [vmem:[#allocation3 + $0x30] sm:$0xff]
      %v5372 = vld [vmem:[#allocation3 + $0x38] sm:$0xff]
      %v5373 = vld [vmem:[#allocation3 + $0x40] sm:$0xff]
      %v5374 = vld [vmem:[#allocation3 + $0x48] sm:$0xff]
      %v5375 = vld [vmem:[#allocation3 + $0x50] sm:$0xff]
      %v5376 = vld [vmem:[#allocation3 + $0x58] sm:$0xff]
      %v5377 = vld [vmem:[#allocation3 + $0x60] sm:$0xff]
      %v5378 = vld [vmem:[#allocation3 + $0x68] sm:$0xff]
      %v5379 = vld [vmem:[#allocation3 + $0x70] sm:$0xff]
      %v5380 = vld [vmem:[#allocation3 + $0x78] sm:$0xff]
      %v5381 = vld [vmem:[#allocation3 + $0x80] sm:$0xff]
      %v5382 = vld [vmem:[#allocation3 + $0x88] sm:$0xff]
      %v5383 = vld [vmem:[#allocation3 + $0x90] sm:$0xff]
      %v5384 = vld [vmem:[#allocation3 + $0x98] sm:$0xff]
      %v5385 = vld [vmem:[#allocation3 + $0xa0] sm:$0xff]
      %v5386 = vld [vmem:[#allocation3 + $0xa8] sm:$0xff]
      %v5387 = vld [vmem:[#allocation3 + $0xb0] sm:$0xff]
      %v5388 = vld [vmem:[#allocation3 + $0xb8] sm:$0xff]
      %v5389 = vld [vmem:[#allocation3 + $0xc0] sm:$0xff]
      %v5390 = vld [vmem:[#allocation3 + $0xc8] sm:$0xff]
      %v5391 = vld [vmem:[#allocation3 + $0xd0] sm:$0xff]
      %v5392 = vld [vmem:[#allocation3 + $0xd8] sm:$0xff]
      %v5393 = vld [vmem:[#allocation3 + $0xe0] sm:$0xff]
      %v5394 = vld [vmem:[#allocation3 + $0xe8] sm:$0xff]
      %v5395 = vld [vmem:[#allocation3 + $0xf0] sm:$0xff]
      %v5396 = vld [vmem:[#allocation3 + $0xf8] sm:$0xff]
      %v5397 = vld [vmem:[%s2] sm:$0x1]
      %v5399 = vlaneseq
      %v5400 = vshrl.u32 %v5399, 7
      %v5401 = vsub.s32 0, %v5400
      %v5402 = vrot.slane %v5397, %v5401
      %v5404 = vadd.f32 %v5365, %v5402
      %v5405 = vadd.f32 %v5366, %v5402
      %v5406 = vadd.f32 %v5367, %v5402
      %v5407 = vadd.f32 %v5368, %v5402
      %v5408 = vadd.f32 %v5369, %v5402
      %v5409 = vadd.f32 %v5370, %v5402
      %v5410 = vadd.f32 %v5371, %v5402
      %v5411 = vadd.f32 %v5372, %v5402
      %v5412 = vadd.f32 %v5373, %v5402
      %v5413 = vadd.f32 %v5374, %v5402
      %v5414 = vadd.f32 %v5375, %v5402
      %v5415 = vadd.f32 %v5376, %v5402
      %v5416 = vadd.f32 %v5377, %v5402
      %v5417 = vadd.f32 %v5378, %v5402
      %v5418 = vadd.f32 %v5379, %v5402
      %v5419 = vadd.f32 %v5380, %v5402
      %v5420 = vadd.f32 %v5381, %v5402
      %v5421 = vadd.f32 %v5382, %v5402
      %v5422 = vadd.f32 %v5383, %v5402
      %v5423 = vadd.f32 %v5384, %v5402
      %v5424 = vadd.f32 %v5385, %v5402
      %v5425 = vadd.f32 %v5386, %v5402
      %v5426 = vadd.f32 %v5387, %v5402
      %v5427 = vadd.f32 %v5388, %v5402
      %v5428 = vadd.f32 %v5389, %v5402
      %v5429 = vadd.f32 %v5390, %v5402
      %v5430 = vadd.f32 %v5391, %v5402
      %v5431 = vadd.f32 %v5392, %v5402
      %v5432 = vadd.f32 %v5393, %v5402
      %v5433 = vadd.f32 %v5394, %v5402
      %v5434 = vadd.f32 %v5395, %v5402
      %v5435 = vadd.f32 %v5396, %v5402
      %v5436 = vxor.u32 %v5404, 2147483648
      %v5437 = vxor.u32 %v5405, 2147483648
      %v5438 = vxor.u32 %v5406, 2147483648
      %v5439 = vxor.u32 %v5407, 2147483648
      %v5440 = vxor.u32 %v5408, 2147483648
      %v5441 = vxor.u32 %v5409, 2147483648
      %v5442 = vxor.u32 %v5410, 2147483648
      %v5443 = vxor.u32 %v5411, 2147483648
      %v5444 = vxor.u32 %v5412, 2147483648
      %v5445 = vxor.u32 %v5413, 2147483648
      %v5446 = vxor.u32 %v5414, 2147483648
      %v5447 = vxor.u32 %v5415, 2147483648
      %v5448 = vxor.u32 %v5416, 2147483648
      %v5449 = vxor.u32 %v5417, 2147483648
      %v5450 = vxor.u32 %v5418, 2147483648
      %v5451 = vxor.u32 %v5419, 2147483648
      %v5452 = vxor.u32 %v5420, 2147483648
      %v5453 = vxor.u32 %v5421, 2147483648
      %v5454 = vxor.u32 %v5422, 2147483648
      %v5455 = vxor.u32 %v5423, 2147483648
      %v5456 = vxor.u32 %v5424, 2147483648
      %v5457 = vxor.u32 %v5425, 2147483648
      %v5458 = vxor.u32 %v5426, 2147483648
      %v5459 = vxor.u32 %v5427, 2147483648
      %v5460 = vxor.u32 %v5428, 2147483648
      %v5461 = vxor.u32 %v5429, 2147483648
      %v5462 = vxor.u32 %v5430, 2147483648
      %v5463 = vxor.u32 %v5431, 2147483648
      %v5464 = vxor.u32 %v5432, 2147483648
      %v5465 = vxor.u32 %v5433, 2147483648
      %v5466 = vxor.u32 %v5434, 2147483648
      %v5467 = vxor.u32 %v5435, 2147483648
      %v5468 = vmul.f32 %v5436, 1.442695
      %v5469 = vpow.pop %v5468
      %v5470 = vmul.f32 %v5437, 1.442695
      %v5471 = vpow.pop %v5470
      %v5472 = vmul.f32 %v5438, 1.442695
      %v5473 = vpow.pop %v5472
      %v5474 = vmul.f32 %v5439, 1.442695
      %v5475 = vpow.pop %v5474
      %v5476 = vmul.f32 %v5440, 1.442695
      %v5477 = vpow.pop %v5476
      %v5478 = vmul.f32 %v5441, 1.442695
      %v5479 = vpow.pop %v5478
      %v5480 = vmul.f32 %v5442, 1.442695
      %v5481 = vpow.pop %v5480
      %v5482 = vmul.f32 %v5443, 1.442695
      %v5483 = vpow.pop %v5482
      %v5484 = vmul.f32 %v5444, 1.442695
      %v5485 = vpow.pop %v5484
      %v5486 = vmul.f32 %v5445, 1.442695
      %v5487 = vpow.pop %v5486
      %v5488 = vmul.f32 %v5446, 1.442695
      %v5489 = vpow.pop %v5488
      %v5490 = vmul.f32 %v5447, 1.442695
      %v5491 = vpow.pop %v5490
      %v5492 = vmul.f32 %v5448, 1.442695
      %v5493 = vpow.pop %v5492
      %v5494 = vmul.f32 %v5449, 1.442695
      %v5495 = vpow.pop %v5494
      %v5496 = vmul.f32 %v5450, 1.442695
      %v5497 = vpow.pop %v5496
      %v5498 = vmul.f32 %v5451, 1.442695
      %v5499 = vpow.pop %v5498
      %v5500 = vmul.f32 %v5452, 1.442695
      %v5501 = vpow.pop %v5500
      %v5502 = vmul.f32 %v5453, 1.442695
      %v5503 = vpow.pop %v5502
      %v5504 = vmul.f32 %v5454, 1.442695
      %v5505 = vpow.pop %v5504
      %v5506 = vmul.f32 %v5455, 1.442695
      %v5507 = vpow.pop %v5506
      %v5508 = vmul.f32 %v5456, 1.442695
      %v5509 = vpow.pop %v5508
      %v5510 = vmul.f32 %v5457, 1.442695
      %v5511 = vpow.pop %v5510
      %v5512 = vmul.f32 %v5458, 1.442695
      %v5513 = vpow.pop %v5512
      %v5514 = vmul.f32 %v5459, 1.442695
      %v5515 = vpow.pop %v5514
      %v5516 = vmul.f32 %v5460, 1.442695
      %v5517 = vpow.pop %v5516
      %v5518 = vmul.f32 %v5461, 1.442695
      %v5519 = vpow.pop %v5518
      %v5520 = vmul.f32 %v5462, 1.442695
      %v5521 = vpow.pop %v5520
      %v5522 = vmul.f32 %v5463, 1.442695
      %v5523 = vpow.pop %v5522
      %v5524 = vmul.f32 %v5464, 1.442695
      %v5525 = vpow.pop %v5524
      %v5526 = vmul.f32 %v5465, 1.442695
      %v5527 = vpow.pop %v5526
      %v5528 = vmul.f32 %v5466, 1.442695
      %v5529 = vpow.pop %v5528
      %v5530 = vmul.f32 %v5467, 1.442695
      %v5531 = vpow.pop %v5530
      %v5532 = vadd.f32 %v5469, 1.0
      %v5533 = vadd.f32 %v5471, 1.0
      %v5534 = vadd.f32 %v5473, 1.0
      %v5535 = vadd.f32 %v5475, 1.0
      %v5536 = vadd.f32 %v5477, 1.0
      %v5537 = vadd.f32 %v5479, 1.0
      %v5538 = vadd.f32 %v5481, 1.0
      %v5539 = vadd.f32 %v5483, 1.0
      %v5540 = vadd.f32 %v5485, 1.0
      %v5541 = vadd.f32 %v5487, 1.0
      %v5542 = vadd.f32 %v5489, 1.0
      %v5543 = vadd.f32 %v5491, 1.0
      %v5544 = vadd.f32 %v5493, 1.0
      %v5545 = vadd.f32 %v5495, 1.0
      %v5546 = vadd.f32 %v5497, 1.0
      %v5547 = vadd.f32 %v5499, 1.0
      %v5548 = vadd.f32 %v5501, 1.0
      %v5549 = vadd.f32 %v5503, 1.0
      %v5550 = vadd.f32 %v5505, 1.0
      %v5551 = vadd.f32 %v5507, 1.0
      %v5552 = vadd.f32 %v5509, 1.0
      %v5553 = vadd.f32 %v5511, 1.0
      %v5554 = vadd.f32 %v5513, 1.0
      %v5555 = vadd.f32 %v5515, 1.0
      %v5556 = vadd.f32 %v5517, 1.0
      %v5557 = vadd.f32 %v5519, 1.0
      %v5558 = vadd.f32 %v5521, 1.0
      %v5559 = vadd.f32 %v5523, 1.0
      %v5560 = vadd.f32 %v5525, 1.0
      %v5561 = vadd.f32 %v5527, 1.0
      %v5562 = vadd.f32 %v5529, 1.0
      %v5563 = vadd.f32 %v5531, 1.0
      %v5564 = vrcp.pop %v5532
      %v5565 = vmul.f32 1.0, %v5564
      %v5566 = vrcp.pop %v5533
      %v5567 = vmul.f32 1.0, %v5566
      %v5568 = vrcp.pop %v5534
      %v5569 = vmul.f32 1.0, %v5568
      %v5570 = vrcp.pop %v5535
      %v5571 = vmul.f32 1.0, %v5570
      %v5572 = vrcp.pop %v5536
      %v5573 = vmul.f32 1.0, %v5572
      %v5574 = vrcp.pop %v5537
      %v5575 = vmul.f32 1.0, %v5574
      %v5576 = vrcp.pop %v5538
      %v5577 = vmul.f32 1.0, %v5576
      %v5578 = vrcp.pop %v5539
      %v5579 = vmul.f32 1.0, %v5578
      %v5580 = vrcp.pop %v5540
      %v5581 = vmul.f32 1.0, %v5580
      %v5582 = vrcp.pop %v5541
      %v5583 = vmul.f32 1.0, %v5582
      %v5584 = vrcp.pop %v5542
      %v5585 = vmul.f32 1.0, %v5584
      %v5586 = vrcp.pop %v5543
      %v5587 = vmul.f32 1.0, %v5586
      %v5588 = vrcp.pop %v5544
      %v5589 = vmul.f32 1.0, %v5588
      %v5590 = vrcp.pop %v5545
      %v5591 = vmul.f32 1.0, %v5590
      %v5592 = vrcp.pop %v5546
      %v5593 = vmul.f32 1.0, %v5592
      %v5594 = vrcp.pop %v5547
      %v5595 = vmul.f32 1.0, %v5594
      %v5596 = vrcp.pop %v5548
      %v5597 = vmul.f32 1.0, %v5596
      %v5598 = vrcp.pop %v5549
      %v5599 = vmul.f32 1.0, %v5598
      %v5600 = vrcp.pop %v5550
      %v5601 = vmul.f32 1.0, %v5600
      %v5602 = vrcp.pop %v5551
      %v5603 = vmul.f32 1.0, %v5602
      %v5604 = vrcp.pop %v5552
      %v5605 = vmul.f32 1.0, %v5604
      %v5606 = vrcp.pop %v5553
      %v5607 = vmul.f32 1.0, %v5606
      %v5608 = vrcp.pop %v5554
      %v5609 = vmul.f32 1.0, %v5608
      %v5610 = vrcp.pop %v5555
      %v5611 = vmul.f32 1.0, %v5610
      %v5612 = vrcp.pop %v5556
      %v5613 = vmul.f32 1.0, %v5612
      %v5614 = vrcp.pop %v5557
      %v5615 = vmul.f32 1.0, %v5614
      %v5616 = vrcp.pop %v5558
      %v5617 = vmul.f32 1.0, %v5616
      %v5618 = vrcp.pop %v5559
      %v5619 = vmul.f32 1.0, %v5618
      %v5620 = vrcp.pop %v5560
      %v5621 = vmul.f32 1.0, %v5620
      %v5622 = vrcp.pop %v5561
      %v5623 = vmul.f32 1.0, %v5622
      %v5624 = vrcp.pop %v5562
      %v5625 = vmul.f32 1.0, %v5624
      %v5626 = vrcp.pop %v5563
      %v5627 = vmul.f32 1.0, %v5626
      %v5628 = vmul.f32 %v5404, %v5565
      %v5629 = vmul.f32 %v5405, %v5567
      %v5630 = vmul.f32 %v5406, %v5569
      %v5631 = vmul.f32 %v5407, %v5571
      %v5632 = vmul.f32 %v5408, %v5573
      %v5633 = vmul.f32 %v5409, %v5575
      %v5634 = vmul.f32 %v5410, %v5577
      %v5635 = vmul.f32 %v5411, %v5579
      %v5636 = vmul.f32 %v5412, %v5581
      %v5637 = vmul.f32 %v5413, %v5583
      %v5638 = vmul.f32 %v5414, %v5585
      %v5639 = vmul.f32 %v5415, %v5587
      %v5640 = vmul.f32 %v5416, %v5589
      %v5641 = vmul.f32 %v5417, %v5591
      %v5642 = vmul.f32 %v5418, %v5593
      %v5643 = vmul.f32 %v5419, %v5595
      %v5644 = vmul.f32 %v5420, %v5597
      %v5645 = vmul.f32 %v5421, %v5599
      %v5646 = vmul.f32 %v5422, %v5601
      %v5647 = vmul.f32 %v5423, %v5603
      %v5648 = vmul.f32 %v5424, %v5605
      %v5649 = vmul.f32 %v5425, %v5607
      %v5650 = vmul.f32 %v5426, %v5609
      %v5651 = vmul.f32 %v5427, %v5611
      %v5652 = vmul.f32 %v5428, %v5613
      %v5653 = vmul.f32 %v5429, %v5615
      %v5654 = vmul.f32 %v5430, %v5617
      %v5655 = vmul.f32 %v5431, %v5619
      %v5656 = vmul.f32 %v5432, %v5621
      %v5657 = vmul.f32 %v5433, %v5623
      %v5658 = vmul.f32 %v5434, %v5625
      %v5659 = vmul.f32 %v5435, %v5627
      %5660 = vst [vmem:[%s197] sm:$0xff] %v5628
      %5661 = vst [vmem:[%s197 + $0x8] sm:$0xff] %v5629
      %5662 = vst [vmem:[%s197 + $0x10] sm:$0xff] %v5630
      %5663 = vst [vmem:[%s197 + $0x18] sm:$0xff] %v5631
      %5664 = vst [vmem:[%s197 + $0x20] sm:$0xff] %v5632
      %5665 = vst [vmem:[%s197 + $0x28] sm:$0xff] %v5633
      %5666 = vst [vmem:[%s197 + $0x30] sm:$0xff] %v5634
      %5667 = vst [vmem:[%s197 + $0x38] sm:$0xff] %v5635
      %5668 = vst [vmem:[%s197 + $0x40] sm:$0xff] %v5636
      %5669 = vst [vmem:[%s197 + $0x48] sm:$0xff] %v5637
      %5670 = vst [vmem:[%s197 + $0x50] sm:$0xff] %v5638
      %5671 = vst [vmem:[%s197 + $0x58] sm:$0xff] %v5639
      %5672 = vst [vmem:[%s197 + $0x60] sm:$0xff] %v5640
      %5673 = vst [vmem:[%s197 + $0x68] sm:$0xff] %v5641
      %5674 = vst [vmem:[%s197 + $0x70] sm:$0xff] %v5642
      %5675 = vst [vmem:[%s197 + $0x78] sm:$0xff] %v5643
      %5676 = vst [vmem:[%s197 + $0x80] sm:$0xff] %v5644
      %5677 = vst [vmem:[%s197 + $0x88] sm:$0xff] %v5645
      %5678 = vst [vmem:[%s197 + $0x90] sm:$0xff] %v5646
      %5679 = vst [vmem:[%s197 + $0x98] sm:$0xff] %v5647
      %5680 = vst [vmem:[%s197 + $0xa0] sm:$0xff] %v5648
      %5681 = vst [vmem:[%s197 + $0xa8] sm:$0xff] %v5649
      %5682 = vst [vmem:[%s197 + $0xb0] sm:$0xff] %v5650
      %5683 = vst [vmem:[%s197 + $0xb8] sm:$0xff] %v5651
      %5684 = vst [vmem:[%s197 + $0xc0] sm:$0xff] %v5652
      %5685 = vst [vmem:[%s197 + $0xc8] sm:$0xff] %v5653
      %5686 = vst [vmem:[%s197 + $0xd0] sm:$0xff] %v5654
      %5687 = vst [vmem:[%s197 + $0xd8] sm:$0xff] %v5655
      %5688 = vst [vmem:[%s197 + $0xe0] sm:$0xff] %v5656
      %5689 = vst [vmem:[%s197 + $0xe8] sm:$0xff] %v5657
      %5690 = vst [vmem:[%s197 + $0xf0] sm:$0xff] %v5658
      %5691 = vst [vmem:[%s197 + $0xf8] sm:$0xff] %v5659
      %p5692 = scmp.lt.s32.totalorder %s15, 1
      %s5693 = scalar_select %p5692, %s15, 1
      %s5694 = smul.addr %s5693, 32
      %s5695 = smul.addr %s5694, 8
      %s5696 = scalar_lea.vmem %s4, %s5695
      // Predicated region
      $region37: #{spp_forward.3} parent=35 // pred_check
        %p5697 = pneg %p122
      $region38: #{spp_forward.3} parent=35 // pred_check_branch
        %5699 = sbr.rel (%p5697) target = $region40
      $region39: #{spp_forward.3} parent=35 // pred_region
        _
      $region40: #{spp_forward.3} parent=35 // pred_fallthru
        _
    $region36: #{spp_forward.3} parent=5 // pred_fallthru
      _
    %p5700 = scmp.le.s32.totalorder 2, %s10
    // Predicated region
    $region41: #{spp_forward.3} parent=5 // pred_check
      %p5701 = pneg %p5700
    $region42: #{spp_forward.3} parent=5 // pred_check_branch
      %5703 = sbr.rel (%p5701) target = $region44
    $region43: #{spp_forward.3} parent=5 // pred_region
      %s5704 = ssub.s32 %s10, 2
      // Predicated region
      $region45: #{spp_forward.3} parent=43 // pred_check
        %p5705 = pneg %p128
      $region46: #{spp_forward.3} parent=43 // pred_check_branch
        %5707 = sbr.rel (%p5705) target = $region48
      $region47: #{spp_forward.3} parent=43 // pred_region
        %p5708 = scmp.lt.s32.totalorder %s16, 1
        %s5709 = scalar_select %p5708, %s16, 1
        %s5710 = smul.addr %s5709, 32
        %s5711 = smul.addr %s5710, 8
        %s5712 = scalar_lea.vmem %s4, %s5711
      $region48: #{spp_forward.3} parent=43 // pred_fallthru
        _
    $region44: #{spp_forward.3} parent=5 // pred_fallthru
      _
  $region6: #{spp_forward.3} parent=0 // loop_footer
    %s14 = sadd.s32 1, %s10
  $region7: #{spp_forward.3} parent=0 // loop_footer_branch
    %9 = sbr.rel target = $region3
  $region8: #{spp_forward.3} parent=0 // loop_exit
    _

</llo_original>
